<compile_context>
chip_gen: v6e
topology: v6e:2x2x1
jax: 0.10.0
libtpu: 0.0.40
codegen_flags: <defaults>
</compile_context>

<pallas_src>
import math
import functools

import jax
import jax.numpy as jnp
from jax.experimental import pallas as pl
from jax.experimental.pallas import tpu as pltpu


# ============================================================================
# Small helpers
# ============================================================================

def _round_up(x, m):
    return ((x + m - 1) // m) * m


def _tile(n, pref, align):
    """Return (tile, padded_size) with tile aligned to `align` (pref is a multiple of align)."""
    n_al = _round_up(max(n, 1), align)
    if n_al <= pref:
        return n_al, n_al
    return pref, _round_up(n, pref)


def _pick_row_tile(s):
    for t in (256, 128, 64, 32, 16, 8):
        if s % t == 0:
            return t
    return s


# ============================================================================
# Tiled bf16 matmul (MXU) with f32 accumulator scratch
# ============================================================================

def _matmul_kernel(a_ref, b_ref, o_ref, acc_ref, *, n_k):
    @pl.when(pl.program_id(2) == 0)
    def _():
        acc_ref[...] = jnp.zeros_like(acc_ref)

    acc_ref[...] += jnp.dot(a_ref[...], b_ref[...],
                            preferred_element_type=jnp.float32)

    @pl.when(pl.program_id(2) == n_k - 1)
    def _():
        o_ref[...] = acc_ref[...].astype(o_ref.dtype)


def _matmul_bias_kernel(a_ref, b_ref, bias_ref, o_ref, acc_ref, *, n_k):
    @pl.when(pl.program_id(2) == 0)
    def _():
        acc_ref[...] = jnp.zeros_like(acc_ref)

    acc_ref[...] += jnp.dot(a_ref[...], b_ref[...],
                            preferred_element_type=jnp.float32)

    @pl.when(pl.program_id(2) == n_k - 1)
    def _():
        o_ref[...] = (acc_ref[...] + bias_ref[...]).astype(o_ref.dtype)


def pallas_linear(a, w, b=None, out_dtype=jnp.float32,
                  tm_pref=256, tn_pref=256, tk_pref=512):
    """a: (M, K), w: (K, N), b: (N,) or None -> (M, N). bf16 operands, f32 accumulation."""
    M, K = a.shape
    N = w.shape[1]

    a = a.astype(jnp.bfloat16)
    w = w.astype(jnp.bfloat16)

    tm, Mp = _tile(M, tm_pref, 16)    # bf16 sublane packing wants multiples of 16
    tn, Np = _tile(N, tn_pref, 128)
    tk, Kp = _tile(K, tk_pref, 128)

    if (Mp, Kp) != (M, K):
        a = jnp.pad(a, ((0, Mp - M), (0, Kp - K)))
    if (Kp, Np) != (K, N):
        w = jnp.pad(w, ((0, Kp - K), (0, Np - N)))

    n_k = Kp // tk
    grid = (Mp // tm, Np // tn, n_k)

    a_spec = pl.BlockSpec((tm, tk), lambda i, j, k: (i, k))
    w_spec = pl.BlockSpec((tk, tn), lambda i, j, k: (k, j))
    o_spec = pl.BlockSpec((tm, tn), lambda i, j, k: (i, j))
    scratch = [pltpu.VMEM((tm, tn), jnp.float32)]
    cp = pltpu.CompilerParams(
        dimension_semantics=("parallel", "parallel", "arbitrary"),
        vmem_limit_bytes=48 * 1024 * 1024)

    if b is None:
        out = pl.pallas_call(
            functools.partial(_matmul_kernel, n_k=n_k),
            out_shape=jax.ShapeDtypeStruct((Mp, Np), out_dtype),
            grid=grid,
            in_specs=[a_spec, w_spec],
            out_specs=o_spec,
            scratch_shapes=scratch,
            compiler_params=cp,
        )(a, w)
    else:
        bias = jnp.pad(b.astype(jnp.float32).reshape(1, N), ((0, 0), (0, Np - N)))
        b_spec = pl.BlockSpec((1, tn), lambda i, j, k: (0, j))
        out = pl.pallas_call(
            functools.partial(_matmul_bias_kernel, n_k=n_k),
            out_shape=jax.ShapeDtypeStruct((Mp, Np), out_dtype),
            grid=grid,
            in_specs=[a_spec, w_spec, b_spec],
            out_specs=o_spec,
            scratch_shapes=scratch,
            compiler_params=cp,
        )(a, w, bias)

    return out[:M, :N]


# ============================================================================
# Fused SwiGLU matmul: silu(a @ w1) * (a @ w3), bf16 writeback
# ============================================================================

def _swiglu_matmul_kernel(a_ref, w1_ref, w3_ref, o_ref, acc1_ref, acc3_ref, *, n_k):
    @pl.when(pl.program_id(2) == 0)
    def _():
        acc1_ref[...] = jnp.zeros_like(acc1_ref)
        acc3_ref[...] = jnp.zeros_like(acc3_ref)

    a = a_ref[...]
    acc1_ref[...] += jnp.dot(a, w1_ref[...], preferred_element_type=jnp.float32)
    acc3_ref[...] += jnp.dot(a, w3_ref[...], preferred_element_type=jnp.float32)

    @pl.when(pl.program_id(2) == n_k - 1)
    def _():
        g = acc1_ref[...]
        o_ref[...] = (g * jax.nn.sigmoid(g) * acc3_ref[...]).astype(o_ref.dtype)


def pallas_swiglu_matmul(a, w1, w3, tm_pref=256, tn_pref=256, tk_pref=512):
    """a: (M, K), w1/w3: (K, H) -> silu(a@w1)*(a@w3): (M, H) bf16."""
    M, K = a.shape
    H = w1.shape[1]

    a = a.astype(jnp.bfloat16)
    w1 = w1.astype(jnp.bfloat16)
    w3 = w3.astype(jnp.bfloat16)

    tm, Mp = _tile(M, tm_pref, 16)
    tn, Hp = _tile(H, tn_pref, 128)
    tk, Kp = _tile(K, tk_pref, 128)

    if (Mp, Kp) != (M, K):
        a = jnp.pad(a, ((0, Mp - M), (0, Kp - K)))
    if (Kp, Hp) != (K, H):
        w1 = jnp.pad(w1, ((0, Kp - K), (0, Hp - H)))
        w3 = jnp.pad(w3, ((0, Kp - K), (0, Hp - H)))

    n_k = Kp // tk
    grid = (Mp // tm, Hp // tn, n_k)

    a_spec = pl.BlockSpec((tm, tk), lambda i, j, k: (i, k))
    w_spec = pl.BlockSpec((tk, tn), lambda i, j, k: (k, j))
    o_spec = pl.BlockSpec((tm, tn), lambda i, j, k: (i, j))

    out = pl.pallas_call(
        functools.partial(_swiglu_matmul_kernel, n_k=n_k),
        out_shape=jax.ShapeDtypeStruct((Mp, Hp), jnp.bfloat16),
        grid=grid,
        in_specs=[a_spec, w_spec, w_spec],
        out_specs=o_spec,
        scratch_shapes=[pltpu.VMEM((tm, tn), jnp.float32),
                        pltpu.VMEM((tm, tn), jnp.float32)],
        compiler_params=pltpu.CompilerParams(
            dimension_semantics=("parallel", "parallel", "arbitrary"),
            vmem_limit_bytes=48 * 1024 * 1024),
    )(a, w1, w3)
    return out[:M, :H]


# ============================================================================
# Attention: all heads of one batch element per grid step, batched MXU matmuls
# ============================================================================

def _attn_kernel(q_ref, k_ref, v_ref, o_ref, *, scale):
    q = q_ref[...]                                       # (NH, S, Dh) bf16
    k = k_ref[...]
    v = v_ref[...]
    s = jnp.einsum('hqd,hkd->hqk', q, k,
                   preferred_element_type=jnp.float32) * scale
    m = jnp.max(s, axis=-1, keepdims=True)
    p = jnp.exp(s - m)
    l = jnp.sum(p, axis=-1, keepdims=True)
    p = p * pl.reciprocal(l, approx=True)                # divide on the EUP slot
    o = jnp.einsum('hqk,hkd->hqd', p.astype(v.dtype), v,
                   preferred_element_type=jnp.float32)
    o_ref[...] = o.astype(o_ref.dtype)


def pallas_attention(q, k, v):
    """q, k, v: (B, NH, S, Dh) -> (B, NH, S, Dh) bf16. One batch element per grid step."""
    B, NH, S, Dh = q.shape
    scale = 1.0 / math.sqrt(Dh)
    spec = pl.BlockSpec((None, NH, S, Dh), lambda b: (b, 0, 0, 0))
    return pl.pallas_call(
        functools.partial(_attn_kernel, scale=scale),
        out_shape=jax.ShapeDtypeStruct((B, NH, S, Dh), jnp.bfloat16),
        grid=(B,),
        in_specs=[spec, spec, spec],
        out_specs=spec,
        compiler_params=pltpu.CompilerParams(dimension_semantics=("parallel",)),
    )(q.astype(jnp.bfloat16), k.astype(jnp.bfloat16), v.astype(jnp.bfloat16))


# ============================================================================
# Fused norm + adaLN modulation / gated residual kernels (tiled over rows)
# ============================================================================

def _rmsnorm_mod_kernel(x_ref, w_ref, scale_ref, shift_ref, o_ref, *, eps):
    x = x_ref[...]                                        # (ts, D) f32
    ms = jnp.mean(x * x, axis=-1, keepdims=True)
    xn = x * jax.lax.rsqrt(ms + eps) * w_ref[...]
    o_ref[...] = (xn * (1.0 + scale_ref[...]) + shift_ref[...]).astype(o_ref.dtype)


def pallas_rmsnorm_mod(x, w, scale, shift, eps):
    """x: (B,S,D) f32, w: (D,), scale/shift: (B,D) -> bf16 (B,S,D) modulated normed tokens."""
    B, S, D = x.shape
    ts = _pick_row_tile(S)
    x_spec = pl.BlockSpec((None, ts, D), lambda b, r: (b, r, 0))
    w_spec = pl.BlockSpec((1, D), lambda b, r: (0, 0))
    m_spec = pl.BlockSpec((None, 1, D), lambda b, r: (b, 0, 0))
    return pl.pallas_call(
        functools.partial(_rmsnorm_mod_kernel, eps=eps),
        out_shape=jax.ShapeDtypeStruct((B, S, D), jnp.bfloat16),
        grid=(B, S // ts),
        in_specs=[x_spec, w_spec, m_spec, m_spec],
        out_specs=x_spec,
        compiler_params=pltpu.CompilerParams(
            dimension_semantics=("parallel", "parallel")),
    )(x, w.reshape(1, D).astype(jnp.float32),
      scale.reshape(B, 1, D).astype(jnp.float32),
      shift.reshape(B, 1, D).astype(jnp.float32))


def _gated_res_rmsnorm_mod_kernel(res_ref, gate_ref, y_ref, w_ref, scale_ref, shift_ref,
                                  res_out_ref, xn_out_ref, *, eps):
    r = res_ref[...] + gate_ref[...] * y_ref[...]         # (ts, D) f32
    res_out_ref[...] = r
    ms = jnp.mean(r * r, axis=-1, keepdims=True)
    xn = r * jax.lax.rsqrt(ms + eps) * w_ref[...]
    xn_out_ref[...] = (xn * (1.0 + scale_ref[...]) + shift_ref[...]).astype(xn_out_ref.dtype)


def pallas_gated_res_rmsnorm_mod(res, gate, y, w, scale, shift, eps):
    """Fused: new_res = res + gate*y ; xn = modulate(rmsnorm(new_res)). Returns (new_res f32, xn bf16)."""
    B, S, D = res.shape
    ts = _pick_row_tile(S)
    x_spec = pl.BlockSpec((None, ts, D), lambda b, r: (b, r, 0))
    m_spec = pl.BlockSpec((None, 1, D), lambda b, r: (b, 0, 0))
    w_spec = pl.BlockSpec((1, D), lambda b, r: (0, 0))
    return pl.pallas_call(
        functools.partial(_gated_res_rmsnorm_mod_kernel, eps=eps),
        out_shape=(jax.ShapeDtypeStruct((B, S, D), jnp.float32),
                   jax.ShapeDtypeStruct((B, S, D), jnp.bfloat16)),
        grid=(B, S // ts),
        in_specs=[x_spec, m_spec, x_spec, w_spec, m_spec, m_spec],
        out_specs=[x_spec, x_spec],
        compiler_params=pltpu.CompilerParams(
            dimension_semantics=("parallel", "parallel")),
    )(res, gate.reshape(B, 1, D).astype(jnp.float32), y.astype(jnp.float32),
      w.reshape(1, D).astype(jnp.float32),
      scale.reshape(B, 1, D).astype(jnp.float32),
      shift.reshape(B, 1, D).astype(jnp.float32))


def _layernorm_mod_kernel(x_ref, scale_ref, shift_ref, o_ref, *, eps):
    x = x_ref[...]
    mu = jnp.mean(x, axis=-1, keepdims=True)
    xc = x - mu
    var = jnp.mean(xc * xc, axis=-1, keepdims=True)
    xn = xc * jax.lax.rsqrt(var + eps)
    o_ref[...] = (xn * (1.0 + scale_ref[...]) + shift_ref[...]).astype(o_ref.dtype)


def pallas_layernorm_mod(x, scale, shift, eps):
    B, S, D = x.shape
    ts = _pick_row_tile(S)
    x_spec = pl.BlockSpec((None, ts, D), lambda b, r: (b, r, 0))
    m_spec = pl.BlockSpec((None, 1, D), lambda b, r: (b, 0, 0))
    return pl.pallas_call(
        functools.partial(_layernorm_mod_kernel, eps=eps),
        out_shape=jax.ShapeDtypeStruct((B, S, D), jnp.bfloat16),
        grid=(B, S // ts),
        in_specs=[x_spec, m_spec, m_spec],
        out_specs=x_spec,
        compiler_params=pltpu.CompilerParams(
            dimension_semantics=("parallel", "parallel")),
    )(x, scale.reshape(B, 1, D).astype(jnp.float32),
      shift.reshape(B, 1, D).astype(jnp.float32))


def _gated_residual_kernel(res_ref, gate_ref, y_ref, o_ref):
    o_ref[...] = res_ref[...] + gate_ref[...] * y_ref[...]


def pallas_gated_residual(res, gate, y):
    """res + gate[:,None,:] * y, all (B,S,D) except gate (B,D). f32 residual stream."""
    B, S, D = res.shape
    ts = _pick_row_tile(S)
    x_spec = pl.BlockSpec((None, ts, D), lambda b, r: (b, r, 0))
    g_spec = pl.BlockSpec((None, 1, D), lambda b, r: (b, 0, 0))
    return pl.pallas_call(
        _gated_residual_kernel,
        out_shape=jax.ShapeDtypeStruct((B, S, D), jnp.float32),
        grid=(B, S // ts),
        in_specs=[x_spec, g_spec, x_spec],
        out_specs=x_spec,
        compiler_params=pltpu.CompilerParams(
            dimension_semantics=("parallel", "parallel")),
    )(res, gate.reshape(B, 1, D).astype(jnp.float32), y.astype(jnp.float32))


# ============================================================================
# Rectified-flow math kernels (lane-dense, tiled over the feature axis)
# ============================================================================

def _interp_kernel(t_ref, x_ref, z1_ref, o_ref):
    t = t_ref[...]                                        # (B, 1) broadcast over lanes
    o_ref[...] = (1.0 - t) * x_ref[...] + t * z1_ref[...]


def pallas_interp(t, x_flat, z1_flat):
    """z_t = (1 - t) * x + t * z_1, per-batch scalar t broadcast over features."""
    B, F = x_flat.shape
    tf, Fp = _tile(F, 1024, 128)
    if Fp != F:
        x_flat = jnp.pad(x_flat, ((0, 0), (0, Fp - F)))
        z1_flat = jnp.pad(z1_flat, ((0, 0), (0, Fp - F)))
    x_spec = pl.BlockSpec((B, tf), lambda f: (0, f))
    t_spec = pl.BlockSpec((B, 1), lambda f: (0, 0))
    out = pl.pallas_call(
        _interp_kernel,
        out_shape=jax.ShapeDtypeStruct((B, Fp), jnp.float32),
        grid=(Fp // tf,),
        in_specs=[t_spec, x_spec, x_spec],
        out_specs=x_spec,
        compiler_params=pltpu.CompilerParams(dimension_semantics=("parallel",)),
    )(t.reshape(B, 1).astype(jnp.float32), x_flat, z1_flat)
    return out[:, :F]


def _mse_kernel(x_ref, z1_ref, v_ref, o_ref, acc_ref, *, n_f, inv_f):
    @pl.when(pl.program_id(0) == 0)
    def _():
        acc_ref[...] = jnp.zeros_like(acc_ref)

    d = z1_ref[...] - x_ref[...] - v_ref[...]
    acc_ref[...] += d * d                                 # lane-dense partial sums

    @pl.when(pl.program_id(0) == n_f - 1)
    def _():
        o_ref[...] = jnp.sum(acc_ref[...], axis=-1, keepdims=True) * inv_f


def pallas_batchwise_mse(x_flat, z1_flat, v_flat):
    """mean over all non-batch dims of (z1 - x - v)^2 -> (B,)."""
    B, F = x_flat.shape
    tf, Fp = _tile(F, 1024, 128)
    if Fp != F:
        pad = ((0, 0), (0, Fp - F))
        x_flat = jnp.pad(x_flat, pad)
        z1_flat = jnp.pad(z1_flat, pad)
        v_flat = jnp.pad(v_flat, pad)
    n_f = Fp // tf
    x_spec = pl.BlockSpec((B, tf), lambda f: (0, f))
    out = pl.pallas_call(
        functools.partial(_mse_kernel, n_f=n_f, inv_f=1.0 / float(F)),
        out_shape=jax.ShapeDtypeStruct((B, 1), jnp.float32),
        grid=(n_f,),
        in_specs=[x_spec, x_spec, x_spec],
        out_specs=pl.BlockSpec((B, 1), lambda f: (0, 0)),
        scratch_shapes=[pltpu.VMEM((B, tf), jnp.float32)],
        compiler_params=pltpu.CompilerParams(dimension_semantics=("arbitrary",)),
    )(x_flat, z1_flat, v_flat)
    return out[:, 0]


# ============================================================================
# Glue: conv stem, norms, patchify, embeddings, RoPE
# ============================================================================

def conv5x5_same(x, w, b):
    """NCHW 5x5 'same' conv. TODO(synk): stem left to XLA's conv (lax.conv_general_dilated)
    instead of a 25x im2col blow-up in HBM; no clean small Pallas win at this size."""
    out = jax.lax.conv_general_dilated(
        x, w, window_strides=(1, 1), padding='SAME',
        dimension_numbers=('NCHW', 'OIHW', 'NCHW'))
    return out + b[None, :, None, None]


def group_norm(x, num_groups, w, b, eps=1e-5):
    B, C, H, W = x.shape
    g = num_groups
    xg = x.reshape(B, g, C // g, H, W)
    mu = jnp.mean(xg, axis=(2, 3, 4), keepdims=True)
    var = jnp.mean((xg - mu) ** 2, axis=(2, 3, 4), keepdims=True)
    xn = ((xg - mu) * jax.lax.rsqrt(var + eps)).reshape(B, C, H, W)
    return xn * w[None, :, None, None] + b[None, :, None, None]


def patchify(x, P):
    B, C, H, W = x.shape
    x = x.reshape(B, C, H // P, P, W // P, P)
    x = x.transpose(0, 2, 4, 1, 3, 5).reshape(B, (H // P) * (W // P), C * P * P)
    return x


def unpatchify(x, C_out, P, Hp, Wp):
    B, S, _ = x.shape
    x = x.reshape(B, Hp, Wp, C_out, P, P)
    return x.transpose(0, 3, 1, 4, 2, 5).reshape(B, C_out, Hp * P, Wp * P)


def timestep_embedding(t, dim=256, max_period=10000.0):
    half = dim // 2
    freqs = jnp.exp(-math.log(max_period) * jnp.arange(half, dtype=jnp.float32) / half)
    args = t[:, None].astype(jnp.float32) * freqs[None, :]
    return jnp.concatenate([jnp.cos(args), jnp.sin(args)], axis=-1)


def precompute_rope(dh, S, theta=10000.0):
    freqs = 1.0 / (theta ** (jnp.arange(0, dh, 2, dtype=jnp.float32) / dh))
    pos = jnp.arange(S, dtype=jnp.float32)
    angles = jnp.outer(pos, freqs)                            # (S, dh//2)
    cos = jnp.concatenate([jnp.cos(angles)] * 2, axis=-1)     # (S, dh)
    sin = jnp.concatenate([jnp.sin(angles)] * 2, axis=-1)
    return cos, sin


def apply_rope(x, cos, sin):
    # x: (B, S, NH, Dh). Rotate-half convention: contiguous halves, no strided interleave.
    Dh = x.shape[-1]
    x1, x2 = x[..., :Dh // 2], x[..., Dh // 2:]
    rot = jnp.concatenate([-x2, x1], axis=-1)
    return x * cos[None, :, None, :] + rot * sin[None, :, None, :]


def _ffn_hidden(dim, multiple_of):
    hidden = 4 * dim
    hidden = int(2 * hidden / 3)
    return multiple_of * ((hidden + multiple_of - 1) // multiple_of)


# ============================================================================
# Reconstructed DiffusionTransformer forward
# ============================================================================

def attention_block(x_bf16, lp, cos, sin, nh, dh):
    B, S, D = x_bf16.shape
    x2 = x_bf16.reshape(B * S, D)
    qkv = pallas_linear(x2, lp['wqkv'])                       # fused QKV: (B*S, 3D) f32
    qkv = qkv.reshape(B, S, 3, nh, dh)
    q = apply_rope(qkv[:, :, 0], cos, sin)
    k = apply_rope(qkv[:, :, 1], cos, sin)
    v = qkv[:, :, 2]
    q = q.transpose(0, 2, 1, 3)
    k = k.transpose(0, 2, 1, 3)
    v = v.transpose(0, 2, 1, 3)
    o = pallas_attention(q, k, v)                             # (B, nh, S, dh) bf16
    o = o.transpose(0, 2, 1, 3).reshape(B * S, D)
    return pallas_linear(o, lp['wo']).reshape(B, S, D)        # f32 for residual add


def dit_forward(params, x, t, y, cfg):
    """x: (B, Cin, H, W) NCHW; t: (B,) f32; y: (B,) int32 -> (B, Cout, H, W)."""
    B, _, H, W = x.shape
    P = cfg['patch_size']
    dim = cfg['dim']
    nh = cfg['num_heads']
    dh = dim // nh
    eps = cfg['norm_epsilon']
    L = cfg['num_layers']

    # conv stem (conv -> SiLU -> GroupNorm) x2
    h = conv5x5_same(x, params['conv1_w'], params['conv1_b'])
    h = jax.nn.silu(h)
    h = group_norm(h, 32, params['gn1_w'], params['gn1_b'])
    h = conv5x5_same(h, params['conv2_w'], params['conv2_b'])
    h = jax.nn.silu(h)
    h = group_norm(h, 32, params['gn2_w'], params['gn2_b'])

    # patchify + token embedding
    patches = patchify(h, P)                                  # (B, S, P*P*dim//2)
    S = patches.shape[1]
    tok = pallas_linear(patches.reshape(B * S, -1),
                        params['x_emb_w'], params['x_emb_b']).reshape(B, S, dim)

    # conditioning: timestep MLP + label embedding table
    tfreq = timestep_embedding(t, 256)
    temb = pallas_linear(tfreq, params['t_w1'], params['t_b1'])
    temb = pallas_linear(jax.nn.silu(temb), params['t_w2'], params['t_b2'])
    yemb = params['y_emb'][jnp.clip(y, 0, params['y_emb'].shape[0] - 1)]
    adaln = temb + yemb                                       # (B, t_hidden)

    # all adaLN modulations (every block + final layer) in a single matmul
    mod_all = pallas_linear(jax.nn.silu(adaln),
                            params['adaln_all_w'], params['adaln_all_b'])  # (B, L*6*dim + 2*dim)

    cos, sin = precompute_rope(dh, S)

    for li, lp in enumerate(params['layers']):
        base = li * 6 * dim
        shift_msa = mod_all[:, base + 0 * dim: base + 1 * dim]
        scale_msa = mod_all[:, base + 1 * dim: base + 2 * dim]
        gate_msa = mod_all[:, base + 2 * dim: base + 3 * dim]
        shift_mlp = mod_all[:, base + 3 * dim: base + 4 * dim]
        scale_mlp = mod_all[:, base + 4 * dim: base + 5 * dim]
        gate_mlp = mod_all[:, base + 5 * dim: base + 6 * dim]

        # fused RMSNorm + adaLN modulation (bf16 out -> feeds fused QKV matmul)
        xa = pallas_rmsnorm_mod(tok, lp['attn_norm_w'], scale_msa, shift_msa, eps)
        attn_out = attention_block(xa, lp, cos, sin, nh, dh)

        # fused: gated residual add + RMSNorm + adaLN modulation for the FFN branch
        tok, xm = pallas_gated_res_rmsnorm_mod(
            tok, gate_msa, attn_out, lp['ffn_norm_w'], scale_mlp, shift_mlp, eps)

        # fused SwiGLU: silu(xm @ w1) * (xm @ w3), bf16 out -> feeds w2 matmul
        xm2 = xm.reshape(B * S, dim)
        gu = pallas_swiglu_matmul(xm2, lp['ffn_w1'], lp['ffn_w3'])
        ff = pallas_linear(gu, lp['ffn_w2']).reshape(B, S, dim)
        tok = pallas_gated_residual(tok, gate_mlp, ff)

    # final adaLN layer (fused LayerNorm + modulation)
    fbase = L * 6 * dim
    shift_f = mod_all[:, fbase: fbase + dim]
    scale_f = mod_all[:, fbase + dim: fbase + 2 * dim]
    xf = pallas_layernorm_mod(tok, scale_f, shift_f, 1e-6)
    out = pallas_linear(xf.reshape(B * S, dim), params['final_w'], params['final_b'])
    out = out.reshape(B, S, -1)
    return unpatchify(out, cfg['out_channels'], P, H // P, W // P)


# ============================================================================
# RectifiedFlow.forward (device math jitted; host conversion outside)
# ============================================================================

def make_device_forward(cfg):
    @jax.jit
    def _device_forward(params, x, cond, key):
        B = x.shape[0]
        F = x[0].size
        k_t, k_z = jax.random.split(key)
        t = jax.nn.sigmoid(jax.random.normal(k_t, (B,), jnp.float32))
        z1 = jax.random.normal(k_z, x.shape, jnp.float32)

        xf = x.reshape(B, F).astype(jnp.float32)
        z1f = z1.reshape(B, F)

        zt = pallas_interp(t, xf, z1f).reshape(x.shape)       # (1-t)*x + t*z1
        v_theta = dit_forward(params, zt, t, cond, cfg)       # model(z_t, t, cond)

        mse = pallas_batchwise_mse(xf, z1f, v_theta.reshape(B, F))
        loss = jnp.mean(mse)
        return loss, t, mse
    return _device_forward


def rectified_flow_forward(device_forward, params, x, cond, key):
    """Returns (loss, [(t_i, mse_i), ...]) exactly like the PyTorch forward."""
    loss, t, mse = device_forward(params, x, cond, key)
    t_host, mse_host = jax.device_get((t, mse))               # single host sync, after jit
    t_t_loss = [(t_v, t_loss) for t_v, t_loss in
                zip(list(t_host.reshape(-1)), list(mse_host.reshape(-1)))]
    return loss, t_t_loss


# ============================================================================
# Deterministic parameter init (QKV fused; adaLN weights of all layers fused)
# ============================================================================

def init_params(key, cfg):
    dim = cfg['dim']
    cstem = dim // 2
    P = cfg['patch_size']
    cin = cfg['in_channels']
    cout = cfg['out_channels']
    L = cfg['num_layers']
    t_hidden = min(dim, 1024)
    ffn_hidden = _ffn_hidden(dim, cfg['multiple_of'])

    keys = iter(jax.random.split(key, 256))

    def nrm(shape, scale=0.02):
        return scale * jax.random.normal(next(keys), shape, jnp.float32)

    p = {
        'conv1_w': nrm((cstem, cin, 5, 5), 0.1), 'conv1_b': jnp.zeros((cstem,), jnp.float32),
        'gn1_w': jnp.ones((cstem,), jnp.float32), 'gn1_b': jnp.zeros((cstem,), jnp.float32),
        'conv2_w': nrm((cstem, cstem, 5, 5), 0.1), 'conv2_b': jnp.zeros((cstem,), jnp.float32),
        'gn2_w': jnp.ones((cstem,), jnp.float32), 'gn2_b': jnp.zeros((cstem,), jnp.float32),
        'x_emb_w': nrm((P * P * cstem, dim)), 'x_emb_b': jnp.zeros((dim,), jnp.float32),
        't_w1': nrm((256, t_hidden)), 't_b1': jnp.zeros((t_hidden,), jnp.float32),
        't_w2': nrm((t_hidden, t_hidden)), 't_b2': jnp.zeros((t_hidden,), jnp.float32),
        'y_emb': nrm((cfg['num_classes'] + 1, t_hidden)),
        # all per-layer adaLN (6*dim each) + final adaLN (2*dim) fused into one projection
        'adaln_all_w': nrm((t_hidden, L * 6 * dim + 2 * dim)),
        'adaln_all_b': jnp.zeros((L * 6 * dim + 2 * dim,), jnp.float32),
        'final_w': nrm((dim, P * P * cout)),
        'final_b': jnp.zeros((P * P * cout,), jnp.float32),
        'layers': [],
    }
    for _ in range(L):
        p['layers'].append({
            'attn_norm_w': jnp.ones((dim,), jnp.float32),
            'ffn_norm_w': jnp.ones((dim,), jnp.float32),
            'wqkv': nrm((dim, 3 * dim)),                    # fused q|k|v projection
            'wo': nrm((dim, dim)),
            'ffn_w1': nrm((dim, ffn_hidden)),
            'ffn_w3': nrm((dim, ffn_hidden)),
            'ffn_w2': nrm((ffn_hidden, dim)),
        })
    return p


# ============================================================================
# Main
# ============================================================================

if __name__ == "__main__":
    cfg = dict(in_channels=3, out_channels=3, input_size=16, patch_size=2,
               dim=64, num_layers=2, num_heads=4, multiple_of=32,
               norm_epsilon=1e-5, label_dropout=0.1, num_classes=10)

    key = jax.random.PRNGKey(0)
    kx, kc, kt, kp = jax.random.split(key, 4)

    B = 2
    x = jax.random.normal(kx, (B, cfg['in_channels'], cfg['input_size'], cfg['input_size']),
                          jnp.float32)
    cond = jax.random.randint(kc, (B,), 0, cfg['num_classes'])

    params = init_params(kp, cfg)
    device_forward = make_device_forward(cfg)

    loss, t_t_loss = rectified_flow_forward(device_forward, params, x, cond, kt)
    jax.block_until_ready(loss)
    assert loss.shape == () and len(t_t_loss) == B
    assert bool(jnp.isfinite(loss))
    print("KERNEL_OK")
</pallas_src>

<mosaic_0001>
module attributes {stable_mosaic.version = 11 : i64} {
  func.func @_interp_kernel(%arg0: i32, %arg1: memref<2x1xf32, #tpu.memory_space<vmem>>, %arg2: memref<2x768xf32, #tpu.memory_space<vmem>>, %arg3: memref<2x768xf32, #tpu.memory_space<vmem>>, %arg4: memref<2x768xf32, #tpu.memory_space<vmem>>) attributes {dimension_semantics = [#tpu.dimension_semantics<parallel>], iteration_bounds = array<i64: 1>, scalar_prefetch = 0 : i64, scratch_operands = 0 : i64, tpu.core_type = #tpu.core_type<tc>, window_params = [{pipeline_mode = #tpu.pipeline_mode<synchronous>, transform_indices = @transform_0, window_bounds = array<i64: 2, 1>}, {transform_indices = @transform_1, window_bounds = array<i64: 2, 768>}, {transform_indices = @transform_2, window_bounds = array<i64: 2, 768>}, {transform_indices = @transform_3, window_bounds = array<i64: 2, 768>}]} {
    %c0 = arith.constant 0 : index
    %c0_0 = arith.constant 0 : index
    %0 = vector.load %arg1[%c0, %c0_0] : memref<2x1xf32, #tpu.memory_space<vmem>>, vector<2x1xf32>
    %cst = arith.constant 1.000000e+00 : f32
    %1 = vector.broadcast %cst : f32 to vector<2x1xf32>
    %2 = arith.subf %1, %0 : vector<2x1xf32>
    %c0_1 = arith.constant 0 : index
    %c0_2 = arith.constant 0 : index
    %3 = vector.load %arg2[%c0_1, %c0_2] : memref<2x768xf32, #tpu.memory_space<vmem>>, vector<2x768xf32>
    %4 = vector.broadcast %2 : vector<2x1xf32> to vector<2x768xf32>
    %5 = arith.mulf %4, %3 : vector<2x768xf32>
    %c0_3 = arith.constant 0 : index
    %c0_4 = arith.constant 0 : index
    %6 = vector.load %arg3[%c0_3, %c0_4] : memref<2x768xf32, #tpu.memory_space<vmem>>, vector<2x768xf32>
    %7 = vector.broadcast %0 : vector<2x1xf32> to vector<2x768xf32>
    %8 = arith.mulf %7, %6 : vector<2x768xf32>
    %9 = arith.addf %5, %8 : vector<2x768xf32>
    %c0_5 = arith.constant 0 : index
    %c0_6 = arith.constant 0 : index
    %10 = vector.load %arg4[%c0_5, %c0_6] : memref<2x768xf32, #tpu.memory_space<vmem>>, vector<2x768xf32>
    tpu.vector_store %arg4[%c0_5, %c0_6], %9 {strides = array<i32>} : memref<2x768xf32, #tpu.memory_space<vmem>>, vector<2x768xf32>,
    return
  }
  func.func @transform_0(%arg0: i32) -> (i32, i32) {
    %c0_i32 = arith.constant 0 : i32
    %c0_i32_0 = arith.constant 0 : i32
    %c0_i32_1 = arith.constant 0 : i32
    return %c0_i32, %c0_i32_0 : i32, i32
  }
  func.func @transform_1(%arg0: i32) -> (i32, i32) {
    %c0_i32 = arith.constant 0 : i32
    %c0_i32_0 = arith.constant 0 : i32
    return %c0_i32, %arg0 : i32, i32
  }
  func.func @transform_2(%arg0: i32) -> (i32, i32) {
    %c0_i32 = arith.constant 0 : i32
    %c0_i32_0 = arith.constant 0 : i32
    return %c0_i32, %arg0 : i32, i32
  }
  func.func @transform_3(%arg0: i32) -> (i32, i32) {
    %c0_i32 = arith.constant 0 : i32
    %c0_i32_0 = arith.constant 0 : i32
    return %c0_i32, %arg0 : i32, i32
  }
}

module attributes {stable_mosaic.version = 11 : i64} {
  func.func @_matmul_bias_kernel(%arg0: i32, %arg1: i32, %arg2: i32, %arg3: memref<128x128xbf16, #tpu.memory_space<vmem>>, %arg4: memref<128x128xbf16, #tpu.memory_space<vmem>>, %arg5: memref<1x128xf32, #tpu.memory_space<vmem>>, %arg6: memref<128x128xf32, #tpu.memory_space<vmem>>, %arg7: memref<128x128xf32, #tpu.memory_space<vmem>>) attributes {dimension_semantics = [#tpu.dimension_semantics<parallel>, #tpu.dimension_semantics<parallel>, #tpu.dimension_semantics<arbitrary>], iteration_bounds = array<i64: 1, 1, 1>, scalar_prefetch = 0 : i64, scratch_operands = 1 : i64, tpu.core_type = #tpu.core_type<tc>, window_params = [{transform_indices = @transform_0, window_bounds = array<i64: 128, 128>}, {transform_indices = @transform_1, window_bounds = array<i64: 128, 128>}, {transform_indices = @transform_2, window_bounds = array<i64: 1, 128>}, {transform_indices = @transform_3, window_bounds = array<i64: 128, 128>}]} {
    %c0_i32 = arith.constant 0 : i32
    %0 = arith.cmpi eq, %arg2, %c0_i32 : i32
    %1 = arith.extui %0 : i1 to i32
    %c0_i32_0 = arith.constant 0 : i32
    %2 = arith.cmpi ne, %1, %c0_i32_0 : i32
    scf.if %2 {
      %cst_10 = arith.constant 0.000000e+00 : f32
      %12 = vector.broadcast %cst_10 : f32 to vector<128x128xf32>
      %c0_11 = arith.constant 0 : index
      %c0_12 = arith.constant 0 : index
      %13 = vector.load %arg7[%c0_11, %c0_12] : memref<128x128xf32, #tpu.memory_space<vmem>>, vector<128x128xf32>
      tpu.vector_store %arg7[%c0_11, %c0_12], %12 {strides = array<i32>} : memref<128x128xf32, #tpu.memory_space<vmem>>, vector<128x128xf32>,
    } else {
    }
    %c0 = arith.constant 0 : index
    %c0_1 = arith.constant 0 : index
    %3 = vector.load %arg7[%c0, %c0_1] : memref<128x128xf32, #tpu.memory_space<vmem>>, vector<128x128xf32>
    %c0_2 = arith.constant 0 : index
    %c0_3 = arith.constant 0 : index
    %4 = vector.load %arg3[%c0_2, %c0_3] : memref<128x128xbf16, #tpu.memory_space<vmem>>, vector<128x128xbf16>
    %c0_4 = arith.constant 0 : index
    %c0_5 = arith.constant 0 : index
    %5 = vector.load %arg4[%c0_4, %c0_5] : memref<128x128xbf16, #tpu.memory_space<vmem>>, vector<128x128xbf16>
    %cst = arith.constant dense<0.000000e+00> : vector<128x128xf32>
    %6 = tpu.matmul %4, %5, %cst {dimension_numbers = #tpu.dot_dimension_numbers<[1], [0], [0], [1], [0, 0, 1, 1], [], []>} : vector<128x128xbf16>, vector<128x128xbf16>, vector<128x128xf32> -> vector<128x128xf32>
    %7 = arith.addf %3, %6 : vector<128x128xf32>
    %c0_6 = arith.constant 0 : index
    %c0_7 = arith.constant 0 : index
    %8 = vector.load %arg7[%c0_6, %c0_7] : memref<128x128xf32, #tpu.memory_space<vmem>>, vector<128x128xf32>
    tpu.vector_store %arg7[%c0_6, %c0_7], %7 {strides = array<i32>} : memref<128x128xf32, #tpu.memory_space<vmem>>, vector<128x128xf32>,
    %c0_i32_8 = arith.constant 0 : i32
    %9 = arith.cmpi eq, %arg2, %c0_i32_8 : i32
    %10 = arith.extui %9 : i1 to i32
    %c0_i32_9 = arith.constant 0 : i32
    %11 = arith.cmpi ne, %10, %c0_i32_9 : i32
    scf.if %11 {
      %c0_10 = arith.constant 0 : index
      %c0_11 = arith.constant 0 : index
      %12 = vector.load %arg7[%c0_10, %c0_11] : memref<128x128xf32, #tpu.memory_space<vmem>>, vector<128x128xf32>
      %c0_12 = arith.constant 0 : index
      %c0_13 = arith.constant 0 : index
      %13 = vector.load %arg5[%c0_12, %c0_13] : memref<1x128xf32, #tpu.memory_space<vmem>>, vector<1x128xf32>
      %14 = vector.broadcast %13 : vector<1x128xf32> to vector<128x128xf32>
      %15 = arith.addf %12, %14 : vector<128x128xf32>
      %c0_14 = arith.constant 0 : index
      %c0_15 = arith.constant 0 : index
      %16 = vector.load %arg6[%c0_14, %c0_15] : memref<128x128xf32, #tpu.memory_space<vmem>>, vector<128x128xf32>
      tpu.vector_store %arg6[%c0_14, %c0_15], %15 {strides = array<i32>} : memref<128x128xf32, #tpu.memory_space<vmem>>, vector<128x128xf32>,
    } else {
    }
    return
  }
  func.func @transform_0(%arg0: i32, %arg1: i32, %arg2: i32) -> (i32, i32) {
    %c0_i32 = arith.constant 0 : i32
    return %arg0, %arg2 : i32, i32
  }
  func.func @transform_1(%arg0: i32, %arg1: i32, %arg2: i32) -> (i32, i32) {
    %c0_i32 = arith.constant 0 : i32
    return %arg2, %arg1 : i32, i32
  }
  func.func @transform_2(%arg0: i32, %arg1: i32, %arg2: i32) -> (i32, i32) {
    %c0_i32 = arith.constant 0 : i32
    %c0_i32_0 = arith.constant 0 : i32
    return %c0_i32, %arg1 : i32, i32
  }
  func.func @transform_3(%arg0: i32, %arg1: i32, %arg2: i32) -> (i32, i32) {
    %c0_i32 = arith.constant 0 : i32
    return %arg0, %arg1 : i32, i32
  }
}

module attributes {stable_mosaic.version = 11 : i64} {
  func.func @_matmul_bias_kernel(%arg0: i32, %arg1: i32, %arg2: i32, %arg3: memref<16x256xbf16, #tpu.memory_space<vmem>>, %arg4: memref<256x128xbf16, #tpu.memory_space<vmem>>, %arg5: memref<1x128xf32, #tpu.memory_space<vmem>>, %arg6: memref<16x128xf32, #tpu.memory_space<vmem>>, %arg7: memref<16x128xf32, #tpu.memory_space<vmem>>) attributes {dimension_semantics = [#tpu.dimension_semantics<parallel>, #tpu.dimension_semantics<parallel>, #tpu.dimension_semantics<arbitrary>], iteration_bounds = array<i64: 1, 1, 1>, scalar_prefetch = 0 : i64, scratch_operands = 1 : i64, tpu.core_type = #tpu.core_type<tc>, window_params = [{transform_indices = @transform_0, window_bounds = array<i64: 16, 256>}, {transform_indices = @transform_1, window_bounds = array<i64: 256, 128>}, {transform_indices = @transform_2, window_bounds = array<i64: 1, 128>}, {transform_indices = @transform_3, window_bounds = array<i64: 16, 128>}]} {
    %c0_i32 = arith.constant 0 : i32
    %0 = arith.cmpi eq, %arg2, %c0_i32 : i32
    %1 = arith.extui %0 : i1 to i32
    %c0_i32_0 = arith.constant 0 : i32
    %2 = arith.cmpi ne, %1, %c0_i32_0 : i32
    scf.if %2 {
      %cst_10 = arith.constant 0.000000e+00 : f32
      %12 = vector.broadcast %cst_10 : f32 to vector<16x128xf32>
      %c0_11 = arith.constant 0 : index
      %c0_12 = arith.constant 0 : index
      %13 = vector.load %arg7[%c0_11, %c0_12] : memref<16x128xf32, #tpu.memory_space<vmem>>, vector<16x128xf32>
      tpu.vector_store %arg7[%c0_11, %c0_12], %12 {strides = array<i32>} : memref<16x128xf32, #tpu.memory_space<vmem>>, vector<16x128xf32>,
    } else {
    }
    %c0 = arith.constant 0 : index
    %c0_1 = arith.constant 0 : index
    %3 = vector.load %arg7[%c0, %c0_1] : memref<16x128xf32, #tpu.memory_space<vmem>>, vector<16x128xf32>
    %c0_2 = arith.constant 0 : index
    %c0_3 = arith.constant 0 : index
    %4 = vector.load %arg3[%c0_2, %c0_3] : memref<16x256xbf16, #tpu.memory_space<vmem>>, vector<16x256xbf16>
    %c0_4 = arith.constant 0 : index
    %c0_5 = arith.constant 0 : index
    %5 = vector.load %arg4[%c0_4, %c0_5] : memref<256x128xbf16, #tpu.memory_space<vmem>>, vector<256x128xbf16>
    %cst = arith.constant dense<0.000000e+00> : vector<16x128xf32>
    %6 = tpu.matmul %4, %5, %cst {dimension_numbers = #tpu.dot_dimension_numbers<[1], [0], [0], [1], [0, 0, 1, 1], [], []>} : vector<16x256xbf16>, vector<256x128xbf16>, vector<16x128xf32> -> vector<16x128xf32>
    %7 = arith.addf %3, %6 : vector<16x128xf32>
    %c0_6 = arith.constant 0 : index
    %c0_7 = arith.constant 0 : index
    %8 = vector.load %arg7[%c0_6, %c0_7] : memref<16x128xf32, #tpu.memory_space<vmem>>, vector<16x128xf32>
    tpu.vector_store %arg7[%c0_6, %c0_7], %7 {strides = array<i32>} : memref<16x128xf32, #tpu.memory_space<vmem>>, vector<16x128xf32>,
    %c0_i32_8 = arith.constant 0 : i32
    %9 = arith.cmpi eq, %arg2, %c0_i32_8 : i32
    %10 = arith.extui %9 : i1 to i32
    %c0_i32_9 = arith.constant 0 : i32
    %11 = arith.cmpi ne, %10, %c0_i32_9 : i32
    scf.if %11 {
      %c0_10 = arith.constant 0 : index
      %c0_11 = arith.constant 0 : index
      %12 = vector.load %arg7[%c0_10, %c0_11] : memref<16x128xf32, #tpu.memory_space<vmem>>, vector<16x128xf32>
      %c0_12 = arith.constant 0 : index
      %c0_13 = arith.constant 0 : index
      %13 = vector.load %arg5[%c0_12, %c0_13] : memref<1x128xf32, #tpu.memory_space<vmem>>, vector<1x128xf32>
      %14 = vector.broadcast %13 : vector<1x128xf32> to vector<16x128xf32>
      %15 = arith.addf %12, %14 : vector<16x128xf32>
      %c0_14 = arith.constant 0 : index
      %c0_15 = arith.constant 0 : index
      %16 = vector.load %arg6[%c0_14, %c0_15] : memref<16x128xf32, #tpu.memory_space<vmem>>, vector<16x128xf32>
      tpu.vector_store %arg6[%c0_14, %c0_15], %15 {strides = array<i32>} : memref<16x128xf32, #tpu.memory_space<vmem>>, vector<16x128xf32>,
    } else {
    }
    return
  }
  func.func @transform_0(%arg0: i32, %arg1: i32, %arg2: i32) -> (i32, i32) {
    %c0_i32 = arith.constant 0 : i32
    return %arg0, %arg2 : i32, i32
  }
  func.func @transform_1(%arg0: i32, %arg1: i32, %arg2: i32) -> (i32, i32) {
    %c0_i32 = arith.constant 0 : i32
    return %arg2, %arg1 : i32, i32
  }
  func.func @transform_2(%arg0: i32, %arg1: i32, %arg2: i32) -> (i32, i32) {
    %c0_i32 = arith.constant 0 : i32
    %c0_i32_0 = arith.constant 0 : i32
    return %c0_i32, %arg1 : i32, i32
  }
  func.func @transform_3(%arg0: i32, %arg1: i32, %arg2: i32) -> (i32, i32) {
    %c0_i32 = arith.constant 0 : i32
    return %arg0, %arg1 : i32, i32
  }
}

module attributes {stable_mosaic.version = 11 : i64} {
  func.func @_matmul_bias_kernel(%arg0: i32, %arg1: i32, %arg2: i32, %arg3: memref<16x128xbf16, #tpu.memory_space<vmem>>, %arg4: memref<128x128xbf16, #tpu.memory_space<vmem>>, %arg5: memref<1x128xf32, #tpu.memory_space<vmem>>, %arg6: memref<16x128xf32, #tpu.memory_space<vmem>>, %arg7: memref<16x128xf32, #tpu.memory_space<vmem>>) attributes {dimension_semantics = [#tpu.dimension_semantics<parallel>, #tpu.dimension_semantics<parallel>, #tpu.dimension_semantics<arbitrary>], iteration_bounds = array<i64: 1, 1, 1>, scalar_prefetch = 0 : i64, scratch_operands = 1 : i64, tpu.core_type = #tpu.core_type<tc>, window_params = [{transform_indices = @transform_0, window_bounds = array<i64: 16, 128>}, {transform_indices = @transform_1, window_bounds = array<i64: 128, 128>}, {transform_indices = @transform_2, window_bounds = array<i64: 1, 128>}, {transform_indices = @transform_3, window_bounds = array<i64: 16, 128>}]} {
    %c0_i32 = arith.constant 0 : i32
    %0 = arith.cmpi eq, %arg2, %c0_i32 : i32
    %1 = arith.extui %0 : i1 to i32
    %c0_i32_0 = arith.constant 0 : i32
    %2 = arith.cmpi ne, %1, %c0_i32_0 : i32
    scf.if %2 {
      %cst_10 = arith.constant 0.000000e+00 : f32
      %12 = vector.broadcast %cst_10 : f32 to vector<16x128xf32>
      %c0_11 = arith.constant 0 : index
      %c0_12 = arith.constant 0 : index
      %13 = vector.load %arg7[%c0_11, %c0_12] : memref<16x128xf32, #tpu.memory_space<vmem>>, vector<16x128xf32>
      tpu.vector_store %arg7[%c0_11, %c0_12], %12 {strides = array<i32>} : memref<16x128xf32, #tpu.memory_space<vmem>>, vector<16x128xf32>,
    } else {
    }
    %c0 = arith.constant 0 : index
    %c0_1 = arith.constant 0 : index
    %3 = vector.load %arg7[%c0, %c0_1] : memref<16x128xf32, #tpu.memory_space<vmem>>, vector<16x128xf32>
    %c0_2 = arith.constant 0 : index
    %c0_3 = arith.constant 0 : index
    %4 = vector.load %arg3[%c0_2, %c0_3] : memref<16x128xbf16, #tpu.memory_space<vmem>>, vector<16x128xbf16>
    %c0_4 = arith.constant 0 : index
    %c0_5 = arith.constant 0 : index
    %5 = vector.load %arg4[%c0_4, %c0_5] : memref<128x128xbf16, #tpu.memory_space<vmem>>, vector<128x128xbf16>
    %cst = arith.constant dense<0.000000e+00> : vector<16x128xf32>
    %6 = tpu.matmul %4, %5, %cst {dimension_numbers = #tpu.dot_dimension_numbers<[1], [0], [0], [1], [0, 0, 1, 1], [], []>} : vector<16x128xbf16>, vector<128x128xbf16>, vector<16x128xf32> -> vector<16x128xf32>
    %7 = arith.addf %3, %6 : vector<16x128xf32>
    %c0_6 = arith.constant 0 : index
    %c0_7 = arith.constant 0 : index
    %8 = vector.load %arg7[%c0_6, %c0_7] : memref<16x128xf32, #tpu.memory_space<vmem>>, vector<16x128xf32>
    tpu.vector_store %arg7[%c0_6, %c0_7], %7 {strides = array<i32>} : memref<16x128xf32, #tpu.memory_space<vmem>>, vector<16x128xf32>,
    %c0_i32_8 = arith.constant 0 : i32
    %9 = arith.cmpi eq, %arg2, %c0_i32_8 : i32
    %10 = arith.extui %9 : i1 to i32
    %c0_i32_9 = arith.constant 0 : i32
    %11 = arith.cmpi ne, %10, %c0_i32_9 : i32
    scf.if %11 {
      %c0_10 = arith.constant 0 : index
      %c0_11 = arith.constant 0 : index
      %12 = vector.load %arg7[%c0_10, %c0_11] : memref<16x128xf32, #tpu.memory_space<vmem>>, vector<16x128xf32>
      %c0_12 = arith.constant 0 : index
      %c0_13 = arith.constant 0 : index
      %13 = vector.load %arg5[%c0_12, %c0_13] : memref<1x128xf32, #tpu.memory_space<vmem>>, vector<1x128xf32>
      %14 = vector.broadcast %13 : vector<1x128xf32> to vector<16x128xf32>
      %15 = arith.addf %12, %14 : vector<16x128xf32>
      %c0_14 = arith.constant 0 : index
      %c0_15 = arith.constant 0 : index
      %16 = vector.load %arg6[%c0_14, %c0_15] : memref<16x128xf32, #tpu.memory_space<vmem>>, vector<16x128xf32>
      tpu.vector_store %arg6[%c0_14, %c0_15], %15 {strides = array<i32>} : memref<16x128xf32, #tpu.memory_space<vmem>>, vector<16x128xf32>,
    } else {
    }
    return
  }
  func.func @transform_0(%arg0: i32, %arg1: i32, %arg2: i32) -> (i32, i32) {
    %c0_i32 = arith.constant 0 : i32
    return %arg0, %arg2 : i32, i32
  }
  func.func @transform_1(%arg0: i32, %arg1: i32, %arg2: i32) -> (i32, i32) {
    %c0_i32 = arith.constant 0 : i32
    return %arg2, %arg1 : i32, i32
  }
  func.func @transform_2(%arg0: i32, %arg1: i32, %arg2: i32) -> (i32, i32) {
    %c0_i32 = arith.constant 0 : i32
    %c0_i32_0 = arith.constant 0 : i32
    return %c0_i32, %arg1 : i32, i32
  }
  func.func @transform_3(%arg0: i32, %arg1: i32, %arg2: i32) -> (i32, i32) {
    %c0_i32 = arith.constant 0 : i32
    return %arg0, %arg1 : i32, i32
  }
}

module attributes {stable_mosaic.version = 11 : i64} {
  func.func @_matmul_bias_kernel(%arg0: i32, %arg1: i32, %arg2: i32, %arg3: memref<16x128xbf16, #tpu.memory_space<vmem>>, %arg4: memref<128x256xbf16, #tpu.memory_space<vmem>>, %arg5: memref<1x256xf32, #tpu.memory_space<vmem>>, %arg6: memref<16x256xf32, #tpu.memory_space<vmem>>, %arg7: memref<16x256xf32, #tpu.memory_space<vmem>>) attributes {dimension_semantics = [#tpu.dimension_semantics<parallel>, #tpu.dimension_semantics<parallel>, #tpu.dimension_semantics<arbitrary>], iteration_bounds = array<i64: 1, 4, 1>, scalar_prefetch = 0 : i64, scratch_operands = 1 : i64, tpu.core_type = #tpu.core_type<tc>, window_params = [{transform_indices = @transform_0, window_bounds = array<i64: 16, 128>}, {transform_indices = @transform_1, window_bounds = array<i64: 128, 256>}, {transform_indices = @transform_2, window_bounds = array<i64: 1, 256>}, {transform_indices = @transform_3, window_bounds = array<i64: 16, 256>}]} {
    %c0_i32 = arith.constant 0 : i32
    %0 = arith.cmpi eq, %arg2, %c0_i32 : i32
    %1 = arith.extui %0 : i1 to i32
    %c0_i32_0 = arith.constant 0 : i32
    %2 = arith.cmpi ne, %1, %c0_i32_0 : i32
    scf.if %2 {
      %cst_10 = arith.constant 0.000000e+00 : f32
      %12 = vector.broadcast %cst_10 : f32 to vector<16x256xf32>
      %c0_11 = arith.constant 0 : index
      %c0_12 = arith.constant 0 : index
      %13 = vector.load %arg7[%c0_11, %c0_12] : memref<16x256xf32, #tpu.memory_space<vmem>>, vector<16x256xf32>
      tpu.vector_store %arg7[%c0_11, %c0_12], %12 {strides = array<i32>} : memref<16x256xf32, #tpu.memory_space<vmem>>, vector<16x256xf32>,
    } else {
    }
    %c0 = arith.constant 0 : index
    %c0_1 = arith.constant 0 : index
    %3 = vector.load %arg7[%c0, %c0_1] : memref<16x256xf32, #tpu.memory_space<vmem>>, vector<16x256xf32>
    %c0_2 = arith.constant 0 : index
    %c0_3 = arith.constant 0 : index
    %4 = vector.load %arg3[%c0_2, %c0_3] : memref<16x128xbf16, #tpu.memory_space<vmem>>, vector<16x128xbf16>
    %c0_4 = arith.constant 0 : index
    %c0_5 = arith.constant 0 : index
    %5 = vector.load %arg4[%c0_4, %c0_5] : memref<128x256xbf16, #tpu.memory_space<vmem>>, vector<128x256xbf16>
    %cst = arith.constant dense<0.000000e+00> : vector<16x256xf32>
    %6 = tpu.matmul %4, %5, %cst {dimension_numbers = #tpu.dot_dimension_numbers<[1], [0], [0], [1], [0, 0, 1, 1], [], []>} : vector<16x128xbf16>, vector<128x256xbf16>, vector<16x256xf32> -> vector<16x256xf32>
    %7 = arith.addf %3, %6 : vector<16x256xf32>
    %c0_6 = arith.constant 0 : index
    %c0_7 = arith.constant 0 : index
    %8 = vector.load %arg7[%c0_6, %c0_7] : memref<16x256xf32, #tpu.memory_space<vmem>>, vector<16x256xf32>
    tpu.vector_store %arg7[%c0_6, %c0_7], %7 {strides = array<i32>} : memref<16x256xf32, #tpu.memory_space<vmem>>, vector<16x256xf32>,
    %c0_i32_8 = arith.constant 0 : i32
    %9 = arith.cmpi eq, %arg2, %c0_i32_8 : i32
    %10 = arith.extui %9 : i1 to i32
    %c0_i32_9 = arith.constant 0 : i32
    %11 = arith.cmpi ne, %10, %c0_i32_9 : i32
    scf.if %11 {
      %c0_10 = arith.constant 0 : index
      %c0_11 = arith.constant 0 : index
      %12 = vector.load %arg7[%c0_10, %c0_11] : memref<16x256xf32, #tpu.memory_space<vmem>>, vector<16x256xf32>
      %c0_12 = arith.constant 0 : index
      %c0_13 = arith.constant 0 : index
      %13 = vector.load %arg5[%c0_12, %c0_13] : memref<1x256xf32, #tpu.memory_space<vmem>>, vector<1x256xf32>
      %14 = vector.broadcast %13 : vector<1x256xf32> to vector<16x256xf32>
      %15 = arith.addf %12, %14 : vector<16x256xf32>
      %c0_14 = arith.constant 0 : index
      %c0_15 = arith.constant 0 : index
      %16 = vector.load %arg6[%c0_14, %c0_15] : memref<16x256xf32, #tpu.memory_space<vmem>>, vector<16x256xf32>
      tpu.vector_store %arg6[%c0_14, %c0_15], %15 {strides = array<i32>} : memref<16x256xf32, #tpu.memory_space<vmem>>, vector<16x256xf32>,
    } else {
    }
    return
  }
  func.func @transform_0(%arg0: i32, %arg1: i32, %arg2: i32) -> (i32, i32) {
    %c0_i32 = arith.constant 0 : i32
    return %arg0, %arg2 : i32, i32
  }
  func.func @transform_1(%arg0: i32, %arg1: i32, %arg2: i32) -> (i32, i32) {
    %c0_i32 = arith.constant 0 : i32
    return %arg2, %arg1 : i32, i32
  }
  func.func @transform_2(%arg0: i32, %arg1: i32, %arg2: i32) -> (i32, i32) {
    %c0_i32 = arith.constant 0 : i32
    %c0_i32_0 = arith.constant 0 : i32
    return %c0_i32, %arg1 : i32, i32
  }
  func.func @transform_3(%arg0: i32, %arg1: i32, %arg2: i32) -> (i32, i32) {
    %c0_i32 = arith.constant 0 : i32
    return %arg0, %arg1 : i32, i32
  }
}

module attributes {stable_mosaic.version = 11 : i64} {
  func.func @_rmsnorm_mod_kernel(%arg0: i32, %arg1: i32, %arg2: memref<1x64x64xf32, #tpu.memory_space<vmem>>, %arg3: memref<1x64xf32, #tpu.memory_space<vmem>>, %arg4: memref<1x1x64xf32, #tpu.memory_space<vmem>>, %arg5: memref<1x1x64xf32, #tpu.memory_space<vmem>>, %arg6: memref<1x64x64xbf16, #tpu.memory_space<vmem>>) attributes {dimension_semantics = [#tpu.dimension_semantics<parallel>, #tpu.dimension_semantics<parallel>], iteration_bounds = array<i64: 2, 1>, scalar_prefetch = 0 : i64, scratch_operands = 0 : i64, tpu.core_type = #tpu.core_type<tc>, window_params = [{transform_indices = @transform_0, window_bounds = array<i64: 1, 64, 64>}, {pipeline_mode = #tpu.pipeline_mode<synchronous>, transform_indices = @transform_1, window_bounds = array<i64: 1, 64>}, {transform_indices = @transform_2, window_bounds = array<i64: 1, 1, 64>}, {transform_indices = @transform_3, window_bounds = array<i64: 1, 1, 64>}, {transform_indices = @transform_4, window_bounds = array<i64: 1, 64, 64>}]} {
    %c0 = arith.constant 0 : index
    %c0_0 = arith.constant 0 : index
    %c0_1 = arith.constant 0 : index
    %0 = vector.load %arg2[%c0, %c0_0, %c0_1] : memref<1x64x64xf32, #tpu.memory_space<vmem>>, vector<1x64x64xf32>
    %1 = vector.shape_cast %0 : vector<1x64x64xf32> to vector<64x64xf32>
    %2 = arith.mulf %1, %1 : vector<64x64xf32>
    %cst = arith.constant dense<0.000000e+00> : vector<64xf32>
    %3 = vector.multi_reduction <add>, %2, %cst [1] : vector<64x64xf32> to vector<64xf32>
    %4 = vector.shape_cast %3 : vector<64xf32> to vector<64x1xf32>
    %cst_2 = arith.constant 6.400000e+01 : f32
    %5 = vector.broadcast %cst_2 : f32 to vector<64x1xf32>
    %6 = arith.divf %4, %5 : vector<64x1xf32>
    %cst_3 = arith.constant 9.99999974E-6 : f32
    %7 = vector.broadcast %cst_3 : f32 to vector<64x1xf32>
    %8 = arith.addf %6, %7 : vector<64x1xf32>
    %9 = math.rsqrt %8 : vector<64x1xf32>
    %10 = vector.broadcast %9 : vector<64x1xf32> to vector<64x64xf32>
    %11 = arith.mulf %1, %10 : vector<64x64xf32>
    %c0_4 = arith.constant 0 : index
    %c0_5 = arith.constant 0 : index
    %12 = vector.load %arg3[%c0_4, %c0_5] : memref<1x64xf32, #tpu.memory_space<vmem>>, vector<1x64xf32>
    %13 = vector.broadcast %12 : vector<1x64xf32> to vector<64x64xf32>
    %14 = arith.mulf %11, %13 : vector<64x64xf32>
    %c0_6 = arith.constant 0 : index
    %c0_7 = arith.constant 0 : index
    %c0_8 = arith.constant 0 : index
    %15 = vector.load %arg4[%c0_6, %c0_7, %c0_8] : memref<1x1x64xf32, #tpu.memory_space<vmem>>, vector<1x1x64xf32>
    %16 = vector.shape_cast %15 : vector<1x1x64xf32> to vector<1x64xf32>
    %cst_9 = arith.constant 1.000000e+00 : f32
    %17 = vector.broadcast %cst_9 : f32 to vector<1x64xf32>
    %18 = arith.addf %17, %16 : vector<1x64xf32>
    %19 = vector.broadcast %18 : vector<1x64xf32> to vector<64x64xf32>
    %20 = arith.mulf %14, %19 : vector<64x64xf32>
    %c0_10 = arith.constant 0 : index
    %c0_11 = arith.constant 0 : index
    %c0_12 = arith.constant 0 : index
    %21 = vector.load %arg5[%c0_10, %c0_11, %c0_12] : memref<1x1x64xf32, #tpu.memory_space<vmem>>, vector<1x1x64xf32>
    %22 = vector.shape_cast %21 : vector<1x1x64xf32> to vector<1x64xf32>
    %23 = vector.broadcast %22 : vector<1x64xf32> to vector<64x64xf32>
    %24 = arith.addf %20, %23 : vector<64x64xf32>
    %25 = arith.truncf %24 : vector<64x64xf32> to vector<64x64xbf16>
    %c0_13 = arith.constant 0 : index
    %c0_14 = arith.constant 0 : index
    %c0_15 = arith.constant 0 : index
    %26 = vector.load %arg6[%c0_13, %c0_14, %c0_15] : memref<1x64x64xbf16, #tpu.memory_space<vmem>>, vector<1x64x64xbf16>
    %27 = vector.shape_cast %26 : vector<1x64x64xbf16> to vector<64x64xbf16>
    %28 = vector.shape_cast %25 : vector<64x64xbf16> to vector<1x64x64xbf16>
    tpu.vector_store %arg6[%c0_13, %c0_14, %c0_15], %28 {strides = array<i32>} : memref<1x64x64xbf16, #tpu.memory_space<vmem>>, vector<1x64x64xbf16>,
    return
  }
  func.func @transform_0(%arg0: i32, %arg1: i32) -> (i32, i32, i32) {
    %c0_i32 = arith.constant 0 : i32
    %c0_i32_0 = arith.constant 0 : i32
    return %arg0, %arg1, %c0_i32 : i32, i32, i32
  }
  func.func @transform_1(%arg0: i32, %arg1: i32) -> (i32, i32) {
    %c0_i32 = arith.constant 0 : i32
    %c0_i32_0 = arith.constant 0 : i32
    %c0_i32_1 = arith.constant 0 : i32
    return %c0_i32, %c0_i32_0 : i32, i32
  }
  func.func @transform_2(%arg0: i32, %arg1: i32) -> (i32, i32, i32) {
    %c0_i32 = arith.constant 0 : i32
    %c0_i32_0 = arith.constant 0 : i32
    %c0_i32_1 = arith.constant 0 : i32
    return %arg0, %c0_i32, %c0_i32_0 : i32, i32, i32
  }
  func.func @transform_3(%arg0: i32, %arg1: i32) -> (i32, i32, i32) {
    %c0_i32 = arith.constant 0 : i32
    %c0_i32_0 = arith.constant 0 : i32
    %c0_i32_1 = arith.constant 0 : i32
    return %arg0, %c0_i32, %c0_i32_0 : i32, i32, i32
  }
  func.func @transform_4(%arg0: i32, %arg1: i32) -> (i32, i32, i32) {
    %c0_i32 = arith.constant 0 : i32
    %c0_i32_0 = arith.constant 0 : i32
    return %arg0, %arg1, %c0_i32 : i32, i32, i32
  }
}

module attributes {stable_mosaic.version = 11 : i64} {
  func.func @_matmul_kernel(%arg0: i32, %arg1: i32, %arg2: i32, %arg3: memref<128x128xbf16, #tpu.memory_space<vmem>>, %arg4: memref<128x256xbf16, #tpu.memory_space<vmem>>, %arg5: memref<128x256xf32, #tpu.memory_space<vmem>>, %arg6: memref<128x256xf32, #tpu.memory_space<vmem>>) attributes {dimension_semantics = [#tpu.dimension_semantics<parallel>, #tpu.dimension_semantics<parallel>, #tpu.dimension_semantics<arbitrary>], iteration_bounds = array<i64: 1, 1, 1>, scalar_prefetch = 0 : i64, scratch_operands = 1 : i64, tpu.core_type = #tpu.core_type<tc>, window_params = [{transform_indices = @transform_0, window_bounds = array<i64: 128, 128>}, {transform_indices = @transform_1, window_bounds = array<i64: 128, 256>}, {transform_indices = @transform_2, window_bounds = array<i64: 128, 256>}]} {
    %c0_i32 = arith.constant 0 : i32
    %0 = arith.cmpi eq, %arg2, %c0_i32 : i32
    %1 = arith.extui %0 : i1 to i32
    %c0_i32_0 = arith.constant 0 : i32
    %2 = arith.cmpi ne, %1, %c0_i32_0 : i32
    scf.if %2 {
      %cst_10 = arith.constant 0.000000e+00 : f32
      %12 = vector.broadcast %cst_10 : f32 to vector<128x256xf32>
      %c0_11 = arith.constant 0 : index
      %c0_12 = arith.constant 0 : index
      %13 = vector.load %arg6[%c0_11, %c0_12] : memref<128x256xf32, #tpu.memory_space<vmem>>, vector<128x256xf32>
      tpu.vector_store %arg6[%c0_11, %c0_12], %12 {strides = array<i32>} : memref<128x256xf32, #tpu.memory_space<vmem>>, vector<128x256xf32>,
    } else {
    }
    %c0 = arith.constant 0 : index
    %c0_1 = arith.constant 0 : index
    %3 = vector.load %arg6[%c0, %c0_1] : memref<128x256xf32, #tpu.memory_space<vmem>>, vector<128x256xf32>
    %c0_2 = arith.constant 0 : index
    %c0_3 = arith.constant 0 : index
    %4 = vector.load %arg3[%c0_2, %c0_3] : memref<128x128xbf16, #tpu.memory_space<vmem>>, vector<128x128xbf16>
    %c0_4 = arith.constant 0 : index
    %c0_5 = arith.constant 0 : index
    %5 = vector.load %arg4[%c0_4, %c0_5] : memref<128x256xbf16, #tpu.memory_space<vmem>>, vector<128x256xbf16>
    %cst = arith.constant dense<0.000000e+00> : vector<128x256xf32>
    %6 = tpu.matmul %4, %5, %cst {dimension_numbers = #tpu.dot_dimension_numbers<[1], [0], [0], [1], [0, 0, 1, 1], [], []>} : vector<128x128xbf16>, vector<128x256xbf16>, vector<128x256xf32> -> vector<128x256xf32>
    %7 = arith.addf %3, %6 : vector<128x256xf32>
    %c0_6 = arith.constant 0 : index
    %c0_7 = arith.constant 0 : index
    %8 = vector.load %arg6[%c0_6, %c0_7] : memref<128x256xf32, #tpu.memory_space<vmem>>, vector<128x256xf32>
    tpu.vector_store %arg6[%c0_6, %c0_7], %7 {strides = array<i32>} : memref<128x256xf32, #tpu.memory_space<vmem>>, vector<128x256xf32>,
    %c0_i32_8 = arith.constant 0 : i32
    %9 = arith.cmpi eq, %arg2, %c0_i32_8 : i32
    %10 = arith.extui %9 : i1 to i32
    %c0_i32_9 = arith.constant 0 : i32
    %11 = arith.cmpi ne, %10, %c0_i32_9 : i32
    scf.if %11 {
      %c0_10 = arith.constant 0 : index
      %c0_11 = arith.constant 0 : index
      %12 = vector.load %arg6[%c0_10, %c0_11] : memref<128x256xf32, #tpu.memory_space<vmem>>, vector<128x256xf32>
      %c0_12 = arith.constant 0 : index
      %c0_13 = arith.constant 0 : index
      %13 = vector.load %arg5[%c0_12, %c0_13] : memref<128x256xf32, #tpu.memory_space<vmem>>, vector<128x256xf32>
      tpu.vector_store %arg5[%c0_12, %c0_13], %12 {strides = array<i32>} : memref<128x256xf32, #tpu.memory_space<vmem>>, vector<128x256xf32>,
    } else {
    }
    return
  }
  func.func @transform_0(%arg0: i32, %arg1: i32, %arg2: i32) -> (i32, i32) {
    %c0_i32 = arith.constant 0 : i32
    return %arg0, %arg2 : i32, i32
  }
  func.func @transform_1(%arg0: i32, %arg1: i32, %arg2: i32) -> (i32, i32) {
    %c0_i32 = arith.constant 0 : i32
    return %arg2, %arg1 : i32, i32
  }
  func.func @transform_2(%arg0: i32, %arg1: i32, %arg2: i32) -> (i32, i32) {
    %c0_i32 = arith.constant 0 : i32
    return %arg0, %arg1 : i32, i32
  }
}

module attributes {stable_mosaic.version = 11 : i64} {
  func.func @_attn_kernel(%arg0: i32, %arg1: memref<1x4x64x16xbf16, #tpu.memory_space<vmem>>, %arg2: memref<1x4x64x16xbf16, #tpu.memory_space<vmem>>, %arg3: memref<1x4x64x16xbf16, #tpu.memory_space<vmem>>, %arg4: memref<1x4x64x16xbf16, #tpu.memory_space<vmem>>) attributes {dimension_semantics = [#tpu.dimension_semantics<parallel>], iteration_bounds = array<i64: 2>, scalar_prefetch = 0 : i64, scratch_operands = 0 : i64, tpu.core_type = #tpu.core_type<tc>, window_params = [{transform_indices = @transform_0, window_bounds = array<i64: 1, 4, 64, 16>}, {transform_indices = @transform_1, window_bounds = array<i64: 1, 4, 64, 16>}, {transform_indices = @transform_2, window_bounds = array<i64: 1, 4, 64, 16>}, {transform_indices = @transform_3, window_bounds = array<i64: 1, 4, 64, 16>}]} {
    %c0 = arith.constant 0 : index
    %c0_0 = arith.constant 0 : index
    %c0_1 = arith.constant 0 : index
    %c0_2 = arith.constant 0 : index
    %0 = vector.load %arg1[%c0, %c0_0, %c0_1, %c0_2] : memref<1x4x64x16xbf16, #tpu.memory_space<vmem>>, vector<1x4x64x16xbf16>
    %1 = vector.shape_cast %0 : vector<1x4x64x16xbf16> to vector<4x64x16xbf16>
    %c0_3 = arith.constant 0 : index
    %c0_4 = arith.constant 0 : index
    %c0_5 = arith.constant 0 : index
    %c0_6 = arith.constant 0 : index
    %2 = vector.load %arg2[%c0_3, %c0_4, %c0_5, %c0_6] : memref<1x4x64x16xbf16, #tpu.memory_space<vmem>>, vector<1x4x64x16xbf16>
    %3 = vector.shape_cast %2 : vector<1x4x64x16xbf16> to vector<4x64x16xbf16>
    %c0_7 = arith.constant 0 : index
    %c0_8 = arith.constant 0 : index
    %c0_9 = arith.constant 0 : index
    %c0_10 = arith.constant 0 : index
    %4 = vector.load %arg3[%c0_7, %c0_8, %c0_9, %c0_10] : memref<1x4x64x16xbf16, #tpu.memory_space<vmem>>, vector<1x4x64x16xbf16>
    %5 = vector.shape_cast %4 : vector<1x4x64x16xbf16> to vector<4x64x16xbf16>
    "tpu.trace_start"() <{level = 10 : i32, message = "hqd,hkd->hqk"}> : () -> ()
    %cst = arith.constant dense<0.000000e+00> : vector<4x64x64xf32>
    %6 = tpu.matmul %1, %3, %cst {dimension_numbers = #tpu.dot_dimension_numbers<[2], [2], [1], [1], [0, 0, 0, 1, 1, 1], [0], [0]>} : vector<4x64x16xbf16>, vector<4x64x16xbf16>, vector<4x64x64xf32> -> vector<4x64x64xf32>
    "tpu.trace_stop"() : () -> ()
    %cst_11 = arith.constant 2.500000e-01 : f32
    %7 = vector.broadcast %cst_11 : f32 to vector<4x64x64xf32>
    %8 = arith.mulf %6, %7 : vector<4x64x64xf32>
    %cst_12 = arith.constant dense<0xFF800000> : vector<4x64xf32>
    %9 = vector.multi_reduction <maximumf>, %8, %cst_12 [2] : vector<4x64x64xf32> to vector<4x64xf32>
    %10 = vector.shape_cast %9 : vector<4x64xf32> to vector<4x64x1xf32>
    %11 = vector.broadcast %10 : vector<4x64x1xf32> to vector<4x64x64xf32>
    %12 = arith.subf %8, %11 : vector<4x64x64xf32>
    %13 = math.exp %12 : vector<4x64x64xf32>
    %cst_13 = arith.constant dense<0.000000e+00> : vector<4x64xf32>
    %14 = vector.multi_reduction <add>, %13, %cst_13 [2] : vector<4x64x64xf32> to vector<4x64xf32>
    %15 = vector.shape_cast %14 : vector<4x64xf32> to vector<4x64x1xf32>
    %16 = tpu.reciprocal %15 {approx = true} : vector<4x64x1xf32> -> vector<4x64x1xf32>
    %17 = vector.broadcast %16 : vector<4x64x1xf32> to vector<4x64x64xf32>
    %18 = arith.mulf %13, %17 : vector<4x64x64xf32>
    %19 = arith.truncf %18 : vector<4x64x64xf32> to vector<4x64x64xbf16>
    "tpu.trace_start"() <{level = 10 : i32, message = "hqk,hkd->hqd"}> : () -> ()
    %cst_14 = arith.constant dense<0.000000e+00> : vector<4x64x16xf32>
    %20 = tpu.matmul %19, %5, %cst_14 {dimension_numbers = #tpu.dot_dimension_numbers<[2], [1], [1], [2], [0, 0, 0, 1, 1, 2], [0], [0]>} : vector<4x64x64xbf16>, vector<4x64x16xbf16>, vector<4x64x16xf32> -> vector<4x64x16xf32>
    "tpu.trace_stop"() : () -> ()
    %21 = arith.truncf %20 : vector<4x64x16xf32> to vector<4x64x16xbf16>
    %c0_15 = arith.constant 0 : index
    %c0_16 = arith.constant 0 : index
    %c0_17 = arith.constant 0 : index
    %c0_18 = arith.constant 0 : index
    %22 = vector.load %arg4[%c0_15, %c0_16, %c0_17, %c0_18] : memref<1x4x64x16xbf16, #tpu.memory_space<vmem>>, vector<1x4x64x16xbf16>
    %23 = vector.shape_cast %22 : vector<1x4x64x16xbf16> to vector<4x64x16xbf16>
    %24 = vector.shape_cast %21 : vector<4x64x16xbf16> to vector<1x4x64x16xbf16>
    tpu.vector_store %arg4[%c0_15, %c0_16, %c0_17, %c0_18], %24 {strides = array<i32>} : memref<1x4x64x16xbf16, #tpu.memory_space<vmem>>, vector<1x4x64x16xbf16>,
    return
  }
  func.func @transform_0(%arg0: i32) -> (i32, i32, i32, i32) {
    %c0_i32 = arith.constant 0 : i32
    %c0_i32_0 = arith.constant 0 : i32
    %c0_i32_1 = arith.constant 0 : i32
    %c0_i32_2 = arith.constant 0 : i32
    return %arg0, %c0_i32, %c0_i32_0, %c0_i32_1 : i32, i32, i32, i32
  }
  func.func @transform_1(%arg0: i32) -> (i32, i32, i32, i32) {
    %c0_i32 = arith.constant 0 : i32
    %c0_i32_0 = arith.constant 0 : i32
    %c0_i32_1 = arith.constant 0 : i32
    %c0_i32_2 = arith.constant 0 : i32
    return %arg0, %c0_i32, %c0_i32_0, %c0_i32_1 : i32, i32, i32, i32
  }
  func.func @transform_2(%arg0: i32) -> (i32, i32, i32, i32) {
    %c0_i32 = arith.constant 0 : i32
    %c0_i32_0 = arith.constant 0 : i32
    %c0_i32_1 = arith.constant 0 : i32
    %c0_i32_2 = arith.constant 0 : i32
    return %arg0, %c0_i32, %c0_i32_0, %c0_i32_1 : i32, i32, i32, i32
  }
  func.func @transform_3(%arg0: i32) -> (i32, i32, i32, i32) {
    %c0_i32 = arith.constant 0 : i32
    %c0_i32_0 = arith.constant 0 : i32
    %c0_i32_1 = arith.constant 0 : i32
    %c0_i32_2 = arith.constant 0 : i32
    return %arg0, %c0_i32, %c0_i32_0, %c0_i32_1 : i32, i32, i32, i32
  }
}

module attributes {stable_mosaic.version = 11 : i64} {
  func.func @_matmul_kernel(%arg0: i32, %arg1: i32, %arg2: i32, %arg3: memref<128x128xbf16, #tpu.memory_space<vmem>>, %arg4: memref<128x128xbf16, #tpu.memory_space<vmem>>, %arg5: memref<128x128xf32, #tpu.memory_space<vmem>>, %arg6: memref<128x128xf32, #tpu.memory_space<vmem>>) attributes {dimension_semantics = [#tpu.dimension_semantics<parallel>, #tpu.dimension_semantics<parallel>, #tpu.dimension_semantics<arbitrary>], iteration_bounds = array<i64: 1, 1, 1>, scalar_prefetch = 0 : i64, scratch_operands = 1 : i64, tpu.core_type = #tpu.core_type<tc>, window_params = [{transform_indices = @transform_0, window_bounds = array<i64: 128, 128>}, {transform_indices = @transform_1, window_bounds = array<i64: 128, 128>}, {transform_indices = @transform_2, window_bounds = array<i64: 128, 128>}]} {
    %c0_i32 = arith.constant 0 : i32
    %0 = arith.cmpi eq, %arg2, %c0_i32 : i32
    %1 = arith.extui %0 : i1 to i32
    %c0_i32_0 = arith.constant 0 : i32
    %2 = arith.cmpi ne, %1, %c0_i32_0 : i32
    scf.if %2 {
      %cst_10 = arith.constant 0.000000e+00 : f32
      %12 = vector.broadcast %cst_10 : f32 to vector<128x128xf32>
      %c0_11 = arith.constant 0 : index
      %c0_12 = arith.constant 0 : index
      %13 = vector.load %arg6[%c0_11, %c0_12] : memref<128x128xf32, #tpu.memory_space<vmem>>, vector<128x128xf32>
      tpu.vector_store %arg6[%c0_11, %c0_12], %12 {strides = array<i32>} : memref<128x128xf32, #tpu.memory_space<vmem>>, vector<128x128xf32>,
    } else {
    }
    %c0 = arith.constant 0 : index
    %c0_1 = arith.constant 0 : index
    %3 = vector.load %arg6[%c0, %c0_1] : memref<128x128xf32, #tpu.memory_space<vmem>>, vector<128x128xf32>
    %c0_2 = arith.constant 0 : index
    %c0_3 = arith.constant 0 : index
    %4 = vector.load %arg3[%c0_2, %c0_3] : memref<128x128xbf16, #tpu.memory_space<vmem>>, vector<128x128xbf16>
    %c0_4 = arith.constant 0 : index
    %c0_5 = arith.constant 0 : index
    %5 = vector.load %arg4[%c0_4, %c0_5] : memref<128x128xbf16, #tpu.memory_space<vmem>>, vector<128x128xbf16>
    %cst = arith.constant dense<0.000000e+00> : vector<128x128xf32>
    %6 = tpu.matmul %4, %5, %cst {dimension_numbers = #tpu.dot_dimension_numbers<[1], [0], [0], [1], [0, 0, 1, 1], [], []>} : vector<128x128xbf16>, vector<128x128xbf16>, vector<128x128xf32> -> vector<128x128xf32>
    %7 = arith.addf %3, %6 : vector<128x128xf32>
    %c0_6 = arith.constant 0 : index
    %c0_7 = arith.constant 0 : index
    %8 = vector.load %arg6[%c0_6, %c0_7] : memref<128x128xf32, #tpu.memory_space<vmem>>, vector<128x128xf32>
    tpu.vector_store %arg6[%c0_6, %c0_7], %7 {strides = array<i32>} : memref<128x128xf32, #tpu.memory_space<vmem>>, vector<128x128xf32>,
    %c0_i32_8 = arith.constant 0 : i32
    %9 = arith.cmpi eq, %arg2, %c0_i32_8 : i32
    %10 = arith.extui %9 : i1 to i32
    %c0_i32_9 = arith.constant 0 : i32
    %11 = arith.cmpi ne, %10, %c0_i32_9 : i32
    scf.if %11 {
      %c0_10 = arith.constant 0 : index
      %c0_11 = arith.constant 0 : index
      %12 = vector.load %arg6[%c0_10, %c0_11] : memref<128x128xf32, #tpu.memory_space<vmem>>, vector<128x128xf32>
      %c0_12 = arith.constant 0 : index
      %c0_13 = arith.constant 0 : index
      %13 = vector.load %arg5[%c0_12, %c0_13] : memref<128x128xf32, #tpu.memory_space<vmem>>, vector<128x128xf32>
      tpu.vector_store %arg5[%c0_12, %c0_13], %12 {strides = array<i32>} : memref<128x128xf32, #tpu.memory_space<vmem>>, vector<128x128xf32>,
    } else {
    }
    return
  }
  func.func @transform_0(%arg0: i32, %arg1: i32, %arg2: i32) -> (i32, i32) {
    %c0_i32 = arith.constant 0 : i32
    return %arg0, %arg2 : i32, i32
  }
  func.func @transform_1(%arg0: i32, %arg1: i32, %arg2: i32) -> (i32, i32) {
    %c0_i32 = arith.constant 0 : i32
    return %arg2, %arg1 : i32, i32
  }
  func.func @transform_2(%arg0: i32, %arg1: i32, %arg2: i32) -> (i32, i32) {
    %c0_i32 = arith.constant 0 : i32
    return %arg0, %arg1 : i32, i32
  }
}

module attributes {stable_mosaic.version = 11 : i64} {
  func.func @_gated_res_rmsnorm_mod_kernel(%arg0: i32, %arg1: i32, %arg2: memref<1x64x64xf32, #tpu.memory_space<vmem>>, %arg3: memref<1x1x64xf32, #tpu.memory_space<vmem>>, %arg4: memref<1x64x64xf32, #tpu.memory_space<vmem>>, %arg5: memref<1x64xf32, #tpu.memory_space<vmem>>, %arg6: memref<1x1x64xf32, #tpu.memory_space<vmem>>, %arg7: memref<1x1x64xf32, #tpu.memory_space<vmem>>, %arg8: memref<1x64x64xf32, #tpu.memory_space<vmem>>, %arg9: memref<1x64x64xbf16, #tpu.memory_space<vmem>>) attributes {dimension_semantics = [#tpu.dimension_semantics<parallel>, #tpu.dimension_semantics<parallel>], iteration_bounds = array<i64: 2, 1>, scalar_prefetch = 0 : i64, scratch_operands = 0 : i64, tpu.core_type = #tpu.core_type<tc>, window_params = [{transform_indices = @transform_0, window_bounds = array<i64: 1, 64, 64>}, {transform_indices = @transform_1, window_bounds = array<i64: 1, 1, 64>}, {transform_indices = @transform_2, window_bounds = array<i64: 1, 64, 64>}, {pipeline_mode = #tpu.pipeline_mode<synchronous>, transform_indices = @transform_3, window_bounds = array<i64: 1, 64>}, {transform_indices = @transform_4, window_bounds = array<i64: 1, 1, 64>}, {transform_indices = @transform_5, window_bounds = array<i64: 1, 1, 64>}, {transform_indices = @transform_6, window_bounds = array<i64: 1, 64, 64>}, {transform_indices = @transform_7, window_bounds = array<i64: 1, 64, 64>}]} {
    %c0 = arith.constant 0 : index
    %c0_0 = arith.constant 0 : index
    %c0_1 = arith.constant 0 : index
    %0 = vector.load %arg2[%c0, %c0_0, %c0_1] : memref<1x64x64xf32, #tpu.memory_space<vmem>>, vector<1x64x64xf32>
    %1 = vector.shape_cast %0 : vector<1x64x64xf32> to vector<64x64xf32>
    %c0_2 = arith.constant 0 : index
    %c0_3 = arith.constant 0 : index
    %c0_4 = arith.constant 0 : index
    %2 = vector.load %arg3[%c0_2, %c0_3, %c0_4] : memref<1x1x64xf32, #tpu.memory_space<vmem>>, vector<1x1x64xf32>
    %3 = vector.shape_cast %2 : vector<1x1x64xf32> to vector<1x64xf32>
    %c0_5 = arith.constant 0 : index
    %c0_6 = arith.constant 0 : index
    %c0_7 = arith.constant 0 : index
    %4 = vector.load %arg4[%c0_5, %c0_6, %c0_7] : memref<1x64x64xf32, #tpu.memory_space<vmem>>, vector<1x64x64xf32>
    %5 = vector.shape_cast %4 : vector<1x64x64xf32> to vector<64x64xf32>
    %6 = vector.broadcast %3 : vector<1x64xf32> to vector<64x64xf32>
    %7 = arith.mulf %6, %5 : vector<64x64xf32>
    %8 = arith.addf %1, %7 : vector<64x64xf32>
    %c0_8 = arith.constant 0 : index
    %c0_9 = arith.constant 0 : index
    %c0_10 = arith.constant 0 : index
    %9 = vector.load %arg8[%c0_8, %c0_9, %c0_10] : memref<1x64x64xf32, #tpu.memory_space<vmem>>, vector<1x64x64xf32>
    %10 = vector.shape_cast %9 : vector<1x64x64xf32> to vector<64x64xf32>
    %11 = vector.shape_cast %8 : vector<64x64xf32> to vector<1x64x64xf32>
    tpu.vector_store %arg8[%c0_8, %c0_9, %c0_10], %11 {strides = array<i32>} : memref<1x64x64xf32, #tpu.memory_space<vmem>>, vector<1x64x64xf32>,
    %12 = arith.mulf %8, %8 : vector<64x64xf32>
    %cst = arith.constant dense<0.000000e+00> : vector<64xf32>
    %13 = vector.multi_reduction <add>, %12, %cst [1] : vector<64x64xf32> to vector<64xf32>
    %14 = vector.shape_cast %13 : vector<64xf32> to vector<64x1xf32>
    %cst_11 = arith.constant 6.400000e+01 : f32
    %15 = vector.broadcast %cst_11 : f32 to vector<64x1xf32>
    %16 = arith.divf %14, %15 : vector<64x1xf32>
    %cst_12 = arith.constant 9.99999974E-6 : f32
    %17 = vector.broadcast %cst_12 : f32 to vector<64x1xf32>
    %18 = arith.addf %16, %17 : vector<64x1xf32>
    %19 = math.rsqrt %18 : vector<64x1xf32>
    %20 = vector.broadcast %19 : vector<64x1xf32> to vector<64x64xf32>
    %21 = arith.mulf %8, %20 : vector<64x64xf32>
    %c0_13 = arith.constant 0 : index
    %c0_14 = arith.constant 0 : index
    %22 = vector.load %arg5[%c0_13, %c0_14] : memref<1x64xf32, #tpu.memory_space<vmem>>, vector<1x64xf32>
    %23 = vector.broadcast %22 : vector<1x64xf32> to vector<64x64xf32>
    %24 = arith.mulf %21, %23 : vector<64x64xf32>
    %c0_15 = arith.constant 0 : index
    %c0_16 = arith.constant 0 : index
    %c0_17 = arith.constant 0 : index
    %25 = vector.load %arg6[%c0_15, %c0_16, %c0_17] : memref<1x1x64xf32, #tpu.memory_space<vmem>>, vector<1x1x64xf32>
    %26 = vector.shape_cast %25 : vector<1x1x64xf32> to vector<1x64xf32>
    %cst_18 = arith.constant 1.000000e+00 : f32
    %27 = vector.broadcast %cst_18 : f32 to vector<1x64xf32>
    %28 = arith.addf %27, %26 : vector<1x64xf32>
    %29 = vector.broadcast %28 : vector<1x64xf32> to vector<64x64xf32>
    %30 = arith.mulf %24, %29 : vector<64x64xf32>
    %c0_19 = arith.constant 0 : index
    %c0_20 = arith.constant 0 : index
    %c0_21 = arith.constant 0 : index
    %31 = vector.load %arg7[%c0_19, %c0_20, %c0_21] : memref<1x1x64xf32, #tpu.memory_space<vmem>>, vector<1x1x64xf32>
    %32 = vector.shape_cast %31 : vector<1x1x64xf32> to vector<1x64xf32>
    %33 = vector.broadcast %32 : vector<1x64xf32> to vector<64x64xf32>
    %34 = arith.addf %30, %33 : vector<64x64xf32>
    %35 = arith.truncf %34 : vector<64x64xf32> to vector<64x64xbf16>
    %c0_22 = arith.constant 0 : index
    %c0_23 = arith.constant 0 : index
    %c0_24 = arith.constant 0 : index
    %36 = vector.load %arg9[%c0_22, %c0_23, %c0_24] : memref<1x64x64xbf16, #tpu.memory_space<vmem>>, vector<1x64x64xbf16>
    %37 = vector.shape_cast %36 : vector<1x64x64xbf16> to vector<64x64xbf16>
    %38 = vector.shape_cast %35 : vector<64x64xbf16> to vector<1x64x64xbf16>
    tpu.vector_store %arg9[%c0_22, %c0_23, %c0_24], %38 {strides = array<i32>} : memref<1x64x64xbf16, #tpu.memory_space<vmem>>, vector<1x64x64xbf16>,
    return
  }
  func.func @transform_0(%arg0: i32, %arg1: i32) -> (i32, i32, i32) {
    %c0_i32 = arith.constant 0 : i32
    %c0_i32_0 = arith.constant 0 : i32
    return %arg0, %arg1, %c0_i32 : i32, i32, i32
  }
  func.func @transform_1(%arg0: i32, %arg1: i32) -> (i32, i32, i32) {
    %c0_i32 = arith.constant 0 : i32
    %c0_i32_0 = arith.constant 0 : i32
    %c0_i32_1 = arith.constant 0 : i32
    return %arg0, %c0_i32, %c0_i32_0 : i32, i32, i32
  }
  func.func @transform_2(%arg0: i32, %arg1: i32) -> (i32, i32, i32) {
    %c0_i32 = arith.constant 0 : i32
    %c0_i32_0 = arith.constant 0 : i32
    return %arg0, %arg1, %c0_i32 : i32, i32, i32
  }
  func.func @transform_3(%arg0: i32, %arg1: i32) -> (i32, i32) {
    %c0_i32 = arith.constant 0 : i32
    %c0_i32_0 = arith.constant 0 : i32
    %c0_i32_1 = arith.constant 0 : i32
    return %c0_i32, %c0_i32_0 : i32, i32
  }
  func.func @transform_4(%arg0: i32, %arg1: i32) -> (i32, i32, i32) {
    %c0_i32 = arith.constant 0 : i32
    %c0_i32_0 = arith.constant 0 : i32
    %c0_i32_1 = arith.constant 0 : i32
    return %arg0, %c0_i32, %c0_i32_0 : i32, i32, i32
  }
  func.func @transform_5(%arg0: i32, %arg1: i32) -> (i32, i32, i32) {
    %c0_i32 = arith.constant 0 : i32
    %c0_i32_0 = arith.constant 0 : i32
    %c0_i32_1 = arith.constant 0 : i32
    return %arg0, %c0_i32, %c0_i32_0 : i32, i32, i32
  }
  func.func @transform_6(%arg0: i32, %arg1: i32) -> (i32, i32, i32) {
    %c0_i32 = arith.constant 0 : i32
    %c0_i32_0 = arith.constant 0 : i32
    return %arg0, %arg1, %c0_i32 : i32, i32, i32
  }
  func.func @transform_7(%arg0: i32, %arg1: i32) -> (i32, i32, i32) {
    %c0_i32 = arith.constant 0 : i32
    %c0_i32_0 = arith.constant 0 : i32
    return %arg0, %arg1, %c0_i32 : i32, i32, i32
  }
}

module attributes {stable_mosaic.version = 11 : i64} {
  func.func @_swiglu_matmul_kernel(%arg0: i32, %arg1: i32, %arg2: i32, %arg3: memref<128x128xbf16, #tpu.memory_space<vmem>>, %arg4: memref<128x256xbf16, #tpu.memory_space<vmem>>, %arg5: memref<128x256xbf16, #tpu.memory_space<vmem>>, %arg6: memref<128x256xbf16, #tpu.memory_space<vmem>>, %arg7: memref<128x256xf32, #tpu.memory_space<vmem>>, %arg8: memref<128x256xf32, #tpu.memory_space<vmem>>) attributes {dimension_semantics = [#tpu.dimension_semantics<parallel>, #tpu.dimension_semantics<parallel>, #tpu.dimension_semantics<arbitrary>], iteration_bounds = array<i64: 1, 1, 1>, scalar_prefetch = 0 : i64, scratch_operands = 2 : i64, tpu.core_type = #tpu.core_type<tc>, window_params = [{transform_indices = @transform_0, window_bounds = array<i64: 128, 128>}, {transform_indices = @transform_1, window_bounds = array<i64: 128, 256>}, {transform_indices = @transform_2, window_bounds = array<i64: 128, 256>}, {transform_indices = @transform_3, window_bounds = array<i64: 128, 256>}]} {
    %c0_i32 = arith.constant 0 : i32
    %0 = arith.cmpi eq, %arg2, %c0_i32 : i32
    %1 = arith.extui %0 : i1 to i32
    %c0_i32_0 = arith.constant 0 : i32
    %2 = arith.cmpi ne, %1, %c0_i32_0 : i32
    scf.if %2 {
      %cst_17 = arith.constant 0.000000e+00 : f32
      %17 = vector.broadcast %cst_17 : f32 to vector<128x256xf32>
      %c0_18 = arith.constant 0 : index
      %c0_19 = arith.constant 0 : index
      %18 = vector.load %arg7[%c0_18, %c0_19] : memref<128x256xf32, #tpu.memory_space<vmem>>, vector<128x256xf32>
      tpu.vector_store %arg7[%c0_18, %c0_19], %17 {strides = array<i32>} : memref<128x256xf32, #tpu.memory_space<vmem>>, vector<128x256xf32>,
      %cst_20 = arith.constant 0.000000e+00 : f32
      %19 = vector.broadcast %cst_20 : f32 to vector<128x256xf32>
      %c0_21 = arith.constant 0 : index
      %c0_22 = arith.constant 0 : index
      %20 = vector.load %arg8[%c0_21, %c0_22] : memref<128x256xf32, #tpu.memory_space<vmem>>, vector<128x256xf32>
      tpu.vector_store %arg8[%c0_21, %c0_22], %19 {strides = array<i32>} : memref<128x256xf32, #tpu.memory_space<vmem>>, vector<128x256xf32>,
    } else {
    }
    %c0 = arith.constant 0 : index
    %c0_1 = arith.constant 0 : index
    %3 = vector.load %arg3[%c0, %c0_1] : memref<128x128xbf16, #tpu.memory_space<vmem>>, vector<128x128xbf16>
    %c0_2 = arith.constant 0 : index
    %c0_3 = arith.constant 0 : index
    %4 = vector.load %arg7[%c0_2, %c0_3] : memref<128x256xf32, #tpu.memory_space<vmem>>, vector<128x256xf32>
    %c0_4 = arith.constant 0 : index
    %c0_5 = arith.constant 0 : index
    %5 = vector.load %arg4[%c0_4, %c0_5] : memref<128x256xbf16, #tpu.memory_space<vmem>>, vector<128x256xbf16>
    %cst = arith.constant dense<0.000000e+00> : vector<128x256xf32>
    %6 = tpu.matmul %3, %5, %cst {dimension_numbers = #tpu.dot_dimension_numbers<[1], [0], [0], [1], [0, 0, 1, 1], [], []>} : vector<128x128xbf16>, vector<128x256xbf16>, vector<128x256xf32> -> vector<128x256xf32>
    %7 = arith.addf %4, %6 : vector<128x256xf32>
    %c0_6 = arith.constant 0 : index
    %c0_7 = arith.constant 0 : index
    %8 = vector.load %arg7[%c0_6, %c0_7] : memref<128x256xf32, #tpu.memory_space<vmem>>, vector<128x256xf32>
    tpu.vector_store %arg7[%c0_6, %c0_7], %7 {strides = array<i32>} : memref<128x256xf32, #tpu.memory_space<vmem>>, vector<128x256xf32>,
    %c0_8 = arith.constant 0 : index
    %c0_9 = arith.constant 0 : index
    %9 = vector.load %arg8[%c0_8, %c0_9] : memref<128x256xf32, #tpu.memory_space<vmem>>, vector<128x256xf32>
    %c0_10 = arith.constant 0 : index
    %c0_11 = arith.constant 0 : index
    %10 = vector.load %arg5[%c0_10, %c0_11] : memref<128x256xbf16, #tpu.memory_space<vmem>>, vector<128x256xbf16>
    %cst_12 = arith.constant dense<0.000000e+00> : vector<128x256xf32>
    %11 = tpu.matmul %3, %10, %cst_12 {dimension_numbers = #tpu.dot_dimension_numbers<[1], [0], [0], [1], [0, 0, 1, 1], [], []>} : vector<128x128xbf16>, vector<128x256xbf16>, vector<128x256xf32> -> vector<128x256xf32>
    %12 = arith.addf %9, %11 : vector<128x256xf32>
    %c0_13 = arith.constant 0 : index
    %c0_14 = arith.constant 0 : index
    %13 = vector.load %arg8[%c0_13, %c0_14] : memref<128x256xf32, #tpu.memory_space<vmem>>, vector<128x256xf32>
    tpu.vector_store %arg8[%c0_13, %c0_14], %12 {strides = array<i32>} : memref<128x256xf32, #tpu.memory_space<vmem>>, vector<128x256xf32>,
    %c0_i32_15 = arith.constant 0 : i32
    %14 = arith.cmpi eq, %arg2, %c0_i32_15 : i32
    %15 = arith.extui %14 : i1 to i32
    %c0_i32_16 = arith.constant 0 : i32
    %16 = arith.cmpi ne, %15, %c0_i32_16 : i32
    scf.if %16 {
      %c0_17 = arith.constant 0 : index
      %c0_18 = arith.constant 0 : index
      %17 = vector.load %arg7[%c0_17, %c0_18] : memref<128x256xf32, #tpu.memory_space<vmem>>, vector<128x256xf32>
      %18 = arith.negf %17 : vector<128x256xf32>
      %19 = math.exp %18 : vector<128x256xf32>
      %cst_19 = arith.constant 1.000000e+00 : f32
      %20 = vector.broadcast %cst_19 : f32 to vector<128x256xf32>
      %21 = arith.addf %20, %19 : vector<128x256xf32>
      %22 = arith.divf %20, %21 : vector<128x256xf32>
      %23 = arith.mulf %17, %22 : vector<128x256xf32>
      %c0_20 = arith.constant 0 : index
      %c0_21 = arith.constant 0 : index
      %24 = vector.load %arg8[%c0_20, %c0_21] : memref<128x256xf32, #tpu.memory_space<vmem>>, vector<128x256xf32>
      %25 = arith.mulf %23, %24 : vector<128x256xf32>
      %26 = arith.truncf %25 : vector<128x256xf32> to vector<128x256xbf16>
      %c0_22 = arith.constant 0 : index
      %c0_23 = arith.constant 0 : index
      %27 = vector.load %arg6[%c0_22, %c0_23] : memref<128x256xbf16, #tpu.memory_space<vmem>>, vector<128x256xbf16>
      tpu.vector_store %arg6[%c0_22, %c0_23], %26 {strides = array<i32>} : memref<128x256xbf16, #tpu.memory_space<vmem>>, vector<128x256xbf16>,
    } else {
    }
    return
  }
  func.func @transform_0(%arg0: i32, %arg1: i32, %arg2: i32) -> (i32, i32) {
    %c0_i32 = arith.constant 0 : i32
    return %arg0, %arg2 : i32, i32
  }
  func.func @transform_1(%arg0: i32, %arg1: i32, %arg2: i32) -> (i32, i32) {
    %c0_i32 = arith.constant 0 : i32
    return %arg2, %arg1 : i32, i32
  }
  func.func @transform_2(%arg0: i32, %arg1: i32, %arg2: i32) -> (i32, i32) {
    %c0_i32 = arith.constant 0 : i32
    return %arg2, %arg1 : i32, i32
  }
  func.func @transform_3(%arg0: i32, %arg1: i32, %arg2: i32) -> (i32, i32) {
    %c0_i32 = arith.constant 0 : i32
    return %arg0, %arg1 : i32, i32
  }
}

module attributes {stable_mosaic.version = 11 : i64} {
  func.func @_gated_residual_kernel(%arg0: i32, %arg1: i32, %arg2: memref<1x64x64xf32, #tpu.memory_space<vmem>>, %arg3: memref<1x1x64xf32, #tpu.memory_space<vmem>>, %arg4: memref<1x64x64xf32, #tpu.memory_space<vmem>>, %arg5: memref<1x64x64xf32, #tpu.memory_space<vmem>>) attributes {dimension_semantics = [#tpu.dimension_semantics<parallel>, #tpu.dimension_semantics<parallel>], iteration_bounds = array<i64: 2, 1>, scalar_prefetch = 0 : i64, scratch_operands = 0 : i64, tpu.core_type = #tpu.core_type<tc>, window_params = [{transform_indices = @transform_0, window_bounds = array<i64: 1, 64, 64>}, {transform_indices = @transform_1, window_bounds = array<i64: 1, 1, 64>}, {transform_indices = @transform_2, window_bounds = array<i64: 1, 64, 64>}, {transform_indices = @transform_3, window_bounds = array<i64: 1, 64, 64>}]} {
    %c0 = arith.constant 0 : index
    %c0_0 = arith.constant 0 : index
    %c0_1 = arith.constant 0 : index
    %0 = vector.load %arg2[%c0, %c0_0, %c0_1] : memref<1x64x64xf32, #tpu.memory_space<vmem>>, vector<1x64x64xf32>
    %1 = vector.shape_cast %0 : vector<1x64x64xf32> to vector<64x64xf32>
    %c0_2 = arith.constant 0 : index
    %c0_3 = arith.constant 0 : index
    %c0_4 = arith.constant 0 : index
    %2 = vector.load %arg3[%c0_2, %c0_3, %c0_4] : memref<1x1x64xf32, #tpu.memory_space<vmem>>, vector<1x1x64xf32>
    %3 = vector.shape_cast %2 : vector<1x1x64xf32> to vector<1x64xf32>
    %c0_5 = arith.constant 0 : index
    %c0_6 = arith.constant 0 : index
    %c0_7 = arith.constant 0 : index
    %4 = vector.load %arg4[%c0_5, %c0_6, %c0_7] : memref<1x64x64xf32, #tpu.memory_space<vmem>>, vector<1x64x64xf32>
    %5 = vector.shape_cast %4 : vector<1x64x64xf32> to vector<64x64xf32>
    %6 = vector.broadcast %3 : vector<1x64xf32> to vector<64x64xf32>
    %7 = arith.mulf %6, %5 : vector<64x64xf32>
    %8 = arith.addf %1, %7 : vector<64x64xf32>
    %c0_8 = arith.constant 0 : index
    %c0_9 = arith.constant 0 : index
    %c0_10 = arith.constant 0 : index
    %9 = vector.load %arg5[%c0_8, %c0_9, %c0_10] : memref<1x64x64xf32, #tpu.memory_space<vmem>>, vector<1x64x64xf32>
    %10 = vector.shape_cast %9 : vector<1x64x64xf32> to vector<64x64xf32>
    %11 = vector.shape_cast %8 : vector<64x64xf32> to vector<1x64x64xf32>
    tpu.vector_store %arg5[%c0_8, %c0_9, %c0_10], %11 {strides = array<i32>} : memref<1x64x64xf32, #tpu.memory_space<vmem>>, vector<1x64x64xf32>,
    return
  }
  func.func @transform_0(%arg0: i32, %arg1: i32) -> (i32, i32, i32) {
    %c0_i32 = arith.constant 0 : i32
    %c0_i32_0 = arith.constant 0 : i32
    return %arg0, %arg1, %c0_i32 : i32, i32, i32
  }
  func.func @transform_1(%arg0: i32, %arg1: i32) -> (i32, i32, i32) {
    %c0_i32 = arith.constant 0 : i32
    %c0_i32_0 = arith.constant 0 : i32
    %c0_i32_1 = arith.constant 0 : i32
    return %arg0, %c0_i32, %c0_i32_0 : i32, i32, i32
  }
  func.func @transform_2(%arg0: i32, %arg1: i32) -> (i32, i32, i32) {
    %c0_i32 = arith.constant 0 : i32
    %c0_i32_0 = arith.constant 0 : i32
    return %arg0, %arg1, %c0_i32 : i32, i32, i32
  }
  func.func @transform_3(%arg0: i32, %arg1: i32) -> (i32, i32, i32) {
    %c0_i32 = arith.constant 0 : i32
    %c0_i32_0 = arith.constant 0 : i32
    return %arg0, %arg1, %c0_i32 : i32, i32, i32
  }
}

module attributes {stable_mosaic.version = 11 : i64} {
  func.func @_matmul_kernel(%arg0: i32, %arg1: i32, %arg2: i32, %arg3: memref<128x256xbf16, #tpu.memory_space<vmem>>, %arg4: memref<256x128xbf16, #tpu.memory_space<vmem>>, %arg5: memref<128x128xf32, #tpu.memory_space<vmem>>, %arg6: memref<128x128xf32, #tpu.memory_space<vmem>>) attributes {dimension_semantics = [#tpu.dimension_semantics<parallel>, #tpu.dimension_semantics<parallel>, #tpu.dimension_semantics<arbitrary>], iteration_bounds = array<i64: 1, 1, 1>, scalar_prefetch = 0 : i64, scratch_operands = 1 : i64, tpu.core_type = #tpu.core_type<tc>, window_params = [{transform_indices = @transform_0, window_bounds = array<i64: 128, 256>}, {transform_indices = @transform_1, window_bounds = array<i64: 256, 128>}, {transform_indices = @transform_2, window_bounds = array<i64: 128, 128>}]} {
    %c0_i32 = arith.constant 0 : i32
    %0 = arith.cmpi eq, %arg2, %c0_i32 : i32
    %1 = arith.extui %0 : i1 to i32
    %c0_i32_0 = arith.constant 0 : i32
    %2 = arith.cmpi ne, %1, %c0_i32_0 : i32
    scf.if %2 {
      %cst_10 = arith.constant 0.000000e+00 : f32
      %12 = vector.broadcast %cst_10 : f32 to vector<128x128xf32>
      %c0_11 = arith.constant 0 : index
      %c0_12 = arith.constant 0 : index
      %13 = vector.load %arg6[%c0_11, %c0_12] : memref<128x128xf32, #tpu.memory_space<vmem>>, vector<128x128xf32>
      tpu.vector_store %arg6[%c0_11, %c0_12], %12 {strides = array<i32>} : memref<128x128xf32, #tpu.memory_space<vmem>>, vector<128x128xf32>,
    } else {
    }
    %c0 = arith.constant 0 : index
    %c0_1 = arith.constant 0 : index
    %3 = vector.load %arg6[%c0, %c0_1] : memref<128x128xf32, #tpu.memory_space<vmem>>, vector<128x128xf32>
    %c0_2 = arith.constant 0 : index
    %c0_3 = arith.constant 0 : index
    %4 = vector.load %arg3[%c0_2, %c0_3] : memref<128x256xbf16, #tpu.memory_space<vmem>>, vector<128x256xbf16>
    %c0_4 = arith.constant 0 : index
    %c0_5 = arith.constant 0 : index
    %5 = vector.load %arg4[%c0_4, %c0_5] : memref<256x128xbf16, #tpu.memory_space<vmem>>, vector<256x128xbf16>
    %cst = arith.constant dense<0.000000e+00> : vector<128x128xf32>
    %6 = tpu.matmul %4, %5, %cst {dimension_numbers = #tpu.dot_dimension_numbers<[1], [0], [0], [1], [0, 0, 1, 1], [], []>} : vector<128x256xbf16>, vector<256x128xbf16>, vector<128x128xf32> -> vector<128x128xf32>
    %7 = arith.addf %3, %6 : vector<128x128xf32>
    %c0_6 = arith.constant 0 : index
    %c0_7 = arith.constant 0 : index
    %8 = vector.load %arg6[%c0_6, %c0_7] : memref<128x128xf32, #tpu.memory_space<vmem>>, vector<128x128xf32>
    tpu.vector_store %arg6[%c0_6, %c0_7], %7 {strides = array<i32>} : memref<128x128xf32, #tpu.memory_space<vmem>>, vector<128x128xf32>,
    %c0_i32_8 = arith.constant 0 : i32
    %9 = arith.cmpi eq, %arg2, %c0_i32_8 : i32
    %10 = arith.extui %9 : i1 to i32
    %c0_i32_9 = arith.constant 0 : i32
    %11 = arith.cmpi ne, %10, %c0_i32_9 : i32
    scf.if %11 {
      %c0_10 = arith.constant 0 : index
      %c0_11 = arith.constant 0 : index
      %12 = vector.load %arg6[%c0_10, %c0_11] : memref<128x128xf32, #tpu.memory_space<vmem>>, vector<128x128xf32>
      %c0_12 = arith.constant 0 : index
      %c0_13 = arith.constant 0 : index
      %13 = vector.load %arg5[%c0_12, %c0_13] : memref<128x128xf32, #tpu.memory_space<vmem>>, vector<128x128xf32>
      tpu.vector_store %arg5[%c0_12, %c0_13], %12 {strides = array<i32>} : memref<128x128xf32, #tpu.memory_space<vmem>>, vector<128x128xf32>,
    } else {
    }
    return
  }
  func.func @transform_0(%arg0: i32, %arg1: i32, %arg2: i32) -> (i32, i32) {
    %c0_i32 = arith.constant 0 : i32
    return %arg0, %arg2 : i32, i32
  }
  func.func @transform_1(%arg0: i32, %arg1: i32, %arg2: i32) -> (i32, i32) {
    %c0_i32 = arith.constant 0 : i32
    return %arg2, %arg1 : i32, i32
  }
  func.func @transform_2(%arg0: i32, %arg1: i32, %arg2: i32) -> (i32, i32) {
    %c0_i32 = arith.constant 0 : i32
    return %arg0, %arg1 : i32, i32
  }
}

module attributes {stable_mosaic.version = 11 : i64} {
  func.func @_layernorm_mod_kernel(%arg0: i32, %arg1: i32, %arg2: memref<1x64x64xf32, #tpu.memory_space<vmem>>, %arg3: memref<1x1x64xf32, #tpu.memory_space<vmem>>, %arg4: memref<1x1x64xf32, #tpu.memory_space<vmem>>, %arg5: memref<1x64x64xbf16, #tpu.memory_space<vmem>>) attributes {dimension_semantics = [#tpu.dimension_semantics<parallel>, #tpu.dimension_semantics<parallel>], iteration_bounds = array<i64: 2, 1>, scalar_prefetch = 0 : i64, scratch_operands = 0 : i64, tpu.core_type = #tpu.core_type<tc>, window_params = [{transform_indices = @transform_0, window_bounds = array<i64: 1, 64, 64>}, {transform_indices = @transform_1, window_bounds = array<i64: 1, 1, 64>}, {transform_indices = @transform_2, window_bounds = array<i64: 1, 1, 64>}, {transform_indices = @transform_3, window_bounds = array<i64: 1, 64, 64>}]} {
    %c0 = arith.constant 0 : index
    %c0_0 = arith.constant 0 : index
    %c0_1 = arith.constant 0 : index
    %0 = vector.load %arg2[%c0, %c0_0, %c0_1] : memref<1x64x64xf32, #tpu.memory_space<vmem>>, vector<1x64x64xf32>
    %1 = vector.shape_cast %0 : vector<1x64x64xf32> to vector<64x64xf32>
    %cst = arith.constant dense<0.000000e+00> : vector<64xf32>
    %2 = vector.multi_reduction <add>, %1, %cst [1] : vector<64x64xf32> to vector<64xf32>
    %3 = vector.shape_cast %2 : vector<64xf32> to vector<64x1xf32>
    %cst_2 = arith.constant 6.400000e+01 : f32
    %4 = vector.broadcast %cst_2 : f32 to vector<64x1xf32>
    %5 = arith.divf %3, %4 : vector<64x1xf32>
    %6 = vector.broadcast %5 : vector<64x1xf32> to vector<64x64xf32>
    %7 = arith.subf %1, %6 : vector<64x64xf32>
    %8 = arith.mulf %7, %7 : vector<64x64xf32>
    %cst_3 = arith.constant dense<0.000000e+00> : vector<64xf32>
    %9 = vector.multi_reduction <add>, %8, %cst_3 [1] : vector<64x64xf32> to vector<64xf32>
    %10 = vector.shape_cast %9 : vector<64xf32> to vector<64x1xf32>
    %cst_4 = arith.constant 6.400000e+01 : f32
    %11 = vector.broadcast %cst_4 : f32 to vector<64x1xf32>
    %12 = arith.divf %10, %11 : vector<64x1xf32>
    %cst_5 = arith.constant 9.99999997E-7 : f32
    %13 = vector.broadcast %cst_5 : f32 to vector<64x1xf32>
    %14 = arith.addf %12, %13 : vector<64x1xf32>
    %15 = math.rsqrt %14 : vector<64x1xf32>
    %16 = vector.broadcast %15 : vector<64x1xf32> to vector<64x64xf32>
    %17 = arith.mulf %7, %16 : vector<64x64xf32>
    %c0_6 = arith.constant 0 : index
    %c0_7 = arith.constant 0 : index
    %c0_8 = arith.constant 0 : index
    %18 = vector.load %arg3[%c0_6, %c0_7, %c0_8] : memref<1x1x64xf32, #tpu.memory_space<vmem>>, vector<1x1x64xf32>
    %19 = vector.shape_cast %18 : vector<1x1x64xf32> to vector<1x64xf32>
    %cst_9 = arith.constant 1.000000e+00 : f32
    %20 = vector.broadcast %cst_9 : f32 to vector<1x64xf32>
    %21 = arith.addf %20, %19 : vector<1x64xf32>
    %22 = vector.broadcast %21 : vector<1x64xf32> to vector<64x64xf32>
    %23 = arith.mulf %17, %22 : vector<64x64xf32>
    %c0_10 = arith.constant 0 : index
    %c0_11 = arith.constant 0 : index
    %c0_12 = arith.constant 0 : index
    %24 = vector.load %arg4[%c0_10, %c0_11, %c0_12] : memref<1x1x64xf32, #tpu.memory_space<vmem>>, vector<1x1x64xf32>
    %25 = vector.shape_cast %24 : vector<1x1x64xf32> to vector<1x64xf32>
    %26 = vector.broadcast %25 : vector<1x64xf32> to vector<64x64xf32>
    %27 = arith.addf %23, %26 : vector<64x64xf32>
    %28 = arith.truncf %27 : vector<64x64xf32> to vector<64x64xbf16>
    %c0_13 = arith.constant 0 : index
    %c0_14 = arith.constant 0 : index
    %c0_15 = arith.constant 0 : index
    %29 = vector.load %arg5[%c0_13, %c0_14, %c0_15] : memref<1x64x64xbf16, #tpu.memory_space<vmem>>, vector<1x64x64xbf16>
    %30 = vector.shape_cast %29 : vector<1x64x64xbf16> to vector<64x64xbf16>
    %31 = vector.shape_cast %28 : vector<64x64xbf16> to vector<1x64x64xbf16>
    tpu.vector_store %arg5[%c0_13, %c0_14, %c0_15], %31 {strides = array<i32>} : memref<1x64x64xbf16, #tpu.memory_space<vmem>>, vector<1x64x64xbf16>,
    return
  }
  func.func @transform_0(%arg0: i32, %arg1: i32) -> (i32, i32, i32) {
    %c0_i32 = arith.constant 0 : i32
    %c0_i32_0 = arith.constant 0 : i32
    return %arg0, %arg1, %c0_i32 : i32, i32, i32
  }
  func.func @transform_1(%arg0: i32, %arg1: i32) -> (i32, i32, i32) {
    %c0_i32 = arith.constant 0 : i32
    %c0_i32_0 = arith.constant 0 : i32
    %c0_i32_1 = arith.constant 0 : i32
    return %arg0, %c0_i32, %c0_i32_0 : i32, i32, i32
  }
  func.func @transform_2(%arg0: i32, %arg1: i32) -> (i32, i32, i32) {
    %c0_i32 = arith.constant 0 : i32
    %c0_i32_0 = arith.constant 0 : i32
    %c0_i32_1 = arith.constant 0 : i32
    return %arg0, %c0_i32, %c0_i32_0 : i32, i32, i32
  }
  func.func @transform_3(%arg0: i32, %arg1: i32) -> (i32, i32, i32) {
    %c0_i32 = arith.constant 0 : i32
    %c0_i32_0 = arith.constant 0 : i32
    return %arg0, %arg1, %c0_i32 : i32, i32, i32
  }
}

module attributes {stable_mosaic.version = 11 : i64} {
  func.func @_mse_kernel(%arg0: i32, %arg1: memref<2x768xf32, #tpu.memory_space<vmem>>, %arg2: memref<2x768xf32, #tpu.memory_space<vmem>>, %arg3: memref<2x768xf32, #tpu.memory_space<vmem>>, %arg4: memref<2x1xf32, #tpu.memory_space<vmem>>, %arg5: memref<2x768xf32, #tpu.memory_space<vmem>>) attributes {dimension_semantics = [#tpu.dimension_semantics<arbitrary>], iteration_bounds = array<i64: 1>, scalar_prefetch = 0 : i64, scratch_operands = 1 : i64, tpu.core_type = #tpu.core_type<tc>, window_params = [{transform_indices = @transform_0, window_bounds = array<i64: 2, 768>}, {transform_indices = @transform_1, window_bounds = array<i64: 2, 768>}, {transform_indices = @transform_2, window_bounds = array<i64: 2, 768>}, {pipeline_mode = #tpu.pipeline_mode<synchronous>, transform_indices = @transform_3, window_bounds = array<i64: 2, 1>}]} {
    %c0_i32 = arith.constant 0 : i32
    %0 = arith.cmpi eq, %arg0, %c0_i32 : i32
    %1 = arith.extui %0 : i1 to i32
    %c0_i32_0 = arith.constant 0 : i32
    %2 = arith.cmpi ne, %1, %c0_i32_0 : i32
    scf.if %2 {
      %cst = arith.constant 0.000000e+00 : f32
      %15 = vector.broadcast %cst : f32 to vector<2x768xf32>
      %c0_12 = arith.constant 0 : index
      %c0_13 = arith.constant 0 : index
      %16 = vector.load %arg5[%c0_12, %c0_13] : memref<2x768xf32, #tpu.memory_space<vmem>>, vector<2x768xf32>
      tpu.vector_store %arg5[%c0_12, %c0_13], %15 {strides = array<i32>} : memref<2x768xf32, #tpu.memory_space<vmem>>, vector<2x768xf32>,
    } else {
    }
    %c0 = arith.constant 0 : index
    %c0_1 = arith.constant 0 : index
    %3 = vector.load %arg2[%c0, %c0_1] : memref<2x768xf32, #tpu.memory_space<vmem>>, vector<2x768xf32>
    %c0_2 = arith.constant 0 : index
    %c0_3 = arith.constant 0 : index
    %4 = vector.load %arg1[%c0_2, %c0_3] : memref<2x768xf32, #tpu.memory_space<vmem>>, vector<2x768xf32>
    %5 = arith.subf %3, %4 : vector<2x768xf32>
    %c0_4 = arith.constant 0 : index
    %c0_5 = arith.constant 0 : index
    %6 = vector.load %arg3[%c0_4, %c0_5] : memref<2x768xf32, #tpu.memory_space<vmem>>, vector<2x768xf32>
    %7 = arith.subf %5, %6 : vector<2x768xf32>
    %c0_6 = arith.constant 0 : index
    %c0_7 = arith.constant 0 : index
    %8 = vector.load %arg5[%c0_6, %c0_7] : memref<2x768xf32, #tpu.memory_space<vmem>>, vector<2x768xf32>
    %9 = arith.mulf %7, %7 : vector<2x768xf32>
    %10 = arith.addf %8, %9 : vector<2x768xf32>
    %c0_8 = arith.constant 0 : index
    %c0_9 = arith.constant 0 : index
    %11 = vector.load %arg5[%c0_8, %c0_9] : memref<2x768xf32, #tpu.memory_space<vmem>>, vector<2x768xf32>
    tpu.vector_store %arg5[%c0_8, %c0_9], %10 {strides = array<i32>} : memref<2x768xf32, #tpu.memory_space<vmem>>, vector<2x768xf32>,
    %c0_i32_10 = arith.constant 0 : i32
    %12 = arith.cmpi eq, %arg0, %c0_i32_10 : i32
    %13 = arith.extui %12 : i1 to i32
    %c0_i32_11 = arith.constant 0 : i32
    %14 = arith.cmpi ne, %13, %c0_i32_11 : i32
    scf.if %14 {
      %c0_12 = arith.constant 0 : index
      %c0_13 = arith.constant 0 : index
      %15 = vector.load %arg5[%c0_12, %c0_13] : memref<2x768xf32, #tpu.memory_space<vmem>>, vector<2x768xf32>
      %cst = arith.constant dense<0.000000e+00> : vector<2xf32>
      %16 = vector.multi_reduction <add>, %15, %cst [1] : vector<2x768xf32> to vector<2xf32>
      %17 = vector.shape_cast %16 : vector<2xf32> to vector<2x1xf32>
      %cst_14 = arith.constant 0.00130208337 : f32
      %18 = vector.broadcast %cst_14 : f32 to vector<2x1xf32>
      %19 = arith.mulf %17, %18 : vector<2x1xf32>
      %c0_15 = arith.constant 0 : index
      %c0_16 = arith.constant 0 : index
      %20 = vector.load %arg4[%c0_15, %c0_16] : memref<2x1xf32, #tpu.memory_space<vmem>>, vector<2x1xf32>
      tpu.vector_store %arg4[%c0_15, %c0_16], %19 {strides = array<i32>} : memref<2x1xf32, #tpu.memory_space<vmem>>, vector<2x1xf32>,
    } else {
    }
    return
  }
  func.func @transform_0(%arg0: i32) -> (i32, i32) {
    %c0_i32 = arith.constant 0 : i32
    %c0_i32_0 = arith.constant 0 : i32
    return %c0_i32, %arg0 : i32, i32
  }
  func.func @transform_1(%arg0: i32) -> (i32, i32) {
    %c0_i32 = arith.constant 0 : i32
    %c0_i32_0 = arith.constant 0 : i32
    return %c0_i32, %arg0 : i32, i32
  }
  func.func @transform_2(%arg0: i32) -> (i32, i32) {
    %c0_i32 = arith.constant 0 : i32
    %c0_i32_0 = arith.constant 0 : i32
    return %c0_i32, %arg0 : i32, i32
  }
  func.func @transform_3(%arg0: i32) -> (i32, i32) {
    %c0_i32 = arith.constant 0 : i32
    %c0_i32_0 = arith.constant 0 : i32
    %c0_i32_1 = arith.constant 0 : i32
    return %c0_i32, %c0_i32_0 : i32, i32
  }
}

</mosaic_0001>

<llo_original>
// kernel: _device_forward.24
$region0: #{_device_forward.24}
  #allocation0 [shape = 'u32[]', space=smem, size = 0x4, offset = 0x4, fixed_abs, tag = 'smem constant byte address 0x4 - core index']
  #allocation1 [shape = 'u32[144,128]{1,0:T(1,128)}', space=vmem, size = 0x12000, scoped, tag = 'internal scratch']
  %s0 = inlined_call_operand.vmem [shape: f32[2,1], index: 0, kind: input, shape index: {}]
  %s1 = inlined_call_operand.vmem [shape: f32[2,768], index: 1, kind: input, shape index: {}]
  %s2 = inlined_call_operand.vmem [shape: f32[2,768], index: 2, kind: input, shape index: {}]
  %s3 = inlined_call_operand.vmem [shape: f32[2,768], index: 3, kind: output, shape index: {}]
  %s4 = sld [smem:[#allocation0]]
  $region22: #{_device_forward.24} parent=0
    _
  %s6 = ssub.s32 1, %s4
  %s7 = scalar_select 0, %s6, %s4
  // Predicated region
  $region2: #{_device_forward.24} parent=0 // pred_check
    _
  $region3: #{_device_forward.24} parent=0 // pred_check_branch
    %9 = sbr.rel (0) target = $region5
  $region4: #{_device_forward.24} parent=0 // pred_region
    _
  $region5: #{_device_forward.24} parent=0 // pred_fallthru
    _
  // Predicated region
  $region6: #{_device_forward.24} parent=0 // pred_check
    _
  $region7: #{_device_forward.24} parent=0 // pred_check_branch
    %11 = sbr.rel (0) target = $region9
  $region8: #{_device_forward.24} parent=0 // pred_region
    _
  $region9: #{_device_forward.24} parent=0 // pred_fallthru
    _
  // Predicated region
  $region10: #{_device_forward.24} parent=0 // pred_check
    _
  $region11: #{_device_forward.24} parent=0 // pred_check_branch
    %13 = sbr.rel (0) target = $region13
  $region12: #{_device_forward.24} parent=0 // pred_region
    _
  $region13: #{_device_forward.24} parent=0 // pred_fallthru
    _
  %v14 = vld [vmem:[%s0] sm:$0x3]
  %v15 = vsub.f32 1.0, %v14
  %v16 = vld [vmem:[%s1] sm:$0xff]
  %v17 = vld [vmem:[%s1 + $0x8] sm:$0xf]
  %19 = vset.pattern.permute.xlu0 0
  %20 = vperm.xlu0 %19, %v15
  %v21 = vpop.permute.xlu0 %20
  %v25 = vcombine.high %v16, %v16
  %v27 = vunpack.c.l.s4 1983009808
  %v28 = vunpack.c.0.s8 %v27
  %v29 = vlaneseq
  %v30 = vshrl.u32 %v29, 7
  %v31 = vsub.s32 %v28, %v30
  %v32 = vrot.slane %v16, %v31
  %v34 = vunpack.c.l.s4 1983009808
  %v35 = vunpack.c.0.s8 %v34
  %v36 = vlaneseq
  %v37 = vshrl.u32 %v36, 7
  %v38 = vsub.s32 %v35, %v37
  %v39 = vrot.slane %v25, %v38
  %v40 = vcombine.high %v32, %v32
  %v41 = vcombine.high %v39, %v39
  %v43 = vunpack.c.l.s4 1983009808
  %v44 = vunpack.c.0.s8 %v43
  %v45 = vlaneseq
  %v46 = vshrl.u32 %v45, 7
  %v47 = vsub.s32 %v44, %v46
  %v48 = vrot.slane %v17, %v47
  %v49 = vcombine.high %v48, %v48
  %v56 = vmul.f32 %v21, %v32
  %v57 = vmul.f32 %v21, %v40
  %v58 = vmul.f32 %v21, %v39
  %v59 = vmul.f32 %v21, %v41
  %v60 = vmul.f32 %v21, %v48
  %v61 = vmul.f32 %v21, %v49
  %v62 = vld [vmem:[%s2] sm:$0xff]
  %v63 = vld [vmem:[%s2 + $0x8] sm:$0xf]
  %65 = vset.pattern.permute.xlu0 0
  %66 = vperm.xlu0 %65, %v14
  %v67 = vpop.permute.xlu0 %66
  %v71 = vcombine.high %v62, %v62
  %v73 = vunpack.c.l.s4 1983009808
  %v74 = vunpack.c.0.s8 %v73
  %v75 = vlaneseq
  %v76 = vshrl.u32 %v75, 7
  %v77 = vsub.s32 %v74, %v76
  %v78 = vrot.slane %v62, %v77
  %v80 = vunpack.c.l.s4 1983009808
  %v81 = vunpack.c.0.s8 %v80
  %v82 = vlaneseq
  %v83 = vshrl.u32 %v82, 7
  %v84 = vsub.s32 %v81, %v83
  %v85 = vrot.slane %v71, %v84
  %v86 = vcombine.high %v78, %v78
  %v87 = vcombine.high %v85, %v85
  %v89 = vunpack.c.l.s4 1983009808
  %v90 = vunpack.c.0.s8 %v89
  %v91 = vlaneseq
  %v92 = vshrl.u32 %v91, 7
  %v93 = vsub.s32 %v90, %v92
  %v94 = vrot.slane %v63, %v93
  %v95 = vcombine.high %v94, %v94
  %v102 = vmul.f32 %v67, %v78
  %v103 = vmul.f32 %v67, %v86
  %v104 = vmul.f32 %v67, %v85
  %v105 = vmul.f32 %v67, %v87
  %v106 = vmul.f32 %v67, %v94
  %v107 = vmul.f32 %v67, %v95
  %v108 = vadd.f32 %v56, %v102
  %v109 = vadd.f32 %v57, %v103
  %v110 = vadd.f32 %v58, %v104
  %v111 = vadd.f32 %v59, %v105
  %v112 = vadd.f32 %v60, %v106
  %v113 = vadd.f32 %v61, %v107
  %v120 = vcombine.low %v108, %v109
  %v121 = vcombine.low %v110, %v111
  %v123 = vunpack.c.l.s4 1983009808
  %v124 = vunpack.c.0.s8 %v123
  %v125 = vlaneseq
  %v126 = vshrl.u32 %v125, 7
  %v127 = vsub.s32 %v124, %v126
  %v128 = vrot.slane %v120, %v127
  %v130 = vunpack.c.l.s4 1983009808
  %v131 = vunpack.c.0.s8 %v130
  %v132 = vlaneseq
  %v133 = vshrl.u32 %v132, 7
  %v134 = vsub.s32 %v131, %v133
  %v135 = vrot.slane %v121, %v134
  %v136 = vcombine.low %v128, %v135
  %v137 = vcombine.low %v112, %v113
  %v139 = vunpack.c.l.s4 1983009808
  %v140 = vunpack.c.0.s8 %v139
  %v141 = vlaneseq
  %v142 = vshrl.u32 %v141, 7
  %v143 = vsub.s32 %v140, %v142
  %v144 = vrot.slane %v137, %v143
  %147 = vst [vmem:[%s3] sm:$0xff] %v136
  %148 = vst [vmem:[%s3 + $0x8] sm:$0xf] %v144
  // Predicated region
  $region14: #{_device_forward.24} parent=0 // pred_check
    _
  $region15: #{_device_forward.24} parent=0 // pred_check_branch
    %150 = sbr.rel (0) target = $region17
  $region16: #{_device_forward.24} parent=0 // pred_region
    _
  $region17: #{_device_forward.24} parent=0 // pred_fallthru
    _
  // Predicated region
  $region18: #{_device_forward.24} parent=0 // pred_check
    _
  $region19: #{_device_forward.24} parent=0 // pred_check_branch
    %152 = sbr.rel (0) target = $region21
  $region20: #{_device_forward.24} parent=0 // pred_region
    _
  $region21: #{_device_forward.24} parent=0 // pred_fallthru
    _

// kernel: _device_forward.25
$region0: #{_device_forward.25}
  #allocation0 [shape = 'u32[]', space=smem, size = 0x4, offset = 0x4, fixed_abs, tag = 'smem constant byte address 0x4 - core index']
  #allocation1 [shape = 'u32[144,128]{1,0:T(1,128)}', space=vmem, size = 0x12000, scoped, tag = 'internal scratch']
  #allocation2 [shape = 'f32[128,128]{1,0:T(8,128)}', space=vmem, size = 0x10000, scoped, tag = 'scratch operand']
  %s0 = inlined_call_operand.vmem [shape: bf16[128,128], index: 0, kind: input, shape index: {}]
  %s1 = inlined_call_operand.vmem [shape: bf16[128,128], index: 1, kind: input, shape index: {}]
  %s2 = inlined_call_operand.vmem [shape: f32[1,128], index: 2, kind: input, shape index: {}]
  %s3 = inlined_call_operand.vmem [shape: f32[128,128], index: 3, kind: output, shape index: {}]
  %s4 = sld [smem:[#allocation0]]
  $region30: #{_device_forward.25} parent=0
    _
  %s6 = ssub.s32 1, %s4
  %s7 = scalar_select 0, %s6, %s4
  // Predicated region
  $region2: #{_device_forward.25} parent=0 // pred_check
    _
  $region3: #{_device_forward.25} parent=0 // pred_check_branch
    %9 = sbr.rel (0) target = $region5
  $region4: #{_device_forward.25} parent=0 // pred_region
    _
  $region5: #{_device_forward.25} parent=0 // pred_fallthru
    _
  // Predicated region
  $region6: #{_device_forward.25} parent=0 // pred_check
    _
  $region7: #{_device_forward.25} parent=0 // pred_check_branch
    %11 = sbr.rel (0) target = $region9
  $region8: #{_device_forward.25} parent=0 // pred_region
    _
  $region9: #{_device_forward.25} parent=0 // pred_fallthru
    _
  // Predicated region
  $region10: #{_device_forward.25} parent=0 // pred_check
    _
  $region11: #{_device_forward.25} parent=0 // pred_check_branch
    %13 = sbr.rel (0) target = $region13
  $region12: #{_device_forward.25} parent=0 // pred_region
    _
  $region13: #{_device_forward.25} parent=0 // pred_fallthru
    _
  %p15 = scmp.eq.s32.totalorder 0, 0
  // Predicated region
  $region14: #{_device_forward.25} parent=0 // pred_check
    %p16 = pneg %p15
  $region15: #{_device_forward.25} parent=0 // pred_check_branch
    %18 = sbr.rel (%p16) target = $region17
  $region16: #{_device_forward.25} parent=0 // pred_region
    %19 = vst [vmem:[#allocation2] sm:$0xff] 0.0
    %20 = vst [vmem:[#allocation2 + $0x8] sm:$0xff] 0.0
    %21 = vst [vmem:[#allocation2 + $0x10] sm:$0xff] 0.0
    %22 = vst [vmem:[#allocation2 + $0x18] sm:$0xff] 0.0
    %23 = vst [vmem:[#allocation2 + $0x20] sm:$0xff] 0.0
    %24 = vst [vmem:[#allocation2 + $0x28] sm:$0xff] 0.0
    %25 = vst [vmem:[#allocation2 + $0x30] sm:$0xff] 0.0
    %26 = vst [vmem:[#allocation2 + $0x38] sm:$0xff] 0.0
    %27 = vst [vmem:[#allocation2 + $0x40] sm:$0xff] 0.0
    %28 = vst [vmem:[#allocation2 + $0x48] sm:$0xff] 0.0
    %29 = vst [vmem:[#allocation2 + $0x50] sm:$0xff] 0.0
    %30 = vst [vmem:[#allocation2 + $0x58] sm:$0xff] 0.0
    %31 = vst [vmem:[#allocation2 + $0x60] sm:$0xff] 0.0
    %32 = vst [vmem:[#allocation2 + $0x68] sm:$0xff] 0.0
    %33 = vst [vmem:[#allocation2 + $0x70] sm:$0xff] 0.0
    %34 = vst [vmem:[#allocation2 + $0x78] sm:$0xff] 0.0
  $region17: #{_device_forward.25} parent=0 // pred_fallthru
    _
  %v35 = vld [vmem:[#allocation2] sm:$0xff]
  %v36 = vld [vmem:[#allocation2 + $0x8] sm:$0xff]
  %v37 = vld [vmem:[#allocation2 + $0x10] sm:$0xff]
  %v38 = vld [vmem:[#allocation2 + $0x18] sm:$0xff]
  %v39 = vld [vmem:[#allocation2 + $0x20] sm:$0xff]
  %v40 = vld [vmem:[#allocation2 + $0x28] sm:$0xff]
  %v41 = vld [vmem:[#allocation2 + $0x30] sm:$0xff]
  %v42 = vld [vmem:[#allocation2 + $0x38] sm:$0xff]
  %v43 = vld [vmem:[#allocation2 + $0x40] sm:$0xff]
  %v44 = vld [vmem:[#allocation2 + $0x48] sm:$0xff]
  %v45 = vld [vmem:[#allocation2 + $0x50] sm:$0xff]
  %v46 = vld [vmem:[#allocation2 + $0x58] sm:$0xff]
  %v47 = vld [vmem:[#allocation2 + $0x60] sm:$0xff]
  %v48 = vld [vmem:[#allocation2 + $0x68] sm:$0xff]
  %v49 = vld [vmem:[#allocation2 + $0x70] sm:$0xff]
  %v50 = vld [vmem:[#allocation2 + $0x78] sm:$0xff]
  %v51 = vld [vmem:[%s0] sm:$0xf]
  %v52 = vld [vmem:[%s0 + $0x4] sm:$0xf]
  %v53 = vld [vmem:[%s0 + $0x8] sm:$0xf]
  %v54 = vld [vmem:[%s0 + $0xc] sm:$0xf]
  %v55 = vld [vmem:[%s0 + $0x10] sm:$0xf]
  %v56 = vld [vmem:[%s0 + $0x14] sm:$0xf]
  %v57 = vld [vmem:[%s0 + $0x18] sm:$0xf]
  %v58 = vld [vmem:[%s0 + $0x1c] sm:$0xf]
  %v59 = vld [vmem:[%s0 + $0x20] sm:$0xf]
  %v60 = vld [vmem:[%s0 + $0x24] sm:$0xf]
  %v61 = vld [vmem:[%s0 + $0x28] sm:$0xf]
  %v62 = vld [vmem:[%s0 + $0x2c] sm:$0xf]
  %v63 = vld [vmem:[%s0 + $0x30] sm:$0xf]
  %v64 = vld [vmem:[%s0 + $0x34] sm:$0xf]
  %v65 = vld [vmem:[%s0 + $0x38] sm:$0xf]
  %v66 = vld [vmem:[%s0 + $0x3c] sm:$0xf]
  %v67 = vld [vmem:[%s1] sm:$0xf]
  %v68 = vld [vmem:[%s1 + $0x4] sm:$0xf]
  %v69 = vld [vmem:[%s1 + $0x8] sm:$0xf]
  %v70 = vld [vmem:[%s1 + $0xc] sm:$0xf]
  %v71 = vld [vmem:[%s1 + $0x10] sm:$0xf]
  %v72 = vld [vmem:[%s1 + $0x14] sm:$0xf]
  %v73 = vld [vmem:[%s1 + $0x18] sm:$0xf]
  %v74 = vld [vmem:[%s1 + $0x1c] sm:$0xf]
  %v75 = vld [vmem:[%s1 + $0x20] sm:$0xf]
  %v76 = vld [vmem:[%s1 + $0x24] sm:$0xf]
  %v77 = vld [vmem:[%s1 + $0x28] sm:$0xf]
  %v78 = vld [vmem:[%s1 + $0x2c] sm:$0xf]
  %v79 = vld [vmem:[%s1 + $0x30] sm:$0xf]
  %v80 = vld [vmem:[%s1 + $0x34] sm:$0xf]
  %v81 = vld [vmem:[%s1 + $0x38] sm:$0xf]
  %v82 = vld [vmem:[%s1 + $0x3c] sm:$0xf]
  %v99 = vunpack.c.l.b16 %v51
  %v100 = vunpack.c.l.b16 %v52
  %v101 = vunpack.c.l.b16 %v53
  %v102 = vunpack.c.l.b16 %v54
  %v103 = vunpack.c.l.b16 %v55
  %v104 = vunpack.c.l.b16 %v56
  %v105 = vunpack.c.l.b16 %v57
  %v106 = vunpack.c.l.b16 %v58
  %v107 = vunpack.c.l.b16 %v59
  %v108 = vunpack.c.l.b16 %v60
  %v109 = vunpack.c.l.b16 %v61
  %v110 = vunpack.c.l.b16 %v62
  %v111 = vunpack.c.l.b16 %v63
  %v112 = vunpack.c.l.b16 %v64
  %v113 = vunpack.c.l.b16 %v65
  %v114 = vunpack.c.l.b16 %v66
  %v115 = vpack.c.b16 %v100, %v99
  %v116 = vpack.c.b16 %v102, %v101
  %v117 = vpack.c.b16 %v104, %v103
  %v118 = vpack.c.b16 %v106, %v105
  %v119 = vpack.c.b16 %v108, %v107
  %v120 = vpack.c.b16 %v110, %v109
  %v121 = vpack.c.b16 %v112, %v111
  %v122 = vpack.c.b16 %v114, %v113
  %v147 = vunpack.c.l.b16 %v67
  %v148 = vunpack.c.l.b16 %v68
  %v149 = vunpack.c.l.b16 %v69
  %v150 = vunpack.c.l.b16 %v70
  %v151 = vunpack.c.l.b16 %v71
  %v152 = vunpack.c.l.b16 %v72
  %v153 = vunpack.c.l.b16 %v73
  %v154 = vunpack.c.l.b16 %v74
  %v155 = vunpack.c.l.b16 %v75
  %v156 = vunpack.c.l.b16 %v76
  %v157 = vunpack.c.l.b16 %v77
  %v158 = vunpack.c.l.b16 %v78
  %v159 = vunpack.c.l.b16 %v79
  %v160 = vunpack.c.l.b16 %v80
  %v161 = vunpack.c.l.b16 %v81
  %v162 = vunpack.c.l.b16 %v82
  %v163 = vpack.c.b16 %v148, %v147
  %v164 = vpack.c.b16 %v150, %v149
  %v165 = vpack.c.b16 %v152, %v151
  %v166 = vpack.c.b16 %v154, %v153
  %v167 = vpack.c.b16 %v156, %v155
  %v168 = vpack.c.b16 %v158, %v157
  %v169 = vpack.c.b16 %v160, %v159
  %v170 = vpack.c.b16 %v162, %v161
  %179 = vmatprep.subr.bf16.mxu0 0
  %180 = vmatpush1.bf16.msra.mxu0 %v170
  %181 = vmatprep.subr.bf16.mxu0 0
  %182 = vmatpush1.bf16.msra.mxu0 %v169
  %183 = vmatprep.subr.bf16.mxu0 0
  %184 = vmatpush1.bf16.msra.mxu0 %v168
  %185 = vmatprep.subr.bf16.mxu0 0
  %186 = vmatpush1.bf16.msra.mxu0 %v167
  %187 = vmatprep.subr.bf16.mxu0 0
  %188 = vmatpush1.bf16.msra.mxu0 %v166
  %189 = vmatprep.subr.bf16.mxu0 0
  %190 = vmatpush1.bf16.msra.mxu0 %v165
  %191 = vmatprep.subr.bf16.mxu0 0
  %192 = vmatpush1.bf16.msra.mxu0 %v164
  %193 = vmatprep.subr.bf16.mxu0 0
  %194 = vmatpush1.bf16.msra.mxu0 %v163
  %195 = vmatprep.subr.bf16.mxu0 0
  %196 = vmatpush2.bf16.msra.mxu0 0
  %197 = vmatprep.subr.bf16.mxu0 0
  %198 = vmatpush2.bf16.msra.mxu0 0
  %199 = vmatprep.subr.bf16.mxu0 0
  %200 = vmatpush2.bf16.msra.mxu0 0
  %201 = vmatprep.subr.bf16.mxu0 0
  %202 = vmatpush2.bf16.msra.mxu0 0
  %203 = vmatprep.subr.bf16.mxu0 0
  %204 = vmatpush2.bf16.msra.mxu0 0
  %205 = vmatprep.subr.bf16.mxu0 0
  %206 = vmatpush2.bf16.msra.mxu0 0
  %207 = vmatprep.subr.bf16.mxu0 0
  %208 = vmatpush2.bf16.msra.mxu0 0
  %209 = vmatprep.subr.bf16.mxu0 0
  %210 = vmatpush2.bf16.msra.mxu0 0
  %211 = vmatprep.mubr.bf16.mxu0 0
  %212 = vmatmul.mubr.bf16.gmra.mxu0 %v115
  %v213 = vpop.f32.mrf.mxu0
  %v214 = vadd.f32 0.0, %v213
  %v215 = vpop.f32.mrf.mxu0
  %v216 = vpop.f32.mrf.mxu0
  %v217 = vadd.f32 0.0, %v216
  %v218 = vpop.f32.mrf.mxu0
  %219 = vmatprep.mubr.bf16.mxu0 0
  %220 = vmatmul.mubr.bf16.gmra.mxu0 %v116
  %v221 = vpop.f32.mrf.mxu0
  %v222 = vadd.f32 0.0, %v221
  %v223 = vpop.f32.mrf.mxu0
  %v224 = vpop.f32.mrf.mxu0
  %v225 = vadd.f32 0.0, %v224
  %v226 = vpop.f32.mrf.mxu0
  %227 = vmatprep.mubr.bf16.mxu0 0
  %228 = vmatmul.mubr.bf16.gmra.mxu0 %v117
  %v229 = vpop.f32.mrf.mxu0
  %v230 = vadd.f32 0.0, %v229
  %v231 = vpop.f32.mrf.mxu0
  %v232 = vpop.f32.mrf.mxu0
  %v233 = vadd.f32 0.0, %v232
  %v234 = vpop.f32.mrf.mxu0
  %235 = vmatprep.mubr.bf16.mxu0 0
  %236 = vmatmul.mubr.bf16.gmra.mxu0 %v118
  %v237 = vpop.f32.mrf.mxu0
  %v238 = vadd.f32 0.0, %v237
  %v239 = vpop.f32.mrf.mxu0
  %v240 = vpop.f32.mrf.mxu0
  %v241 = vadd.f32 0.0, %v240
  %v242 = vpop.f32.mrf.mxu0
  %243 = vmatprep.mubr.bf16.mxu0 0
  %244 = vmatmul.mubr.bf16.gmra.mxu0 %v119
  %v245 = vpop.f32.mrf.mxu0
  %v246 = vadd.f32 0.0, %v245
  %v247 = vpop.f32.mrf.mxu0
  %v248 = vpop.f32.mrf.mxu0
  %v249 = vadd.f32 0.0, %v248
  %v250 = vpop.f32.mrf.mxu0
  %251 = vmatprep.mubr.bf16.mxu0 0
  %252 = vmatmul.mubr.bf16.gmra.mxu0 %v120
  %v253 = vpop.f32.mrf.mxu0
  %v254 = vadd.f32 0.0, %v253
  %v255 = vpop.f32.mrf.mxu0
  %v256 = vpop.f32.mrf.mxu0
  %v257 = vadd.f32 0.0, %v256
  %v258 = vpop.f32.mrf.mxu0
  %259 = vmatprep.mubr.bf16.mxu0 0
  %260 = vmatmul.mubr.bf16.gmra.mxu0 %v121
  %v261 = vpop.f32.mrf.mxu0
  %v262 = vadd.f32 0.0, %v261
  %v263 = vpop.f32.mrf.mxu0
  %v264 = vpop.f32.mrf.mxu0
  %v265 = vadd.f32 0.0, %v264
  %v266 = vpop.f32.mrf.mxu0
  %267 = vmatprep.mubr.bf16.mxu0 0
  %268 = vmatmul.mubr.bf16.gmra.mxu0 %v122
  %v269 = vpop.f32.mrf.mxu0
  %v270 = vadd.f32 0.0, %v269
  %v271 = vpop.f32.mrf.mxu0
  %v272 = vpop.f32.mrf.mxu0
  %v273 = vadd.f32 0.0, %v272
  %v274 = vpop.f32.mrf.mxu0
  %275 = vdwg.mxu0
  %v276 = vadd.f32 %v35, %v214
  %v277 = vadd.f32 %v36, %v217
  %v278 = vadd.f32 %v37, %v222
  %v279 = vadd.f32 %v38, %v225
  %v280 = vadd.f32 %v39, %v230
  %v281 = vadd.f32 %v40, %v233
  %v282 = vadd.f32 %v41, %v238
  %v283 = vadd.f32 %v42, %v241
  %v284 = vadd.f32 %v43, %v246
  %v285 = vadd.f32 %v44, %v249
  %v286 = vadd.f32 %v45, %v254
  %v287 = vadd.f32 %v46, %v257
  %v288 = vadd.f32 %v47, %v262
  %v289 = vadd.f32 %v48, %v265
  %v290 = vadd.f32 %v49, %v270
  %v291 = vadd.f32 %v50, %v273
  %292 = vst [vmem:[#allocation2] sm:$0xff] %v276
  %293 = vst [vmem:[#allocation2 + $0x8] sm:$0xff] %v277
  %294 = vst [vmem:[#allocation2 + $0x10] sm:$0xff] %v278
  %295 = vst [vmem:[#allocation2 + $0x18] sm:$0xff] %v279
  %296 = vst [vmem:[#allocation2 + $0x20] sm:$0xff] %v280
  %297 = vst [vmem:[#allocation2 + $0x28] sm:$0xff] %v281
  %298 = vst [vmem:[#allocation2 + $0x30] sm:$0xff] %v282
  %299 = vst [vmem:[#allocation2 + $0x38] sm:$0xff] %v283
  %300 = vst [vmem:[#allocation2 + $0x40] sm:$0xff] %v284
  %301 = vst [vmem:[#allocation2 + $0x48] sm:$0xff] %v285
  %302 = vst [vmem:[#allocation2 + $0x50] sm:$0xff] %v286
  %303 = vst [vmem:[#allocation2 + $0x58] sm:$0xff] %v287
  %304 = vst [vmem:[#allocation2 + $0x60] sm:$0xff] %v288
  %305 = vst [vmem:[#allocation2 + $0x68] sm:$0xff] %v289
  %306 = vst [vmem:[#allocation2 + $0x70] sm:$0xff] %v290
  %307 = vst [vmem:[#allocation2 + $0x78] sm:$0xff] %v291
  // Predicated region
  $region18: #{_device_forward.25} parent=0 // pred_check
    %p308 = pneg %p15
  $region19: #{_device_forward.25} parent=0 // pred_check_branch
    %310 = sbr.rel (%p308) target = $region21
  $region20: #{_device_forward.25} parent=0 // pred_region
    %v311 = vld [vmem:[#allocation2] sm:$0xff]
    %v312 = vld [vmem:[#allocation2 + $0x8] sm:$0xff]
    %v313 = vld [vmem:[#allocation2 + $0x10] sm:$0xff]
    %v314 = vld [vmem:[#allocation2 + $0x18] sm:$0xff]
    %v315 = vld [vmem:[#allocation2 + $0x20] sm:$0xff]
    %v316 = vld [vmem:[#allocation2 + $0x28] sm:$0xff]
    %v317 = vld [vmem:[#allocation2 + $0x30] sm:$0xff]
    %v318 = vld [vmem:[#allocation2 + $0x38] sm:$0xff]
    %v319 = vld [vmem:[#allocation2 + $0x40] sm:$0xff]
    %v320 = vld [vmem:[#allocation2 + $0x48] sm:$0xff]
    %v321 = vld [vmem:[#allocation2 + $0x50] sm:$0xff]
    %v322 = vld [vmem:[#allocation2 + $0x58] sm:$0xff]
    %v323 = vld [vmem:[#allocation2 + $0x60] sm:$0xff]
    %v324 = vld [vmem:[#allocation2 + $0x68] sm:$0xff]
    %v325 = vld [vmem:[#allocation2 + $0x70] sm:$0xff]
    %v326 = vld [vmem:[#allocation2 + $0x78] sm:$0xff]
    %v327 = vld [vmem:[%s2] sm:$0x1]
    %v329 = vlaneseq
    %v330 = vshrl.u32 %v329, 7
    %v331 = vsub.s32 0, %v330
    %v332 = vrot.slane %v327, %v331
    %v334 = vadd.f32 %v311, %v332
    %v335 = vadd.f32 %v312, %v332
    %v336 = vadd.f32 %v313, %v332
    %v337 = vadd.f32 %v314, %v332
    %v338 = vadd.f32 %v315, %v332
    %v339 = vadd.f32 %v316, %v332
    %v340 = vadd.f32 %v317, %v332
    %v341 = vadd.f32 %v318, %v332
    %v342 = vadd.f32 %v319, %v332
    %v343 = vadd.f32 %v320, %v332
    %v344 = vadd.f32 %v321, %v332
    %v345 = vadd.f32 %v322, %v332
    %v346 = vadd.f32 %v323, %v332
    %v347 = vadd.f32 %v324, %v332
    %v348 = vadd.f32 %v325, %v332
    %v349 = vadd.f32 %v326, %v332
    %350 = vst [vmem:[%s3] sm:$0xff] %v334
    %351 = vst [vmem:[%s3 + $0x8] sm:$0xff] %v335
    %352 = vst [vmem:[%s3 + $0x10] sm:$0xff] %v336
    %353 = vst [vmem:[%s3 + $0x18] sm:$0xff] %v337
    %354 = vst [vmem:[%s3 + $0x20] sm:$0xff] %v338
    %355 = vst [vmem:[%s3 + $0x28] sm:$0xff] %v339
    %356 = vst [vmem:[%s3 + $0x30] sm:$0xff] %v340
    %357 = vst [vmem:[%s3 + $0x38] sm:$0xff] %v341
    %358 = vst [vmem:[%s3 + $0x40] sm:$0xff] %v342
    %359 = vst [vmem:[%s3 + $0x48] sm:$0xff] %v343
    %360 = vst [vmem:[%s3 + $0x50] sm:$0xff] %v344
    %361 = vst [vmem:[%s3 + $0x58] sm:$0xff] %v345
    %362 = vst [vmem:[%s3 + $0x60] sm:$0xff] %v346
    %363 = vst [vmem:[%s3 + $0x68] sm:$0xff] %v347
    %364 = vst [vmem:[%s3 + $0x70] sm:$0xff] %v348
    %365 = vst [vmem:[%s3 + $0x78] sm:$0xff] %v349
  $region21: #{_device_forward.25} parent=0 // pred_fallthru
    _
  // Predicated region
  $region22: #{_device_forward.25} parent=0 // pred_check
    _
  $region23: #{_device_forward.25} parent=0 // pred_check_branch
    %367 = sbr.rel (0) target = $region25
  $region24: #{_device_forward.25} parent=0 // pred_region
    _
  $region25: #{_device_forward.25} parent=0 // pred_fallthru
    _
  // Predicated region
  $region26: #{_device_forward.25} parent=0 // pred_check
    _
  $region27: #{_device_forward.25} parent=0 // pred_check_branch
    %369 = sbr.rel (0) target = $region29
  $region28: #{_device_forward.25} parent=0 // pred_region
    _
  $region29: #{_device_forward.25} parent=0 // pred_fallthru
    _

// kernel: _device_forward.27
$region0: #{_device_forward.27}
  #allocation0 [shape = 'u32[]', space=smem, size = 0x4, offset = 0x4, fixed_abs, tag = 'smem constant byte address 0x4 - core index']
  #allocation1 [shape = 'u32[144,128]{1,0:T(1,128)}', space=vmem, size = 0x12000, scoped, tag = 'internal scratch']
  #allocation2 [shape = 'f32[16,128]{1,0:T(8,128)}', space=vmem, size = 0x2000, scoped, tag = 'scratch operand']
  %s0 = inlined_call_operand.vmem [shape: bf16[16,128], index: 0, kind: input, shape index: {}]
  %s1 = inlined_call_operand.vmem [shape: bf16[128,128], index: 1, kind: input, shape index: {}]
  %s2 = inlined_call_operand.vmem [shape: f32[1,128], index: 2, kind: input, shape index: {}]
  %s3 = inlined_call_operand.vmem [shape: f32[16,128], index: 3, kind: output, shape index: {}]
  %s4 = sld [smem:[#allocation0]]
  $region30: #{_device_forward.27} parent=0
    _
  %s6 = ssub.s32 1, %s4
  %s7 = scalar_select 0, %s6, %s4
  // Predicated region
  $region2: #{_device_forward.27} parent=0 // pred_check
    _
  $region3: #{_device_forward.27} parent=0 // pred_check_branch
    %9 = sbr.rel (0) target = $region5
  $region4: #{_device_forward.27} parent=0 // pred_region
    _
  $region5: #{_device_forward.27} parent=0 // pred_fallthru
    _
  // Predicated region
  $region6: #{_device_forward.27} parent=0 // pred_check
    _
  $region7: #{_device_forward.27} parent=0 // pred_check_branch
    %11 = sbr.rel (0) target = $region9
  $region8: #{_device_forward.27} parent=0 // pred_region
    _
  $region9: #{_device_forward.27} parent=0 // pred_fallthru
    _
  // Predicated region
  $region10: #{_device_forward.27} parent=0 // pred_check
    _
  $region11: #{_device_forward.27} parent=0 // pred_check_branch
    %13 = sbr.rel (0) target = $region13
  $region12: #{_device_forward.27} parent=0 // pred_region
    _
  $region13: #{_device_forward.27} parent=0 // pred_fallthru
    _
  %p15 = scmp.eq.s32.totalorder 0, 0
  // Predicated region
  $region14: #{_device_forward.27} parent=0 // pred_check
    %p16 = pneg %p15
  $region15: #{_device_forward.27} parent=0 // pred_check_branch
    %18 = sbr.rel (%p16) target = $region17
  $region16: #{_device_forward.27} parent=0 // pred_region
    %19 = vst [vmem:[#allocation2] sm:$0xff] 0.0
    %20 = vst [vmem:[#allocation2 + $0x8] sm:$0xff] 0.0
  $region17: #{_device_forward.27} parent=0 // pred_fallthru
    _
  %v21 = vld [vmem:[#allocation2] sm:$0xff]
  %v22 = vld [vmem:[#allocation2 + $0x8] sm:$0xff]
  %v23 = vld [vmem:[%s0] sm:$0xf]
  %v24 = vld [vmem:[%s0 + $0x4] sm:$0xf]
  %v25 = vld [vmem:[%s1] sm:$0xf]
  %v26 = vld [vmem:[%s1 + $0x4] sm:$0xf]
  %v27 = vld [vmem:[%s1 + $0x8] sm:$0xf]
  %v28 = vld [vmem:[%s1 + $0xc] sm:$0xf]
  %v29 = vld [vmem:[%s1 + $0x10] sm:$0xf]
  %v30 = vld [vmem:[%s1 + $0x14] sm:$0xf]
  %v31 = vld [vmem:[%s1 + $0x18] sm:$0xf]
  %v32 = vld [vmem:[%s1 + $0x1c] sm:$0xf]
  %v33 = vld [vmem:[%s1 + $0x20] sm:$0xf]
  %v34 = vld [vmem:[%s1 + $0x24] sm:$0xf]
  %v35 = vld [vmem:[%s1 + $0x28] sm:$0xf]
  %v36 = vld [vmem:[%s1 + $0x2c] sm:$0xf]
  %v37 = vld [vmem:[%s1 + $0x30] sm:$0xf]
  %v38 = vld [vmem:[%s1 + $0x34] sm:$0xf]
  %v39 = vld [vmem:[%s1 + $0x38] sm:$0xf]
  %v40 = vld [vmem:[%s1 + $0x3c] sm:$0xf]
  %v43 = vunpack.c.l.b16 %v23
  %v44 = vunpack.c.l.b16 %v24
  %v45 = vpack.c.b16 %v44, %v43
  %v63 = vunpack.c.l.b16 %v25
  %v64 = vunpack.c.l.b16 %v26
  %v65 = vunpack.c.l.b16 %v27
  %v66 = vunpack.c.l.b16 %v28
  %v67 = vunpack.c.l.b16 %v29
  %v68 = vunpack.c.l.b16 %v30
  %v69 = vunpack.c.l.b16 %v31
  %v70 = vunpack.c.l.b16 %v32
  %v71 = vunpack.c.l.b16 %v33
  %v72 = vunpack.c.l.b16 %v34
  %v73 = vunpack.c.l.b16 %v35
  %v74 = vunpack.c.l.b16 %v36
  %v75 = vunpack.c.l.b16 %v37
  %v76 = vunpack.c.l.b16 %v38
  %v77 = vunpack.c.l.b16 %v39
  %v78 = vunpack.c.l.b16 %v40
  %v79 = vpack.c.b16 %v64, %v63
  %v80 = vpack.c.b16 %v66, %v65
  %v81 = vpack.c.b16 %v68, %v67
  %v82 = vpack.c.b16 %v70, %v69
  %v83 = vpack.c.b16 %v72, %v71
  %v84 = vpack.c.b16 %v74, %v73
  %v85 = vpack.c.b16 %v76, %v75
  %v86 = vpack.c.b16 %v78, %v77
  %95 = vmatprep.subr.bf16.mxu0 0
  %96 = vmatpush1.bf16.msra.mxu0 %v86
  %97 = vmatprep.subr.bf16.mxu0 0
  %98 = vmatpush1.bf16.msra.mxu0 %v85
  %99 = vmatprep.subr.bf16.mxu0 0
  %100 = vmatpush1.bf16.msra.mxu0 %v84
  %101 = vmatprep.subr.bf16.mxu0 0
  %102 = vmatpush1.bf16.msra.mxu0 %v83
  %103 = vmatprep.subr.bf16.mxu0 0
  %104 = vmatpush1.bf16.msra.mxu0 %v82
  %105 = vmatprep.subr.bf16.mxu0 0
  %106 = vmatpush1.bf16.msra.mxu0 %v81
  %107 = vmatprep.subr.bf16.mxu0 0
  %108 = vmatpush1.bf16.msra.mxu0 %v80
  %109 = vmatprep.subr.bf16.mxu0 0
  %110 = vmatpush1.bf16.msra.mxu0 %v79
  %111 = vmatprep.subr.bf16.mxu0 0
  %112 = vmatpush2.bf16.msra.mxu0 0
  %113 = vmatprep.subr.bf16.mxu0 0
  %114 = vmatpush2.bf16.msra.mxu0 0
  %115 = vmatprep.subr.bf16.mxu0 0
  %116 = vmatpush2.bf16.msra.mxu0 0
  %117 = vmatprep.subr.bf16.mxu0 0
  %118 = vmatpush2.bf16.msra.mxu0 0
  %119 = vmatprep.subr.bf16.mxu0 0
  %120 = vmatpush2.bf16.msra.mxu0 0
  %121 = vmatprep.subr.bf16.mxu0 0
  %122 = vmatpush2.bf16.msra.mxu0 0
  %123 = vmatprep.subr.bf16.mxu0 0
  %124 = vmatpush2.bf16.msra.mxu0 0
  %125 = vmatprep.subr.bf16.mxu0 0
  %126 = vmatpush2.bf16.msra.mxu0 0
  %127 = vmatprep.mubr.bf16.mxu0 0
  %128 = vmatmul.mubr.bf16.gmra.mxu0 %v45
  %v129 = vpop.f32.mrf.mxu0
  %v130 = vadd.f32 0.0, %v129
  %v131 = vpop.f32.mrf.mxu0
  %v132 = vpop.f32.mrf.mxu0
  %v133 = vadd.f32 0.0, %v132
  %v134 = vpop.f32.mrf.mxu0
  %135 = vdwg.mxu0
  %v136 = vadd.f32 %v21, %v130
  %v137 = vadd.f32 %v22, %v133
  %138 = vst [vmem:[#allocation2] sm:$0xff] %v136
  %139 = vst [vmem:[#allocation2 + $0x8] sm:$0xff] %v137
  // Predicated region
  $region18: #{_device_forward.27} parent=0 // pred_check
    %p140 = pneg %p15
  $region19: #{_device_forward.27} parent=0 // pred_check_branch
    %142 = sbr.rel (%p140) target = $region21
  $region20: #{_device_forward.27} parent=0 // pred_region
    %v143 = vld [vmem:[#allocation2] sm:$0xff]
    %v144 = vld [vmem:[#allocation2 + $0x8] sm:$0xff]
    %v145 = vld [vmem:[%s2] sm:$0x1]
    %v147 = vlaneseq
    %v148 = vshrl.u32 %v147, 7
    %v149 = vsub.s32 0, %v148
    %v150 = vrot.slane %v145, %v149
    %v152 = vadd.f32 %v143, %v150
    %v153 = vadd.f32 %v144, %v150
    %154 = vst [vmem:[%s3] sm:$0xff] %v152
    %155 = vst [vmem:[%s3 + $0x8] sm:$0xff] %v153
  $region21: #{_device_forward.27} parent=0 // pred_fallthru
    _
  // Predicated region
  $region22: #{_device_forward.27} parent=0 // pred_check
    _
  $region23: #{_device_forward.27} parent=0 // pred_check_branch
    %157 = sbr.rel (0) target = $region25
  $region24: #{_device_forward.27} parent=0 // pred_region
    _
  $region25: #{_device_forward.27} parent=0 // pred_fallthru
    _
  // Predicated region
  $region26: #{_device_forward.27} parent=0 // pred_check
    _
  $region27: #{_device_forward.27} parent=0 // pred_check_branch
    %159 = sbr.rel (0) target = $region29
  $region28: #{_device_forward.27} parent=0 // pred_region
    _
  $region29: #{_device_forward.27} parent=0 // pred_fallthru
    _

// kernel: _device_forward.26
$region0: #{_device_forward.26}
  #allocation0 [shape = 'u32[]', space=smem, size = 0x4, offset = 0x4, fixed_abs, tag = 'smem constant byte address 0x4 - core index']
  #allocation1 [shape = 'u32[144,128]{1,0:T(1,128)}', space=vmem, size = 0x12000, scoped, tag = 'internal scratch']
  #allocation2 [shape = 'f32[16,128]{1,0:T(8,128)}', space=vmem, size = 0x2000, scoped, tag = 'scratch operand']
  %s0 = inlined_call_operand.vmem [shape: bf16[16,256], index: 0, kind: input, shape index: {}]
  %s1 = inlined_call_operand.vmem [shape: bf16[256,128], index: 1, kind: input, shape index: {}]
  %s2 = inlined_call_operand.vmem [shape: f32[1,128], index: 2, kind: input, shape index: {}]
  %s3 = inlined_call_operand.vmem [shape: f32[16,128], index: 3, kind: output, shape index: {}]
  %s4 = sld [smem:[#allocation0]]
  $region30: #{_device_forward.26} parent=0
    _
  %s6 = ssub.s32 1, %s4
  %s7 = scalar_select 0, %s6, %s4
  // Predicated region
  $region2: #{_device_forward.26} parent=0 // pred_check
    _
  $region3: #{_device_forward.26} parent=0 // pred_check_branch
    %9 = sbr.rel (0) target = $region5
  $region4: #{_device_forward.26} parent=0 // pred_region
    _
  $region5: #{_device_forward.26} parent=0 // pred_fallthru
    _
  // Predicated region
  $region6: #{_device_forward.26} parent=0 // pred_check
    _
  $region7: #{_device_forward.26} parent=0 // pred_check_branch
    %11 = sbr.rel (0) target = $region9
  $region8: #{_device_forward.26} parent=0 // pred_region
    _
  $region9: #{_device_forward.26} parent=0 // pred_fallthru
    _
  // Predicated region
  $region10: #{_device_forward.26} parent=0 // pred_check
    _
  $region11: #{_device_forward.26} parent=0 // pred_check_branch
    %13 = sbr.rel (0) target = $region13
  $region12: #{_device_forward.26} parent=0 // pred_region
    _
  $region13: #{_device_forward.26} parent=0 // pred_fallthru
    _
  %p15 = scmp.eq.s32.totalorder 0, 0
  // Predicated region
  $region14: #{_device_forward.26} parent=0 // pred_check
    %p16 = pneg %p15
  $region15: #{_device_forward.26} parent=0 // pred_check_branch
    %18 = sbr.rel (%p16) target = $region17
  $region16: #{_device_forward.26} parent=0 // pred_region
    %19 = vst [vmem:[#allocation2] sm:$0xff] 0.0
    %20 = vst [vmem:[#allocation2 + $0x8] sm:$0xff] 0.0
  $region17: #{_device_forward.26} parent=0 // pred_fallthru
    _
  %v21 = vld [vmem:[#allocation2] sm:$0xff]
  %v22 = vld [vmem:[#allocation2 + $0x8] sm:$0xff]
  %v23 = vld [vmem:[%s0] sm:$0xff]
  %v24 = vld [vmem:[%s0 + $0x8] sm:$0xff]
  %v25 = vld [vmem:[%s1] sm:$0xf]
  %v26 = vld [vmem:[%s1 + $0x4] sm:$0xf]
  %v27 = vld [vmem:[%s1 + $0x8] sm:$0xf]
  %v28 = vld [vmem:[%s1 + $0xc] sm:$0xf]
  %v29 = vld [vmem:[%s1 + $0x10] sm:$0xf]
  %v30 = vld [vmem:[%s1 + $0x14] sm:$0xf]
  %v31 = vld [vmem:[%s1 + $0x18] sm:$0xf]
  %v32 = vld [vmem:[%s1 + $0x1c] sm:$0xf]
  %v33 = vld [vmem:[%s1 + $0x20] sm:$0xf]
  %v34 = vld [vmem:[%s1 + $0x24] sm:$0xf]
  %v35 = vld [vmem:[%s1 + $0x28] sm:$0xf]
  %v36 = vld [vmem:[%s1 + $0x2c] sm:$0xf]
  %v37 = vld [vmem:[%s1 + $0x30] sm:$0xf]
  %v38 = vld [vmem:[%s1 + $0x34] sm:$0xf]
  %v39 = vld [vmem:[%s1 + $0x38] sm:$0xf]
  %v40 = vld [vmem:[%s1 + $0x3c] sm:$0xf]
  %v41 = vld [vmem:[%s1 + $0x40] sm:$0xf]
  %v42 = vld [vmem:[%s1 + $0x44] sm:$0xf]
  %v43 = vld [vmem:[%s1 + $0x48] sm:$0xf]
  %v44 = vld [vmem:[%s1 + $0x4c] sm:$0xf]
  %v45 = vld [vmem:[%s1 + $0x50] sm:$0xf]
  %v46 = vld [vmem:[%s1 + $0x54] sm:$0xf]
  %v47 = vld [vmem:[%s1 + $0x58] sm:$0xf]
  %v48 = vld [vmem:[%s1 + $0x5c] sm:$0xf]
  %v49 = vld [vmem:[%s1 + $0x60] sm:$0xf]
  %v50 = vld [vmem:[%s1 + $0x64] sm:$0xf]
  %v51 = vld [vmem:[%s1 + $0x68] sm:$0xf]
  %v52 = vld [vmem:[%s1 + $0x6c] sm:$0xf]
  %v53 = vld [vmem:[%s1 + $0x70] sm:$0xf]
  %v54 = vld [vmem:[%s1 + $0x74] sm:$0xf]
  %v55 = vld [vmem:[%s1 + $0x78] sm:$0xf]
  %v56 = vld [vmem:[%s1 + $0x7c] sm:$0xf]
  %v59 = vunpack.c.l.b16 %v23
  %v60 = vunpack.c.h.b16 %v23
  %v61 = vunpack.c.l.b16 %v24
  %v62 = vunpack.c.h.b16 %v24
  %v63 = vpack.c.b16 %v61, %v59
  %v64 = vpack.c.b16 %v62, %v60
  %v99 = vunpack.c.l.b16 %v25
  %v100 = vunpack.c.l.b16 %v26
  %v101 = vunpack.c.l.b16 %v27
  %v102 = vunpack.c.l.b16 %v28
  %v103 = vunpack.c.l.b16 %v29
  %v104 = vunpack.c.l.b16 %v30
  %v105 = vunpack.c.l.b16 %v31
  %v106 = vunpack.c.l.b16 %v32
  %v107 = vunpack.c.l.b16 %v33
  %v108 = vunpack.c.l.b16 %v34
  %v109 = vunpack.c.l.b16 %v35
  %v110 = vunpack.c.l.b16 %v36
  %v111 = vunpack.c.l.b16 %v37
  %v112 = vunpack.c.l.b16 %v38
  %v113 = vunpack.c.l.b16 %v39
  %v114 = vunpack.c.l.b16 %v40
  %v115 = vunpack.c.l.b16 %v41
  %v116 = vunpack.c.l.b16 %v42
  %v117 = vunpack.c.l.b16 %v43
  %v118 = vunpack.c.l.b16 %v44
  %v119 = vunpack.c.l.b16 %v45
  %v120 = vunpack.c.l.b16 %v46
  %v121 = vunpack.c.l.b16 %v47
  %v122 = vunpack.c.l.b16 %v48
  %v123 = vunpack.c.l.b16 %v49
  %v124 = vunpack.c.l.b16 %v50
  %v125 = vunpack.c.l.b16 %v51
  %v126 = vunpack.c.l.b16 %v52
  %v127 = vunpack.c.l.b16 %v53
  %v128 = vunpack.c.l.b16 %v54
  %v129 = vunpack.c.l.b16 %v55
  %v130 = vunpack.c.l.b16 %v56
  %v131 = vpack.c.b16 %v100, %v99
  %v132 = vpack.c.b16 %v102, %v101
  %v133 = vpack.c.b16 %v104, %v103
  %v134 = vpack.c.b16 %v106, %v105
  %v135 = vpack.c.b16 %v108, %v107
  %v136 = vpack.c.b16 %v110, %v109
  %v137 = vpack.c.b16 %v112, %v111
  %v138 = vpack.c.b16 %v114, %v113
  %v139 = vpack.c.b16 %v116, %v115
  %v140 = vpack.c.b16 %v118, %v117
  %v141 = vpack.c.b16 %v120, %v119
  %v142 = vpack.c.b16 %v122, %v121
  %v143 = vpack.c.b16 %v124, %v123
  %v144 = vpack.c.b16 %v126, %v125
  %v145 = vpack.c.b16 %v128, %v127
  %v146 = vpack.c.b16 %v130, %v129
  %163 = vmatprep.subr.bf16.mxu0 0
  %164 = vmatpush1.bf16.msra.mxu0 %v138
  %165 = vmatprep.subr.bf16.mxu0 0
  %166 = vmatpush1.bf16.msra.mxu0 %v137
  %167 = vmatprep.subr.bf16.mxu0 0
  %168 = vmatpush1.bf16.msra.mxu0 %v136
  %169 = vmatprep.subr.bf16.mxu0 0
  %170 = vmatpush1.bf16.msra.mxu0 %v135
  %171 = vmatprep.subr.bf16.mxu0 0
  %172 = vmatpush1.bf16.msra.mxu0 %v134
  %173 = vmatprep.subr.bf16.mxu0 0
  %174 = vmatpush1.bf16.msra.mxu0 %v133
  %175 = vmatprep.subr.bf16.mxu0 0
  %176 = vmatpush1.bf16.msra.mxu0 %v132
  %177 = vmatprep.subr.bf16.mxu0 0
  %178 = vmatpush1.bf16.msra.mxu0 %v131
  %179 = vmatprep.subr.bf16.mxu0 0
  %180 = vmatpush2.bf16.msra.mxu0 %v146
  %181 = vmatprep.subr.bf16.mxu0 0
  %182 = vmatpush2.bf16.msra.mxu0 %v145
  %183 = vmatprep.subr.bf16.mxu0 0
  %184 = vmatpush2.bf16.msra.mxu0 %v144
  %185 = vmatprep.subr.bf16.mxu0 0
  %186 = vmatpush2.bf16.msra.mxu0 %v143
  %187 = vmatprep.subr.bf16.mxu0 0
  %188 = vmatpush2.bf16.msra.mxu0 %v142
  %189 = vmatprep.subr.bf16.mxu0 0
  %190 = vmatpush2.bf16.msra.mxu0 %v141
  %191 = vmatprep.subr.bf16.mxu0 0
  %192 = vmatpush2.bf16.msra.mxu0 %v140
  %193 = vmatprep.subr.bf16.mxu0 0
  %194 = vmatpush2.bf16.msra.mxu0 %v139
  %195 = vmatprep.mubr.bf16.mxu0 %v64
  %196 = vmatmul.mubr.bf16.gmra.mxu0 %v63
  %v197 = vpop.f32.mrf.mxu0
  %v198 = vadd.f32 0.0, %v197
  %v199 = vpop.f32.mrf.mxu0
  %v200 = vpop.f32.mrf.mxu0
  %v201 = vadd.f32 0.0, %v200
  %v202 = vpop.f32.mrf.mxu0
  %203 = vdwg.mxu0
  %v204 = vadd.f32 %v21, %v198
  %v205 = vadd.f32 %v22, %v201
  %206 = vst [vmem:[#allocation2] sm:$0xff] %v204
  %207 = vst [vmem:[#allocation2 + $0x8] sm:$0xff] %v205
  // Predicated region
  $region18: #{_device_forward.26} parent=0 // pred_check
    %p208 = pneg %p15
  $region19: #{_device_forward.26} parent=0 // pred_check_branch
    %210 = sbr.rel (%p208) target = $region21
  $region20: #{_device_forward.26} parent=0 // pred_region
    %v211 = vld [vmem:[#allocation2] sm:$0xff]
    %v212 = vld [vmem:[#allocation2 + $0x8] sm:$0xff]
    %v213 = vld [vmem:[%s2] sm:$0x1]
    %v215 = vlaneseq
    %v216 = vshrl.u32 %v215, 7
    %v217 = vsub.s32 0, %v216
    %v218 = vrot.slane %v213, %v217
    %v220 = vadd.f32 %v211, %v218
    %v221 = vadd.f32 %v212, %v218
    %222 = vst [vmem:[%s3] sm:$0xff] %v220
    %223 = vst [vmem:[%s3 + $0x8] sm:$0xff] %v221
  $region21: #{_device_forward.26} parent=0 // pred_fallthru
    _
  // Predicated region
  $region22: #{_device_forward.26} parent=0 // pred_check
    _
  $region23: #{_device_forward.26} parent=0 // pred_check_branch
    %225 = sbr.rel (0) target = $region25
  $region24: #{_device_forward.26} parent=0 // pred_region
    _
  $region25: #{_device_forward.26} parent=0 // pred_fallthru
    _
  // Predicated region
  $region26: #{_device_forward.26} parent=0 // pred_check
    _
  $region27: #{_device_forward.26} parent=0 // pred_check_branch
    %227 = sbr.rel (0) target = $region29
  $region28: #{_device_forward.26} parent=0 // pred_region
    _
  $region29: #{_device_forward.26} parent=0 // pred_fallthru
    _

// kernel: _device_forward.28
$region0: #{_device_forward.28}
  #allocation0 [shape = 'u32[]', space=smem, size = 0x4, offset = 0x4, fixed_abs, tag = 'smem constant byte address 0x4 - core index']
  #allocation1 [shape = 'u32[144,128]{1,0:T(1,128)}', space=vmem, size = 0x12000, scoped, tag = 'internal scratch']
  #allocation2 [shape = 'f32[16,256]{1,0:T(8,128)}', space=vmem, size = 0x4000, scoped, tag = 'scratch operand']
  %s0 = inlined_call_operand.vmem [shape: bf16[16,128], index: 0, kind: input, shape index: {}]
  %s1 = inlined_call_operand.vmem [shape: bf16[128,1024], index: 1, kind: input, shape index: {}]
  %s2 = inlined_call_operand.vmem [shape: f32[1,1024], index: 2, kind: input, shape index: {}]
  %s3 = inlined_call_operand.vmem [shape: f32[16,1024], index: 3, kind: output, shape index: {}]
  %s4 = sld [smem:[#allocation0]]
  $region110: #{_device_forward.28} parent=0
    _
  %s6 = ssub.s32 1, %s4
  %s7 = scalar_select 0, %s6, %s4
  $region1: #{_device_forward.28} parent=0
    #allocation3 [shape = 'u8[131072]{0}', space=vmem, size = 0x20000, scoped, tag = 'input window, operand 1']
    #allocation4 [shape = 'u8[32768]{0}', space=vmem, size = 0x8000, scoped, tag = 'output window, operand 0']
    loop: start=0, step=1, limit=6
    $region2: #{_device_forward.28} parent=1 // loop_pre_header
      _
    $region3: #{_device_forward.28} parent=1 // loop_header
      %s9 = sphi 0, %s13
      %p10 = scmp.ge.s32.totalorder %s9, 6
      %s16 = sphi 0, %s35
      %s17 = sphi 0, %s31
      %s18 = sphi 0, %s27
      %s19 = sphi 0, %s16
      %s20 = sphi 0, %s17
      %s21 = sphi 0, %s18
      %s22 = sphi 0, %s19
      %s23 = sphi 0, %s20
      %s24 = sphi 0, %s21
      %s40 = sphi 0, %s42
      %s43 = sphi 0, %s40
      %s44 = sphi 0, %s43
      %s60 = sphi 0, %s44
      %s68 = sphi 0, %s70
      %s71 = sphi 0, %s68
      %s72 = sphi 0, %s71
      %s88 = sphi 0, %s72
      %s94 = sphi 0, %s96
      %s97 = sphi 0, %s94
      %s98 = sphi 0, %s97
      %s114 = sphi 0, %s98
      %s122 = sphi 0, %s124
      %s125 = sphi 0, %s122
      %s126 = sphi 0, %s125
      %s142 = sphi 0, %s126
    $region4: #{_device_forward.28} parent=1 // loop_header_branch
      %12 = sbr.rel (%p10) target = $region8
    $region5: #{_device_forward.28} parent=1 // loop_body
      %s14 = ssub.s32 %s9, 1
      %s15 = ssub.s32 %s9, 2
      %s25 = sadd.s32 1, %s18
      %p26 = scmp.ge.s32.totalorder %s25, 1
      %s27 = scalar_select %p26, 0, %s25
      %s28 = sadd.s32 1, %s17
      %s29 = scalar_select %p26, %s28, %s17
      %p30 = scmp.ge.s32.totalorder %s29, 4
      %s31 = scalar_select %p30, 0, %s29
      %s32 = sadd.s32 1, %s16
      %s33 = scalar_select %p30, %s32, %s16
      %p34 = scmp.ge.s32.totalorder %s33, 1
      %s35 = scalar_select %p34, 0, %s33
      %s36 = ssub.s32 %s16, %s35
      %s37 = ssub.s32 %s18, %s27
      %s38 = sor.u32 %s36, %s37
      %p39 = scmp.eq.s32.totalorder %s38, 0
      %s41 = sadd.s32 %s40, 1
      %s42 = scalar_select %p39, %s40, %s41
      %p45 = pneg %p39
      %p46 = scmp.eq.s32.totalorder %s9, 3
      %p47 = por %p45, %p46
      %p48 = scmp.ne.s32.totalorder %s40, %s43
      %p49 = scmp.eq.s32.totalorder %s9, 0
      %p50 = por %p48, %p49
      %p51 = scmp.ne.s32.totalorder %s40, %s43
      %p52 = scmp.eq.s32.totalorder %s14, 3
      %p53 = por %p51, %p52
      %p54 = scmp.ne.s32.totalorder %s43, %s44
      %p55 = scmp.eq.s32.totalorder %s14, 0
      %p56 = por %p54, %p55
      %p57 = scmp.ne.s32.totalorder %s43, %s44
      %p58 = scmp.eq.s32.totalorder %s15, 3
      %p59 = por %p57, %p58
      %p61 = scmp.ne.s32.totalorder %s44, %s60
      %p62 = scmp.eq.s32.totalorder %s15, 0
      %p63 = por %p61, %p62
      %s64 = ssub.s32 %s18, %s27
      %s65 = ssub.s32 %s17, %s31
      %s66 = sor.u32 %s64, %s65
      %p67 = scmp.eq.s32.totalorder %s66, 0
      %s69 = sadd.s32 %s68, 1
      %s70 = scalar_select %p67, %s68, %s69
      %p73 = pneg %p67
      %p74 = scmp.eq.s32.totalorder %s9, 3
      %p75 = por %p73, %p74
      %p76 = scmp.ne.s32.totalorder %s68, %s71
      %p77 = scmp.eq.s32.totalorder %s9, 0
      %p78 = por %p76, %p77
      %p79 = scmp.ne.s32.totalorder %s68, %s71
      %p80 = scmp.eq.s32.totalorder %s14, 3
      %p81 = por %p79, %p80
      %p82 = scmp.ne.s32.totalorder %s71, %s72
      %p83 = scmp.eq.s32.totalorder %s14, 0
      %p84 = por %p82, %p83
      %p85 = scmp.ne.s32.totalorder %s71, %s72
      %p86 = scmp.eq.s32.totalorder %s15, 3
      %p87 = por %p85, %p86
      %p89 = scmp.ne.s32.totalorder %s72, %s88
      %p90 = scmp.eq.s32.totalorder %s15, 0
      %p91 = por %p89, %p90
      %s92 = ssub.s32 %s17, %s31
      %p93 = scmp.eq.s32.totalorder %s92, 0
      %s95 = sadd.s32 %s94, 1
      %s96 = scalar_select %p93, %s94, %s95
      %p99 = pneg %p93
      %p100 = scmp.eq.s32.totalorder %s9, 3
      %p101 = por %p99, %p100
      %p102 = scmp.ne.s32.totalorder %s94, %s97
      %p103 = scmp.eq.s32.totalorder %s9, 0
      %p104 = por %p102, %p103
      %p105 = scmp.ne.s32.totalorder %s94, %s97
      %p106 = scmp.eq.s32.totalorder %s14, 3
      %p107 = por %p105, %p106
      %p108 = scmp.ne.s32.totalorder %s97, %s98
      %p109 = scmp.eq.s32.totalorder %s14, 0
      %p110 = por %p108, %p109
      %p111 = scmp.ne.s32.totalorder %s97, %s98
      %p112 = scmp.eq.s32.totalorder %s15, 3
      %p113 = por %p111, %p112
      %p115 = scmp.ne.s32.totalorder %s98, %s114
      %p116 = scmp.eq.s32.totalorder %s15, 0
      %p117 = por %p115, %p116
      %s118 = ssub.s32 %s16, %s35
      %s119 = ssub.s32 %s17, %s31
      %s120 = sor.u32 %s118, %s119
      %p121 = scmp.eq.s32.totalorder %s120, 0
      %s123 = sadd.s32 %s122, 1
      %s124 = scalar_select %p121, %s122, %s123
      %p127 = pneg %p121
      %p128 = scmp.eq.s32.totalorder %s9, 3
      %p129 = por %p127, %p128
      %p130 = scmp.ne.s32.totalorder %s122, %s125
      %p131 = scmp.eq.s32.totalorder %s9, 0
      %p132 = por %p130, %p131
      %p133 = scmp.ne.s32.totalorder %s122, %s125
      %p134 = scmp.eq.s32.totalorder %s14, 3
      %p135 = por %p133, %p134
      %p136 = scmp.ne.s32.totalorder %s125, %s126
      %p137 = scmp.eq.s32.totalorder %s14, 0
      %p138 = por %p136, %p137
      %p139 = scmp.ne.s32.totalorder %s125, %s126
      %p140 = scmp.eq.s32.totalorder %s15, 3
      %p141 = por %p139, %p140
      %p143 = scmp.ne.s32.totalorder %s126, %s142
      %p144 = scmp.eq.s32.totalorder %s15, 0
      %p145 = por %p143, %p144
      %p146 = scmp.le.s32.totalorder 1, %s9
      %p147 = scmp.lt.s32.totalorder %s9, 5
      %p148 = pnand %p146, %p147
      %p149 = pneg %p148
      // Predicated region
      $region9: #{_device_forward.28} parent=5 // pred_check
        _
      $region10: #{_device_forward.28} parent=5 // pred_check_branch
        %151 = sbr.rel (%p148) target = $region12
      $region11: #{_device_forward.28} parent=5 // pred_region
        %s152 = ssub.s32 %s9, 1
        // Predicated region
        $region13: #{_device_forward.28} parent=11 // pred_check
          %p153 = pneg %p56
        $region14: #{_device_forward.28} parent=11 // pred_check_branch
          %155 = sbr.rel (%p153) target = $region16
        $region15: #{_device_forward.28} parent=11 // pred_region
          %s156 = smul.u32 2, %s19
          %p157 = scmp.lt.s32.totalorder %s156, 1
          %s158 = scalar_select %p157, %s156, 1
          %p159 = scmp.lt.s32.totalorder %s21, 0
          %s160 = scalar_select %p159, %s21, 0
          %s161 = sadd.s32 %s160, %s158
          %s162 = smul.addr %s161, 4
          %s163 = scalar_lea.vmem %s0, %s162
          %s164 = smul.u32 2, %s19
        $region16: #{_device_forward.28} parent=11 // pred_fallthru
          _
      $region12: #{_device_forward.28} parent=5 // pred_fallthru
        _
      %p165 = scmp.lt.s32.totalorder %s9, 4
      // Predicated region
      $region17: #{_device_forward.28} parent=5 // pred_check
        %p166 = pneg %p165
      $region18: #{_device_forward.28} parent=5 // pred_check_branch
        %168 = sbr.rel (%p166) target = $region20
      $region19: #{_device_forward.28} parent=5 // pred_region
        // Predicated region
        $region21: #{_device_forward.28} parent=19 // pred_check
          %p169 = pneg %p78
        $region22: #{_device_forward.28} parent=19 // pred_check_branch
          %171 = sbr.rel (%p169) target = $region24
        $region23: #{_device_forward.28} parent=19 // pred_region
          %s172 = sand.u32 %s68, 1
          %s173 = sand.u32 %s68, 1
          %s174 = smul.addr %s173, 128
          %s175 = scalar_lea.vmem [#allocation3], %s174
          %s176 = smul.u32 16, %s18
          %s177 = smul.u32 2, %s17
          %s178 = smul.addr %s176, 8
          %s179 = sadd.s32 %s177, %s178
          %s180 = smul.addr %s179, 4
          %s181 = scalar_lea.vmem %s1, %s180
          // Predicated region
          $region25: #{_device_forward.28} parent=23 // pred_check
            _
          $region26: #{_device_forward.28} parent=23 // pred_check_branch
            %183 = sbr.rel (0) target = $region28
          $region27: #{_device_forward.28} parent=23 // pred_region
            // Predicated region
            $region29: #{_device_forward.28} parent=27 // pred_check
              _
            $region30: #{_device_forward.28} parent=27 // pred_check_branch
              %185 = sbr.rel (0) target = $region32
            $region31: #{_device_forward.28} parent=27 // pred_region
              // Predicated region
              $region44: #{_device_forward.28} parent=31 // pred_check
                _
              $region45: #{_device_forward.28} parent=31 // pred_check_branch
                %231 = sbr.rel (0) target = $region47
              $region46: #{_device_forward.28} parent=31 // pred_region
                loop: start=0, step=1, limit=1
                $region48: #{_device_forward.28} parent=46 // loop_pre_header
                  _
                $region49: #{_device_forward.28} parent=46 // loop_header
                  %s233 = sphi 0, %s237
                  %p234 = scmp.ge.s32.totalorder %s233, 1
                  %s238 = sphi %s181, %s181
                  %s239 = sphi %s175, %s175
                $region50: #{_device_forward.28} parent=46 // loop_header_branch
                  %236 = sbr.rel (%p234) target = $region54
                $region51: #{_device_forward.28} parent=46 // loop_body
                  %v240 = vld [vmem:[%s238] sm:$0xff]
                  %241 = vst [vmem:[%s239] sm:$0xff] %v240
                  %v242 = vld [vmem:[%s238 + $0x20] sm:$0xff]
                  %243 = vst [vmem:[%s239 + $0x8] sm:$0xff] %v242
                  %v244 = vld [vmem:[%s238 + $0x40] sm:$0xff]
                  %245 = vst [vmem:[%s239 + $0x10] sm:$0xff] %v244
                  %v246 = vld [vmem:[%s238 + $0x60] sm:$0xff]
                  %247 = vst [vmem:[%s239 + $0x18] sm:$0xff] %v246
                  %v248 = vld [vmem:[%s238 + $0x80] sm:$0xff]
                  %249 = vst [vmem:[%s239 + $0x20] sm:$0xff] %v248
                  %v250 = vld [vmem:[%s238 + $0xa0] sm:$0xff]
                  %251 = vst [vmem:[%s239 + $0x28] sm:$0xff] %v250
                  %v252 = vld [vmem:[%s238 + $0xc0] sm:$0xff]
                  %253 = vst [vmem:[%s239 + $0x30] sm:$0xff] %v252
                  %v254 = vld [vmem:[%s238 + $0xe0] sm:$0xff]
                  %255 = vst [vmem:[%s239 + $0x38] sm:$0xff] %v254
                  %v256 = vld [vmem:[%s238 + $0x100] sm:$0xff]
                  %257 = vst [vmem:[%s239 + $0x40] sm:$0xff] %v256
                  %v258 = vld [vmem:[%s238 + $0x120] sm:$0xff]
                  %259 = vst [vmem:[%s239 + $0x48] sm:$0xff] %v258
                  %v260 = vld [vmem:[%s238 + $0x140] sm:$0xff]
                  %261 = vst [vmem:[%s239 + $0x50] sm:$0xff] %v260
                  %v262 = vld [vmem:[%s238 + $0x160] sm:$0xff]
                  %263 = vst [vmem:[%s239 + $0x58] sm:$0xff] %v262
                  %v264 = vld [vmem:[%s238 + $0x180] sm:$0xff]
                  %265 = vst [vmem:[%s239 + $0x60] sm:$0xff] %v264
                  %v266 = vld [vmem:[%s238 + $0x1a0] sm:$0xff]
                  %267 = vst [vmem:[%s239 + $0x68] sm:$0xff] %v266
                  %v268 = vld [vmem:[%s238 + $0x1c0] sm:$0xff]
                  %269 = vst [vmem:[%s239 + $0x70] sm:$0xff] %v268
                  %v270 = vld [vmem:[%s238 + $0x1e0] sm:$0xff]
                  %271 = vst [vmem:[%s239 + $0x78] sm:$0xff] %v270
                $region52: #{_device_forward.28} parent=46 // loop_footer
                  %s237 = sadd.s32 1, %s233
                $region53: #{_device_forward.28} parent=46 // loop_footer_branch
                  %232 = sbr.rel target = $region49
                $region54: #{_device_forward.28} parent=46 // loop_exit
                  _
              $region47: #{_device_forward.28} parent=31 // pred_fallthru
                _
              // Predicated region
              $region55: #{_device_forward.28} parent=31 // pred_check
                _
              $region56: #{_device_forward.28} parent=31 // pred_check_branch
                %273 = sbr.rel target = $region58
              $region57: #{_device_forward.28} parent=31 // pred_region
                _
              $region58: #{_device_forward.28} parent=31 // pred_fallthru
                _
            $region32: #{_device_forward.28} parent=27 // pred_fallthru
              _
            // Predicated region
            $region33: #{_device_forward.28} parent=27 // pred_check
              _
            $region34: #{_device_forward.28} parent=27 // pred_check_branch
              %187 = sbr.rel target = $region36
            $region35: #{_device_forward.28} parent=27 // pred_region
              %s189 = ssub.s32 256, 1
              loop: start=0, step=1, limit=1
              $region37: #{_device_forward.28} parent=35 // loop_pre_header
                _
              $region38: #{_device_forward.28} parent=35 // loop_header
                %s191 = sphi 0, %s195
                %p192 = scmp.ge.s32.totalorder %s191, 1
                %s196 = sphi %s181, %s181
                %s197 = sphi %s175, %s175
              $region39: #{_device_forward.28} parent=35 // loop_header_branch
                %194 = sbr.rel (%p192) target = $region43
              $region40: #{_device_forward.28} parent=35 // loop_body
                %v198 = vld [vmem:[%s196] sm:%s189]
                %199 = vst [vmem:[%s197] sm:%s189] %v198
                %v200 = vld [vmem:[%s196 + $0x20] sm:%s189]
                %201 = vst [vmem:[%s197 + $0x8] sm:%s189] %v200
                %v202 = vld [vmem:[%s196 + $0x40] sm:%s189]
                %203 = vst [vmem:[%s197 + $0x10] sm:%s189] %v202
                %v204 = vld [vmem:[%s196 + $0x60] sm:%s189]
                %205 = vst [vmem:[%s197 + $0x18] sm:%s189] %v204
                %v206 = vld [vmem:[%s196 + $0x80] sm:%s189]
                %207 = vst [vmem:[%s197 + $0x20] sm:%s189] %v206
                %v208 = vld [vmem:[%s196 + $0xa0] sm:%s189]
                %209 = vst [vmem:[%s197 + $0x28] sm:%s189] %v208
                %v210 = vld [vmem:[%s196 + $0xc0] sm:%s189]
                %211 = vst [vmem:[%s197 + $0x30] sm:%s189] %v210
                %v212 = vld [vmem:[%s196 + $0xe0] sm:%s189]
                %213 = vst [vmem:[%s197 + $0x38] sm:%s189] %v212
                %v214 = vld [vmem:[%s196 + $0x100] sm:%s189]
                %215 = vst [vmem:[%s197 + $0x40] sm:%s189] %v214
                %v216 = vld [vmem:[%s196 + $0x120] sm:%s189]
                %217 = vst [vmem:[%s197 + $0x48] sm:%s189] %v216
                %v218 = vld [vmem:[%s196 + $0x140] sm:%s189]
                %219 = vst [vmem:[%s197 + $0x50] sm:%s189] %v218
                %v220 = vld [vmem:[%s196 + $0x160] sm:%s189]
                %221 = vst [vmem:[%s197 + $0x58] sm:%s189] %v220
                %v222 = vld [vmem:[%s196 + $0x180] sm:%s189]
                %223 = vst [vmem:[%s197 + $0x60] sm:%s189] %v222
                %v224 = vld [vmem:[%s196 + $0x1a0] sm:%s189]
                %225 = vst [vmem:[%s197 + $0x68] sm:%s189] %v224
                %v226 = vld [vmem:[%s196 + $0x1c0] sm:%s189]
                %227 = vst [vmem:[%s197 + $0x70] sm:%s189] %v226
                %v228 = vld [vmem:[%s196 + $0x1e0] sm:%s189]
                %229 = vst [vmem:[%s197 + $0x78] sm:%s189] %v228
              $region41: #{_device_forward.28} parent=35 // loop_footer
                %s195 = sadd.s32 1, %s191
              $region42: #{_device_forward.28} parent=35 // loop_footer_branch
                %190 = sbr.rel target = $region38
              $region43: #{_device_forward.28} parent=35 // loop_exit
                _
            $region36: #{_device_forward.28} parent=27 // pred_fallthru
              _
          $region28: #{_device_forward.28} parent=23 // pred_fallthru
            _
          %274 = vnop
        $region24: #{_device_forward.28} parent=19 // pred_fallthru
          _
        // Predicated region
        $region59: #{_device_forward.28} parent=19 // pred_check
          %p275 = pneg %p104
        $region60: #{_device_forward.28} parent=19 // pred_check_branch
          %277 = sbr.rel (%p275) target = $region62
        $region61: #{_device_forward.28} parent=19 // pred_region
          %s278 = smul.u32 2, %s17
          %p279 = scmp.lt.s32.totalorder %s278, 7
          %s280 = scalar_select %p279, %s278, 7
          %s281 = scalar_lea.vmem %s2, %s280
          %s282 = smul.u32 2, %s17
        $region62: #{_device_forward.28} parent=19 // pred_fallthru
          _
      $region20: #{_device_forward.28} parent=5 // pred_fallthru
        _
      %p283 = scmp.le.s32.totalorder 1, %s9
      %p284 = scmp.lt.s32.totalorder %s9, 5
      %p285 = pnand %p283, %p284
      %p286 = pneg %p285
      // Predicated region
      $region63: #{_device_forward.28} parent=5 // pred_check
        _
      $region64: #{_device_forward.28} parent=5 // pred_check_branch
        %288 = sbr.rel (%p285) target = $region66
      $region65: #{_device_forward.28} parent=5 // pred_region
        %s289 = ssub.s32 %s9, 1
        %s290 = sand.u32 %s71, 1
        %s291 = sand.u32 %s71, 1
        %s292 = smul.addr %s291, 128
        %s293 = scalar_lea.vmem [#allocation3], %s292
        // Predicated region
        $region67: #{_device_forward.28} parent=65 // pred_check
          %p294 = pneg %p84
        $region68: #{_device_forward.28} parent=65 // pred_check_branch
          %296 = sbr.rel (%p294) target = $region70
        $region69: #{_device_forward.28} parent=65 // pred_region
          _
        $region70: #{_device_forward.28} parent=65 // pred_fallthru
          _
        %s297 = smul.u32 2, %s19
        %p298 = scmp.lt.s32.totalorder %s297, 1
        %s299 = scalar_select %p298, %s297, 1
        %p300 = scmp.lt.s32.totalorder %s21, 0
        %s301 = scalar_select %p300, %s21, 0
        %s302 = sadd.s32 %s301, %s299
        %s303 = smul.addr %s302, 4
        %s304 = scalar_lea.vmem %s0, %s303
        %p305 = pneg %p56
        %p306 = pneg %p53
        %s307 = sand.u32 %s71, 1
        %s308 = sand.u32 %s71, 1
        %s309 = smul.addr %s308, 128
        %s310 = scalar_lea.vmem [#allocation3], %s309
        %p311 = pneg %p84
        %p312 = pneg %p81
        %s313 = smul.u32 2, %s20
        %p314 = scmp.lt.s32.totalorder %s313, 7
        %s315 = scalar_select %p314, %s313, 7
        %s316 = scalar_lea.vmem %s2, %s315
        %p317 = pneg %p110
        %p318 = pneg %p107
        %p319 = pneg %p138
        %p320 = pneg %p135
        %s321 = sand.u32 %s125, 1
        %s322 = sand.u32 %s125, 1
        %s323 = smul.addr %s322, 32
        %s324 = scalar_lea.vmem [#allocation4], %s323
        %s325 = smul.u32 2, %s19
        %p326 = scmp.lt.s32.totalorder %s325, 1
        %s327 = scalar_select %p326, %s325, 1
        %p328 = scmp.lt.s32.totalorder %s21, 0
        %s329 = scalar_select %p328, %s21, 0
        %s330 = sadd.s32 %s329, %s327
        %s331 = smul.addr %s330, 4
        %s332 = scalar_lea.vmem %s0, %s331
        %s333 = smul.u32 2, %s19
        %s334 = smul.u32 16, %s21
        %s335 = smul.u32 2, %s20
        %s336 = smul.u32 2, %s20
        %p337 = scmp.lt.s32.totalorder %s336, 7
        %s338 = scalar_select %p337, %s336, 7
        %s339 = scalar_lea.vmem %s2, %s338
        %s340 = smul.u32 2, %s20
        %s341 = smul.u32 2, %s19
        %s342 = smul.u32 2, %s20
        %p344 = scmp.eq.s32.totalorder %s21, 0
        // Predicated region
        $region71: #{_device_forward.28} parent=65 // pred_check
          %p345 = pneg %p344
        $region72: #{_device_forward.28} parent=65 // pred_check_branch
          %347 = sbr.rel (%p345) target = $region74
        $region73: #{_device_forward.28} parent=65 // pred_region
          %348 = vst [vmem:[#allocation2] sm:$0xff] 0.0
          %349 = vst [vmem:[#allocation2 + $0x8] sm:$0xff] 0.0
          %350 = vst [vmem:[#allocation2 + $0x10] sm:$0xff] 0.0
          %351 = vst [vmem:[#allocation2 + $0x18] sm:$0xff] 0.0
        $region74: #{_device_forward.28} parent=65 // pred_fallthru
          _
        %v352 = vld [vmem:[#allocation2] sm:$0xff]
        %v353 = vld [vmem:[#allocation2 + $0x8] sm:$0xff]
        %v354 = vld [vmem:[#allocation2 + $0x10] sm:$0xff]
        %v355 = vld [vmem:[#allocation2 + $0x18] sm:$0xff]
        %v356 = vld [vmem:[%s332] sm:$0xf]
        %v357 = vld [vmem:[%s332 + $0x4] sm:$0xf]
        %v358 = vld [vmem:[%s293] sm:$0xff]
        %v359 = vld [vmem:[%s293 + $0x8] sm:$0xff]
        %v360 = vld [vmem:[%s293 + $0x10] sm:$0xff]
        %v361 = vld [vmem:[%s293 + $0x18] sm:$0xff]
        %v362 = vld [vmem:[%s293 + $0x20] sm:$0xff]
        %v363 = vld [vmem:[%s293 + $0x28] sm:$0xff]
        %v364 = vld [vmem:[%s293 + $0x30] sm:$0xff]
        %v365 = vld [vmem:[%s293 + $0x38] sm:$0xff]
        %v366 = vld [vmem:[%s293 + $0x40] sm:$0xff]
        %v367 = vld [vmem:[%s293 + $0x48] sm:$0xff]
        %v368 = vld [vmem:[%s293 + $0x50] sm:$0xff]
        %v369 = vld [vmem:[%s293 + $0x58] sm:$0xff]
        %v370 = vld [vmem:[%s293 + $0x60] sm:$0xff]
        %v371 = vld [vmem:[%s293 + $0x68] sm:$0xff]
        %v372 = vld [vmem:[%s293 + $0x70] sm:$0xff]
        %v373 = vld [vmem:[%s293 + $0x78] sm:$0xff]
        %v376 = vunpack.c.l.b16 %v356
        %v377 = vunpack.c.l.b16 %v357
        %v378 = vpack.c.b16 %v377, %v376
        %v396 = vunpack.c.l.b16 %v358
        %v397 = vunpack.c.h.b16 %v358
        %v398 = vunpack.c.l.b16 %v359
        %v399 = vunpack.c.h.b16 %v359
        %v400 = vunpack.c.l.b16 %v360
        %v401 = vunpack.c.h.b16 %v360
        %v402 = vunpack.c.l.b16 %v361
        %v403 = vunpack.c.h.b16 %v361
        %v404 = vunpack.c.l.b16 %v362
        %v405 = vunpack.c.h.b16 %v362
        %v406 = vunpack.c.l.b16 %v363
        %v407 = vunpack.c.h.b16 %v363
        %v408 = vunpack.c.l.b16 %v364
        %v409 = vunpack.c.h.b16 %v364
        %v410 = vunpack.c.l.b16 %v365
        %v411 = vunpack.c.h.b16 %v365
        %v412 = vunpack.c.l.b16 %v366
        %v413 = vunpack.c.h.b16 %v366
        %v414 = vunpack.c.l.b16 %v367
        %v415 = vunpack.c.h.b16 %v367
        %v416 = vunpack.c.l.b16 %v368
        %v417 = vunpack.c.h.b16 %v368
        %v418 = vunpack.c.l.b16 %v369
        %v419 = vunpack.c.h.b16 %v369
        %v420 = vunpack.c.l.b16 %v370
        %v421 = vunpack.c.h.b16 %v370
        %v422 = vunpack.c.l.b16 %v371
        %v423 = vunpack.c.h.b16 %v371
        %v424 = vunpack.c.l.b16 %v372
        %v425 = vunpack.c.h.b16 %v372
        %v426 = vunpack.c.l.b16 %v373
        %v427 = vunpack.c.h.b16 %v373
        %v428 = vpack.c.b16 %v398, %v396
        %v429 = vpack.c.b16 %v399, %v397
        %v430 = vpack.c.b16 %v402, %v400
        %v431 = vpack.c.b16 %v403, %v401
        %v432 = vpack.c.b16 %v406, %v404
        %v433 = vpack.c.b16 %v407, %v405
        %v434 = vpack.c.b16 %v410, %v408
        %v435 = vpack.c.b16 %v411, %v409
        %v436 = vpack.c.b16 %v414, %v412
        %v437 = vpack.c.b16 %v415, %v413
        %v438 = vpack.c.b16 %v418, %v416
        %v439 = vpack.c.b16 %v419, %v417
        %v440 = vpack.c.b16 %v422, %v420
        %v441 = vpack.c.b16 %v423, %v421
        %v442 = vpack.c.b16 %v426, %v424
        %v443 = vpack.c.b16 %v427, %v425
        %460 = vmatprep.subr.bf16.mxu0 %v443
        %461 = vmatpush1.bf16.msra.mxu0 %v442
        %462 = vmatprep.subr.bf16.mxu0 %v441
        %463 = vmatpush1.bf16.msra.mxu0 %v440
        %464 = vmatprep.subr.bf16.mxu0 %v439
        %465 = vmatpush1.bf16.msra.mxu0 %v438
        %466 = vmatprep.subr.bf16.mxu0 %v437
        %467 = vmatpush1.bf16.msra.mxu0 %v436
        %468 = vmatprep.subr.bf16.mxu0 %v435
        %469 = vmatpush1.bf16.msra.mxu0 %v434
        %470 = vmatprep.subr.bf16.mxu0 %v433
        %471 = vmatpush1.bf16.msra.mxu0 %v432
        %472 = vmatprep.subr.bf16.mxu0 %v431
        %473 = vmatpush1.bf16.msra.mxu0 %v430
        %474 = vmatprep.subr.bf16.mxu0 %v429
        %475 = vmatpush1.bf16.msra.mxu0 %v428
        %476 = vmatprep.subr.bf16.mxu0 0
        %477 = vmatpush2.bf16.msra.mxu0 0
        %478 = vmatprep.subr.bf16.mxu0 0
        %479 = vmatpush2.bf16.msra.mxu0 0
        %480 = vmatprep.subr.bf16.mxu0 0
        %481 = vmatpush2.bf16.msra.mxu0 0
        %482 = vmatprep.subr.bf16.mxu0 0
        %483 = vmatpush2.bf16.msra.mxu0 0
        %484 = vmatprep.subr.bf16.mxu0 0
        %485 = vmatpush2.bf16.msra.mxu0 0
        %486 = vmatprep.subr.bf16.mxu0 0
        %487 = vmatpush2.bf16.msra.mxu0 0
        %488 = vmatprep.subr.bf16.mxu0 0
        %489 = vmatpush2.bf16.msra.mxu0 0
        %490 = vmatprep.subr.bf16.mxu0 0
        %491 = vmatpush2.bf16.msra.mxu0 0
        %492 = vmatprep.mubr.bf16.mxu0 0
        %493 = vmatmul.mubr.bf16.gmra.mxu0 %v378
        %v494 = vpop.f32.mrf.mxu0
        %v495 = vadd.f32 0.0, %v494
        %v496 = vpop.f32.mrf.mxu0
        %v497 = vadd.f32 0.0, %v496
        %v498 = vpop.f32.mrf.mxu0
        %v499 = vadd.f32 0.0, %v498
        %v500 = vpop.f32.mrf.mxu0
        %v501 = vadd.f32 0.0, %v500
        %502 = vdwg.mxu0
        %v503 = vadd.f32 %v352, %v495
        %v504 = vadd.f32 %v353, %v497
        %v505 = vadd.f32 %v354, %v499
        %v506 = vadd.f32 %v355, %v501
        %507 = vst [vmem:[#allocation2] sm:$0xff] %v503
        %508 = vst [vmem:[#allocation2 + $0x8] sm:$0xff] %v504
        %509 = vst [vmem:[#allocation2 + $0x10] sm:$0xff] %v505
        %510 = vst [vmem:[#allocation2 + $0x18] sm:$0xff] %v506
        // Predicated region
        $region75: #{_device_forward.28} parent=65 // pred_check
          %p511 = pneg %p344
        $region76: #{_device_forward.28} parent=65 // pred_check_branch
          %513 = sbr.rel (%p511) target = $region78
        $region77: #{_device_forward.28} parent=65 // pred_region
          %v514 = vld [vmem:[#allocation2] sm:$0xff]
          %v515 = vld [vmem:[#allocation2 + $0x8] sm:$0xff]
          %v516 = vld [vmem:[#allocation2 + $0x10] sm:$0xff]
          %v517 = vld [vmem:[#allocation2 + $0x18] sm:$0xff]
          %v518 = vld [vmem:[%s339] sm:$0x3]
          %v520 = vlaneseq
          %v521 = vshrl.u32 %v520, 7
          %v522 = vsub.s32 0, %v521
          %v523 = vrot.slane %v518, %v522
          %v524 = vlaneseq
          %v525 = vshrl.u32 %v524, 7
          %v526 = vsub.s32 1, %v525
          %v527 = vrot.slane %v518, %v526
          %v530 = vadd.f32 %v514, %v523
          %v531 = vadd.f32 %v515, %v527
          %v532 = vadd.f32 %v516, %v523
          %v533 = vadd.f32 %v517, %v527
          %534 = vst [vmem:[%s324] sm:$0xff] %v530
          %535 = vst [vmem:[%s324 + $0x8] sm:$0xff] %v531
          %536 = vst [vmem:[%s324 + $0x10] sm:$0xff] %v532
          %537 = vst [vmem:[%s324 + $0x18] sm:$0xff] %v533
        $region78: #{_device_forward.28} parent=65 // pred_fallthru
          _
        %s538 = sand.u32 %s125, 1
        %s539 = sand.u32 %s125, 1
        %s540 = smul.addr %s539, 32
        %s541 = scalar_lea.vmem [#allocation4], %s540
        // Predicated region
        $region79: #{_device_forward.28} parent=65 // pred_check
          %p542 = pneg %p135
        $region80: #{_device_forward.28} parent=65 // pred_check_branch
          %544 = sbr.rel (%p542) target = $region82
        $region81: #{_device_forward.28} parent=65 // pred_region
          %s545 = smul.u32 2, %s19
          %s546 = smul.u32 2, %s20
          %s547 = smul.addr %s545, 8
          %s548 = sadd.s32 %s546, %s547
          %s549 = smul.addr %s548, 8
          %s550 = scalar_lea.vmem %s3, %s549
          // Predicated region
          $region83: #{_device_forward.28} parent=81 // pred_check
            _
          $region84: #{_device_forward.28} parent=81 // pred_check_branch
            %552 = sbr.rel (0) target = $region86
          $region85: #{_device_forward.28} parent=81 // pred_region
            // Predicated region
            $region87: #{_device_forward.28} parent=85 // pred_check
              _
            $region88: #{_device_forward.28} parent=85 // pred_check_branch
              %554 = sbr.rel (0) target = $region90
            $region89: #{_device_forward.28} parent=85 // pred_region
              loop: start=0, step=1, limit=1
              $region91: #{_device_forward.28} parent=89 // loop_pre_header
                _
              $region92: #{_device_forward.28} parent=89 // loop_header
                %s556 = sphi 0, %s560
                %p557 = scmp.ge.s32.totalorder %s556, 1
                %s561 = sphi %s541, %s541
                %s562 = sphi %s550, %s550
              $region93: #{_device_forward.28} parent=89 // loop_header_branch
                %559 = sbr.rel (%p557) target = $region97
              $region94: #{_device_forward.28} parent=89 // loop_body
                %v563 = vld [vmem:[%s561] sm:$0xff]
                %564 = vst [vmem:[%s562] sm:$0xff] %v563
                %v565 = vld [vmem:[%s561 + $0x8] sm:$0xff]
                %566 = vst [vmem:[%s562 + $0x8] sm:$0xff] %v565
                %v567 = vld [vmem:[%s561 + $0x10] sm:$0xff]
                %568 = vst [vmem:[%s562 + $0x40] sm:$0xff] %v567
                %v569 = vld [vmem:[%s561 + $0x18] sm:$0xff]
                %570 = vst [vmem:[%s562 + $0x48] sm:$0xff] %v569
              $region95: #{_device_forward.28} parent=89 // loop_footer
                %s560 = sadd.s32 1, %s556
              $region96: #{_device_forward.28} parent=89 // loop_footer_branch
                %555 = sbr.rel target = $region92
              $region97: #{_device_forward.28} parent=89 // loop_exit
                _
            $region90: #{_device_forward.28} parent=85 // pred_fallthru
              _
            // Predicated region
            $region98: #{_device_forward.28} parent=85 // pred_check
              _
            $region99: #{_device_forward.28} parent=85 // pred_check_branch
              %572 = sbr.rel target = $region101
            $region100: #{_device_forward.28} parent=85 // pred_region
              _
            $region101: #{_device_forward.28} parent=85 // pred_fallthru
              _
          $region86: #{_device_forward.28} parent=81 // pred_fallthru
            _
          %573 = vnop
        $region82: #{_device_forward.28} parent=65 // pred_fallthru
          _
      $region66: #{_device_forward.28} parent=5 // pred_fallthru
        _
      %p574 = scmp.le.s32.totalorder 2, %s9
      // Predicated region
      $region102: #{_device_forward.28} parent=5 // pred_check
        %p575 = pneg %p574
      $region103: #{_device_forward.28} parent=5 // pred_check_branch
        %577 = sbr.rel (%p575) target = $region105
      $region104: #{_device_forward.28} parent=5 // pred_region
        %s578 = ssub.s32 %s9, 2
        // Predicated region
        $region106: #{_device_forward.28} parent=104 // pred_check
          %p579 = pneg %p141
        $region107: #{_device_forward.28} parent=104 // pred_check_branch
          %581 = sbr.rel (%p579) target = $region109
        $region108: #{_device_forward.28} parent=104 // pred_region
          %s582 = sand.u32 %s126, 1
          %s583 = sand.u32 %s126, 1
          %s584 = smul.addr %s583, 32
          %s585 = scalar_lea.vmem [#allocation4], %s584
        $region109: #{_device_forward.28} parent=104 // pred_fallthru
          _
      $region105: #{_device_forward.28} parent=5 // pred_fallthru
        _
    $region6: #{_device_forward.28} parent=1 // loop_footer
      %s13 = sadd.s32 1, %s9
    $region7: #{_device_forward.28} parent=1 // loop_footer_branch
      %8 = sbr.rel target = $region3
    $region8: #{_device_forward.28} parent=1 // loop_exit
      _

// kernel: _device_forward.29
$region0: #{_device_forward.29}
  #allocation0 [shape = 'u32[]', space=smem, size = 0x4, offset = 0x4, fixed_abs, tag = 'smem constant byte address 0x4 - core index']
  #allocation1 [shape = 'u32[144,128]{1,0:T(1,128)}', space=vmem, size = 0x12000, scoped, tag = 'internal scratch']
  %s0 = inlined_call_operand.vmem [shape: f32[2,64,64], index: 0, kind: input, shape index: {}]
  %s1 = inlined_call_operand.vmem [shape: f32[1,64], index: 1, kind: input, shape index: {}]
  %s2 = inlined_call_operand.vmem [shape: f32[2,1,64], index: 2, kind: input, shape index: {}]
  %s3 = inlined_call_operand.vmem [shape: f32[2,1,64], index: 3, kind: input, shape index: {}]
  %s4 = inlined_call_operand.vmem [shape: bf16[2,64,64], index: 4, kind: output, shape index: {}]
  %s5 = sld [smem:[#allocation0]]
  $region49: #{_device_forward.29} parent=0
    _
  %s7 = ssub.s32 1, %s5
  %s8 = scalar_select 0, %s7, %s5
  loop: start=0, step=1, limit=4
  $region2: #{_device_forward.29} parent=0 // loop_pre_header
    _
  $region3: #{_device_forward.29} parent=0 // loop_header
    %s10 = sphi 0, %s14
    %p11 = scmp.ge.s32.totalorder %s10, 4
    %s17 = sphi 0, %s29
    %s18 = sphi 0, %s25
    %s19 = sphi 0, %s17
    %s20 = sphi 0, %s18
    %s21 = sphi 0, %s19
    %s22 = sphi 0, %s20
    %s34 = sphi 0, %s36
    %s37 = sphi 0, %s34
    %s38 = sphi 0, %s37
    %s54 = sphi 0, %s38
    %s58 = sphi 0, %s58
    %s60 = sphi 0, %s58
    %s61 = sphi 0, %s60
    %s75 = sphi 0, %s61
    %s81 = sphi 0, %s83
    %s84 = sphi 0, %s81
    %s85 = sphi 0, %s84
    %s101 = sphi 0, %s85
    %s107 = sphi 0, %s109
    %s110 = sphi 0, %s107
    %s111 = sphi 0, %s110
    %s127 = sphi 0, %s111
    %s135 = sphi 0, %s137
    %s138 = sphi 0, %s135
    %s139 = sphi 0, %s138
    %s155 = sphi 0, %s139
  $region4: #{_device_forward.29} parent=0 // loop_header_branch
    %13 = sbr.rel (%p11) target = $region8
  $region5: #{_device_forward.29} parent=0 // loop_body
    %s15 = ssub.s32 %s10, 1
    %s16 = ssub.s32 %s10, 2
    %s23 = sadd.s32 1, %s18
    %p24 = scmp.ge.s32.totalorder %s23, 1
    %s25 = scalar_select %p24, 0, %s23
    %s26 = sadd.s32 1, %s17
    %s27 = scalar_select %p24, %s26, %s17
    %p28 = scmp.ge.s32.totalorder %s27, 2
    %s29 = scalar_select %p28, 0, %s27
    %s30 = ssub.s32 %s17, %s29
    %s31 = ssub.s32 %s18, %s25
    %s32 = sor.u32 %s30, %s31
    %p33 = scmp.eq.s32.totalorder %s32, 0
    %s35 = sadd.s32 %s34, 1
    %s36 = scalar_select %p33, %s34, %s35
    %p39 = pneg %p33
    %p40 = scmp.eq.s32.totalorder %s10, 1
    %p41 = por %p39, %p40
    %p42 = scmp.ne.s32.totalorder %s34, %s37
    %p43 = scmp.eq.s32.totalorder %s10, 0
    %p44 = por %p42, %p43
    %p45 = scmp.ne.s32.totalorder %s34, %s37
    %p46 = scmp.eq.s32.totalorder %s15, 1
    %p47 = por %p45, %p46
    %p48 = scmp.ne.s32.totalorder %s37, %s38
    %p49 = scmp.eq.s32.totalorder %s15, 0
    %p50 = por %p48, %p49
    %p51 = scmp.ne.s32.totalorder %s37, %s38
    %p52 = scmp.eq.s32.totalorder %s16, 1
    %p53 = por %p51, %p52
    %p55 = scmp.ne.s32.totalorder %s38, %s54
    %p56 = scmp.eq.s32.totalorder %s16, 0
    %p57 = por %p55, %p56
    %s59 = sadd.s32 %s58, 1
    %p62 = scmp.eq.s32.totalorder %s10, 1
    %p63 = scmp.ne.s32.totalorder %s58, %s60
    %p64 = scmp.eq.s32.totalorder %s10, 0
    %p65 = por %p63, %p64
    %p66 = scmp.ne.s32.totalorder %s58, %s60
    %p67 = scmp.eq.s32.totalorder %s15, 1
    %p68 = por %p66, %p67
    %p69 = scmp.ne.s32.totalorder %s60, %s61
    %p70 = scmp.eq.s32.totalorder %s15, 0
    %p71 = por %p69, %p70
    %p72 = scmp.ne.s32.totalorder %s60, %s61
    %p73 = scmp.eq.s32.totalorder %s16, 1
    %p74 = por %p72, %p73
    %p76 = scmp.ne.s32.totalorder %s61, %s75
    %p77 = scmp.eq.s32.totalorder %s16, 0
    %p78 = por %p76, %p77
    %s79 = ssub.s32 %s17, %s29
    %p80 = scmp.eq.s32.totalorder %s79, 0
    %s82 = sadd.s32 %s81, 1
    %s83 = scalar_select %p80, %s81, %s82
    %p86 = pneg %p80
    %p87 = scmp.eq.s32.totalorder %s10, 1
    %p88 = por %p86, %p87
    %p89 = scmp.ne.s32.totalorder %s81, %s84
    %p90 = scmp.eq.s32.totalorder %s10, 0
    %p91 = por %p89, %p90
    %p92 = scmp.ne.s32.totalorder %s81, %s84
    %p93 = scmp.eq.s32.totalorder %s15, 1
    %p94 = por %p92, %p93
    %p95 = scmp.ne.s32.totalorder %s84, %s85
    %p96 = scmp.eq.s32.totalorder %s15, 0
    %p97 = por %p95, %p96
    %p98 = scmp.ne.s32.totalorder %s84, %s85
    %p99 = scmp.eq.s32.totalorder %s16, 1
    %p100 = por %p98, %p99
    %p102 = scmp.ne.s32.totalorder %s85, %s101
    %p103 = scmp.eq.s32.totalorder %s16, 0
    %p104 = por %p102, %p103
    %s105 = ssub.s32 %s17, %s29
    %p106 = scmp.eq.s32.totalorder %s105, 0
    %s108 = sadd.s32 %s107, 1
    %s109 = scalar_select %p106, %s107, %s108
    %p112 = pneg %p106
    %p113 = scmp.eq.s32.totalorder %s10, 1
    %p114 = por %p112, %p113
    %p115 = scmp.ne.s32.totalorder %s107, %s110
    %p116 = scmp.eq.s32.totalorder %s10, 0
    %p117 = por %p115, %p116
    %p118 = scmp.ne.s32.totalorder %s107, %s110
    %p119 = scmp.eq.s32.totalorder %s15, 1
    %p120 = por %p118, %p119
    %p121 = scmp.ne.s32.totalorder %s110, %s111
    %p122 = scmp.eq.s32.totalorder %s15, 0
    %p123 = por %p121, %p122
    %p124 = scmp.ne.s32.totalorder %s110, %s111
    %p125 = scmp.eq.s32.totalorder %s16, 1
    %p126 = por %p124, %p125
    %p128 = scmp.ne.s32.totalorder %s111, %s127
    %p129 = scmp.eq.s32.totalorder %s16, 0
    %p130 = por %p128, %p129
    %s131 = ssub.s32 %s17, %s29
    %s132 = ssub.s32 %s18, %s25
    %s133 = sor.u32 %s131, %s132
    %p134 = scmp.eq.s32.totalorder %s133, 0
    %s136 = sadd.s32 %s135, 1
    %s137 = scalar_select %p134, %s135, %s136
    %p140 = pneg %p134
    %p141 = scmp.eq.s32.totalorder %s10, 1
    %p142 = por %p140, %p141
    %p143 = scmp.ne.s32.totalorder %s135, %s138
    %p144 = scmp.eq.s32.totalorder %s10, 0
    %p145 = por %p143, %p144
    %p146 = scmp.ne.s32.totalorder %s135, %s138
    %p147 = scmp.eq.s32.totalorder %s15, 1
    %p148 = por %p146, %p147
    %p149 = scmp.ne.s32.totalorder %s138, %s139
    %p150 = scmp.eq.s32.totalorder %s15, 0
    %p151 = por %p149, %p150
    %p152 = scmp.ne.s32.totalorder %s138, %s139
    %p153 = scmp.eq.s32.totalorder %s16, 1
    %p154 = por %p152, %p153
    %p156 = scmp.ne.s32.totalorder %s139, %s155
    %p157 = scmp.eq.s32.totalorder %s16, 0
    %p158 = por %p156, %p157
    %p159 = scmp.le.s32.totalorder 1, %s10
    %p160 = scmp.lt.s32.totalorder %s10, 3
    %p161 = pnand %p159, %p160
    %p162 = pneg %p161
    // Predicated region
    $region9: #{_device_forward.29} parent=5 // pred_check
      _
    $region10: #{_device_forward.29} parent=5 // pred_check_branch
      %164 = sbr.rel (%p161) target = $region12
    $region11: #{_device_forward.29} parent=5 // pred_region
      %s165 = ssub.s32 %s10, 1
      // Predicated region
      $region13: #{_device_forward.29} parent=11 // pred_check
        %p166 = pneg %p71
      $region14: #{_device_forward.29} parent=11 // pred_check_branch
        %168 = sbr.rel (%p166) target = $region16
      $region15: #{_device_forward.29} parent=11 // pred_region
        _
      $region16: #{_device_forward.29} parent=11 // pred_fallthru
        _
    $region12: #{_device_forward.29} parent=5 // pred_fallthru
      _
    %p169 = scmp.lt.s32.totalorder %s10, 2
    // Predicated region
    $region17: #{_device_forward.29} parent=5 // pred_check
      %p170 = pneg %p169
    $region18: #{_device_forward.29} parent=5 // pred_check_branch
      %172 = sbr.rel (%p170) target = $region20
    $region19: #{_device_forward.29} parent=5 // pred_region
      // Predicated region
      $region21: #{_device_forward.29} parent=19 // pred_check
        %p173 = pneg %p44
      $region22: #{_device_forward.29} parent=19 // pred_check_branch
        %175 = sbr.rel (%p173) target = $region24
      $region23: #{_device_forward.29} parent=19 // pred_region
        %s176 = smul.u32 8, %s18
        %p177 = scmp.lt.s32.totalorder %s17, 1
        %s178 = scalar_select %p177, %s17, 1
        %p179 = scmp.lt.s32.totalorder %s176, 7
        %s180 = scalar_select %p179, %s176, 7
        %s181 = smul.addr %s178, 8
        %s182 = sadd.s32 %s180, %s181
        %s183 = smul.addr %s182, 8
        %s184 = scalar_lea.vmem %s0, %s183
        %s185 = smul.u32 8, %s18
      $region24: #{_device_forward.29} parent=19 // pred_fallthru
        _
      // Predicated region
      $region25: #{_device_forward.29} parent=19 // pred_check
        %p186 = pneg %p91
      $region26: #{_device_forward.29} parent=19 // pred_check_branch
        %188 = sbr.rel (%p186) target = $region28
      $region27: #{_device_forward.29} parent=19 // pred_region
        %p189 = scmp.lt.s32.totalorder %s17, 1
        %s190 = scalar_select %p189, %s17, 1
        %s191 = scalar_lea.vmem %s2, %s190
      $region28: #{_device_forward.29} parent=19 // pred_fallthru
        _
      // Predicated region
      $region29: #{_device_forward.29} parent=19 // pred_check
        %p192 = pneg %p117
      $region30: #{_device_forward.29} parent=19 // pred_check_branch
        %194 = sbr.rel (%p192) target = $region32
      $region31: #{_device_forward.29} parent=19 // pred_region
        %p195 = scmp.lt.s32.totalorder %s17, 1
        %s196 = scalar_select %p195, %s17, 1
        %s197 = scalar_lea.vmem %s3, %s196
      $region32: #{_device_forward.29} parent=19 // pred_fallthru
        _
    $region20: #{_device_forward.29} parent=5 // pred_fallthru
      _
    %p198 = scmp.le.s32.totalorder 1, %s10
    %p199 = scmp.lt.s32.totalorder %s10, 3
    %p200 = pnand %p198, %p199
    %p201 = pneg %p200
    // Predicated region
    $region33: #{_device_forward.29} parent=5 // pred_check
      _
    $region34: #{_device_forward.29} parent=5 // pred_check_branch
      %203 = sbr.rel (%p200) target = $region36
    $region35: #{_device_forward.29} parent=5 // pred_region
      %s204 = ssub.s32 %s10, 1
      %s205 = smul.u32 8, %s20
      %p206 = scmp.lt.s32.totalorder %s19, 1
      %s207 = scalar_select %p206, %s19, 1
      %p208 = scmp.lt.s32.totalorder %s205, 7
      %s209 = scalar_select %p208, %s205, 7
      %s210 = smul.addr %s207, 8
      %s211 = sadd.s32 %s209, %s210
      %s212 = smul.addr %s211, 8
      %s213 = scalar_lea.vmem %s0, %s212
      %p214 = pneg %p50
      %p215 = pneg %p47
      %p216 = pneg %p71
      %p217 = pneg %p68
      %p218 = scmp.lt.s32.totalorder %s19, 1
      %s219 = scalar_select %p218, %s19, 1
      %s220 = scalar_lea.vmem %s2, %s219
      %p221 = pneg %p97
      %p222 = pneg %p94
      %p223 = scmp.lt.s32.totalorder %s19, 1
      %s224 = scalar_select %p223, %s19, 1
      %s225 = scalar_lea.vmem %s3, %s224
      %p226 = pneg %p123
      %p227 = pneg %p120
      %p228 = pneg %p151
      %p229 = pneg %p148
      %s230 = smul.u32 8, %s20
      %p231 = scmp.lt.s32.totalorder %s19, 1
      %s232 = scalar_select %p231, %s19, 1
      %p233 = scmp.lt.s32.totalorder %s230, 7
      %s234 = scalar_select %p233, %s230, 7
      %s235 = smul.addr %s232, 8
      %s236 = sadd.s32 %s234, %s235
      %s237 = smul.addr %s236, 4
      %s238 = scalar_lea.vmem %s4, %s237
      %s239 = smul.u32 8, %s20
      %p240 = scmp.lt.s32.totalorder %s19, 1
      %s241 = scalar_select %p240, %s19, 1
      %p242 = scmp.lt.s32.totalorder %s239, 7
      %s243 = scalar_select %p242, %s239, 7
      %s244 = smul.addr %s241, 8
      %s245 = sadd.s32 %s243, %s244
      %s246 = smul.addr %s245, 8
      %s247 = scalar_lea.vmem %s0, %s246
      %s248 = smul.u32 8, %s20
      %p249 = scmp.lt.s32.totalorder %s19, 1
      %s250 = scalar_select %p249, %s19, 1
      %s251 = scalar_lea.vmem %s2, %s250
      %p252 = scmp.lt.s32.totalorder %s19, 1
      %s253 = scalar_select %p252, %s19, 1
      %s254 = scalar_lea.vmem %s3, %s253
      %s255 = smul.u32 8, %s20
      %p256 = scmp.lt.s32.totalorder %s19, 1
      %s257 = scalar_select %p256, %s19, 1
      %p258 = scmp.lt.s32.totalorder %s255, 7
      %s259 = scalar_select %p258, %s255, 7
      %s260 = smul.addr %s257, 8
      %s261 = sadd.s32 %s259, %s260
      %s262 = smul.addr %s261, 4
      %s263 = scalar_lea.vmem %s4, %s262
      %s264 = smul.u32 8, %s20
      %v265 = vld [vmem:[%s247] sm:$0xff]
      %v266 = vld [vmem:[%s247 + $0x8] sm:$0xff]
      %v267 = vld [vmem:[%s247 + $0x10] sm:$0xff]
      %v268 = vld [vmem:[%s247 + $0x18] sm:$0xff]
      %v269 = vld [vmem:[%s247 + $0x20] sm:$0xff]
      %v270 = vld [vmem:[%s247 + $0x28] sm:$0xff]
      %v271 = vld [vmem:[%s247 + $0x30] sm:$0xff]
      %v272 = vld [vmem:[%s247 + $0x38] sm:$0xff]
      %v273 = vmul.f32 %v265, %v265
      %v274 = vmul.f32 %v266, %v266
      %v275 = vmul.f32 %v267, %v267
      %v276 = vmul.f32 %v268, %v268
      %v277 = vmul.f32 %v269, %v269
      %v278 = vmul.f32 %v270, %v270
      %v279 = vmul.f32 %v271, %v271
      %v280 = vmul.f32 %v272, %v272
      %vm281 = vcmask 523264
      %v282 = vsel %vm281, %v273, 0.0
      %283 = vadd.xlane.f32.xlu0 %v282
      %v284 = vpop.xlane.xlu0 %283
      %v285 = vsel %vm281, %v274, 0.0
      %286 = vadd.xlane.f32.xlu0 %v285
      %v287 = vpop.xlane.xlu0 %286
      %v288 = vsel %vm281, %v275, 0.0
      %289 = vadd.xlane.f32.xlu0 %v288
      %v290 = vpop.xlane.xlu0 %289
      %v291 = vsel %vm281, %v276, 0.0
      %292 = vadd.xlane.f32.xlu0 %v291
      %v293 = vpop.xlane.xlu0 %292
      %v294 = vsel %vm281, %v277, 0.0
      %295 = vadd.xlane.f32.xlu0 %v294
      %v296 = vpop.xlane.xlu0 %295
      %v297 = vsel %vm281, %v278, 0.0
      %298 = vadd.xlane.f32.xlu0 %v297
      %v299 = vpop.xlane.xlu0 %298
      %v300 = vsel %vm281, %v279, 0.0
      %301 = vadd.xlane.f32.xlu0 %v300
      %v302 = vpop.xlane.xlu0 %301
      %v303 = vsel %vm281, %v280, 0.0
      %304 = vadd.xlane.f32.xlu0 %v303
      %v305 = vpop.xlane.xlu0 %304
      %v306 = vrcp.pop 64.0
      %v307 = vmul.f32 %v284, %v306
      %v308 = vmul.f32 %v287, %v306
      %v309 = vmul.f32 %v290, %v306
      %v310 = vmul.f32 %v293, %v306
      %v311 = vmul.f32 %v296, %v306
      %v312 = vmul.f32 %v299, %v306
      %v313 = vmul.f32 %v302, %v306
      %v314 = vmul.f32 %v305, %v306
      %v315 = vadd.f32 %v307, 1e-05
      %v316 = vadd.f32 %v308, 1e-05
      %v317 = vadd.f32 %v309, 1e-05
      %v318 = vadd.f32 %v310, 1e-05
      %v319 = vadd.f32 %v311, 1e-05
      %v320 = vadd.f32 %v312, 1e-05
      %v321 = vadd.f32 %v313, 1e-05
      %v322 = vadd.f32 %v314, 1e-05
      %v323 = vrsqrt.pop %v315
      %v324 = vrsqrt.pop %v316
      %v325 = vrsqrt.pop %v317
      %v326 = vrsqrt.pop %v318
      %v327 = vrsqrt.pop %v319
      %v328 = vrsqrt.pop %v320
      %v329 = vrsqrt.pop %v321
      %v330 = vrsqrt.pop %v322
      %v331 = vmul.f32 %v265, %v323
      %v332 = vmul.f32 %v266, %v324
      %v333 = vmul.f32 %v267, %v325
      %v334 = vmul.f32 %v268, %v326
      %v335 = vmul.f32 %v269, %v327
      %v336 = vmul.f32 %v270, %v328
      %v337 = vmul.f32 %v271, %v329
      %v338 = vmul.f32 %v272, %v330
      %v339 = vld [vmem:[%s1] sm:$0x1]
      %v341 = vlaneseq
      %v342 = vshrl.u32 %v341, 7
      %v343 = vsub.s32 0, %v342
      %v344 = vrot.slane %v339, %v343
      %v346 = vmul.f32 %v331, %v344
      %v347 = vmul.f32 %v332, %v344
      %v348 = vmul.f32 %v333, %v344
      %v349 = vmul.f32 %v334, %v344
      %v350 = vmul.f32 %v335, %v344
      %v351 = vmul.f32 %v336, %v344
      %v352 = vmul.f32 %v337, %v344
      %v353 = vmul.f32 %v338, %v344
      %v354 = vld [vmem:[%s251] sm:$0x1]
      %v355 = vadd.f32 %v354, 1.0
      %v357 = vlaneseq
      %v358 = vshrl.u32 %v357, 7
      %v359 = vsub.s32 0, %v358
      %v360 = vrot.slane %v355, %v359
      %v362 = vmul.f32 %v346, %v360
      %v363 = vmul.f32 %v347, %v360
      %v364 = vmul.f32 %v348, %v360
      %v365 = vmul.f32 %v349, %v360
      %v366 = vmul.f32 %v350, %v360
      %v367 = vmul.f32 %v351, %v360
      %v368 = vmul.f32 %v352, %v360
      %v369 = vmul.f32 %v353, %v360
      %v370 = vld [vmem:[%s254] sm:$0x1]
      %v372 = vlaneseq
      %v373 = vshrl.u32 %v372, 7
      %v374 = vsub.s32 0, %v373
      %v375 = vrot.slane %v370, %v374
      %v377 = vadd.f32 %v362, %v375
      %v378 = vadd.f32 %v363, %v375
      %v379 = vadd.f32 %v364, %v375
      %v380 = vadd.f32 %v365, %v375
      %v381 = vadd.f32 %v366, %v375
      %v382 = vadd.f32 %v367, %v375
      %v383 = vadd.f32 %v368, %v375
      %v384 = vadd.f32 %v369, %v375
      %v385 = vpack.c.bf16 %v378, %v377
      %v386 = vpack.c.bf16 %v380, %v379
      %v387 = vpack.c.bf16 %v382, %v381
      %v388 = vpack.c.bf16 %v384, %v383
      %v393 = vunpack.c.l.b16 %v385
      %v394 = vunpack.c.h.b16 %v385
      %v395 = vunpack.c.l.b16 %v386
      %v396 = vunpack.c.h.b16 %v386
      %v397 = vunpack.c.l.b16 %v387
      %v398 = vunpack.c.h.b16 %v387
      %v399 = vunpack.c.l.b16 %v388
      %v400 = vunpack.c.h.b16 %v388
      %v401 = vpack.c.b16 %v393, %v393
      %v402 = vpack.c.b16 %v394, %v394
      %v403 = vpack.c.b16 %v395, %v395
      %v404 = vpack.c.b16 %v396, %v396
      %v405 = vpack.c.b16 %v397, %v397
      %v406 = vpack.c.b16 %v398, %v398
      %v407 = vpack.c.b16 %v399, %v399
      %v408 = vpack.c.b16 %v400, %v400
      %vm417 = vcmask 519168
      %418 = vst.msk [vmem:[%s263] sm:$0xf] %vm417, %v401
      %419 = vst.msk [vmem:[%s263 + $0x4] sm:$0xf] %vm417, %v402
      %420 = vst.msk [vmem:[%s263 + $0x8] sm:$0xf] %vm417, %v403
      %421 = vst.msk [vmem:[%s263 + $0xc] sm:$0xf] %vm417, %v404
      %422 = vst.msk [vmem:[%s263 + $0x10] sm:$0xf] %vm417, %v405
      %423 = vst.msk [vmem:[%s263 + $0x14] sm:$0xf] %vm417, %v406
      %424 = vst.msk [vmem:[%s263 + $0x18] sm:$0xf] %vm417, %v407
      %425 = vst.msk [vmem:[%s263 + $0x1c] sm:$0xf] %vm417, %v408
      %s426 = smul.u32 8, %s20
      %p427 = scmp.lt.s32.totalorder %s19, 1
      %s428 = scalar_select %p427, %s19, 1
      %p429 = scmp.lt.s32.totalorder %s426, 7
      %s430 = scalar_select %p429, %s426, 7
      %s431 = smul.addr %s428, 8
      %s432 = sadd.s32 %s430, %s431
      %s433 = smul.addr %s432, 4
      %s434 = scalar_lea.vmem %s4, %s433
      // Predicated region
      $region37: #{_device_forward.29} parent=35 // pred_check
        %p435 = pneg %p148
      $region38: #{_device_forward.29} parent=35 // pred_check_branch
        %437 = sbr.rel (%p435) target = $region40
      $region39: #{_device_forward.29} parent=35 // pred_region
        %s438 = smul.u32 8, %s20
      $region40: #{_device_forward.29} parent=35 // pred_fallthru
        _
    $region36: #{_device_forward.29} parent=5 // pred_fallthru
      _
    %p439 = scmp.le.s32.totalorder 2, %s10
    // Predicated region
    $region41: #{_device_forward.29} parent=5 // pred_check
      %p440 = pneg %p439
    $region42: #{_device_forward.29} parent=5 // pred_check_branch
      %442 = sbr.rel (%p440) target = $region44
    $region43: #{_device_forward.29} parent=5 // pred_region
      %s443 = ssub.s32 %s10, 2
      // Predicated region
      $region45: #{_device_forward.29} parent=43 // pred_check
        %p444 = pneg %p154
      $region46: #{_device_forward.29} parent=43 // pred_check_branch
        %446 = sbr.rel (%p444) target = $region48
      $region47: #{_device_forward.29} parent=43 // pred_region
        %s447 = smul.u32 8, %s22
        %p448 = scmp.lt.s32.totalorder %s21, 1
        %s449 = scalar_select %p448, %s21, 1
        %p450 = scmp.lt.s32.totalorder %s447, 7
        %s451 = scalar_select %p450, %s447, 7
        %s452 = smul.addr %s449, 8
        %s453 = sadd.s32 %s451, %s452
        %s454 = smul.addr %s453, 4
        %s455 = scalar_lea.vmem %s4, %s454
      $region48: #{_device_forward.29} parent=43 // pred_fallthru
        _
    $region44: #{_device_forward.29} parent=5 // pred_fallthru
      _
  $region6: #{_device_forward.29} parent=0 // loop_footer
    %s14 = sadd.s32 1, %s10
  $region7: #{_device_forward.29} parent=0 // loop_footer_branch
    %9 = sbr.rel target = $region3
  $region8: #{_device_forward.29} parent=0 // loop_exit
    _

// kernel: _device_forward.30
$region0: #{_device_forward.30}
  #allocation0 [shape = 'u32[]', space=smem, size = 0x4, offset = 0x4, fixed_abs, tag = 'smem constant byte address 0x4 - core index']
  #allocation1 [shape = 'u32[144,128]{1,0:T(1,128)}', space=vmem, size = 0x12000, scoped, tag = 'internal scratch']
  #allocation2 [shape = 'f32[128,256]{1,0:T(8,128)}', space=vmem, size = 0x20000, scoped, tag = 'scratch operand']
  %s0 = inlined_call_operand.vmem [shape: bf16[128,128], index: 0, kind: input, shape index: {}]
  %s1 = inlined_call_operand.vmem [shape: bf16[128,256], index: 1, kind: input, shape index: {}]
  %s2 = inlined_call_operand.vmem [shape: f32[128,256], index: 2, kind: output, shape index: {}]
  %s3 = sld [smem:[#allocation0]]
  $region26: #{_device_forward.30} parent=0
    _
  %s5 = ssub.s32 1, %s3
  %s6 = scalar_select 0, %s5, %s3
  // Predicated region
  $region2: #{_device_forward.30} parent=0 // pred_check
    _
  $region3: #{_device_forward.30} parent=0 // pred_check_branch
    %8 = sbr.rel (0) target = $region5
  $region4: #{_device_forward.30} parent=0 // pred_region
    _
  $region5: #{_device_forward.30} parent=0 // pred_fallthru
    _
  // Predicated region
  $region6: #{_device_forward.30} parent=0 // pred_check
    _
  $region7: #{_device_forward.30} parent=0 // pred_check_branch
    %10 = sbr.rel (0) target = $region9
  $region8: #{_device_forward.30} parent=0 // pred_region
    _
  $region9: #{_device_forward.30} parent=0 // pred_fallthru
    _
  %p12 = scmp.eq.s32.totalorder 0, 0
  // Predicated region
  $region10: #{_device_forward.30} parent=0 // pred_check
    %p13 = pneg %p12
  $region11: #{_device_forward.30} parent=0 // pred_check_branch
    %15 = sbr.rel (%p13) target = $region13
  $region12: #{_device_forward.30} parent=0 // pred_region
    %16 = vst [vmem:[#allocation2] sm:$0xff] 0.0
    %17 = vst [vmem:[#allocation2 + $0x8] sm:$0xff] 0.0
    %18 = vst [vmem:[#allocation2 + $0x10] sm:$0xff] 0.0
    %19 = vst [vmem:[#allocation2 + $0x18] sm:$0xff] 0.0
    %20 = vst [vmem:[#allocation2 + $0x20] sm:$0xff] 0.0
    %21 = vst [vmem:[#allocation2 + $0x28] sm:$0xff] 0.0
    %22 = vst [vmem:[#allocation2 + $0x30] sm:$0xff] 0.0
    %23 = vst [vmem:[#allocation2 + $0x38] sm:$0xff] 0.0
    %24 = vst [vmem:[#allocation2 + $0x40] sm:$0xff] 0.0
    %25 = vst [vmem:[#allocation2 + $0x48] sm:$0xff] 0.0
    %26 = vst [vmem:[#allocation2 + $0x50] sm:$0xff] 0.0
    %27 = vst [vmem:[#allocation2 + $0x58] sm:$0xff] 0.0
    %28 = vst [vmem:[#allocation2 + $0x60] sm:$0xff] 0.0
    %29 = vst [vmem:[#allocation2 + $0x68] sm:$0xff] 0.0
    %30 = vst [vmem:[#allocation2 + $0x70] sm:$0xff] 0.0
    %31 = vst [vmem:[#allocation2 + $0x78] sm:$0xff] 0.0
    %32 = vst [vmem:[#allocation2 + $0x80] sm:$0xff] 0.0
    %33 = vst [vmem:[#allocation2 + $0x88] sm:$0xff] 0.0
    %34 = vst [vmem:[#allocation2 + $0x90] sm:$0xff] 0.0
    %35 = vst [vmem:[#allocation2 + $0x98] sm:$0xff] 0.0
    %36 = vst [vmem:[#allocation2 + $0xa0] sm:$0xff] 0.0
    %37 = vst [vmem:[#allocation2 + $0xa8] sm:$0xff] 0.0
    %38 = vst [vmem:[#allocation2 + $0xb0] sm:$0xff] 0.0
    %39 = vst [vmem:[#allocation2 + $0xb8] sm:$0xff] 0.0
    %40 = vst [vmem:[#allocation2 + $0xc0] sm:$0xff] 0.0
    %41 = vst [vmem:[#allocation2 + $0xc8] sm:$0xff] 0.0
    %42 = vst [vmem:[#allocation2 + $0xd0] sm:$0xff] 0.0
    %43 = vst [vmem:[#allocation2 + $0xd8] sm:$0xff] 0.0
    %44 = vst [vmem:[#allocation2 + $0xe0] sm:$0xff] 0.0
    %45 = vst [vmem:[#allocation2 + $0xe8] sm:$0xff] 0.0
    %46 = vst [vmem:[#allocation2 + $0xf0] sm:$0xff] 0.0
    %47 = vst [vmem:[#allocation2 + $0xf8] sm:$0xff] 0.0
  $region13: #{_device_forward.30} parent=0 // pred_fallthru
    _
  %v48 = vld [vmem:[#allocation2] sm:$0xff]
  %v49 = vld [vmem:[#allocation2 + $0x8] sm:$0xff]
  %v50 = vld [vmem:[#allocation2 + $0x10] sm:$0xff]
  %v51 = vld [vmem:[#allocation2 + $0x18] sm:$0xff]
  %v52 = vld [vmem:[#allocation2 + $0x20] sm:$0xff]
  %v53 = vld [vmem:[#allocation2 + $0x28] sm:$0xff]
  %v54 = vld [vmem:[#allocation2 + $0x30] sm:$0xff]
  %v55 = vld [vmem:[#allocation2 + $0x38] sm:$0xff]
  %v56 = vld [vmem:[#allocation2 + $0x40] sm:$0xff]
  %v57 = vld [vmem:[#allocation2 + $0x48] sm:$0xff]
  %v58 = vld [vmem:[#allocation2 + $0x50] sm:$0xff]
  %v59 = vld [vmem:[#allocation2 + $0x58] sm:$0xff]
  %v60 = vld [vmem:[#allocation2 + $0x60] sm:$0xff]
  %v61 = vld [vmem:[#allocation2 + $0x68] sm:$0xff]
  %v62 = vld [vmem:[#allocation2 + $0x70] sm:$0xff]
  %v63 = vld [vmem:[#allocation2 + $0x78] sm:$0xff]
  %v64 = vld [vmem:[#allocation2 + $0x80] sm:$0xff]
  %v65 = vld [vmem:[#allocation2 + $0x88] sm:$0xff]
  %v66 = vld [vmem:[#allocation2 + $0x90] sm:$0xff]
  %v67 = vld [vmem:[#allocation2 + $0x98] sm:$0xff]
  %v68 = vld [vmem:[#allocation2 + $0xa0] sm:$0xff]
  %v69 = vld [vmem:[#allocation2 + $0xa8] sm:$0xff]
  %v70 = vld [vmem:[#allocation2 + $0xb0] sm:$0xff]
  %v71 = vld [vmem:[#allocation2 + $0xb8] sm:$0xff]
  %v72 = vld [vmem:[#allocation2 + $0xc0] sm:$0xff]
  %v73 = vld [vmem:[#allocation2 + $0xc8] sm:$0xff]
  %v74 = vld [vmem:[#allocation2 + $0xd0] sm:$0xff]
  %v75 = vld [vmem:[#allocation2 + $0xd8] sm:$0xff]
  %v76 = vld [vmem:[#allocation2 + $0xe0] sm:$0xff]
  %v77 = vld [vmem:[#allocation2 + $0xe8] sm:$0xff]
  %v78 = vld [vmem:[#allocation2 + $0xf0] sm:$0xff]
  %v79 = vld [vmem:[#allocation2 + $0xf8] sm:$0xff]
  %v80 = vld [vmem:[%s0] sm:$0xf]
  %v81 = vld [vmem:[%s0 + $0x4] sm:$0xf]
  %v82 = vld [vmem:[%s0 + $0x8] sm:$0xf]
  %v83 = vld [vmem:[%s0 + $0xc] sm:$0xf]
  %v84 = vld [vmem:[%s0 + $0x10] sm:$0xf]
  %v85 = vld [vmem:[%s0 + $0x14] sm:$0xf]
  %v86 = vld [vmem:[%s0 + $0x18] sm:$0xf]
  %v87 = vld [vmem:[%s0 + $0x1c] sm:$0xf]
  %v88 = vld [vmem:[%s0 + $0x20] sm:$0xf]
  %v89 = vld [vmem:[%s0 + $0x24] sm:$0xf]
  %v90 = vld [vmem:[%s0 + $0x28] sm:$0xf]
  %v91 = vld [vmem:[%s0 + $0x2c] sm:$0xf]
  %v92 = vld [vmem:[%s0 + $0x30] sm:$0xf]
  %v93 = vld [vmem:[%s0 + $0x34] sm:$0xf]
  %v94 = vld [vmem:[%s0 + $0x38] sm:$0xf]
  %v95 = vld [vmem:[%s0 + $0x3c] sm:$0xf]
  %v96 = vld [vmem:[%s1] sm:$0xff]
  %v97 = vld [vmem:[%s1 + $0x8] sm:$0xff]
  %v98 = vld [vmem:[%s1 + $0x10] sm:$0xff]
  %v99 = vld [vmem:[%s1 + $0x18] sm:$0xff]
  %v100 = vld [vmem:[%s1 + $0x20] sm:$0xff]
  %v101 = vld [vmem:[%s1 + $0x28] sm:$0xff]
  %v102 = vld [vmem:[%s1 + $0x30] sm:$0xff]
  %v103 = vld [vmem:[%s1 + $0x38] sm:$0xff]
  %v104 = vld [vmem:[%s1 + $0x40] sm:$0xff]
  %v105 = vld [vmem:[%s1 + $0x48] sm:$0xff]
  %v106 = vld [vmem:[%s1 + $0x50] sm:$0xff]
  %v107 = vld [vmem:[%s1 + $0x58] sm:$0xff]
  %v108 = vld [vmem:[%s1 + $0x60] sm:$0xff]
  %v109 = vld [vmem:[%s1 + $0x68] sm:$0xff]
  %v110 = vld [vmem:[%s1 + $0x70] sm:$0xff]
  %v111 = vld [vmem:[%s1 + $0x78] sm:$0xff]
  %v128 = vunpack.c.l.b16 %v80
  %v129 = vunpack.c.l.b16 %v81
  %v130 = vunpack.c.l.b16 %v82
  %v131 = vunpack.c.l.b16 %v83
  %v132 = vunpack.c.l.b16 %v84
  %v133 = vunpack.c.l.b16 %v85
  %v134 = vunpack.c.l.b16 %v86
  %v135 = vunpack.c.l.b16 %v87
  %v136 = vunpack.c.l.b16 %v88
  %v137 = vunpack.c.l.b16 %v89
  %v138 = vunpack.c.l.b16 %v90
  %v139 = vunpack.c.l.b16 %v91
  %v140 = vunpack.c.l.b16 %v92
  %v141 = vunpack.c.l.b16 %v93
  %v142 = vunpack.c.l.b16 %v94
  %v143 = vunpack.c.l.b16 %v95
  %v144 = vpack.c.b16 %v129, %v128
  %v145 = vpack.c.b16 %v131, %v130
  %v146 = vpack.c.b16 %v133, %v132
  %v147 = vpack.c.b16 %v135, %v134
  %v148 = vpack.c.b16 %v137, %v136
  %v149 = vpack.c.b16 %v139, %v138
  %v150 = vpack.c.b16 %v141, %v140
  %v151 = vpack.c.b16 %v143, %v142
  %v176 = vunpack.c.l.b16 %v96
  %v177 = vunpack.c.h.b16 %v96
  %v178 = vunpack.c.l.b16 %v97
  %v179 = vunpack.c.h.b16 %v97
  %v180 = vunpack.c.l.b16 %v98
  %v181 = vunpack.c.h.b16 %v98
  %v182 = vunpack.c.l.b16 %v99
  %v183 = vunpack.c.h.b16 %v99
  %v184 = vunpack.c.l.b16 %v100
  %v185 = vunpack.c.h.b16 %v100
  %v186 = vunpack.c.l.b16 %v101
  %v187 = vunpack.c.h.b16 %v101
  %v188 = vunpack.c.l.b16 %v102
  %v189 = vunpack.c.h.b16 %v102
  %v190 = vunpack.c.l.b16 %v103
  %v191 = vunpack.c.h.b16 %v103
  %v192 = vunpack.c.l.b16 %v104
  %v193 = vunpack.c.h.b16 %v104
  %v194 = vunpack.c.l.b16 %v105
  %v195 = vunpack.c.h.b16 %v105
  %v196 = vunpack.c.l.b16 %v106
  %v197 = vunpack.c.h.b16 %v106
  %v198 = vunpack.c.l.b16 %v107
  %v199 = vunpack.c.h.b16 %v107
  %v200 = vunpack.c.l.b16 %v108
  %v201 = vunpack.c.h.b16 %v108
  %v202 = vunpack.c.l.b16 %v109
  %v203 = vunpack.c.h.b16 %v109
  %v204 = vunpack.c.l.b16 %v110
  %v205 = vunpack.c.h.b16 %v110
  %v206 = vunpack.c.l.b16 %v111
  %v207 = vunpack.c.h.b16 %v111
  %v208 = vpack.c.b16 %v178, %v176
  %v209 = vpack.c.b16 %v179, %v177
  %v210 = vpack.c.b16 %v182, %v180
  %v211 = vpack.c.b16 %v183, %v181
  %v212 = vpack.c.b16 %v186, %v184
  %v213 = vpack.c.b16 %v187, %v185
  %v214 = vpack.c.b16 %v190, %v188
  %v215 = vpack.c.b16 %v191, %v189
  %v216 = vpack.c.b16 %v194, %v192
  %v217 = vpack.c.b16 %v195, %v193
  %v218 = vpack.c.b16 %v198, %v196
  %v219 = vpack.c.b16 %v199, %v197
  %v220 = vpack.c.b16 %v202, %v200
  %v221 = vpack.c.b16 %v203, %v201
  %v222 = vpack.c.b16 %v206, %v204
  %v223 = vpack.c.b16 %v207, %v205
  %240 = vmatprep.subr.bf16.mxu0 %v223
  %241 = vmatpush1.bf16.msra.mxu0 %v222
  %242 = vmatprep.subr.bf16.mxu0 %v221
  %243 = vmatpush1.bf16.msra.mxu0 %v220
  %244 = vmatprep.subr.bf16.mxu0 %v219
  %245 = vmatpush1.bf16.msra.mxu0 %v218
  %246 = vmatprep.subr.bf16.mxu0 %v217
  %247 = vmatpush1.bf16.msra.mxu0 %v216
  %248 = vmatprep.subr.bf16.mxu0 %v215
  %249 = vmatpush1.bf16.msra.mxu0 %v214
  %250 = vmatprep.subr.bf16.mxu0 %v213
  %251 = vmatpush1.bf16.msra.mxu0 %v212
  %252 = vmatprep.subr.bf16.mxu0 %v211
  %253 = vmatpush1.bf16.msra.mxu0 %v210
  %254 = vmatprep.subr.bf16.mxu0 %v209
  %255 = vmatpush1.bf16.msra.mxu0 %v208
  %256 = vmatprep.subr.bf16.mxu0 0
  %257 = vmatpush2.bf16.msra.mxu0 0
  %258 = vmatprep.subr.bf16.mxu0 0
  %259 = vmatpush2.bf16.msra.mxu0 0
  %260 = vmatprep.subr.bf16.mxu0 0
  %261 = vmatpush2.bf16.msra.mxu0 0
  %262 = vmatprep.subr.bf16.mxu0 0
  %263 = vmatpush2.bf16.msra.mxu0 0
  %264 = vmatprep.subr.bf16.mxu0 0
  %265 = vmatpush2.bf16.msra.mxu0 0
  %266 = vmatprep.subr.bf16.mxu0 0
  %267 = vmatpush2.bf16.msra.mxu0 0
  %268 = vmatprep.subr.bf16.mxu0 0
  %269 = vmatpush2.bf16.msra.mxu0 0
  %270 = vmatprep.subr.bf16.mxu0 0
  %271 = vmatpush2.bf16.msra.mxu0 0
  %272 = vmatprep.mubr.bf16.mxu0 0
  %273 = vmatmul.mubr.bf16.gmra.mxu0 %v144
  %v274 = vpop.f32.mrf.mxu0
  %v275 = vadd.f32 0.0, %v274
  %v276 = vpop.f32.mrf.mxu0
  %v277 = vadd.f32 0.0, %v276
  %v278 = vpop.f32.mrf.mxu0
  %v279 = vadd.f32 0.0, %v278
  %v280 = vpop.f32.mrf.mxu0
  %v281 = vadd.f32 0.0, %v280
  %282 = vmatprep.mubr.bf16.mxu0 0
  %283 = vmatmul.mubr.bf16.gmra.mxu0 %v145
  %v284 = vpop.f32.mrf.mxu0
  %v285 = vadd.f32 0.0, %v284
  %v286 = vpop.f32.mrf.mxu0
  %v287 = vadd.f32 0.0, %v286
  %v288 = vpop.f32.mrf.mxu0
  %v289 = vadd.f32 0.0, %v288
  %v290 = vpop.f32.mrf.mxu0
  %v291 = vadd.f32 0.0, %v290
  %292 = vmatprep.mubr.bf16.mxu0 0
  %293 = vmatmul.mubr.bf16.gmra.mxu0 %v146
  %v294 = vpop.f32.mrf.mxu0
  %v295 = vadd.f32 0.0, %v294
  %v296 = vpop.f32.mrf.mxu0
  %v297 = vadd.f32 0.0, %v296
  %v298 = vpop.f32.mrf.mxu0
  %v299 = vadd.f32 0.0, %v298
  %v300 = vpop.f32.mrf.mxu0
  %v301 = vadd.f32 0.0, %v300
  %302 = vmatprep.mubr.bf16.mxu0 0
  %303 = vmatmul.mubr.bf16.gmra.mxu0 %v147
  %v304 = vpop.f32.mrf.mxu0
  %v305 = vadd.f32 0.0, %v304
  %v306 = vpop.f32.mrf.mxu0
  %v307 = vadd.f32 0.0, %v306
  %v308 = vpop.f32.mrf.mxu0
  %v309 = vadd.f32 0.0, %v308
  %v310 = vpop.f32.mrf.mxu0
  %v311 = vadd.f32 0.0, %v310
  %312 = vmatprep.mubr.bf16.mxu0 0
  %313 = vmatmul.mubr.bf16.gmra.mxu0 %v148
  %v314 = vpop.f32.mrf.mxu0
  %v315 = vadd.f32 0.0, %v314
  %v316 = vpop.f32.mrf.mxu0
  %v317 = vadd.f32 0.0, %v316
  %v318 = vpop.f32.mrf.mxu0
  %v319 = vadd.f32 0.0, %v318
  %v320 = vpop.f32.mrf.mxu0
  %v321 = vadd.f32 0.0, %v320
  %322 = vmatprep.mubr.bf16.mxu0 0
  %323 = vmatmul.mubr.bf16.gmra.mxu0 %v149
  %v324 = vpop.f32.mrf.mxu0
  %v325 = vadd.f32 0.0, %v324
  %v326 = vpop.f32.mrf.mxu0
  %v327 = vadd.f32 0.0, %v326
  %v328 = vpop.f32.mrf.mxu0
  %v329 = vadd.f32 0.0, %v328
  %v330 = vpop.f32.mrf.mxu0
  %v331 = vadd.f32 0.0, %v330
  %332 = vmatprep.mubr.bf16.mxu0 0
  %333 = vmatmul.mubr.bf16.gmra.mxu0 %v150
  %v334 = vpop.f32.mrf.mxu0
  %v335 = vadd.f32 0.0, %v334
  %v336 = vpop.f32.mrf.mxu0
  %v337 = vadd.f32 0.0, %v336
  %v338 = vpop.f32.mrf.mxu0
  %v339 = vadd.f32 0.0, %v338
  %v340 = vpop.f32.mrf.mxu0
  %v341 = vadd.f32 0.0, %v340
  %342 = vmatprep.mubr.bf16.mxu0 0
  %343 = vmatmul.mubr.bf16.gmra.mxu0 %v151
  %v344 = vpop.f32.mrf.mxu0
  %v345 = vadd.f32 0.0, %v344
  %v346 = vpop.f32.mrf.mxu0
  %v347 = vadd.f32 0.0, %v346
  %v348 = vpop.f32.mrf.mxu0
  %v349 = vadd.f32 0.0, %v348
  %v350 = vpop.f32.mrf.mxu0
  %v351 = vadd.f32 0.0, %v350
  %352 = vdwg.mxu0
  %v353 = vadd.f32 %v48, %v275
  %v354 = vadd.f32 %v49, %v277
  %v355 = vadd.f32 %v50, %v279
  %v356 = vadd.f32 %v51, %v281
  %v357 = vadd.f32 %v52, %v285
  %v358 = vadd.f32 %v53, %v287
  %v359 = vadd.f32 %v54, %v289
  %v360 = vadd.f32 %v55, %v291
  %v361 = vadd.f32 %v56, %v295
  %v362 = vadd.f32 %v57, %v297
  %v363 = vadd.f32 %v58, %v299
  %v364 = vadd.f32 %v59, %v301
  %v365 = vadd.f32 %v60, %v305
  %v366 = vadd.f32 %v61, %v307
  %v367 = vadd.f32 %v62, %v309
  %v368 = vadd.f32 %v63, %v311
  %v369 = vadd.f32 %v64, %v315
  %v370 = vadd.f32 %v65, %v317
  %v371 = vadd.f32 %v66, %v319
  %v372 = vadd.f32 %v67, %v321
  %v373 = vadd.f32 %v68, %v325
  %v374 = vadd.f32 %v69, %v327
  %v375 = vadd.f32 %v70, %v329
  %v376 = vadd.f32 %v71, %v331
  %v377 = vadd.f32 %v72, %v335
  %v378 = vadd.f32 %v73, %v337
  %v379 = vadd.f32 %v74, %v339
  %v380 = vadd.f32 %v75, %v341
  %v381 = vadd.f32 %v76, %v345
  %v382 = vadd.f32 %v77, %v347
  %v383 = vadd.f32 %v78, %v349
  %v384 = vadd.f32 %v79, %v351
  %385 = vst [vmem:[#allocation2] sm:$0xff] %v353
  %386 = vst [vmem:[#allocation2 + $0x8] sm:$0xff] %v354
  %387 = vst [vmem:[#allocation2 + $0x10] sm:$0xff] %v355
  %388 = vst [vmem:[#allocation2 + $0x18] sm:$0xff] %v356
  %389 = vst [vmem:[#allocation2 + $0x20] sm:$0xff] %v357
  %390 = vst [vmem:[#allocation2 + $0x28] sm:$0xff] %v358
  %391 = vst [vmem:[#allocation2 + $0x30] sm:$0xff] %v359
  %392 = vst [vmem:[#allocation2 + $0x38] sm:$0xff] %v360
  %393 = vst [vmem:[#allocation2 + $0x40] sm:$0xff] %v361
  %394 = vst [vmem:[#allocation2 + $0x48] sm:$0xff] %v362
  %395 = vst [vmem:[#allocation2 + $0x50] sm:$0xff] %v363
  %396 = vst [vmem:[#allocation2 + $0x58] sm:$0xff] %v364
  %397 = vst [vmem:[#allocation2 + $0x60] sm:$0xff] %v365
  %398 = vst [vmem:[#allocation2 + $0x68] sm:$0xff] %v366
  %399 = vst [vmem:[#allocation2 + $0x70] sm:$0xff] %v367
  %400 = vst [vmem:[#allocation2 + $0x78] sm:$0xff] %v368
  %401 = vst [vmem:[#allocation2 + $0x80] sm:$0xff] %v369
  %402 = vst [vmem:[#allocation2 + $0x88] sm:$0xff] %v370
  %403 = vst [vmem:[#allocation2 + $0x90] sm:$0xff] %v371
  %404 = vst [vmem:[#allocation2 + $0x98] sm:$0xff] %v372
  %405 = vst [vmem:[#allocation2 + $0xa0] sm:$0xff] %v373
  %406 = vst [vmem:[#allocation2 + $0xa8] sm:$0xff] %v374
  %407 = vst [vmem:[#allocation2 + $0xb0] sm:$0xff] %v375
  %408 = vst [vmem:[#allocation2 + $0xb8] sm:$0xff] %v376
  %409 = vst [vmem:[#allocation2 + $0xc0] sm:$0xff] %v377
  %410 = vst [vmem:[#allocation2 + $0xc8] sm:$0xff] %v378
  %411 = vst [vmem:[#allocation2 + $0xd0] sm:$0xff] %v379
  %412 = vst [vmem:[#allocation2 + $0xd8] sm:$0xff] %v380
  %413 = vst [vmem:[#allocation2 + $0xe0] sm:$0xff] %v381
  %414 = vst [vmem:[#allocation2 + $0xe8] sm:$0xff] %v382
  %415 = vst [vmem:[#allocation2 + $0xf0] sm:$0xff] %v383
  %416 = vst [vmem:[#allocation2 + $0xf8] sm:$0xff] %v384
  // Predicated region
  $region14: #{_device_forward.30} parent=0 // pred_check
    %p417 = pneg %p12
  $region15: #{_device_forward.30} parent=0 // pred_check_branch
    %419 = sbr.rel (%p417) target = $region17
  $region16: #{_device_forward.30} parent=0 // pred_region
    %v420 = vld [vmem:[#allocation2] sm:$0xff]
    %v421 = vld [vmem:[#allocation2 + $0x8] sm:$0xff]
    %v422 = vld [vmem:[#allocation2 + $0x10] sm:$0xff]
    %v423 = vld [vmem:[#allocation2 + $0x18] sm:$0xff]
    %v424 = vld [vmem:[#allocation2 + $0x20] sm:$0xff]
    %v425 = vld [vmem:[#allocation2 + $0x28] sm:$0xff]
    %v426 = vld [vmem:[#allocation2 + $0x30] sm:$0xff]
    %v427 = vld [vmem:[#allocation2 + $0x38] sm:$0xff]
    %v428 = vld [vmem:[#allocation2 + $0x40] sm:$0xff]
    %v429 = vld [vmem:[#allocation2 + $0x48] sm:$0xff]
    %v430 = vld [vmem:[#allocation2 + $0x50] sm:$0xff]
    %v431 = vld [vmem:[#allocation2 + $0x58] sm:$0xff]
    %v432 = vld [vmem:[#allocation2 + $0x60] sm:$0xff]
    %v433 = vld [vmem:[#allocation2 + $0x68] sm:$0xff]
    %v434 = vld [vmem:[#allocation2 + $0x70] sm:$0xff]
    %v435 = vld [vmem:[#allocation2 + $0x78] sm:$0xff]
    %v436 = vld [vmem:[#allocation2 + $0x80] sm:$0xff]
    %v437 = vld [vmem:[#allocation2 + $0x88] sm:$0xff]
    %v438 = vld [vmem:[#allocation2 + $0x90] sm:$0xff]
    %v439 = vld [vmem:[#allocation2 + $0x98] sm:$0xff]
    %v440 = vld [vmem:[#allocation2 + $0xa0] sm:$0xff]
    %v441 = vld [vmem:[#allocation2 + $0xa8] sm:$0xff]
    %v442 = vld [vmem:[#allocation2 + $0xb0] sm:$0xff]
    %v443 = vld [vmem:[#allocation2 + $0xb8] sm:$0xff]
    %v444 = vld [vmem:[#allocation2 + $0xc0] sm:$0xff]
    %v445 = vld [vmem:[#allocation2 + $0xc8] sm:$0xff]
    %v446 = vld [vmem:[#allocation2 + $0xd0] sm:$0xff]
    %v447 = vld [vmem:[#allocation2 + $0xd8] sm:$0xff]
    %v448 = vld [vmem:[#allocation2 + $0xe0] sm:$0xff]
    %v449 = vld [vmem:[#allocation2 + $0xe8] sm:$0xff]
    %v450 = vld [vmem:[#allocation2 + $0xf0] sm:$0xff]
    %v451 = vld [vmem:[#allocation2 + $0xf8] sm:$0xff]
    %452 = vst [vmem:[%s2] sm:$0xff] %v420
    %453 = vst [vmem:[%s2 + $0x8] sm:$0xff] %v421
    %454 = vst [vmem:[%s2 + $0x10] sm:$0xff] %v422
    %455 = vst [vmem:[%s2 + $0x18] sm:$0xff] %v423
    %456 = vst [vmem:[%s2 + $0x20] sm:$0xff] %v424
    %457 = vst [vmem:[%s2 + $0x28] sm:$0xff] %v425
    %458 = vst [vmem:[%s2 + $0x30] sm:$0xff] %v426
    %459 = vst [vmem:[%s2 + $0x38] sm:$0xff] %v427
    %460 = vst [vmem:[%s2 + $0x40] sm:$0xff] %v428
    %461 = vst [vmem:[%s2 + $0x48] sm:$0xff] %v429
    %462 = vst [vmem:[%s2 + $0x50] sm:$0xff] %v430
    %463 = vst [vmem:[%s2 + $0x58] sm:$0xff] %v431
    %464 = vst [vmem:[%s2 + $0x60] sm:$0xff] %v432
    %465 = vst [vmem:[%s2 + $0x68] sm:$0xff] %v433
    %466 = vst [vmem:[%s2 + $0x70] sm:$0xff] %v434
    %467 = vst [vmem:[%s2 + $0x78] sm:$0xff] %v435
    %468 = vst [vmem:[%s2 + $0x80] sm:$0xff] %v436
    %469 = vst [vmem:[%s2 + $0x88] sm:$0xff] %v437
    %470 = vst [vmem:[%s2 + $0x90] sm:$0xff] %v438
    %471 = vst [vmem:[%s2 + $0x98] sm:$0xff] %v439
    %472 = vst [vmem:[%s2 + $0xa0] sm:$0xff] %v440
    %473 = vst [vmem:[%s2 + $0xa8] sm:$0xff] %v441
    %474 = vst [vmem:[%s2 + $0xb0] sm:$0xff] %v442
    %475 = vst [vmem:[%s2 + $0xb8] sm:$0xff] %v443
    %476 = vst [vmem:[%s2 + $0xc0] sm:$0xff] %v444
    %477 = vst [vmem:[%s2 + $0xc8] sm:$0xff] %v445
    %478 = vst [vmem:[%s2 + $0xd0] sm:$0xff] %v446
    %479 = vst [vmem:[%s2 + $0xd8] sm:$0xff] %v447
    %480 = vst [vmem:[%s2 + $0xe0] sm:$0xff] %v448
    %481 = vst [vmem:[%s2 + $0xe8] sm:$0xff] %v449
    %482 = vst [vmem:[%s2 + $0xf0] sm:$0xff] %v450
    %483 = vst [vmem:[%s2 + $0xf8] sm:$0xff] %v451
  $region17: #{_device_forward.30} parent=0 // pred_fallthru
    _
  // Predicated region
  $region18: #{_device_forward.30} parent=0 // pred_check
    _
  $region19: #{_device_forward.30} parent=0 // pred_check_branch
    %485 = sbr.rel (0) target = $region21
  $region20: #{_device_forward.30} parent=0 // pred_region
    _
  $region21: #{_device_forward.30} parent=0 // pred_fallthru
    _
  // Predicated region
  $region22: #{_device_forward.30} parent=0 // pred_check
    _
  $region23: #{_device_forward.30} parent=0 // pred_check_branch
    %487 = sbr.rel (0) target = $region25
  $region24: #{_device_forward.30} parent=0 // pred_region
    _
  $region25: #{_device_forward.30} parent=0 // pred_fallthru
    _

// kernel: _device_forward.31
$region0: #{_device_forward.31}
  #allocation0 [shape = 'u32[]', space=smem, size = 0x4, offset = 0x4, fixed_abs, tag = 'smem constant byte address 0x4 - core index']
  #allocation1 [shape = 'u32[144,128]{1,0:T(1,128)}', space=vmem, size = 0x12000, scoped, tag = 'internal scratch']
  %s0 = inlined_call_operand.vmem [shape: bf16[2,4,64,16], index: 0, kind: input, shape index: {}]
  %s1 = inlined_call_operand.vmem [shape: bf16[2,4,64,16], index: 1, kind: input, shape index: {}]
  %s2 = inlined_call_operand.vmem [shape: bf16[2,4,64,16], index: 2, kind: input, shape index: {}]
  %s3 = inlined_call_operand.vmem [shape: bf16[2,4,64,16], index: 3, kind: output, shape index: {}]
  %s4 = sld [smem:[#allocation0]]
  $region45: #{_device_forward.31} parent=0
    _
  %s6 = ssub.s32 1, %s4
  %s7 = scalar_select 0, %s6, %s4
  loop: start=0, step=1, limit=4
  $region2: #{_device_forward.31} parent=0 // loop_pre_header
    _
  $region3: #{_device_forward.31} parent=0 // loop_header
    %s9 = sphi 0, %s13
    %p10 = scmp.ge.s32.totalorder %s9, 4
    %s19 = sphi 0, %s21
    %s22 = sphi 0, %s19
    %s23 = sphi 0, %s22
    %s39 = sphi 0, %s23
    %s45 = sphi 0, %s47
    %s48 = sphi 0, %s45
    %s49 = sphi 0, %s48
    %s65 = sphi 0, %s49
    %s71 = sphi 0, %s73
    %s74 = sphi 0, %s71
    %s75 = sphi 0, %s74
    %s91 = sphi 0, %s75
    %s97 = sphi 0, %s99
    %s100 = sphi 0, %s97
    %s101 = sphi 0, %s100
    %s117 = sphi 0, %s101
  $region4: #{_device_forward.31} parent=0 // loop_header_branch
    %12 = sbr.rel (%p10) target = $region8
  $region5: #{_device_forward.31} parent=0 // loop_body
    %s14 = ssub.s32 %s9, 1
    %s15 = ssub.s32 %s9, 2
    %s16 = sadd.s32 %s9, 1
    %s17 = ssub.s32 %s9, %s16
    %p18 = scmp.eq.s32.totalorder %s17, 0
    %s20 = sadd.s32 %s19, 1
    %s21 = scalar_select %p18, %s19, %s20
    %p24 = pneg %p18
    %p25 = scmp.eq.s32.totalorder %s9, 1
    %p26 = por %p24, %p25
    %p27 = scmp.ne.s32.totalorder %s19, %s22
    %p28 = scmp.eq.s32.totalorder %s9, 0
    %p29 = por %p27, %p28
    %p30 = scmp.ne.s32.totalorder %s19, %s22
    %p31 = scmp.eq.s32.totalorder %s14, 1
    %p32 = por %p30, %p31
    %p33 = scmp.ne.s32.totalorder %s22, %s23
    %p34 = scmp.eq.s32.totalorder %s14, 0
    %p35 = por %p33, %p34
    %p36 = scmp.ne.s32.totalorder %s22, %s23
    %p37 = scmp.eq.s32.totalorder %s15, 1
    %p38 = por %p36, %p37
    %p40 = scmp.ne.s32.totalorder %s23, %s39
    %p41 = scmp.eq.s32.totalorder %s15, 0
    %p42 = por %p40, %p41
    %s43 = ssub.s32 %s9, %s16
    %p44 = scmp.eq.s32.totalorder %s43, 0
    %s46 = sadd.s32 %s45, 1
    %s47 = scalar_select %p44, %s45, %s46
    %p50 = pneg %p44
    %p51 = scmp.eq.s32.totalorder %s9, 1
    %p52 = por %p50, %p51
    %p53 = scmp.ne.s32.totalorder %s45, %s48
    %p54 = scmp.eq.s32.totalorder %s9, 0
    %p55 = por %p53, %p54
    %p56 = scmp.ne.s32.totalorder %s45, %s48
    %p57 = scmp.eq.s32.totalorder %s14, 1
    %p58 = por %p56, %p57
    %p59 = scmp.ne.s32.totalorder %s48, %s49
    %p60 = scmp.eq.s32.totalorder %s14, 0
    %p61 = por %p59, %p60
    %p62 = scmp.ne.s32.totalorder %s48, %s49
    %p63 = scmp.eq.s32.totalorder %s15, 1
    %p64 = por %p62, %p63
    %p66 = scmp.ne.s32.totalorder %s49, %s65
    %p67 = scmp.eq.s32.totalorder %s15, 0
    %p68 = por %p66, %p67
    %s69 = ssub.s32 %s9, %s16
    %p70 = scmp.eq.s32.totalorder %s69, 0
    %s72 = sadd.s32 %s71, 1
    %s73 = scalar_select %p70, %s71, %s72
    %p76 = pneg %p70
    %p77 = scmp.eq.s32.totalorder %s9, 1
    %p78 = por %p76, %p77
    %p79 = scmp.ne.s32.totalorder %s71, %s74
    %p80 = scmp.eq.s32.totalorder %s9, 0
    %p81 = por %p79, %p80
    %p82 = scmp.ne.s32.totalorder %s71, %s74
    %p83 = scmp.eq.s32.totalorder %s14, 1
    %p84 = por %p82, %p83
    %p85 = scmp.ne.s32.totalorder %s74, %s75
    %p86 = scmp.eq.s32.totalorder %s14, 0
    %p87 = por %p85, %p86
    %p88 = scmp.ne.s32.totalorder %s74, %s75
    %p89 = scmp.eq.s32.totalorder %s15, 1
    %p90 = por %p88, %p89
    %p92 = scmp.ne.s32.totalorder %s75, %s91
    %p93 = scmp.eq.s32.totalorder %s15, 0
    %p94 = por %p92, %p93
    %s95 = ssub.s32 %s9, %s16
    %p96 = scmp.eq.s32.totalorder %s95, 0
    %s98 = sadd.s32 %s97, 1
    %s99 = scalar_select %p96, %s97, %s98
    %p102 = pneg %p96
    %p103 = scmp.eq.s32.totalorder %s9, 1
    %p104 = por %p102, %p103
    %p105 = scmp.ne.s32.totalorder %s97, %s100
    %p106 = scmp.eq.s32.totalorder %s9, 0
    %p107 = por %p105, %p106
    %p108 = scmp.ne.s32.totalorder %s97, %s100
    %p109 = scmp.eq.s32.totalorder %s14, 1
    %p110 = por %p108, %p109
    %p111 = scmp.ne.s32.totalorder %s100, %s101
    %p112 = scmp.eq.s32.totalorder %s14, 0
    %p113 = por %p111, %p112
    %p114 = scmp.ne.s32.totalorder %s100, %s101
    %p115 = scmp.eq.s32.totalorder %s15, 1
    %p116 = por %p114, %p115
    %p118 = scmp.ne.s32.totalorder %s101, %s117
    %p119 = scmp.eq.s32.totalorder %s15, 0
    %p120 = por %p118, %p119
    %p121 = scmp.le.s32.totalorder 1, %s9
    %p122 = scmp.lt.s32.totalorder %s9, 3
    %p123 = pnand %p121, %p122
    %p124 = pneg %p123
    // Predicated region
    $region9: #{_device_forward.31} parent=5 // pred_check
      _
    $region10: #{_device_forward.31} parent=5 // pred_check_branch
      %126 = sbr.rel (%p123) target = $region12
    $region11: #{_device_forward.31} parent=5 // pred_region
      %s127 = ssub.s32 %s9, 1
    $region12: #{_device_forward.31} parent=5 // pred_fallthru
      _
    %p128 = scmp.lt.s32.totalorder %s9, 2
    // Predicated region
    $region13: #{_device_forward.31} parent=5 // pred_check
      %p129 = pneg %p128
    $region14: #{_device_forward.31} parent=5 // pred_check_branch
      %131 = sbr.rel (%p129) target = $region16
    $region15: #{_device_forward.31} parent=5 // pred_region
      // Predicated region
      $region17: #{_device_forward.31} parent=15 // pred_check
        %p132 = pneg %p29
      $region18: #{_device_forward.31} parent=15 // pred_check_branch
        %134 = sbr.rel (%p132) target = $region20
      $region19: #{_device_forward.31} parent=15 // pred_region
        %p135 = scmp.lt.s32.totalorder %s9, 1
        %s136 = scalar_select %p135, %s9, 1
        %s137 = smul.addr %s136, 32
        %s138 = smul.addr %s137, 4
        %s139 = scalar_lea.vmem %s0, %s138
      $region20: #{_device_forward.31} parent=15 // pred_fallthru
        _
      // Predicated region
      $region21: #{_device_forward.31} parent=15 // pred_check
        %p140 = pneg %p55
      $region22: #{_device_forward.31} parent=15 // pred_check_branch
        %142 = sbr.rel (%p140) target = $region24
      $region23: #{_device_forward.31} parent=15 // pred_region
        %p143 = scmp.lt.s32.totalorder %s9, 1
        %s144 = scalar_select %p143, %s9, 1
        %s145 = smul.addr %s144, 32
        %s146 = smul.addr %s145, 4
        %s147 = scalar_lea.vmem %s1, %s146
      $region24: #{_device_forward.31} parent=15 // pred_fallthru
        _
      // Predicated region
      $region25: #{_device_forward.31} parent=15 // pred_check
        %p148 = pneg %p81
      $region26: #{_device_forward.31} parent=15 // pred_check_branch
        %150 = sbr.rel (%p148) target = $region28
      $region27: #{_device_forward.31} parent=15 // pred_region
        %p151 = scmp.lt.s32.totalorder %s9, 1
        %s152 = scalar_select %p151, %s9, 1
        %s153 = smul.addr %s152, 32
        %s154 = smul.addr %s153, 4
        %s155 = scalar_lea.vmem %s2, %s154
      $region28: #{_device_forward.31} parent=15 // pred_fallthru
        _
    $region16: #{_device_forward.31} parent=5 // pred_fallthru
      _
    %p156 = scmp.le.s32.totalorder 1, %s9
    %p157 = scmp.lt.s32.totalorder %s9, 3
    %p158 = pnand %p156, %p157
    %p159 = pneg %p158
    // Predicated region
    $region29: #{_device_forward.31} parent=5 // pred_check
      _
    $region30: #{_device_forward.31} parent=5 // pred_check_branch
      %161 = sbr.rel (%p158) target = $region32
    $region31: #{_device_forward.31} parent=5 // pred_region
      %s162 = ssub.s32 %s9, 1
      %p163 = scmp.lt.s32.totalorder %s14, 1
      %s164 = scalar_select %p163, %s14, 1
      %s165 = smul.addr %s164, 32
      %s166 = smul.addr %s165, 4
      %s167 = scalar_lea.vmem %s0, %s166
      %p168 = pneg %p35
      %p169 = pneg %p32
      %p170 = scmp.lt.s32.totalorder %s14, 1
      %s171 = scalar_select %p170, %s14, 1
      %s172 = smul.addr %s171, 32
      %s173 = smul.addr %s172, 4
      %s174 = scalar_lea.vmem %s1, %s173
      %p175 = pneg %p61
      %p176 = pneg %p58
      %p177 = scmp.lt.s32.totalorder %s14, 1
      %s178 = scalar_select %p177, %s14, 1
      %s179 = smul.addr %s178, 32
      %s180 = smul.addr %s179, 4
      %s181 = scalar_lea.vmem %s2, %s180
      %p182 = pneg %p87
      %p183 = pneg %p84
      %p184 = pneg %p113
      %p185 = pneg %p110
      %p186 = scmp.lt.s32.totalorder %s14, 1
      %s187 = scalar_select %p186, %s14, 1
      %s188 = smul.addr %s187, 32
      %s189 = smul.addr %s188, 4
      %s190 = scalar_lea.vmem %s3, %s189
      %p191 = scmp.lt.s32.totalorder %s14, 1
      %s192 = scalar_select %p191, %s14, 1
      %s193 = smul.addr %s192, 32
      %s194 = smul.addr %s193, 4
      %s195 = scalar_lea.vmem %s0, %s194
      %p196 = scmp.lt.s32.totalorder %s14, 1
      %s197 = scalar_select %p196, %s14, 1
      %s198 = smul.addr %s197, 32
      %s199 = smul.addr %s198, 4
      %s200 = scalar_lea.vmem %s1, %s199
      %p201 = scmp.lt.s32.totalorder %s14, 1
      %s202 = scalar_select %p201, %s14, 1
      %s203 = smul.addr %s202, 32
      %s204 = smul.addr %s203, 4
      %s205 = scalar_lea.vmem %s2, %s204
      %p206 = scmp.lt.s32.totalorder %s14, 1
      %s207 = scalar_select %p206, %s14, 1
      %s208 = smul.addr %s207, 32
      %s209 = smul.addr %s208, 4
      %s210 = scalar_lea.vmem %s3, %s209
      %v212 = vld [vmem:[%s195] sm:$0xf]
      %v213 = vld [vmem:[%s195 + $0x4] sm:$0xf]
      %v214 = vld [vmem:[%s195 + $0x8] sm:$0xf]
      %v215 = vld [vmem:[%s195 + $0xc] sm:$0xf]
      %v216 = vld [vmem:[%s195 + $0x10] sm:$0xf]
      %v217 = vld [vmem:[%s195 + $0x14] sm:$0xf]
      %v218 = vld [vmem:[%s195 + $0x18] sm:$0xf]
      %v219 = vld [vmem:[%s195 + $0x1c] sm:$0xf]
      %v220 = vld [vmem:[%s195 + $0x20] sm:$0xf]
      %v221 = vld [vmem:[%s195 + $0x24] sm:$0xf]
      %v222 = vld [vmem:[%s195 + $0x28] sm:$0xf]
      %v223 = vld [vmem:[%s195 + $0x2c] sm:$0xf]
      %v224 = vld [vmem:[%s195 + $0x30] sm:$0xf]
      %v225 = vld [vmem:[%s195 + $0x34] sm:$0xf]
      %v226 = vld [vmem:[%s195 + $0x38] sm:$0xf]
      %v227 = vld [vmem:[%s195 + $0x3c] sm:$0xf]
      %v228 = vld [vmem:[%s195 + $0x40] sm:$0xf]
      %v229 = vld [vmem:[%s195 + $0x44] sm:$0xf]
      %v230 = vld [vmem:[%s195 + $0x48] sm:$0xf]
      %v231 = vld [vmem:[%s195 + $0x4c] sm:$0xf]
      %v232 = vld [vmem:[%s195 + $0x50] sm:$0xf]
      %v233 = vld [vmem:[%s195 + $0x54] sm:$0xf]
      %v234 = vld [vmem:[%s195 + $0x58] sm:$0xf]
      %v235 = vld [vmem:[%s195 + $0x5c] sm:$0xf]
      %v236 = vld [vmem:[%s195 + $0x60] sm:$0xf]
      %v237 = vld [vmem:[%s195 + $0x64] sm:$0xf]
      %v238 = vld [vmem:[%s195 + $0x68] sm:$0xf]
      %v239 = vld [vmem:[%s195 + $0x6c] sm:$0xf]
      %v240 = vld [vmem:[%s195 + $0x70] sm:$0xf]
      %v241 = vld [vmem:[%s195 + $0x74] sm:$0xf]
      %v242 = vld [vmem:[%s195 + $0x78] sm:$0xf]
      %v243 = vld [vmem:[%s195 + $0x7c] sm:$0xf]
      %v244 = vld [vmem:[%s200] sm:$0xf]
      %v245 = vld [vmem:[%s200 + $0x4] sm:$0xf]
      %v246 = vld [vmem:[%s200 + $0x8] sm:$0xf]
      %v247 = vld [vmem:[%s200 + $0xc] sm:$0xf]
      %v248 = vld [vmem:[%s200 + $0x10] sm:$0xf]
      %v249 = vld [vmem:[%s200 + $0x14] sm:$0xf]
      %v250 = vld [vmem:[%s200 + $0x18] sm:$0xf]
      %v251 = vld [vmem:[%s200 + $0x1c] sm:$0xf]
      %v252 = vld [vmem:[%s200 + $0x20] sm:$0xf]
      %v253 = vld [vmem:[%s200 + $0x24] sm:$0xf]
      %v254 = vld [vmem:[%s200 + $0x28] sm:$0xf]
      %v255 = vld [vmem:[%s200 + $0x2c] sm:$0xf]
      %v256 = vld [vmem:[%s200 + $0x30] sm:$0xf]
      %v257 = vld [vmem:[%s200 + $0x34] sm:$0xf]
      %v258 = vld [vmem:[%s200 + $0x38] sm:$0xf]
      %v259 = vld [vmem:[%s200 + $0x3c] sm:$0xf]
      %v260 = vld [vmem:[%s200 + $0x40] sm:$0xf]
      %v261 = vld [vmem:[%s200 + $0x44] sm:$0xf]
      %v262 = vld [vmem:[%s200 + $0x48] sm:$0xf]
      %v263 = vld [vmem:[%s200 + $0x4c] sm:$0xf]
      %v264 = vld [vmem:[%s200 + $0x50] sm:$0xf]
      %v265 = vld [vmem:[%s200 + $0x54] sm:$0xf]
      %v266 = vld [vmem:[%s200 + $0x58] sm:$0xf]
      %v267 = vld [vmem:[%s200 + $0x5c] sm:$0xf]
      %v268 = vld [vmem:[%s200 + $0x60] sm:$0xf]
      %v269 = vld [vmem:[%s200 + $0x64] sm:$0xf]
      %v270 = vld [vmem:[%s200 + $0x68] sm:$0xf]
      %v271 = vld [vmem:[%s200 + $0x6c] sm:$0xf]
      %v272 = vld [vmem:[%s200 + $0x70] sm:$0xf]
      %v273 = vld [vmem:[%s200 + $0x74] sm:$0xf]
      %v274 = vld [vmem:[%s200 + $0x78] sm:$0xf]
      %v275 = vld [vmem:[%s200 + $0x7c] sm:$0xf]
      %v276 = vld [vmem:[%s205] sm:$0xf]
      %v277 = vld [vmem:[%s205 + $0x4] sm:$0xf]
      %v278 = vld [vmem:[%s205 + $0x8] sm:$0xf]
      %v279 = vld [vmem:[%s205 + $0xc] sm:$0xf]
      %v280 = vld [vmem:[%s205 + $0x10] sm:$0xf]
      %v281 = vld [vmem:[%s205 + $0x14] sm:$0xf]
      %v282 = vld [vmem:[%s205 + $0x18] sm:$0xf]
      %v283 = vld [vmem:[%s205 + $0x1c] sm:$0xf]
      %v284 = vld [vmem:[%s205 + $0x20] sm:$0xf]
      %v285 = vld [vmem:[%s205 + $0x24] sm:$0xf]
      %v286 = vld [vmem:[%s205 + $0x28] sm:$0xf]
      %v287 = vld [vmem:[%s205 + $0x2c] sm:$0xf]
      %v288 = vld [vmem:[%s205 + $0x30] sm:$0xf]
      %v289 = vld [vmem:[%s205 + $0x34] sm:$0xf]
      %v290 = vld [vmem:[%s205 + $0x38] sm:$0xf]
      %v291 = vld [vmem:[%s205 + $0x3c] sm:$0xf]
      %v292 = vld [vmem:[%s205 + $0x40] sm:$0xf]
      %v293 = vld [vmem:[%s205 + $0x44] sm:$0xf]
      %v294 = vld [vmem:[%s205 + $0x48] sm:$0xf]
      %v295 = vld [vmem:[%s205 + $0x4c] sm:$0xf]
      %v296 = vld [vmem:[%s205 + $0x50] sm:$0xf]
      %v297 = vld [vmem:[%s205 + $0x54] sm:$0xf]
      %v298 = vld [vmem:[%s205 + $0x58] sm:$0xf]
      %v299 = vld [vmem:[%s205 + $0x5c] sm:$0xf]
      %v300 = vld [vmem:[%s205 + $0x60] sm:$0xf]
      %v301 = vld [vmem:[%s205 + $0x64] sm:$0xf]
      %v302 = vld [vmem:[%s205 + $0x68] sm:$0xf]
      %v303 = vld [vmem:[%s205 + $0x6c] sm:$0xf]
      %v304 = vld [vmem:[%s205 + $0x70] sm:$0xf]
      %v305 = vld [vmem:[%s205 + $0x74] sm:$0xf]
      %v306 = vld [vmem:[%s205 + $0x78] sm:$0xf]
      %v307 = vld [vmem:[%s205 + $0x7c] sm:$0xf]
      %v316 = vunpack.c.l.b16 %v212
      %v317 = vunpack.c.l.b16 %v213
      %v318 = vunpack.c.l.b16 %v214
      %v319 = vunpack.c.l.b16 %v215
      %v320 = vunpack.c.l.b16 %v216
      %v321 = vunpack.c.l.b16 %v217
      %v322 = vunpack.c.l.b16 %v218
      %v323 = vunpack.c.l.b16 %v219
      %v324 = vpack.c.b16 %v317, %v316
      %v325 = vpack.c.b16 %v319, %v318
      %v326 = vpack.c.b16 %v321, %v320
      %v327 = vpack.c.b16 %v323, %v322
      %v336 = vunpack.c.l.b16 %v244
      %v337 = vunpack.c.l.b16 %v245
      %v338 = vunpack.c.l.b16 %v246
      %v339 = vunpack.c.l.b16 %v247
      %v340 = vunpack.c.l.b16 %v248
      %v341 = vunpack.c.l.b16 %v249
      %v342 = vunpack.c.l.b16 %v250
      %v343 = vunpack.c.l.b16 %v251
      %v344 = vpack.c.b16 %v337, %v336
      %v345 = vpack.c.b16 %v339, %v338
      %v346 = vpack.c.b16 %v341, %v340
      %v347 = vpack.c.b16 %v343, %v342
      %vm348 = vcmask 130048
      %v350 = vsel %vm348, %v324, 0
      %v353 = vsel %vm348, %v325, 0
      %v356 = vsel %vm348, %v326, 0
      %v359 = vsel %vm348, %v327, 0
      %v362 = vsel %vm348, %v344, 0
      %v365 = vsel %vm348, %v345, 0
      %v368 = vsel %vm348, %v346, 0
      %v371 = vsel %vm348, %v347, 0
      %373 = vmatprep.subr.bf16.mxu0 0
      %374 = vmatpush1.bf16.xpose.msra.mxu0 0
      %375 = vmatprep.subr.bf16.mxu0 0
      %376 = vmatpush1.bf16.xpose.msra.mxu0 0
      %377 = vmatprep.subr.bf16.mxu0 0
      %378 = vmatpush1.bf16.xpose.msra.mxu0 0
      %379 = vmatprep.subr.bf16.mxu0 0
      %380 = vmatpush1.bf16.xpose.msra.mxu0 0
      %381 = vmatprep.subr.bf16.mxu0 0
      %382 = vmatpush1.bf16.xpose.msra.mxu0 %v371
      %383 = vmatprep.subr.bf16.mxu0 0
      %384 = vmatpush1.bf16.xpose.msra.mxu0 %v368
      %385 = vmatprep.subr.bf16.mxu0 0
      %386 = vmatpush1.bf16.xpose.msra.mxu0 %v365
      %387 = vmatprep.subr.bf16.mxu0 0
      %388 = vmatpush1.bf16.xpose.msra.mxu0 %v362
      %389 = vmatprep.subr.bf16.mxu0 0
      %390 = vmatpush2.bf16.xpose.msra.mxu0 0
      %391 = vmatprep.subr.bf16.mxu0 0
      %392 = vmatpush2.bf16.xpose.msra.mxu0 0
      %393 = vmatprep.subr.bf16.mxu0 0
      %394 = vmatpush2.bf16.xpose.msra.mxu0 0
      %395 = vmatprep.subr.bf16.mxu0 0
      %396 = vmatpush2.bf16.xpose.msra.mxu0 0
      %397 = vmatprep.subr.bf16.mxu0 0
      %398 = vmatpush2.bf16.xpose.msra.mxu0 0
      %399 = vmatprep.subr.bf16.mxu0 0
      %400 = vmatpush2.bf16.xpose.msra.mxu0 0
      %401 = vmatprep.subr.bf16.mxu0 0
      %402 = vmatpush2.bf16.xpose.msra.mxu0 0
      %403 = vmatprep.subr.bf16.mxu0 0
      %404 = vmatpush2.bf16.xpose.msra.mxu0 0
      %405 = vmatprep.mubr.bf16.mxu0 0
      %406 = vmatmul.mubr.bf16.gmra.mxu0 %v350
      %v407 = vpop.f32.mrf.mxu0
      %v408 = vadd.f32 0.0, %v407
      %v409 = vpop.f32.mrf.mxu0
      %v410 = vpop.f32.mrf.mxu0
      %v411 = vadd.f32 0.0, %v410
      %v412 = vpop.f32.mrf.mxu0
      %413 = vmatprep.mubr.bf16.mxu0 0
      %414 = vmatmul.mubr.bf16.gmra.mxu0 %v353
      %v415 = vpop.f32.mrf.mxu0
      %v416 = vadd.f32 0.0, %v415
      %v417 = vpop.f32.mrf.mxu0
      %v418 = vpop.f32.mrf.mxu0
      %v419 = vadd.f32 0.0, %v418
      %v420 = vpop.f32.mrf.mxu0
      %421 = vmatprep.mubr.bf16.mxu0 0
      %422 = vmatmul.mubr.bf16.gmra.mxu0 %v356
      %v423 = vpop.f32.mrf.mxu0
      %v424 = vadd.f32 0.0, %v423
      %v425 = vpop.f32.mrf.mxu0
      %v426 = vpop.f32.mrf.mxu0
      %v427 = vadd.f32 0.0, %v426
      %v428 = vpop.f32.mrf.mxu0
      %429 = vmatprep.mubr.bf16.mxu0 0
      %430 = vmatmul.mubr.bf16.gmra.mxu0 %v359
      %v431 = vpop.f32.mrf.mxu0
      %v432 = vadd.f32 0.0, %v431
      %v433 = vpop.f32.mrf.mxu0
      %v434 = vpop.f32.mrf.mxu0
      %v435 = vadd.f32 0.0, %v434
      %v436 = vpop.f32.mrf.mxu0
      %437 = vdwg.mxu0
      %v446 = vunpack.c.l.b16 %v220
      %v447 = vunpack.c.l.b16 %v221
      %v448 = vunpack.c.l.b16 %v222
      %v449 = vunpack.c.l.b16 %v223
      %v450 = vunpack.c.l.b16 %v224
      %v451 = vunpack.c.l.b16 %v225
      %v452 = vunpack.c.l.b16 %v226
      %v453 = vunpack.c.l.b16 %v227
      %v454 = vpack.c.b16 %v447, %v446
      %v455 = vpack.c.b16 %v449, %v448
      %v456 = vpack.c.b16 %v451, %v450
      %v457 = vpack.c.b16 %v453, %v452
      %v466 = vunpack.c.l.b16 %v252
      %v467 = vunpack.c.l.b16 %v253
      %v468 = vunpack.c.l.b16 %v254
      %v469 = vunpack.c.l.b16 %v255
      %v470 = vunpack.c.l.b16 %v256
      %v471 = vunpack.c.l.b16 %v257
      %v472 = vunpack.c.l.b16 %v258
      %v473 = vunpack.c.l.b16 %v259
      %v474 = vpack.c.b16 %v467, %v466
      %v475 = vpack.c.b16 %v469, %v468
      %v476 = vpack.c.b16 %v471, %v470
      %v477 = vpack.c.b16 %v473, %v472
      %v479 = vsel %vm348, %v454, 0
      %v482 = vsel %vm348, %v455, 0
      %v485 = vsel %vm348, %v456, 0
      %v488 = vsel %vm348, %v457, 0
      %v491 = vsel %vm348, %v474, 0
      %v494 = vsel %vm348, %v475, 0
      %v497 = vsel %vm348, %v476, 0
      %v500 = vsel %vm348, %v477, 0
      %502 = vmatprep.subr.bf16.mxu0 0
      %503 = vmatpush1.bf16.xpose.msra.mxu0 0
      %504 = vmatprep.subr.bf16.mxu0 0
      %505 = vmatpush1.bf16.xpose.msra.mxu0 0
      %506 = vmatprep.subr.bf16.mxu0 0
      %507 = vmatpush1.bf16.xpose.msra.mxu0 0
      %508 = vmatprep.subr.bf16.mxu0 0
      %509 = vmatpush1.bf16.xpose.msra.mxu0 0
      %510 = vmatprep.subr.bf16.mxu0 0
      %511 = vmatpush1.bf16.xpose.msra.mxu0 %v500
      %512 = vmatprep.subr.bf16.mxu0 0
      %513 = vmatpush1.bf16.xpose.msra.mxu0 %v497
      %514 = vmatprep.subr.bf16.mxu0 0
      %515 = vmatpush1.bf16.xpose.msra.mxu0 %v494
      %516 = vmatprep.subr.bf16.mxu0 0
      %517 = vmatpush1.bf16.xpose.msra.mxu0 %v491
      %518 = vmatprep.subr.bf16.mxu0 0
      %519 = vmatpush2.bf16.xpose.msra.mxu0 0
      %520 = vmatprep.subr.bf16.mxu0 0
      %521 = vmatpush2.bf16.xpose.msra.mxu0 0
      %522 = vmatprep.subr.bf16.mxu0 0
      %523 = vmatpush2.bf16.xpose.msra.mxu0 0
      %524 = vmatprep.subr.bf16.mxu0 0
      %525 = vmatpush2.bf16.xpose.msra.mxu0 0
      %526 = vmatprep.subr.bf16.mxu0 0
      %527 = vmatpush2.bf16.xpose.msra.mxu0 0
      %528 = vmatprep.subr.bf16.mxu0 0
      %529 = vmatpush2.bf16.xpose.msra.mxu0 0
      %530 = vmatprep.subr.bf16.mxu0 0
      %531 = vmatpush2.bf16.xpose.msra.mxu0 0
      %532 = vmatprep.subr.bf16.mxu0 0
      %533 = vmatpush2.bf16.xpose.msra.mxu0 0
      %534 = vmatprep.mubr.bf16.mxu0 0
      %535 = vmatmul.mubr.bf16.gmra.mxu0 %v479
      %v536 = vpop.f32.mrf.mxu0
      %v537 = vadd.f32 0.0, %v536
      %v538 = vpop.f32.mrf.mxu0
      %v539 = vpop.f32.mrf.mxu0
      %v540 = vadd.f32 0.0, %v539
      %v541 = vpop.f32.mrf.mxu0
      %542 = vmatprep.mubr.bf16.mxu0 0
      %543 = vmatmul.mubr.bf16.gmra.mxu0 %v482
      %v544 = vpop.f32.mrf.mxu0
      %v545 = vadd.f32 0.0, %v544
      %v546 = vpop.f32.mrf.mxu0
      %v547 = vpop.f32.mrf.mxu0
      %v548 = vadd.f32 0.0, %v547
      %v549 = vpop.f32.mrf.mxu0
      %550 = vmatprep.mubr.bf16.mxu0 0
      %551 = vmatmul.mubr.bf16.gmra.mxu0 %v485
      %v552 = vpop.f32.mrf.mxu0
      %v553 = vadd.f32 0.0, %v552
      %v554 = vpop.f32.mrf.mxu0
      %v555 = vpop.f32.mrf.mxu0
      %v556 = vadd.f32 0.0, %v555
      %v557 = vpop.f32.mrf.mxu0
      %558 = vmatprep.mubr.bf16.mxu0 0
      %559 = vmatmul.mubr.bf16.gmra.mxu0 %v488
      %v560 = vpop.f32.mrf.mxu0
      %v561 = vadd.f32 0.0, %v560
      %v562 = vpop.f32.mrf.mxu0
      %v563 = vpop.f32.mrf.mxu0
      %v564 = vadd.f32 0.0, %v563
      %v565 = vpop.f32.mrf.mxu0
      %566 = vdwg.mxu0
      %v575 = vunpack.c.l.b16 %v228
      %v576 = vunpack.c.l.b16 %v229
      %v577 = vunpack.c.l.b16 %v230
      %v578 = vunpack.c.l.b16 %v231
      %v579 = vunpack.c.l.b16 %v232
      %v580 = vunpack.c.l.b16 %v233
      %v581 = vunpack.c.l.b16 %v234
      %v582 = vunpack.c.l.b16 %v235
      %v583 = vpack.c.b16 %v576, %v575
      %v584 = vpack.c.b16 %v578, %v577
      %v585 = vpack.c.b16 %v580, %v579
      %v586 = vpack.c.b16 %v582, %v581
      %v595 = vunpack.c.l.b16 %v260
      %v596 = vunpack.c.l.b16 %v261
      %v597 = vunpack.c.l.b16 %v262
      %v598 = vunpack.c.l.b16 %v263
      %v599 = vunpack.c.l.b16 %v264
      %v600 = vunpack.c.l.b16 %v265
      %v601 = vunpack.c.l.b16 %v266
      %v602 = vunpack.c.l.b16 %v267
      %v603 = vpack.c.b16 %v596, %v595
      %v604 = vpack.c.b16 %v598, %v597
      %v605 = vpack.c.b16 %v600, %v599
      %v606 = vpack.c.b16 %v602, %v601
      %v608 = vsel %vm348, %v583, 0
      %v611 = vsel %vm348, %v584, 0
      %v614 = vsel %vm348, %v585, 0
      %v617 = vsel %vm348, %v586, 0
      %v620 = vsel %vm348, %v603, 0
      %v623 = vsel %vm348, %v604, 0
      %v626 = vsel %vm348, %v605, 0
      %v629 = vsel %vm348, %v606, 0
      %631 = vmatprep.subr.bf16.mxu0 0
      %632 = vmatpush1.bf16.xpose.msra.mxu0 0
      %633 = vmatprep.subr.bf16.mxu0 0
      %634 = vmatpush1.bf16.xpose.msra.mxu0 0
      %635 = vmatprep.subr.bf16.mxu0 0
      %636 = vmatpush1.bf16.xpose.msra.mxu0 0
      %637 = vmatprep.subr.bf16.mxu0 0
      %638 = vmatpush1.bf16.xpose.msra.mxu0 0
      %639 = vmatprep.subr.bf16.mxu0 0
      %640 = vmatpush1.bf16.xpose.msra.mxu0 %v629
      %641 = vmatprep.subr.bf16.mxu0 0
      %642 = vmatpush1.bf16.xpose.msra.mxu0 %v626
      %643 = vmatprep.subr.bf16.mxu0 0
      %644 = vmatpush1.bf16.xpose.msra.mxu0 %v623
      %645 = vmatprep.subr.bf16.mxu0 0
      %646 = vmatpush1.bf16.xpose.msra.mxu0 %v620
      %647 = vmatprep.subr.bf16.mxu0 0
      %648 = vmatpush2.bf16.xpose.msra.mxu0 0
      %649 = vmatprep.subr.bf16.mxu0 0
      %650 = vmatpush2.bf16.xpose.msra.mxu0 0
      %651 = vmatprep.subr.bf16.mxu0 0
      %652 = vmatpush2.bf16.xpose.msra.mxu0 0
      %653 = vmatprep.subr.bf16.mxu0 0
      %654 = vmatpush2.bf16.xpose.msra.mxu0 0
      %655 = vmatprep.subr.bf16.mxu0 0
      %656 = vmatpush2.bf16.xpose.msra.mxu0 0
      %657 = vmatprep.subr.bf16.mxu0 0
      %658 = vmatpush2.bf16.xpose.msra.mxu0 0
      %659 = vmatprep.subr.bf16.mxu0 0
      %660 = vmatpush2.bf16.xpose.msra.mxu0 0
      %661 = vmatprep.subr.bf16.mxu0 0
      %662 = vmatpush2.bf16.xpose.msra.mxu0 0
      %663 = vmatprep.mubr.bf16.mxu0 0
      %664 = vmatmul.mubr.bf16.gmra.mxu0 %v608
      %v665 = vpop.f32.mrf.mxu0
      %v666 = vadd.f32 0.0, %v665
      %v667 = vpop.f32.mrf.mxu0
      %v668 = vpop.f32.mrf.mxu0
      %v669 = vadd.f32 0.0, %v668
      %v670 = vpop.f32.mrf.mxu0
      %671 = vmatprep.mubr.bf16.mxu0 0
      %672 = vmatmul.mubr.bf16.gmra.mxu0 %v611
      %v673 = vpop.f32.mrf.mxu0
      %v674 = vadd.f32 0.0, %v673
      %v675 = vpop.f32.mrf.mxu0
      %v676 = vpop.f32.mrf.mxu0
      %v677 = vadd.f32 0.0, %v676
      %v678 = vpop.f32.mrf.mxu0
      %679 = vmatprep.mubr.bf16.mxu0 0
      %680 = vmatmul.mubr.bf16.gmra.mxu0 %v614
      %v681 = vpop.f32.mrf.mxu0
      %v682 = vadd.f32 0.0, %v681
      %v683 = vpop.f32.mrf.mxu0
      %v684 = vpop.f32.mrf.mxu0
      %v685 = vadd.f32 0.0, %v684
      %v686 = vpop.f32.mrf.mxu0
      %687 = vmatprep.mubr.bf16.mxu0 0
      %688 = vmatmul.mubr.bf16.gmra.mxu0 %v617
      %v689 = vpop.f32.mrf.mxu0
      %v690 = vadd.f32 0.0, %v689
      %v691 = vpop.f32.mrf.mxu0
      %v692 = vpop.f32.mrf.mxu0
      %v693 = vadd.f32 0.0, %v692
      %v694 = vpop.f32.mrf.mxu0
      %695 = vdwg.mxu0
      %v704 = vunpack.c.l.b16 %v236
      %v705 = vunpack.c.l.b16 %v237
      %v706 = vunpack.c.l.b16 %v238
      %v707 = vunpack.c.l.b16 %v239
      %v708 = vunpack.c.l.b16 %v240
      %v709 = vunpack.c.l.b16 %v241
      %v710 = vunpack.c.l.b16 %v242
      %v711 = vunpack.c.l.b16 %v243
      %v712 = vpack.c.b16 %v705, %v704
      %v713 = vpack.c.b16 %v707, %v706
      %v714 = vpack.c.b16 %v709, %v708
      %v715 = vpack.c.b16 %v711, %v710
      %v724 = vunpack.c.l.b16 %v268
      %v725 = vunpack.c.l.b16 %v269
      %v726 = vunpack.c.l.b16 %v270
      %v727 = vunpack.c.l.b16 %v271
      %v728 = vunpack.c.l.b16 %v272
      %v729 = vunpack.c.l.b16 %v273
      %v730 = vunpack.c.l.b16 %v274
      %v731 = vunpack.c.l.b16 %v275
      %v732 = vpack.c.b16 %v725, %v724
      %v733 = vpack.c.b16 %v727, %v726
      %v734 = vpack.c.b16 %v729, %v728
      %v735 = vpack.c.b16 %v731, %v730
      %v737 = vsel %vm348, %v712, 0
      %v740 = vsel %vm348, %v713, 0
      %v743 = vsel %vm348, %v714, 0
      %v746 = vsel %vm348, %v715, 0
      %v749 = vsel %vm348, %v732, 0
      %v752 = vsel %vm348, %v733, 0
      %v755 = vsel %vm348, %v734, 0
      %v758 = vsel %vm348, %v735, 0
      %760 = vmatprep.subr.bf16.mxu0 0
      %761 = vmatpush1.bf16.xpose.msra.mxu0 0
      %762 = vmatprep.subr.bf16.mxu0 0
      %763 = vmatpush1.bf16.xpose.msra.mxu0 0
      %764 = vmatprep.subr.bf16.mxu0 0
      %765 = vmatpush1.bf16.xpose.msra.mxu0 0
      %766 = vmatprep.subr.bf16.mxu0 0
      %767 = vmatpush1.bf16.xpose.msra.mxu0 0
      %768 = vmatprep.subr.bf16.mxu0 0
      %769 = vmatpush1.bf16.xpose.msra.mxu0 %v758
      %770 = vmatprep.subr.bf16.mxu0 0
      %771 = vmatpush1.bf16.xpose.msra.mxu0 %v755
      %772 = vmatprep.subr.bf16.mxu0 0
      %773 = vmatpush1.bf16.xpose.msra.mxu0 %v752
      %774 = vmatprep.subr.bf16.mxu0 0
      %775 = vmatpush1.bf16.xpose.msra.mxu0 %v749
      %776 = vmatprep.subr.bf16.mxu0 0
      %777 = vmatpush2.bf16.xpose.msra.mxu0 0
      %778 = vmatprep.subr.bf16.mxu0 0
      %779 = vmatpush2.bf16.xpose.msra.mxu0 0
      %780 = vmatprep.subr.bf16.mxu0 0
      %781 = vmatpush2.bf16.xpose.msra.mxu0 0
      %782 = vmatprep.subr.bf16.mxu0 0
      %783 = vmatpush2.bf16.xpose.msra.mxu0 0
      %784 = vmatprep.subr.bf16.mxu0 0
      %785 = vmatpush2.bf16.xpose.msra.mxu0 0
      %786 = vmatprep.subr.bf16.mxu0 0
      %787 = vmatpush2.bf16.xpose.msra.mxu0 0
      %788 = vmatprep.subr.bf16.mxu0 0
      %789 = vmatpush2.bf16.xpose.msra.mxu0 0
      %790 = vmatprep.subr.bf16.mxu0 0
      %791 = vmatpush2.bf16.xpose.msra.mxu0 0
      %792 = vmatprep.mubr.bf16.mxu0 0
      %793 = vmatmul.mubr.bf16.gmra.mxu0 %v737
      %v794 = vpop.f32.mrf.mxu0
      %v795 = vadd.f32 0.0, %v794
      %v796 = vpop.f32.mrf.mxu0
      %v797 = vpop.f32.mrf.mxu0
      %v798 = vadd.f32 0.0, %v797
      %v799 = vpop.f32.mrf.mxu0
      %800 = vmatprep.mubr.bf16.mxu0 0
      %801 = vmatmul.mubr.bf16.gmra.mxu0 %v740
      %v802 = vpop.f32.mrf.mxu0
      %v803 = vadd.f32 0.0, %v802
      %v804 = vpop.f32.mrf.mxu0
      %v805 = vpop.f32.mrf.mxu0
      %v806 = vadd.f32 0.0, %v805
      %v807 = vpop.f32.mrf.mxu0
      %808 = vmatprep.mubr.bf16.mxu0 0
      %809 = vmatmul.mubr.bf16.gmra.mxu0 %v743
      %v810 = vpop.f32.mrf.mxu0
      %v811 = vadd.f32 0.0, %v810
      %v812 = vpop.f32.mrf.mxu0
      %v813 = vpop.f32.mrf.mxu0
      %v814 = vadd.f32 0.0, %v813
      %v815 = vpop.f32.mrf.mxu0
      %816 = vmatprep.mubr.bf16.mxu0 0
      %817 = vmatmul.mubr.bf16.gmra.mxu0 %v746
      %v818 = vpop.f32.mrf.mxu0
      %v819 = vadd.f32 0.0, %v818
      %v820 = vpop.f32.mrf.mxu0
      %v821 = vpop.f32.mrf.mxu0
      %v822 = vadd.f32 0.0, %v821
      %v823 = vpop.f32.mrf.mxu0
      %824 = vdwg.mxu0
      %v825 = vmul.f32 %v408, 0.25
      %v826 = vmul.f32 %v411, 0.25
      %v827 = vmul.f32 %v416, 0.25
      %v828 = vmul.f32 %v419, 0.25
      %v829 = vmul.f32 %v424, 0.25
      %v830 = vmul.f32 %v427, 0.25
      %v831 = vmul.f32 %v432, 0.25
      %v832 = vmul.f32 %v435, 0.25
      %v833 = vmul.f32 %v537, 0.25
      %v834 = vmul.f32 %v540, 0.25
      %v835 = vmul.f32 %v545, 0.25
      %v836 = vmul.f32 %v548, 0.25
      %v837 = vmul.f32 %v553, 0.25
      %v838 = vmul.f32 %v556, 0.25
      %v839 = vmul.f32 %v561, 0.25
      %v840 = vmul.f32 %v564, 0.25
      %v841 = vmul.f32 %v666, 0.25
      %v842 = vmul.f32 %v669, 0.25
      %v843 = vmul.f32 %v674, 0.25
      %v844 = vmul.f32 %v677, 0.25
      %v845 = vmul.f32 %v682, 0.25
      %v846 = vmul.f32 %v685, 0.25
      %v847 = vmul.f32 %v690, 0.25
      %v848 = vmul.f32 %v693, 0.25
      %v849 = vmul.f32 %v795, 0.25
      %v850 = vmul.f32 %v798, 0.25
      %v851 = vmul.f32 %v803, 0.25
      %v852 = vmul.f32 %v806, 0.25
      %v853 = vmul.f32 %v811, 0.25
      %v854 = vmul.f32 %v814, 0.25
      %v855 = vmul.f32 %v819, 0.25
      %v856 = vmul.f32 %v822, 0.25
      %vm857 = vcmask 523264
      %v858 = vsel %vm857, %v825, -inf
      %859 = vmax.xlane.f32.xlu0 %v858
      %v860 = vpop.xlane.xlu0 %859
      %v861 = vsel %vm857, %v826, -inf
      %862 = vmax.xlane.f32.xlu0 %v861
      %v863 = vpop.xlane.xlu0 %862
      %v864 = vsel %vm857, %v827, -inf
      %865 = vmax.xlane.f32.xlu0 %v864
      %v866 = vpop.xlane.xlu0 %865
      %v867 = vsel %vm857, %v828, -inf
      %868 = vmax.xlane.f32.xlu0 %v867
      %v869 = vpop.xlane.xlu0 %868
      %v870 = vsel %vm857, %v829, -inf
      %871 = vmax.xlane.f32.xlu0 %v870
      %v872 = vpop.xlane.xlu0 %871
      %v873 = vsel %vm857, %v830, -inf
      %874 = vmax.xlane.f32.xlu0 %v873
      %v875 = vpop.xlane.xlu0 %874
      %v876 = vsel %vm857, %v831, -inf
      %877 = vmax.xlane.f32.xlu0 %v876
      %v878 = vpop.xlane.xlu0 %877
      %v879 = vsel %vm857, %v832, -inf
      %880 = vmax.xlane.f32.xlu0 %v879
      %v881 = vpop.xlane.xlu0 %880
      %v882 = vsel %vm857, %v833, -inf
      %883 = vmax.xlane.f32.xlu0 %v882
      %v884 = vpop.xlane.xlu0 %883
      %v885 = vsel %vm857, %v834, -inf
      %886 = vmax.xlane.f32.xlu0 %v885
      %v887 = vpop.xlane.xlu0 %886
      %v888 = vsel %vm857, %v835, -inf
      %889 = vmax.xlane.f32.xlu0 %v888
      %v890 = vpop.xlane.xlu0 %889
      %v891 = vsel %vm857, %v836, -inf
      %892 = vmax.xlane.f32.xlu0 %v891
      %v893 = vpop.xlane.xlu0 %892
      %v894 = vsel %vm857, %v837, -inf
      %895 = vmax.xlane.f32.xlu0 %v894
      %v896 = vpop.xlane.xlu0 %895
      %v897 = vsel %vm857, %v838, -inf
      %898 = vmax.xlane.f32.xlu0 %v897
      %v899 = vpop.xlane.xlu0 %898
      %v900 = vsel %vm857, %v839, -inf
      %901 = vmax.xlane.f32.xlu0 %v900
      %v902 = vpop.xlane.xlu0 %901
      %v903 = vsel %vm857, %v840, -inf
      %904 = vmax.xlane.f32.xlu0 %v903
      %v905 = vpop.xlane.xlu0 %904
      %v906 = vsel %vm857, %v841, -inf
      %907 = vmax.xlane.f32.xlu0 %v906
      %v908 = vpop.xlane.xlu0 %907
      %v909 = vsel %vm857, %v842, -inf
      %910 = vmax.xlane.f32.xlu0 %v909
      %v911 = vpop.xlane.xlu0 %910
      %v912 = vsel %vm857, %v843, -inf
      %913 = vmax.xlane.f32.xlu0 %v912
      %v914 = vpop.xlane.xlu0 %913
      %v915 = vsel %vm857, %v844, -inf
      %916 = vmax.xlane.f32.xlu0 %v915
      %v917 = vpop.xlane.xlu0 %916
      %v918 = vsel %vm857, %v845, -inf
      %919 = vmax.xlane.f32.xlu0 %v918
      %v920 = vpop.xlane.xlu0 %919
      %v921 = vsel %vm857, %v846, -inf
      %922 = vmax.xlane.f32.xlu0 %v921
      %v923 = vpop.xlane.xlu0 %922
      %v924 = vsel %vm857, %v847, -inf
      %925 = vmax.xlane.f32.xlu0 %v924
      %v926 = vpop.xlane.xlu0 %925
      %v927 = vsel %vm857, %v848, -inf
      %928 = vmax.xlane.f32.xlu0 %v927
      %v929 = vpop.xlane.xlu0 %928
      %v930 = vsel %vm857, %v849, -inf
      %931 = vmax.xlane.f32.xlu0 %v930
      %v932 = vpop.xlane.xlu0 %931
      %v933 = vsel %vm857, %v850, -inf
      %934 = vmax.xlane.f32.xlu0 %v933
      %v935 = vpop.xlane.xlu0 %934
      %v936 = vsel %vm857, %v851, -inf
      %937 = vmax.xlane.f32.xlu0 %v936
      %v938 = vpop.xlane.xlu0 %937
      %v939 = vsel %vm857, %v852, -inf
      %940 = vmax.xlane.f32.xlu0 %v939
      %v941 = vpop.xlane.xlu0 %940
      %v942 = vsel %vm857, %v853, -inf
      %943 = vmax.xlane.f32.xlu0 %v942
      %v944 = vpop.xlane.xlu0 %943
      %v945 = vsel %vm857, %v854, -inf
      %946 = vmax.xlane.f32.xlu0 %v945
      %v947 = vpop.xlane.xlu0 %946
      %v948 = vsel %vm857, %v855, -inf
      %949 = vmax.xlane.f32.xlu0 %v948
      %v950 = vpop.xlane.xlu0 %949
      %v951 = vsel %vm857, %v856, -inf
      %952 = vmax.xlane.f32.xlu0 %v951
      %v953 = vpop.xlane.xlu0 %952
      %v954 = vsub.f32 %v825, %v860
      %v955 = vsub.f32 %v826, %v863
      %v956 = vsub.f32 %v827, %v866
      %v957 = vsub.f32 %v828, %v869
      %v958 = vsub.f32 %v829, %v872
      %v959 = vsub.f32 %v830, %v875
      %v960 = vsub.f32 %v831, %v878
      %v961 = vsub.f32 %v832, %v881
      %v962 = vsub.f32 %v833, %v884
      %v963 = vsub.f32 %v834, %v887
      %v964 = vsub.f32 %v835, %v890
      %v965 = vsub.f32 %v836, %v893
      %v966 = vsub.f32 %v837, %v896
      %v967 = vsub.f32 %v838, %v899
      %v968 = vsub.f32 %v839, %v902
      %v969 = vsub.f32 %v840, %v905
      %v970 = vsub.f32 %v841, %v908
      %v971 = vsub.f32 %v842, %v911
      %v972 = vsub.f32 %v843, %v914
      %v973 = vsub.f32 %v844, %v917
      %v974 = vsub.f32 %v845, %v920
      %v975 = vsub.f32 %v846, %v923
      %v976 = vsub.f32 %v847, %v926
      %v977 = vsub.f32 %v848, %v929
      %v978 = vsub.f32 %v849, %v932
      %v979 = vsub.f32 %v850, %v935
      %v980 = vsub.f32 %v851, %v938
      %v981 = vsub.f32 %v852, %v941
      %v982 = vsub.f32 %v853, %v944
      %v983 = vsub.f32 %v854, %v947
      %v984 = vsub.f32 %v855, %v950
      %v985 = vsub.f32 %v856, %v953
      %v986 = vmul.f32 %v954, 1.442695
      %v987 = vpow.pop %v986
      %v988 = vmul.f32 %v955, 1.442695
      %v989 = vpow.pop %v988
      %v990 = vmul.f32 %v956, 1.442695
      %v991 = vpow.pop %v990
      %v992 = vmul.f32 %v957, 1.442695
      %v993 = vpow.pop %v992
      %v994 = vmul.f32 %v958, 1.442695
      %v995 = vpow.pop %v994
      %v996 = vmul.f32 %v959, 1.442695
      %v997 = vpow.pop %v996
      %v998 = vmul.f32 %v960, 1.442695
      %v999 = vpow.pop %v998
      %v1000 = vmul.f32 %v961, 1.442695
      %v1001 = vpow.pop %v1000
      %v1002 = vmul.f32 %v962, 1.442695
      %v1003 = vpow.pop %v1002
      %v1004 = vmul.f32 %v963, 1.442695
      %v1005 = vpow.pop %v1004
      %v1006 = vmul.f32 %v964, 1.442695
      %v1007 = vpow.pop %v1006
      %v1008 = vmul.f32 %v965, 1.442695
      %v1009 = vpow.pop %v1008
      %v1010 = vmul.f32 %v966, 1.442695
      %v1011 = vpow.pop %v1010
      %v1012 = vmul.f32 %v967, 1.442695
      %v1013 = vpow.pop %v1012
      %v1014 = vmul.f32 %v968, 1.442695
      %v1015 = vpow.pop %v1014
      %v1016 = vmul.f32 %v969, 1.442695
      %v1017 = vpow.pop %v1016
      %v1018 = vmul.f32 %v970, 1.442695
      %v1019 = vpow.pop %v1018
      %v1020 = vmul.f32 %v971, 1.442695
      %v1021 = vpow.pop %v1020
      %v1022 = vmul.f32 %v972, 1.442695
      %v1023 = vpow.pop %v1022
      %v1024 = vmul.f32 %v973, 1.442695
      %v1025 = vpow.pop %v1024
      %v1026 = vmul.f32 %v974, 1.442695
      %v1027 = vpow.pop %v1026
      %v1028 = vmul.f32 %v975, 1.442695
      %v1029 = vpow.pop %v1028
      %v1030 = vmul.f32 %v976, 1.442695
      %v1031 = vpow.pop %v1030
      %v1032 = vmul.f32 %v977, 1.442695
      %v1033 = vpow.pop %v1032
      %v1034 = vmul.f32 %v978, 1.442695
      %v1035 = vpow.pop %v1034
      %v1036 = vmul.f32 %v979, 1.442695
      %v1037 = vpow.pop %v1036
      %v1038 = vmul.f32 %v980, 1.442695
      %v1039 = vpow.pop %v1038
      %v1040 = vmul.f32 %v981, 1.442695
      %v1041 = vpow.pop %v1040
      %v1042 = vmul.f32 %v982, 1.442695
      %v1043 = vpow.pop %v1042
      %v1044 = vmul.f32 %v983, 1.442695
      %v1045 = vpow.pop %v1044
      %v1046 = vmul.f32 %v984, 1.442695
      %v1047 = vpow.pop %v1046
      %v1048 = vmul.f32 %v985, 1.442695
      %v1049 = vpow.pop %v1048
      %v1050 = vsel %vm857, %v987, 0.0
      %1051 = vadd.xlane.f32.xlu0 %v1050
      %v1052 = vpop.xlane.xlu0 %1051
      %v1053 = vsel %vm857, %v989, 0.0
      %1054 = vadd.xlane.f32.xlu0 %v1053
      %v1055 = vpop.xlane.xlu0 %1054
      %v1056 = vsel %vm857, %v991, 0.0
      %1057 = vadd.xlane.f32.xlu0 %v1056
      %v1058 = vpop.xlane.xlu0 %1057
      %v1059 = vsel %vm857, %v993, 0.0
      %1060 = vadd.xlane.f32.xlu0 %v1059
      %v1061 = vpop.xlane.xlu0 %1060
      %v1062 = vsel %vm857, %v995, 0.0
      %1063 = vadd.xlane.f32.xlu0 %v1062
      %v1064 = vpop.xlane.xlu0 %1063
      %v1065 = vsel %vm857, %v997, 0.0
      %1066 = vadd.xlane.f32.xlu0 %v1065
      %v1067 = vpop.xlane.xlu0 %1066
      %v1068 = vsel %vm857, %v999, 0.0
      %1069 = vadd.xlane.f32.xlu0 %v1068
      %v1070 = vpop.xlane.xlu0 %1069
      %v1071 = vsel %vm857, %v1001, 0.0
      %1072 = vadd.xlane.f32.xlu0 %v1071
      %v1073 = vpop.xlane.xlu0 %1072
      %v1074 = vsel %vm857, %v1003, 0.0
      %1075 = vadd.xlane.f32.xlu0 %v1074
      %v1076 = vpop.xlane.xlu0 %1075
      %v1077 = vsel %vm857, %v1005, 0.0
      %1078 = vadd.xlane.f32.xlu0 %v1077
      %v1079 = vpop.xlane.xlu0 %1078
      %v1080 = vsel %vm857, %v1007, 0.0
      %1081 = vadd.xlane.f32.xlu0 %v1080
      %v1082 = vpop.xlane.xlu0 %1081
      %v1083 = vsel %vm857, %v1009, 0.0
      %1084 = vadd.xlane.f32.xlu0 %v1083
      %v1085 = vpop.xlane.xlu0 %1084
      %v1086 = vsel %vm857, %v1011, 0.0
      %1087 = vadd.xlane.f32.xlu0 %v1086
      %v1088 = vpop.xlane.xlu0 %1087
      %v1089 = vsel %vm857, %v1013, 0.0
      %1090 = vadd.xlane.f32.xlu0 %v1089
      %v1091 = vpop.xlane.xlu0 %1090
      %v1092 = vsel %vm857, %v1015, 0.0
      %1093 = vadd.xlane.f32.xlu0 %v1092
      %v1094 = vpop.xlane.xlu0 %1093
      %v1095 = vsel %vm857, %v1017, 0.0
      %1096 = vadd.xlane.f32.xlu0 %v1095
      %v1097 = vpop.xlane.xlu0 %1096
      %v1098 = vsel %vm857, %v1019, 0.0
      %1099 = vadd.xlane.f32.xlu0 %v1098
      %v1100 = vpop.xlane.xlu0 %1099
      %v1101 = vsel %vm857, %v1021, 0.0
      %1102 = vadd.xlane.f32.xlu0 %v1101
      %v1103 = vpop.xlane.xlu0 %1102
      %v1104 = vsel %vm857, %v1023, 0.0
      %1105 = vadd.xlane.f32.xlu0 %v1104
      %v1106 = vpop.xlane.xlu0 %1105
      %v1107 = vsel %vm857, %v1025, 0.0
      %1108 = vadd.xlane.f32.xlu0 %v1107
      %v1109 = vpop.xlane.xlu0 %1108
      %v1110 = vsel %vm857, %v1027, 0.0
      %1111 = vadd.xlane.f32.xlu0 %v1110
      %v1112 = vpop.xlane.xlu0 %1111
      %v1113 = vsel %vm857, %v1029, 0.0
      %1114 = vadd.xlane.f32.xlu0 %v1113
      %v1115 = vpop.xlane.xlu0 %1114
      %v1116 = vsel %vm857, %v1031, 0.0
      %1117 = vadd.xlane.f32.xlu0 %v1116
      %v1118 = vpop.xlane.xlu0 %1117
      %v1119 = vsel %vm857, %v1033, 0.0
      %1120 = vadd.xlane.f32.xlu0 %v1119
      %v1121 = vpop.xlane.xlu0 %1120
      %v1122 = vsel %vm857, %v1035, 0.0
      %1123 = vadd.xlane.f32.xlu0 %v1122
      %v1124 = vpop.xlane.xlu0 %1123
      %v1125 = vsel %vm857, %v1037, 0.0
      %1126 = vadd.xlane.f32.xlu0 %v1125
      %v1127 = vpop.xlane.xlu0 %1126
      %v1128 = vsel %vm857, %v1039, 0.0
      %1129 = vadd.xlane.f32.xlu0 %v1128
      %v1130 = vpop.xlane.xlu0 %1129
      %v1131 = vsel %vm857, %v1041, 0.0
      %1132 = vadd.xlane.f32.xlu0 %v1131
      %v1133 = vpop.xlane.xlu0 %1132
      %v1134 = vsel %vm857, %v1043, 0.0
      %1135 = vadd.xlane.f32.xlu0 %v1134
      %v1136 = vpop.xlane.xlu0 %1135
      %v1137 = vsel %vm857, %v1045, 0.0
      %1138 = vadd.xlane.f32.xlu0 %v1137
      %v1139 = vpop.xlane.xlu0 %1138
      %v1140 = vsel %vm857, %v1047, 0.0
      %1141 = vadd.xlane.f32.xlu0 %v1140
      %v1142 = vpop.xlane.xlu0 %1141
      %v1143 = vsel %vm857, %v1049, 0.0
      %1144 = vadd.xlane.f32.xlu0 %v1143
      %v1145 = vpop.xlane.xlu0 %1144
      %v1146 = vrcp.pop %v1052
      %v1147 = vrcp.pop %v1055
      %v1148 = vrcp.pop %v1058
      %v1149 = vrcp.pop %v1061
      %v1150 = vrcp.pop %v1064
      %v1151 = vrcp.pop %v1067
      %v1152 = vrcp.pop %v1070
      %v1153 = vrcp.pop %v1073
      %v1154 = vrcp.pop %v1076
      %v1155 = vrcp.pop %v1079
      %v1156 = vrcp.pop %v1082
      %v1157 = vrcp.pop %v1085
      %v1158 = vrcp.pop %v1088
      %v1159 = vrcp.pop %v1091
      %v1160 = vrcp.pop %v1094
      %v1161 = vrcp.pop %v1097
      %v1162 = vrcp.pop %v1100
      %v1163 = vrcp.pop %v1103
      %v1164 = vrcp.pop %v1106
      %v1165 = vrcp.pop %v1109
      %v1166 = vrcp.pop %v1112
      %v1167 = vrcp.pop %v1115
      %v1168 = vrcp.pop %v1118
      %v1169 = vrcp.pop %v1121
      %v1170 = vrcp.pop %v1124
      %v1171 = vrcp.pop %v1127
      %v1172 = vrcp.pop %v1130
      %v1173 = vrcp.pop %v1133
      %v1174 = vrcp.pop %v1136
      %v1175 = vrcp.pop %v1139
      %v1176 = vrcp.pop %v1142
      %v1177 = vrcp.pop %v1145
      %v1178 = vmul.f32 %v987, %v1146
      %v1179 = vmul.f32 %v989, %v1147
      %v1180 = vmul.f32 %v991, %v1148
      %v1181 = vmul.f32 %v993, %v1149
      %v1182 = vmul.f32 %v995, %v1150
      %v1183 = vmul.f32 %v997, %v1151
      %v1184 = vmul.f32 %v999, %v1152
      %v1185 = vmul.f32 %v1001, %v1153
      %v1186 = vmul.f32 %v1003, %v1154
      %v1187 = vmul.f32 %v1005, %v1155
      %v1188 = vmul.f32 %v1007, %v1156
      %v1189 = vmul.f32 %v1009, %v1157
      %v1190 = vmul.f32 %v1011, %v1158
      %v1191 = vmul.f32 %v1013, %v1159
      %v1192 = vmul.f32 %v1015, %v1160
      %v1193 = vmul.f32 %v1017, %v1161
      %v1194 = vmul.f32 %v1019, %v1162
      %v1195 = vmul.f32 %v1021, %v1163
      %v1196 = vmul.f32 %v1023, %v1164
      %v1197 = vmul.f32 %v1025, %v1165
      %v1198 = vmul.f32 %v1027, %v1166
      %v1199 = vmul.f32 %v1029, %v1167
      %v1200 = vmul.f32 %v1031, %v1168
      %v1201 = vmul.f32 %v1033, %v1169
      %v1202 = vmul.f32 %v1035, %v1170
      %v1203 = vmul.f32 %v1037, %v1171
      %v1204 = vmul.f32 %v1039, %v1172
      %v1205 = vmul.f32 %v1041, %v1173
      %v1206 = vmul.f32 %v1043, %v1174
      %v1207 = vmul.f32 %v1045, %v1175
      %v1208 = vmul.f32 %v1047, %v1176
      %v1209 = vmul.f32 %v1049, %v1177
      %v1210 = vpack.c.bf16 %v1179, %v1178
      %v1211 = vpack.c.bf16 %v1181, %v1180
      %v1212 = vpack.c.bf16 %v1183, %v1182
      %v1213 = vpack.c.bf16 %v1185, %v1184
      %v1214 = vpack.c.bf16 %v1187, %v1186
      %v1215 = vpack.c.bf16 %v1189, %v1188
      %v1216 = vpack.c.bf16 %v1191, %v1190
      %v1217 = vpack.c.bf16 %v1193, %v1192
      %v1218 = vpack.c.bf16 %v1195, %v1194
      %v1219 = vpack.c.bf16 %v1197, %v1196
      %v1220 = vpack.c.bf16 %v1199, %v1198
      %v1221 = vpack.c.bf16 %v1201, %v1200
      %v1222 = vpack.c.bf16 %v1203, %v1202
      %v1223 = vpack.c.bf16 %v1205, %v1204
      %v1224 = vpack.c.bf16 %v1207, %v1206
      %v1225 = vpack.c.bf16 %v1209, %v1208
      %v1234 = vunpack.c.l.b16 %v276
      %v1235 = vunpack.c.l.b16 %v277
      %v1236 = vunpack.c.l.b16 %v278
      %v1237 = vunpack.c.l.b16 %v279
      %v1238 = vunpack.c.l.b16 %v280
      %v1239 = vunpack.c.l.b16 %v281
      %v1240 = vunpack.c.l.b16 %v282
      %v1241 = vunpack.c.l.b16 %v283
      %v1242 = vpack.c.b16 %v1235, %v1234
      %v1243 = vpack.c.b16 %v1237, %v1236
      %v1244 = vpack.c.b16 %v1239, %v1238
      %v1245 = vpack.c.b16 %v1241, %v1240
      %v1251 = vsel %vm857, %v1210, 0
      %v1254 = vsel %vm857, %v1211, 0
      %v1257 = vsel %vm857, %v1212, 0
      %v1260 = vsel %vm857, %v1213, 0
      %1262 = vmatprep.subr.bf16.mxu0 0
      %1263 = vmatpush1.bf16.msra.mxu0 0
      %1264 = vmatprep.subr.bf16.mxu0 0
      %1265 = vmatpush1.bf16.msra.mxu0 0
      %1266 = vmatprep.subr.bf16.mxu0 0
      %1267 = vmatpush1.bf16.msra.mxu0 0
      %1268 = vmatprep.subr.bf16.mxu0 0
      %1269 = vmatpush1.bf16.msra.mxu0 0
      %1270 = vmatprep.subr.bf16.mxu0 0
      %1271 = vmatpush1.bf16.msra.mxu0 %v1245
      %1272 = vmatprep.subr.bf16.mxu0 0
      %1273 = vmatpush1.bf16.msra.mxu0 %v1244
      %1274 = vmatprep.subr.bf16.mxu0 0
      %1275 = vmatpush1.bf16.msra.mxu0 %v1243
      %1276 = vmatprep.subr.bf16.mxu0 0
      %1277 = vmatpush1.bf16.msra.mxu0 %v1242
      %1278 = vmatprep.subr.bf16.mxu0 0
      %1279 = vmatpush2.bf16.msra.mxu0 0
      %1280 = vmatprep.subr.bf16.mxu0 0
      %1281 = vmatpush2.bf16.msra.mxu0 0
      %1282 = vmatprep.subr.bf16.mxu0 0
      %1283 = vmatpush2.bf16.msra.mxu0 0
      %1284 = vmatprep.subr.bf16.mxu0 0
      %1285 = vmatpush2.bf16.msra.mxu0 0
      %1286 = vmatprep.subr.bf16.mxu0 0
      %1287 = vmatpush2.bf16.msra.mxu0 0
      %1288 = vmatprep.subr.bf16.mxu0 0
      %1289 = vmatpush2.bf16.msra.mxu0 0
      %1290 = vmatprep.subr.bf16.mxu0 0
      %1291 = vmatpush2.bf16.msra.mxu0 0
      %1292 = vmatprep.subr.bf16.mxu0 0
      %1293 = vmatpush2.bf16.msra.mxu0 0
      %1294 = vmatprep.mubr.bf16.mxu0 0
      %1295 = vmatmul.mubr.bf16.gmra.mxu0 %v1251
      %v1296 = vpop.f32.mrf.mxu0
      %v1297 = vadd.f32 0.0, %v1296
      %v1298 = vpop.f32.mrf.mxu0
      %v1299 = vpop.f32.mrf.mxu0
      %v1300 = vadd.f32 0.0, %v1299
      %v1301 = vpop.f32.mrf.mxu0
      %1302 = vmatprep.mubr.bf16.mxu0 0
      %1303 = vmatmul.mubr.bf16.gmra.mxu0 %v1254
      %v1304 = vpop.f32.mrf.mxu0
      %v1305 = vadd.f32 0.0, %v1304
      %v1306 = vpop.f32.mrf.mxu0
      %v1307 = vpop.f32.mrf.mxu0
      %v1308 = vadd.f32 0.0, %v1307
      %v1309 = vpop.f32.mrf.mxu0
      %1310 = vmatprep.mubr.bf16.mxu0 0
      %1311 = vmatmul.mubr.bf16.gmra.mxu0 %v1257
      %v1312 = vpop.f32.mrf.mxu0
      %v1313 = vadd.f32 0.0, %v1312
      %v1314 = vpop.f32.mrf.mxu0
      %v1315 = vpop.f32.mrf.mxu0
      %v1316 = vadd.f32 0.0, %v1315
      %v1317 = vpop.f32.mrf.mxu0
      %1318 = vmatprep.mubr.bf16.mxu0 0
      %1319 = vmatmul.mubr.bf16.gmra.mxu0 %v1260
      %v1320 = vpop.f32.mrf.mxu0
      %v1321 = vadd.f32 0.0, %v1320
      %v1322 = vpop.f32.mrf.mxu0
      %v1323 = vpop.f32.mrf.mxu0
      %v1324 = vadd.f32 0.0, %v1323
      %v1325 = vpop.f32.mrf.mxu0
      %1326 = vdwg.mxu0
      %v1335 = vunpack.c.l.b16 %v284
      %v1336 = vunpack.c.l.b16 %v285
      %v1337 = vunpack.c.l.b16 %v286
      %v1338 = vunpack.c.l.b16 %v287
      %v1339 = vunpack.c.l.b16 %v288
      %v1340 = vunpack.c.l.b16 %v289
      %v1341 = vunpack.c.l.b16 %v290
      %v1342 = vunpack.c.l.b16 %v291
      %v1343 = vpack.c.b16 %v1336, %v1335
      %v1344 = vpack.c.b16 %v1338, %v1337
      %v1345 = vpack.c.b16 %v1340, %v1339
      %v1346 = vpack.c.b16 %v1342, %v1341
      %v1352 = vsel %vm857, %v1214, 0
      %v1355 = vsel %vm857, %v1215, 0
      %v1358 = vsel %vm857, %v1216, 0
      %v1361 = vsel %vm857, %v1217, 0
      %1363 = vmatprep.subr.bf16.mxu0 0
      %1364 = vmatpush1.bf16.msra.mxu0 0
      %1365 = vmatprep.subr.bf16.mxu0 0
      %1366 = vmatpush1.bf16.msra.mxu0 0
      %1367 = vmatprep.subr.bf16.mxu0 0
      %1368 = vmatpush1.bf16.msra.mxu0 0
      %1369 = vmatprep.subr.bf16.mxu0 0
      %1370 = vmatpush1.bf16.msra.mxu0 0
      %1371 = vmatprep.subr.bf16.mxu0 0
      %1372 = vmatpush1.bf16.msra.mxu0 %v1346
      %1373 = vmatprep.subr.bf16.mxu0 0
      %1374 = vmatpush1.bf16.msra.mxu0 %v1345
      %1375 = vmatprep.subr.bf16.mxu0 0
      %1376 = vmatpush1.bf16.msra.mxu0 %v1344
      %1377 = vmatprep.subr.bf16.mxu0 0
      %1378 = vmatpush1.bf16.msra.mxu0 %v1343
      %1379 = vmatprep.subr.bf16.mxu0 0
      %1380 = vmatpush2.bf16.msra.mxu0 0
      %1381 = vmatprep.subr.bf16.mxu0 0
      %1382 = vmatpush2.bf16.msra.mxu0 0
      %1383 = vmatprep.subr.bf16.mxu0 0
      %1384 = vmatpush2.bf16.msra.mxu0 0
      %1385 = vmatprep.subr.bf16.mxu0 0
      %1386 = vmatpush2.bf16.msra.mxu0 0
      %1387 = vmatprep.subr.bf16.mxu0 0
      %1388 = vmatpush2.bf16.msra.mxu0 0
      %1389 = vmatprep.subr.bf16.mxu0 0
      %1390 = vmatpush2.bf16.msra.mxu0 0
      %1391 = vmatprep.subr.bf16.mxu0 0
      %1392 = vmatpush2.bf16.msra.mxu0 0
      %1393 = vmatprep.subr.bf16.mxu0 0
      %1394 = vmatpush2.bf16.msra.mxu0 0
      %1395 = vmatprep.mubr.bf16.mxu0 0
      %1396 = vmatmul.mubr.bf16.gmra.mxu0 %v1352
      %v1397 = vpop.f32.mrf.mxu0
      %v1398 = vadd.f32 0.0, %v1397
      %v1399 = vpop.f32.mrf.mxu0
      %v1400 = vpop.f32.mrf.mxu0
      %v1401 = vadd.f32 0.0, %v1400
      %v1402 = vpop.f32.mrf.mxu0
      %1403 = vmatprep.mubr.bf16.mxu0 0
      %1404 = vmatmul.mubr.bf16.gmra.mxu0 %v1355
      %v1405 = vpop.f32.mrf.mxu0
      %v1406 = vadd.f32 0.0, %v1405
      %v1407 = vpop.f32.mrf.mxu0
      %v1408 = vpop.f32.mrf.mxu0
      %v1409 = vadd.f32 0.0, %v1408
      %v1410 = vpop.f32.mrf.mxu0
      %1411 = vmatprep.mubr.bf16.mxu0 0
      %1412 = vmatmul.mubr.bf16.gmra.mxu0 %v1358
      %v1413 = vpop.f32.mrf.mxu0
      %v1414 = vadd.f32 0.0, %v1413
      %v1415 = vpop.f32.mrf.mxu0
      %v1416 = vpop.f32.mrf.mxu0
      %v1417 = vadd.f32 0.0, %v1416
      %v1418 = vpop.f32.mrf.mxu0
      %1419 = vmatprep.mubr.bf16.mxu0 0
      %1420 = vmatmul.mubr.bf16.gmra.mxu0 %v1361
      %v1421 = vpop.f32.mrf.mxu0
      %v1422 = vadd.f32 0.0, %v1421
      %v1423 = vpop.f32.mrf.mxu0
      %v1424 = vpop.f32.mrf.mxu0
      %v1425 = vadd.f32 0.0, %v1424
      %v1426 = vpop.f32.mrf.mxu0
      %1427 = vdwg.mxu0
      %v1436 = vunpack.c.l.b16 %v292
      %v1437 = vunpack.c.l.b16 %v293
      %v1438 = vunpack.c.l.b16 %v294
      %v1439 = vunpack.c.l.b16 %v295
      %v1440 = vunpack.c.l.b16 %v296
      %v1441 = vunpack.c.l.b16 %v297
      %v1442 = vunpack.c.l.b16 %v298
      %v1443 = vunpack.c.l.b16 %v299
      %v1444 = vpack.c.b16 %v1437, %v1436
      %v1445 = vpack.c.b16 %v1439, %v1438
      %v1446 = vpack.c.b16 %v1441, %v1440
      %v1447 = vpack.c.b16 %v1443, %v1442
      %v1453 = vsel %vm857, %v1218, 0
      %v1456 = vsel %vm857, %v1219, 0
      %v1459 = vsel %vm857, %v1220, 0
      %v1462 = vsel %vm857, %v1221, 0
      %1464 = vmatprep.subr.bf16.mxu0 0
      %1465 = vmatpush1.bf16.msra.mxu0 0
      %1466 = vmatprep.subr.bf16.mxu0 0
      %1467 = vmatpush1.bf16.msra.mxu0 0
      %1468 = vmatprep.subr.bf16.mxu0 0
      %1469 = vmatpush1.bf16.msra.mxu0 0
      %1470 = vmatprep.subr.bf16.mxu0 0
      %1471 = vmatpush1.bf16.msra.mxu0 0
      %1472 = vmatprep.subr.bf16.mxu0 0
      %1473 = vmatpush1.bf16.msra.mxu0 %v1447
      %1474 = vmatprep.subr.bf16.mxu0 0
      %1475 = vmatpush1.bf16.msra.mxu0 %v1446
      %1476 = vmatprep.subr.bf16.mxu0 0
      %1477 = vmatpush1.bf16.msra.mxu0 %v1445
      %1478 = vmatprep.subr.bf16.mxu0 0
      %1479 = vmatpush1.bf16.msra.mxu0 %v1444
      %1480 = vmatprep.subr.bf16.mxu0 0
      %1481 = vmatpush2.bf16.msra.mxu0 0
      %1482 = vmatprep.subr.bf16.mxu0 0
      %1483 = vmatpush2.bf16.msra.mxu0 0
      %1484 = vmatprep.subr.bf16.mxu0 0
      %1485 = vmatpush2.bf16.msra.mxu0 0
      %1486 = vmatprep.subr.bf16.mxu0 0
      %1487 = vmatpush2.bf16.msra.mxu0 0
      %1488 = vmatprep.subr.bf16.mxu0 0
      %1489 = vmatpush2.bf16.msra.mxu0 0
      %1490 = vmatprep.subr.bf16.mxu0 0
      %1491 = vmatpush2.bf16.msra.mxu0 0
      %1492 = vmatprep.subr.bf16.mxu0 0
      %1493 = vmatpush2.bf16.msra.mxu0 0
      %1494 = vmatprep.subr.bf16.mxu0 0
      %1495 = vmatpush2.bf16.msra.mxu0 0
      %1496 = vmatprep.mubr.bf16.mxu0 0
      %1497 = vmatmul.mubr.bf16.gmra.mxu0 %v1453
      %v1498 = vpop.f32.mrf.mxu0
      %v1499 = vadd.f32 0.0, %v1498
      %v1500 = vpop.f32.mrf.mxu0
      %v1501 = vpop.f32.mrf.mxu0
      %v1502 = vadd.f32 0.0, %v1501
      %v1503 = vpop.f32.mrf.mxu0
      %1504 = vmatprep.mubr.bf16.mxu0 0
      %1505 = vmatmul.mubr.bf16.gmra.mxu0 %v1456
      %v1506 = vpop.f32.mrf.mxu0
      %v1507 = vadd.f32 0.0, %v1506
      %v1508 = vpop.f32.mrf.mxu0
      %v1509 = vpop.f32.mrf.mxu0
      %v1510 = vadd.f32 0.0, %v1509
      %v1511 = vpop.f32.mrf.mxu0
      %1512 = vmatprep.mubr.bf16.mxu0 0
      %1513 = vmatmul.mubr.bf16.gmra.mxu0 %v1459
      %v1514 = vpop.f32.mrf.mxu0
      %v1515 = vadd.f32 0.0, %v1514
      %v1516 = vpop.f32.mrf.mxu0
      %v1517 = vpop.f32.mrf.mxu0
      %v1518 = vadd.f32 0.0, %v1517
      %v1519 = vpop.f32.mrf.mxu0
      %1520 = vmatprep.mubr.bf16.mxu0 0
      %1521 = vmatmul.mubr.bf16.gmra.mxu0 %v1462
      %v1522 = vpop.f32.mrf.mxu0
      %v1523 = vadd.f32 0.0, %v1522
      %v1524 = vpop.f32.mrf.mxu0
      %v1525 = vpop.f32.mrf.mxu0
      %v1526 = vadd.f32 0.0, %v1525
      %v1527 = vpop.f32.mrf.mxu0
      %1528 = vdwg.mxu0
      %v1537 = vunpack.c.l.b16 %v300
      %v1538 = vunpack.c.l.b16 %v301
      %v1539 = vunpack.c.l.b16 %v302
      %v1540 = vunpack.c.l.b16 %v303
      %v1541 = vunpack.c.l.b16 %v304
      %v1542 = vunpack.c.l.b16 %v305
      %v1543 = vunpack.c.l.b16 %v306
      %v1544 = vunpack.c.l.b16 %v307
      %v1545 = vpack.c.b16 %v1538, %v1537
      %v1546 = vpack.c.b16 %v1540, %v1539
      %v1547 = vpack.c.b16 %v1542, %v1541
      %v1548 = vpack.c.b16 %v1544, %v1543
      %v1554 = vsel %vm857, %v1222, 0
      %v1557 = vsel %vm857, %v1223, 0
      %v1560 = vsel %vm857, %v1224, 0
      %v1563 = vsel %vm857, %v1225, 0
      %1565 = vmatprep.subr.bf16.mxu0 0
      %1566 = vmatpush1.bf16.msra.mxu0 0
      %1567 = vmatprep.subr.bf16.mxu0 0
      %1568 = vmatpush1.bf16.msra.mxu0 0
      %1569 = vmatprep.subr.bf16.mxu0 0
      %1570 = vmatpush1.bf16.msra.mxu0 0
      %1571 = vmatprep.subr.bf16.mxu0 0
      %1572 = vmatpush1.bf16.msra.mxu0 0
      %1573 = vmatprep.subr.bf16.mxu0 0
      %1574 = vmatpush1.bf16.msra.mxu0 %v1548
      %1575 = vmatprep.subr.bf16.mxu0 0
      %1576 = vmatpush1.bf16.msra.mxu0 %v1547
      %1577 = vmatprep.subr.bf16.mxu0 0
      %1578 = vmatpush1.bf16.msra.mxu0 %v1546
      %1579 = vmatprep.subr.bf16.mxu0 0
      %1580 = vmatpush1.bf16.msra.mxu0 %v1545
      %1581 = vmatprep.subr.bf16.mxu0 0
      %1582 = vmatpush2.bf16.msra.mxu0 0
      %1583 = vmatprep.subr.bf16.mxu0 0
      %1584 = vmatpush2.bf16.msra.mxu0 0
      %1585 = vmatprep.subr.bf16.mxu0 0
      %1586 = vmatpush2.bf16.msra.mxu0 0
      %1587 = vmatprep.subr.bf16.mxu0 0
      %1588 = vmatpush2.bf16.msra.mxu0 0
      %1589 = vmatprep.subr.bf16.mxu0 0
      %1590 = vmatpush2.bf16.msra.mxu0 0
      %1591 = vmatprep.subr.bf16.mxu0 0
      %1592 = vmatpush2.bf16.msra.mxu0 0
      %1593 = vmatprep.subr.bf16.mxu0 0
      %1594 = vmatpush2.bf16.msra.mxu0 0
      %1595 = vmatprep.subr.bf16.mxu0 0
      %1596 = vmatpush2.bf16.msra.mxu0 0
      %1597 = vmatprep.mubr.bf16.mxu0 0
      %1598 = vmatmul.mubr.bf16.gmra.mxu0 %v1554
      %v1599 = vpop.f32.mrf.mxu0
      %v1600 = vadd.f32 0.0, %v1599
      %v1601 = vpop.f32.mrf.mxu0
      %v1602 = vpop.f32.mrf.mxu0
      %v1603 = vadd.f32 0.0, %v1602
      %v1604 = vpop.f32.mrf.mxu0
      %1605 = vmatprep.mubr.bf16.mxu0 0
      %1606 = vmatmul.mubr.bf16.gmra.mxu0 %v1557
      %v1607 = vpop.f32.mrf.mxu0
      %v1608 = vadd.f32 0.0, %v1607
      %v1609 = vpop.f32.mrf.mxu0
      %v1610 = vpop.f32.mrf.mxu0
      %v1611 = vadd.f32 0.0, %v1610
      %v1612 = vpop.f32.mrf.mxu0
      %1613 = vmatprep.mubr.bf16.mxu0 0
      %1614 = vmatmul.mubr.bf16.gmra.mxu0 %v1560
      %v1615 = vpop.f32.mrf.mxu0
      %v1616 = vadd.f32 0.0, %v1615
      %v1617 = vpop.f32.mrf.mxu0
      %v1618 = vpop.f32.mrf.mxu0
      %v1619 = vadd.f32 0.0, %v1618
      %v1620 = vpop.f32.mrf.mxu0
      %1621 = vmatprep.mubr.bf16.mxu0 0
      %1622 = vmatmul.mubr.bf16.gmra.mxu0 %v1563
      %v1623 = vpop.f32.mrf.mxu0
      %v1624 = vadd.f32 0.0, %v1623
      %v1625 = vpop.f32.mrf.mxu0
      %v1626 = vpop.f32.mrf.mxu0
      %v1627 = vadd.f32 0.0, %v1626
      %v1628 = vpop.f32.mrf.mxu0
      %1629 = vdwg.mxu0
      %v1630 = vpack.c.bf16 %v1300, %v1297
      %v1631 = vpack.c.bf16 %v1308, %v1305
      %v1632 = vpack.c.bf16 %v1316, %v1313
      %v1633 = vpack.c.bf16 %v1324, %v1321
      %v1634 = vpack.c.bf16 %v1401, %v1398
      %v1635 = vpack.c.bf16 %v1409, %v1406
      %v1636 = vpack.c.bf16 %v1417, %v1414
      %v1637 = vpack.c.bf16 %v1425, %v1422
      %v1638 = vpack.c.bf16 %v1502, %v1499
      %v1639 = vpack.c.bf16 %v1510, %v1507
      %v1640 = vpack.c.bf16 %v1518, %v1515
      %v1641 = vpack.c.bf16 %v1526, %v1523
      %v1642 = vpack.c.bf16 %v1603, %v1600
      %v1643 = vpack.c.bf16 %v1611, %v1608
      %v1644 = vpack.c.bf16 %v1619, %v1616
      %v1645 = vpack.c.bf16 %v1627, %v1624
      %v1662 = vunpack.c.l.b16 %v1630
      %v1663 = vunpack.c.h.b16 %v1630
      %v1664 = vunpack.c.l.b16 %v1631
      %v1665 = vunpack.c.h.b16 %v1631
      %v1666 = vunpack.c.l.b16 %v1632
      %v1667 = vunpack.c.h.b16 %v1632
      %v1668 = vunpack.c.l.b16 %v1633
      %v1669 = vunpack.c.h.b16 %v1633
      %v1670 = vunpack.c.l.b16 %v1634
      %v1671 = vunpack.c.h.b16 %v1634
      %v1672 = vunpack.c.l.b16 %v1635
      %v1673 = vunpack.c.h.b16 %v1635
      %v1674 = vunpack.c.l.b16 %v1636
      %v1675 = vunpack.c.h.b16 %v1636
      %v1676 = vunpack.c.l.b16 %v1637
      %v1677 = vunpack.c.h.b16 %v1637
      %v1678 = vunpack.c.l.b16 %v1638
      %v1679 = vunpack.c.h.b16 %v1638
      %v1680 = vunpack.c.l.b16 %v1639
      %v1681 = vunpack.c.h.b16 %v1639
      %v1682 = vunpack.c.l.b16 %v1640
      %v1683 = vunpack.c.h.b16 %v1640
      %v1684 = vunpack.c.l.b16 %v1641
      %v1685 = vunpack.c.h.b16 %v1641
      %v1686 = vunpack.c.l.b16 %v1642
      %v1687 = vunpack.c.h.b16 %v1642
      %v1688 = vunpack.c.l.b16 %v1643
      %v1689 = vunpack.c.h.b16 %v1643
      %v1690 = vunpack.c.l.b16 %v1644
      %v1691 = vunpack.c.h.b16 %v1644
      %v1692 = vunpack.c.l.b16 %v1645
      %v1693 = vunpack.c.h.b16 %v1645
      %v1694 = vpack.c.b16 %v1662, %v1662
      %v1695 = vpack.c.b16 %v1663, %v1663
      %v1696 = vpack.c.b16 %v1664, %v1664
      %v1697 = vpack.c.b16 %v1665, %v1665
      %v1698 = vpack.c.b16 %v1666, %v1666
      %v1699 = vpack.c.b16 %v1667, %v1667
      %v1700 = vpack.c.b16 %v1668, %v1668
      %v1701 = vpack.c.b16 %v1669, %v1669
      %v1702 = vpack.c.b16 %v1670, %v1670
      %v1703 = vpack.c.b16 %v1671, %v1671
      %v1704 = vpack.c.b16 %v1672, %v1672
      %v1705 = vpack.c.b16 %v1673, %v1673
      %v1706 = vpack.c.b16 %v1674, %v1674
      %v1707 = vpack.c.b16 %v1675, %v1675
      %v1708 = vpack.c.b16 %v1676, %v1676
      %v1709 = vpack.c.b16 %v1677, %v1677
      %v1710 = vpack.c.b16 %v1678, %v1678
      %v1711 = vpack.c.b16 %v1679, %v1679
      %v1712 = vpack.c.b16 %v1680, %v1680
      %v1713 = vpack.c.b16 %v1681, %v1681
      %v1714 = vpack.c.b16 %v1682, %v1682
      %v1715 = vpack.c.b16 %v1683, %v1683
      %v1716 = vpack.c.b16 %v1684, %v1684
      %v1717 = vpack.c.b16 %v1685, %v1685
      %v1718 = vpack.c.b16 %v1686, %v1686
      %v1719 = vpack.c.b16 %v1687, %v1687
      %v1720 = vpack.c.b16 %v1688, %v1688
      %v1721 = vpack.c.b16 %v1689, %v1689
      %v1722 = vpack.c.b16 %v1690, %v1690
      %v1723 = vpack.c.b16 %v1691, %v1691
      %v1724 = vpack.c.b16 %v1692, %v1692
      %v1725 = vpack.c.b16 %v1693, %v1693
      %vm1758 = vcmask 125952
      %1759 = vst.msk [vmem:[%s210] sm:$0xf] %vm1758, %v1694
      %1760 = vst.msk [vmem:[%s210 + $0x4] sm:$0xf] %vm1758, %v1695
      %1761 = vst.msk [vmem:[%s210 + $0x8] sm:$0xf] %vm1758, %v1696
      %1762 = vst.msk [vmem:[%s210 + $0xc] sm:$0xf] %vm1758, %v1697
      %1763 = vst.msk [vmem:[%s210 + $0x10] sm:$0xf] %vm1758, %v1698
      %1764 = vst.msk [vmem:[%s210 + $0x14] sm:$0xf] %vm1758, %v1699
      %1765 = vst.msk [vmem:[%s210 + $0x18] sm:$0xf] %vm1758, %v1700
      %1766 = vst.msk [vmem:[%s210 + $0x1c] sm:$0xf] %vm1758, %v1701
      %1767 = vst.msk [vmem:[%s210 + $0x20] sm:$0xf] %vm1758, %v1702
      %1768 = vst.msk [vmem:[%s210 + $0x24] sm:$0xf] %vm1758, %v1703
      %1769 = vst.msk [vmem:[%s210 + $0x28] sm:$0xf] %vm1758, %v1704
      %1770 = vst.msk [vmem:[%s210 + $0x2c] sm:$0xf] %vm1758, %v1705
      %1771 = vst.msk [vmem:[%s210 + $0x30] sm:$0xf] %vm1758, %v1706
      %1772 = vst.msk [vmem:[%s210 + $0x34] sm:$0xf] %vm1758, %v1707
      %1773 = vst.msk [vmem:[%s210 + $0x38] sm:$0xf] %vm1758, %v1708
      %1774 = vst.msk [vmem:[%s210 + $0x3c] sm:$0xf] %vm1758, %v1709
      %1775 = vst.msk [vmem:[%s210 + $0x40] sm:$0xf] %vm1758, %v1710
      %1776 = vst.msk [vmem:[%s210 + $0x44] sm:$0xf] %vm1758, %v1711
      %1777 = vst.msk [vmem:[%s210 + $0x48] sm:$0xf] %vm1758, %v1712
      %1778 = vst.msk [vmem:[%s210 + $0x4c] sm:$0xf] %vm1758, %v1713
      %1779 = vst.msk [vmem:[%s210 + $0x50] sm:$0xf] %vm1758, %v1714
      %1780 = vst.msk [vmem:[%s210 + $0x54] sm:$0xf] %vm1758, %v1715
      %1781 = vst.msk [vmem:[%s210 + $0x58] sm:$0xf] %vm1758, %v1716
      %1782 = vst.msk [vmem:[%s210 + $0x5c] sm:$0xf] %vm1758, %v1717
      %1783 = vst.msk [vmem:[%s210 + $0x60] sm:$0xf] %vm1758, %v1718
      %1784 = vst.msk [vmem:[%s210 + $0x64] sm:$0xf] %vm1758, %v1719
      %1785 = vst.msk [vmem:[%s210 + $0x68] sm:$0xf] %vm1758, %v1720
      %1786 = vst.msk [vmem:[%s210 + $0x6c] sm:$0xf] %vm1758, %v1721
      %1787 = vst.msk [vmem:[%s210 + $0x70] sm:$0xf] %vm1758, %v1722
      %1788 = vst.msk [vmem:[%s210 + $0x74] sm:$0xf] %vm1758, %v1723
      %1789 = vst.msk [vmem:[%s210 + $0x78] sm:$0xf] %vm1758, %v1724
      %1790 = vst.msk [vmem:[%s210 + $0x7c] sm:$0xf] %vm1758, %v1725
      %p1791 = scmp.lt.s32.totalorder %s14, 1
      %s1792 = scalar_select %p1791, %s14, 1
      %s1793 = smul.addr %s1792, 32
      %s1794 = smul.addr %s1793, 4
      %s1795 = scalar_lea.vmem %s3, %s1794
      // Predicated region
      $region33: #{_device_forward.31} parent=31 // pred_check
        %p1796 = pneg %p110
      $region34: #{_device_forward.31} parent=31 // pred_check_branch
        %1798 = sbr.rel (%p1796) target = $region36
      $region35: #{_device_forward.31} parent=31 // pred_region
        _
      $region36: #{_device_forward.31} parent=31 // pred_fallthru
        _
    $region32: #{_device_forward.31} parent=5 // pred_fallthru
      _
    %p1799 = scmp.le.s32.totalorder 2, %s9
    // Predicated region
    $region37: #{_device_forward.31} parent=5 // pred_check
      %p1800 = pneg %p1799
    $region38: #{_device_forward.31} parent=5 // pred_check_branch
      %1802 = sbr.rel (%p1800) target = $region40
    $region39: #{_device_forward.31} parent=5 // pred_region
      %s1803 = ssub.s32 %s9, 2
      // Predicated region
      $region41: #{_device_forward.31} parent=39 // pred_check
        %p1804 = pneg %p116
      $region42: #{_device_forward.31} parent=39 // pred_check_branch
        %1806 = sbr.rel (%p1804) target = $region44
      $region43: #{_device_forward.31} parent=39 // pred_region
        %p1807 = scmp.lt.s32.totalorder %s15, 1
        %s1808 = scalar_select %p1807, %s15, 1
        %s1809 = smul.addr %s1808, 32
        %s1810 = smul.addr %s1809, 4
        %s1811 = scalar_lea.vmem %s3, %s1810
      $region44: #{_device_forward.31} parent=39 // pred_fallthru
        _
    $region40: #{_device_forward.31} parent=5 // pred_fallthru
      _
  $region6: #{_device_forward.31} parent=0 // loop_footer
    %s13 = sadd.s32 1, %s9
  $region7: #{_device_forward.31} parent=0 // loop_footer_branch
    %8 = sbr.rel target = $region3
  $region8: #{_device_forward.31} parent=0 // loop_exit
    _

// kernel: _device_forward.32
$region0: #{_device_forward.32}
  #allocation0 [shape = 'u32[]', space=smem, size = 0x4, offset = 0x4, fixed_abs, tag = 'smem constant byte address 0x4 - core index']
  #allocation1 [shape = 'u32[144,128]{1,0:T(1,128)}', space=vmem, size = 0x12000, scoped, tag = 'internal scratch']
  #allocation2 [shape = 'f32[128,128]{1,0:T(8,128)}', space=vmem, size = 0x10000, scoped, tag = 'scratch operand']
  %s0 = inlined_call_operand.vmem [shape: bf16[128,128], index: 0, kind: input, shape index: {}]
  %s1 = inlined_call_operand.vmem [shape: bf16[128,128], index: 1, kind: input, shape index: {}]
  %s2 = inlined_call_operand.vmem [shape: f32[128,128], index: 2, kind: output, shape index: {}]
  %s3 = sld [smem:[#allocation0]]
  $region26: #{_device_forward.32} parent=0
    _
  %s5 = ssub.s32 1, %s3
  %s6 = scalar_select 0, %s5, %s3
  // Predicated region
  $region2: #{_device_forward.32} parent=0 // pred_check
    _
  $region3: #{_device_forward.32} parent=0 // pred_check_branch
    %8 = sbr.rel (0) target = $region5
  $region4: #{_device_forward.32} parent=0 // pred_region
    _
  $region5: #{_device_forward.32} parent=0 // pred_fallthru
    _
  // Predicated region
  $region6: #{_device_forward.32} parent=0 // pred_check
    _
  $region7: #{_device_forward.32} parent=0 // pred_check_branch
    %10 = sbr.rel (0) target = $region9
  $region8: #{_device_forward.32} parent=0 // pred_region
    _
  $region9: #{_device_forward.32} parent=0 // pred_fallthru
    _
  %p12 = scmp.eq.s32.totalorder 0, 0
  // Predicated region
  $region10: #{_device_forward.32} parent=0 // pred_check
    %p13 = pneg %p12
  $region11: #{_device_forward.32} parent=0 // pred_check_branch
    %15 = sbr.rel (%p13) target = $region13
  $region12: #{_device_forward.32} parent=0 // pred_region
    %16 = vst [vmem:[#allocation2] sm:$0xff] 0.0
    %17 = vst [vmem:[#allocation2 + $0x8] sm:$0xff] 0.0
    %18 = vst [vmem:[#allocation2 + $0x10] sm:$0xff] 0.0
    %19 = vst [vmem:[#allocation2 + $0x18] sm:$0xff] 0.0
    %20 = vst [vmem:[#allocation2 + $0x20] sm:$0xff] 0.0
    %21 = vst [vmem:[#allocation2 + $0x28] sm:$0xff] 0.0
    %22 = vst [vmem:[#allocation2 + $0x30] sm:$0xff] 0.0
    %23 = vst [vmem:[#allocation2 + $0x38] sm:$0xff] 0.0
    %24 = vst [vmem:[#allocation2 + $0x40] sm:$0xff] 0.0
    %25 = vst [vmem:[#allocation2 + $0x48] sm:$0xff] 0.0
    %26 = vst [vmem:[#allocation2 + $0x50] sm:$0xff] 0.0
    %27 = vst [vmem:[#allocation2 + $0x58] sm:$0xff] 0.0
    %28 = vst [vmem:[#allocation2 + $0x60] sm:$0xff] 0.0
    %29 = vst [vmem:[#allocation2 + $0x68] sm:$0xff] 0.0
    %30 = vst [vmem:[#allocation2 + $0x70] sm:$0xff] 0.0
    %31 = vst [vmem:[#allocation2 + $0x78] sm:$0xff] 0.0
  $region13: #{_device_forward.32} parent=0 // pred_fallthru
    _
  %v32 = vld [vmem:[#allocation2] sm:$0xff]
  %v33 = vld [vmem:[#allocation2 + $0x8] sm:$0xff]
  %v34 = vld [vmem:[#allocation2 + $0x10] sm:$0xff]
  %v35 = vld [vmem:[#allocation2 + $0x18] sm:$0xff]
  %v36 = vld [vmem:[#allocation2 + $0x20] sm:$0xff]
  %v37 = vld [vmem:[#allocation2 + $0x28] sm:$0xff]
  %v38 = vld [vmem:[#allocation2 + $0x30] sm:$0xff]
  %v39 = vld [vmem:[#allocation2 + $0x38] sm:$0xff]
  %v40 = vld [vmem:[#allocation2 + $0x40] sm:$0xff]
  %v41 = vld [vmem:[#allocation2 + $0x48] sm:$0xff]
  %v42 = vld [vmem:[#allocation2 + $0x50] sm:$0xff]
  %v43 = vld [vmem:[#allocation2 + $0x58] sm:$0xff]
  %v44 = vld [vmem:[#allocation2 + $0x60] sm:$0xff]
  %v45 = vld [vmem:[#allocation2 + $0x68] sm:$0xff]
  %v46 = vld [vmem:[#allocation2 + $0x70] sm:$0xff]
  %v47 = vld [vmem:[#allocation2 + $0x78] sm:$0xff]
  %v48 = vld [vmem:[%s0] sm:$0xf]
  %v49 = vld [vmem:[%s0 + $0x4] sm:$0xf]
  %v50 = vld [vmem:[%s0 + $0x8] sm:$0xf]
  %v51 = vld [vmem:[%s0 + $0xc] sm:$0xf]
  %v52 = vld [vmem:[%s0 + $0x10] sm:$0xf]
  %v53 = vld [vmem:[%s0 + $0x14] sm:$0xf]
  %v54 = vld [vmem:[%s0 + $0x18] sm:$0xf]
  %v55 = vld [vmem:[%s0 + $0x1c] sm:$0xf]
  %v56 = vld [vmem:[%s0 + $0x20] sm:$0xf]
  %v57 = vld [vmem:[%s0 + $0x24] sm:$0xf]
  %v58 = vld [vmem:[%s0 + $0x28] sm:$0xf]
  %v59 = vld [vmem:[%s0 + $0x2c] sm:$0xf]
  %v60 = vld [vmem:[%s0 + $0x30] sm:$0xf]
  %v61 = vld [vmem:[%s0 + $0x34] sm:$0xf]
  %v62 = vld [vmem:[%s0 + $0x38] sm:$0xf]
  %v63 = vld [vmem:[%s0 + $0x3c] sm:$0xf]
  %v64 = vld [vmem:[%s1] sm:$0xf]
  %v65 = vld [vmem:[%s1 + $0x4] sm:$0xf]
  %v66 = vld [vmem:[%s1 + $0x8] sm:$0xf]
  %v67 = vld [vmem:[%s1 + $0xc] sm:$0xf]
  %v68 = vld [vmem:[%s1 + $0x10] sm:$0xf]
  %v69 = vld [vmem:[%s1 + $0x14] sm:$0xf]
  %v70 = vld [vmem:[%s1 + $0x18] sm:$0xf]
  %v71 = vld [vmem:[%s1 + $0x1c] sm:$0xf]
  %v72 = vld [vmem:[%s1 + $0x20] sm:$0xf]
  %v73 = vld [vmem:[%s1 + $0x24] sm:$0xf]
  %v74 = vld [vmem:[%s1 + $0x28] sm:$0xf]
  %v75 = vld [vmem:[%s1 + $0x2c] sm:$0xf]
  %v76 = vld [vmem:[%s1 + $0x30] sm:$0xf]
  %v77 = vld [vmem:[%s1 + $0x34] sm:$0xf]
  %v78 = vld [vmem:[%s1 + $0x38] sm:$0xf]
  %v79 = vld [vmem:[%s1 + $0x3c] sm:$0xf]
  %v96 = vunpack.c.l.b16 %v48
  %v97 = vunpack.c.l.b16 %v49
  %v98 = vunpack.c.l.b16 %v50
  %v99 = vunpack.c.l.b16 %v51
  %v100 = vunpack.c.l.b16 %v52
  %v101 = vunpack.c.l.b16 %v53
  %v102 = vunpack.c.l.b16 %v54
  %v103 = vunpack.c.l.b16 %v55
  %v104 = vunpack.c.l.b16 %v56
  %v105 = vunpack.c.l.b16 %v57
  %v106 = vunpack.c.l.b16 %v58
  %v107 = vunpack.c.l.b16 %v59
  %v108 = vunpack.c.l.b16 %v60
  %v109 = vunpack.c.l.b16 %v61
  %v110 = vunpack.c.l.b16 %v62
  %v111 = vunpack.c.l.b16 %v63
  %v112 = vpack.c.b16 %v97, %v96
  %v113 = vpack.c.b16 %v99, %v98
  %v114 = vpack.c.b16 %v101, %v100
  %v115 = vpack.c.b16 %v103, %v102
  %v116 = vpack.c.b16 %v105, %v104
  %v117 = vpack.c.b16 %v107, %v106
  %v118 = vpack.c.b16 %v109, %v108
  %v119 = vpack.c.b16 %v111, %v110
  %v144 = vunpack.c.l.b16 %v64
  %v145 = vunpack.c.l.b16 %v65
  %v146 = vunpack.c.l.b16 %v66
  %v147 = vunpack.c.l.b16 %v67
  %v148 = vunpack.c.l.b16 %v68
  %v149 = vunpack.c.l.b16 %v69
  %v150 = vunpack.c.l.b16 %v70
  %v151 = vunpack.c.l.b16 %v71
  %v152 = vunpack.c.l.b16 %v72
  %v153 = vunpack.c.l.b16 %v73
  %v154 = vunpack.c.l.b16 %v74
  %v155 = vunpack.c.l.b16 %v75
  %v156 = vunpack.c.l.b16 %v76
  %v157 = vunpack.c.l.b16 %v77
  %v158 = vunpack.c.l.b16 %v78
  %v159 = vunpack.c.l.b16 %v79
  %v160 = vpack.c.b16 %v145, %v144
  %v161 = vpack.c.b16 %v147, %v146
  %v162 = vpack.c.b16 %v149, %v148
  %v163 = vpack.c.b16 %v151, %v150
  %v164 = vpack.c.b16 %v153, %v152
  %v165 = vpack.c.b16 %v155, %v154
  %v166 = vpack.c.b16 %v157, %v156
  %v167 = vpack.c.b16 %v159, %v158
  %176 = vmatprep.subr.bf16.mxu0 0
  %177 = vmatpush1.bf16.msra.mxu0 %v167
  %178 = vmatprep.subr.bf16.mxu0 0
  %179 = vmatpush1.bf16.msra.mxu0 %v166
  %180 = vmatprep.subr.bf16.mxu0 0
  %181 = vmatpush1.bf16.msra.mxu0 %v165
  %182 = vmatprep.subr.bf16.mxu0 0
  %183 = vmatpush1.bf16.msra.mxu0 %v164
  %184 = vmatprep.subr.bf16.mxu0 0
  %185 = vmatpush1.bf16.msra.mxu0 %v163
  %186 = vmatprep.subr.bf16.mxu0 0
  %187 = vmatpush1.bf16.msra.mxu0 %v162
  %188 = vmatprep.subr.bf16.mxu0 0
  %189 = vmatpush1.bf16.msra.mxu0 %v161
  %190 = vmatprep.subr.bf16.mxu0 0
  %191 = vmatpush1.bf16.msra.mxu0 %v160
  %192 = vmatprep.subr.bf16.mxu0 0
  %193 = vmatpush2.bf16.msra.mxu0 0
  %194 = vmatprep.subr.bf16.mxu0 0
  %195 = vmatpush2.bf16.msra.mxu0 0
  %196 = vmatprep.subr.bf16.mxu0 0
  %197 = vmatpush2.bf16.msra.mxu0 0
  %198 = vmatprep.subr.bf16.mxu0 0
  %199 = vmatpush2.bf16.msra.mxu0 0
  %200 = vmatprep.subr.bf16.mxu0 0
  %201 = vmatpush2.bf16.msra.mxu0 0
  %202 = vmatprep.subr.bf16.mxu0 0
  %203 = vmatpush2.bf16.msra.mxu0 0
  %204 = vmatprep.subr.bf16.mxu0 0
  %205 = vmatpush2.bf16.msra.mxu0 0
  %206 = vmatprep.subr.bf16.mxu0 0
  %207 = vmatpush2.bf16.msra.mxu0 0
  %208 = vmatprep.mubr.bf16.mxu0 0
  %209 = vmatmul.mubr.bf16.gmra.mxu0 %v112
  %v210 = vpop.f32.mrf.mxu0
  %v211 = vadd.f32 0.0, %v210
  %v212 = vpop.f32.mrf.mxu0
  %v213 = vpop.f32.mrf.mxu0
  %v214 = vadd.f32 0.0, %v213
  %v215 = vpop.f32.mrf.mxu0
  %216 = vmatprep.mubr.bf16.mxu0 0
  %217 = vmatmul.mubr.bf16.gmra.mxu0 %v113
  %v218 = vpop.f32.mrf.mxu0
  %v219 = vadd.f32 0.0, %v218
  %v220 = vpop.f32.mrf.mxu0
  %v221 = vpop.f32.mrf.mxu0
  %v222 = vadd.f32 0.0, %v221
  %v223 = vpop.f32.mrf.mxu0
  %224 = vmatprep.mubr.bf16.mxu0 0
  %225 = vmatmul.mubr.bf16.gmra.mxu0 %v114
  %v226 = vpop.f32.mrf.mxu0
  %v227 = vadd.f32 0.0, %v226
  %v228 = vpop.f32.mrf.mxu0
  %v229 = vpop.f32.mrf.mxu0
  %v230 = vadd.f32 0.0, %v229
  %v231 = vpop.f32.mrf.mxu0
  %232 = vmatprep.mubr.bf16.mxu0 0
  %233 = vmatmul.mubr.bf16.gmra.mxu0 %v115
  %v234 = vpop.f32.mrf.mxu0
  %v235 = vadd.f32 0.0, %v234
  %v236 = vpop.f32.mrf.mxu0
  %v237 = vpop.f32.mrf.mxu0
  %v238 = vadd.f32 0.0, %v237
  %v239 = vpop.f32.mrf.mxu0
  %240 = vmatprep.mubr.bf16.mxu0 0
  %241 = vmatmul.mubr.bf16.gmra.mxu0 %v116
  %v242 = vpop.f32.mrf.mxu0
  %v243 = vadd.f32 0.0, %v242
  %v244 = vpop.f32.mrf.mxu0
  %v245 = vpop.f32.mrf.mxu0
  %v246 = vadd.f32 0.0, %v245
  %v247 = vpop.f32.mrf.mxu0
  %248 = vmatprep.mubr.bf16.mxu0 0
  %249 = vmatmul.mubr.bf16.gmra.mxu0 %v117
  %v250 = vpop.f32.mrf.mxu0
  %v251 = vadd.f32 0.0, %v250
  %v252 = vpop.f32.mrf.mxu0
  %v253 = vpop.f32.mrf.mxu0
  %v254 = vadd.f32 0.0, %v253
  %v255 = vpop.f32.mrf.mxu0
  %256 = vmatprep.mubr.bf16.mxu0 0
  %257 = vmatmul.mubr.bf16.gmra.mxu0 %v118
  %v258 = vpop.f32.mrf.mxu0
  %v259 = vadd.f32 0.0, %v258
  %v260 = vpop.f32.mrf.mxu0
  %v261 = vpop.f32.mrf.mxu0
  %v262 = vadd.f32 0.0, %v261
  %v263 = vpop.f32.mrf.mxu0
  %264 = vmatprep.mubr.bf16.mxu0 0
  %265 = vmatmul.mubr.bf16.gmra.mxu0 %v119
  %v266 = vpop.f32.mrf.mxu0
  %v267 = vadd.f32 0.0, %v266
  %v268 = vpop.f32.mrf.mxu0
  %v269 = vpop.f32.mrf.mxu0
  %v270 = vadd.f32 0.0, %v269
  %v271 = vpop.f32.mrf.mxu0
  %272 = vdwg.mxu0
  %v273 = vadd.f32 %v32, %v211
  %v274 = vadd.f32 %v33, %v214
  %v275 = vadd.f32 %v34, %v219
  %v276 = vadd.f32 %v35, %v222
  %v277 = vadd.f32 %v36, %v227
  %v278 = vadd.f32 %v37, %v230
  %v279 = vadd.f32 %v38, %v235
  %v280 = vadd.f32 %v39, %v238
  %v281 = vadd.f32 %v40, %v243
  %v282 = vadd.f32 %v41, %v246
  %v283 = vadd.f32 %v42, %v251
  %v284 = vadd.f32 %v43, %v254
  %v285 = vadd.f32 %v44, %v259
  %v286 = vadd.f32 %v45, %v262
  %v287 = vadd.f32 %v46, %v267
  %v288 = vadd.f32 %v47, %v270
  %289 = vst [vmem:[#allocation2] sm:$0xff] %v273
  %290 = vst [vmem:[#allocation2 + $0x8] sm:$0xff] %v274
  %291 = vst [vmem:[#allocation2 + $0x10] sm:$0xff] %v275
  %292 = vst [vmem:[#allocation2 + $0x18] sm:$0xff] %v276
  %293 = vst [vmem:[#allocation2 + $0x20] sm:$0xff] %v277
  %294 = vst [vmem:[#allocation2 + $0x28] sm:$0xff] %v278
  %295 = vst [vmem:[#allocation2 + $0x30] sm:$0xff] %v279
  %296 = vst [vmem:[#allocation2 + $0x38] sm:$0xff] %v280
  %297 = vst [vmem:[#allocation2 + $0x40] sm:$0xff] %v281
  %298 = vst [vmem:[#allocation2 + $0x48] sm:$0xff] %v282
  %299 = vst [vmem:[#allocation2 + $0x50] sm:$0xff] %v283
  %300 = vst [vmem:[#allocation2 + $0x58] sm:$0xff] %v284
  %301 = vst [vmem:[#allocation2 + $0x60] sm:$0xff] %v285
  %302 = vst [vmem:[#allocation2 + $0x68] sm:$0xff] %v286
  %303 = vst [vmem:[#allocation2 + $0x70] sm:$0xff] %v287
  %304 = vst [vmem:[#allocation2 + $0x78] sm:$0xff] %v288
  // Predicated region
  $region14: #{_device_forward.32} parent=0 // pred_check
    %p305 = pneg %p12
  $region15: #{_device_forward.32} parent=0 // pred_check_branch
    %307 = sbr.rel (%p305) target = $region17
  $region16: #{_device_forward.32} parent=0 // pred_region
    %v308 = vld [vmem:[#allocation2] sm:$0xff]
    %v309 = vld [vmem:[#allocation2 + $0x8] sm:$0xff]
    %v310 = vld [vmem:[#allocation2 + $0x10] sm:$0xff]
    %v311 = vld [vmem:[#allocation2 + $0x18] sm:$0xff]
    %v312 = vld [vmem:[#allocation2 + $0x20] sm:$0xff]
    %v313 = vld [vmem:[#allocation2 + $0x28] sm:$0xff]
    %v314 = vld [vmem:[#allocation2 + $0x30] sm:$0xff]
    %v315 = vld [vmem:[#allocation2 + $0x38] sm:$0xff]
    %v316 = vld [vmem:[#allocation2 + $0x40] sm:$0xff]
    %v317 = vld [vmem:[#allocation2 + $0x48] sm:$0xff]
    %v318 = vld [vmem:[#allocation2 + $0x50] sm:$0xff]
    %v319 = vld [vmem:[#allocation2 + $0x58] sm:$0xff]
    %v320 = vld [vmem:[#allocation2 + $0x60] sm:$0xff]
    %v321 = vld [vmem:[#allocation2 + $0x68] sm:$0xff]
    %v322 = vld [vmem:[#allocation2 + $0x70] sm:$0xff]
    %v323 = vld [vmem:[#allocation2 + $0x78] sm:$0xff]
    %324 = vst [vmem:[%s2] sm:$0xff] %v308
    %325 = vst [vmem:[%s2 + $0x8] sm:$0xff] %v309
    %326 = vst [vmem:[%s2 + $0x10] sm:$0xff] %v310
    %327 = vst [vmem:[%s2 + $0x18] sm:$0xff] %v311
    %328 = vst [vmem:[%s2 + $0x20] sm:$0xff] %v312
    %329 = vst [vmem:[%s2 + $0x28] sm:$0xff] %v313
    %330 = vst [vmem:[%s2 + $0x30] sm:$0xff] %v314
    %331 = vst [vmem:[%s2 + $0x38] sm:$0xff] %v315
    %332 = vst [vmem:[%s2 + $0x40] sm:$0xff] %v316
    %333 = vst [vmem:[%s2 + $0x48] sm:$0xff] %v317
    %334 = vst [vmem:[%s2 + $0x50] sm:$0xff] %v318
    %335 = vst [vmem:[%s2 + $0x58] sm:$0xff] %v319
    %336 = vst [vmem:[%s2 + $0x60] sm:$0xff] %v320
    %337 = vst [vmem:[%s2 + $0x68] sm:$0xff] %v321
    %338 = vst [vmem:[%s2 + $0x70] sm:$0xff] %v322
    %339 = vst [vmem:[%s2 + $0x78] sm:$0xff] %v323
  $region17: #{_device_forward.32} parent=0 // pred_fallthru
    _
  // Predicated region
  $region18: #{_device_forward.32} parent=0 // pred_check
    _
  $region19: #{_device_forward.32} parent=0 // pred_check_branch
    %341 = sbr.rel (0) target = $region21
  $region20: #{_device_forward.32} parent=0 // pred_region
    _
  $region21: #{_device_forward.32} parent=0 // pred_fallthru
    _
  // Predicated region
  $region22: #{_device_forward.32} parent=0 // pred_check
    _
  $region23: #{_device_forward.32} parent=0 // pred_check_branch
    %343 = sbr.rel (0) target = $region25
  $region24: #{_device_forward.32} parent=0 // pred_region
    _
  $region25: #{_device_forward.32} parent=0 // pred_fallthru
    _

// kernel: _device_forward.33
$region0: #{_device_forward.33}
  #allocation0 [shape = 'u32[]', space=smem, size = 0x4, offset = 0x4, fixed_abs, tag = 'smem constant byte address 0x4 - core index']
  #allocation1 [shape = 'u32[144,128]{1,0:T(1,128)}', space=vmem, size = 0x12000, scoped, tag = 'internal scratch']
  %s0 = inlined_call_operand.vmem [shape: f32[2,64,64], index: 0, kind: input, shape index: {}]
  %s1 = inlined_call_operand.vmem [shape: f32[2,1,64], index: 1, kind: input, shape index: {}]
  %s2 = inlined_call_operand.vmem [shape: f32[2,64,64], index: 2, kind: input, shape index: {}]
  %s3 = inlined_call_operand.vmem [shape: f32[1,64], index: 3, kind: input, shape index: {}]
  %s4 = inlined_call_operand.vmem [shape: f32[2,1,64], index: 4, kind: input, shape index: {}]
  %s5 = inlined_call_operand.vmem [shape: f32[2,1,64], index: 5, kind: input, shape index: {}]
  %s6 = inlined_call_operand.vmem [shape: f32[2,64,64], index: 6, kind: output, shape index: {0}]
  %s7 = inlined_call_operand.vmem [shape: bf16[2,64,64], index: 7, kind: output, shape index: {1}]
  %8 = xla_tuple %s6, %s7
  %s9 = sld [smem:[#allocation0]]
  $region65: #{_device_forward.33} parent=0
    _
  %s11 = ssub.s32 1, %s9
  %s12 = scalar_select 0, %s11, %s9
  loop: start=0, step=1, limit=4
  $region2: #{_device_forward.33} parent=0 // loop_pre_header
    _
  $region3: #{_device_forward.33} parent=0 // loop_header
    %s14 = sphi 0, %s18
    %p15 = scmp.ge.s32.totalorder %s14, 4
    %s21 = sphi 0, %s33
    %s22 = sphi 0, %s29
    %s23 = sphi 0, %s21
    %s24 = sphi 0, %s22
    %s25 = sphi 0, %s23
    %s26 = sphi 0, %s24
    %s38 = sphi 0, %s40
    %s41 = sphi 0, %s38
    %s42 = sphi 0, %s41
    %s58 = sphi 0, %s42
    %s64 = sphi 0, %s66
    %s67 = sphi 0, %s64
    %s68 = sphi 0, %s67
    %s84 = sphi 0, %s68
    %s92 = sphi 0, %s94
    %s95 = sphi 0, %s92
    %s96 = sphi 0, %s95
    %s112 = sphi 0, %s96
    %s116 = sphi 0, %s116
    %s118 = sphi 0, %s116
    %s119 = sphi 0, %s118
    %s133 = sphi 0, %s119
    %s139 = sphi 0, %s141
    %s142 = sphi 0, %s139
    %s143 = sphi 0, %s142
    %s159 = sphi 0, %s143
    %s165 = sphi 0, %s167
    %s168 = sphi 0, %s165
    %s169 = sphi 0, %s168
    %s185 = sphi 0, %s169
    %s193 = sphi 0, %s195
    %s196 = sphi 0, %s193
    %s197 = sphi 0, %s196
    %s213 = sphi 0, %s197
    %s221 = sphi 0, %s223
    %s224 = sphi 0, %s221
    %s225 = sphi 0, %s224
    %s241 = sphi 0, %s225
  $region4: #{_device_forward.33} parent=0 // loop_header_branch
    %17 = sbr.rel (%p15) target = $region8
  $region5: #{_device_forward.33} parent=0 // loop_body
    %s19 = ssub.s32 %s14, 1
    %s20 = ssub.s32 %s14, 2
    %s27 = sadd.s32 1, %s22
    %p28 = scmp.ge.s32.totalorder %s27, 1
    %s29 = scalar_select %p28, 0, %s27
    %s30 = sadd.s32 1, %s21
    %s31 = scalar_select %p28, %s30, %s21
    %p32 = scmp.ge.s32.totalorder %s31, 2
    %s33 = scalar_select %p32, 0, %s31
    %s34 = ssub.s32 %s21, %s33
    %s35 = ssub.s32 %s22, %s29
    %s36 = sor.u32 %s34, %s35
    %p37 = scmp.eq.s32.totalorder %s36, 0
    %s39 = sadd.s32 %s38, 1
    %s40 = scalar_select %p37, %s38, %s39
    %p43 = pneg %p37
    %p44 = scmp.eq.s32.totalorder %s14, 1
    %p45 = por %p43, %p44
    %p46 = scmp.ne.s32.totalorder %s38, %s41
    %p47 = scmp.eq.s32.totalorder %s14, 0
    %p48 = por %p46, %p47
    %p49 = scmp.ne.s32.totalorder %s38, %s41
    %p50 = scmp.eq.s32.totalorder %s19, 1
    %p51 = por %p49, %p50
    %p52 = scmp.ne.s32.totalorder %s41, %s42
    %p53 = scmp.eq.s32.totalorder %s19, 0
    %p54 = por %p52, %p53
    %p55 = scmp.ne.s32.totalorder %s41, %s42
    %p56 = scmp.eq.s32.totalorder %s20, 1
    %p57 = por %p55, %p56
    %p59 = scmp.ne.s32.totalorder %s42, %s58
    %p60 = scmp.eq.s32.totalorder %s20, 0
    %p61 = por %p59, %p60
    %s62 = ssub.s32 %s21, %s33
    %p63 = scmp.eq.s32.totalorder %s62, 0
    %s65 = sadd.s32 %s64, 1
    %s66 = scalar_select %p63, %s64, %s65
    %p69 = pneg %p63
    %p70 = scmp.eq.s32.totalorder %s14, 1
    %p71 = por %p69, %p70
    %p72 = scmp.ne.s32.totalorder %s64, %s67
    %p73 = scmp.eq.s32.totalorder %s14, 0
    %p74 = por %p72, %p73
    %p75 = scmp.ne.s32.totalorder %s64, %s67
    %p76 = scmp.eq.s32.totalorder %s19, 1
    %p77 = por %p75, %p76
    %p78 = scmp.ne.s32.totalorder %s67, %s68
    %p79 = scmp.eq.s32.totalorder %s19, 0
    %p80 = por %p78, %p79
    %p81 = scmp.ne.s32.totalorder %s67, %s68
    %p82 = scmp.eq.s32.totalorder %s20, 1
    %p83 = por %p81, %p82
    %p85 = scmp.ne.s32.totalorder %s68, %s84
    %p86 = scmp.eq.s32.totalorder %s20, 0
    %p87 = por %p85, %p86
    %s88 = ssub.s32 %s21, %s33
    %s89 = ssub.s32 %s22, %s29
    %s90 = sor.u32 %s88, %s89
    %p91 = scmp.eq.s32.totalorder %s90, 0
    %s93 = sadd.s32 %s92, 1
    %s94 = scalar_select %p91, %s92, %s93
    %p97 = pneg %p91
    %p98 = scmp.eq.s32.totalorder %s14, 1
    %p99 = por %p97, %p98
    %p100 = scmp.ne.s32.totalorder %s92, %s95
    %p101 = scmp.eq.s32.totalorder %s14, 0
    %p102 = por %p100, %p101
    %p103 = scmp.ne.s32.totalorder %s92, %s95
    %p104 = scmp.eq.s32.totalorder %s19, 1
    %p105 = por %p103, %p104
    %p106 = scmp.ne.s32.totalorder %s95, %s96
    %p107 = scmp.eq.s32.totalorder %s19, 0
    %p108 = por %p106, %p107
    %p109 = scmp.ne.s32.totalorder %s95, %s96
    %p110 = scmp.eq.s32.totalorder %s20, 1
    %p111 = por %p109, %p110
    %p113 = scmp.ne.s32.totalorder %s96, %s112
    %p114 = scmp.eq.s32.totalorder %s20, 0
    %p115 = por %p113, %p114
    %s117 = sadd.s32 %s116, 1
    %p120 = scmp.eq.s32.totalorder %s14, 1
    %p121 = scmp.ne.s32.totalorder %s116, %s118
    %p122 = scmp.eq.s32.totalorder %s14, 0
    %p123 = por %p121, %p122
    %p124 = scmp.ne.s32.totalorder %s116, %s118
    %p125 = scmp.eq.s32.totalorder %s19, 1
    %p126 = por %p124, %p125
    %p127 = scmp.ne.s32.totalorder %s118, %s119
    %p128 = scmp.eq.s32.totalorder %s19, 0
    %p129 = por %p127, %p128
    %p130 = scmp.ne.s32.totalorder %s118, %s119
    %p131 = scmp.eq.s32.totalorder %s20, 1
    %p132 = por %p130, %p131
    %p134 = scmp.ne.s32.totalorder %s119, %s133
    %p135 = scmp.eq.s32.totalorder %s20, 0
    %p136 = por %p134, %p135
    %s137 = ssub.s32 %s21, %s33
    %p138 = scmp.eq.s32.totalorder %s137, 0
    %s140 = sadd.s32 %s139, 1
    %s141 = scalar_select %p138, %s139, %s140
    %p144 = pneg %p138
    %p145 = scmp.eq.s32.totalorder %s14, 1
    %p146 = por %p144, %p145
    %p147 = scmp.ne.s32.totalorder %s139, %s142
    %p148 = scmp.eq.s32.totalorder %s14, 0
    %p149 = por %p147, %p148
    %p150 = scmp.ne.s32.totalorder %s139, %s142
    %p151 = scmp.eq.s32.totalorder %s19, 1
    %p152 = por %p150, %p151
    %p153 = scmp.ne.s32.totalorder %s142, %s143
    %p154 = scmp.eq.s32.totalorder %s19, 0
    %p155 = por %p153, %p154
    %p156 = scmp.ne.s32.totalorder %s142, %s143
    %p157 = scmp.eq.s32.totalorder %s20, 1
    %p158 = por %p156, %p157
    %p160 = scmp.ne.s32.totalorder %s143, %s159
    %p161 = scmp.eq.s32.totalorder %s20, 0
    %p162 = por %p160, %p161
    %s163 = ssub.s32 %s21, %s33
    %p164 = scmp.eq.s32.totalorder %s163, 0
    %s166 = sadd.s32 %s165, 1
    %s167 = scalar_select %p164, %s165, %s166
    %p170 = pneg %p164
    %p171 = scmp.eq.s32.totalorder %s14, 1
    %p172 = por %p170, %p171
    %p173 = scmp.ne.s32.totalorder %s165, %s168
    %p174 = scmp.eq.s32.totalorder %s14, 0
    %p175 = por %p173, %p174
    %p176 = scmp.ne.s32.totalorder %s165, %s168
    %p177 = scmp.eq.s32.totalorder %s19, 1
    %p178 = por %p176, %p177
    %p179 = scmp.ne.s32.totalorder %s168, %s169
    %p180 = scmp.eq.s32.totalorder %s19, 0
    %p181 = por %p179, %p180
    %p182 = scmp.ne.s32.totalorder %s168, %s169
    %p183 = scmp.eq.s32.totalorder %s20, 1
    %p184 = por %p182, %p183
    %p186 = scmp.ne.s32.totalorder %s169, %s185
    %p187 = scmp.eq.s32.totalorder %s20, 0
    %p188 = por %p186, %p187
    %s189 = ssub.s32 %s21, %s33
    %s190 = ssub.s32 %s22, %s29
    %s191 = sor.u32 %s189, %s190
    %p192 = scmp.eq.s32.totalorder %s191, 0
    %s194 = sadd.s32 %s193, 1
    %s195 = scalar_select %p192, %s193, %s194
    %p198 = pneg %p192
    %p199 = scmp.eq.s32.totalorder %s14, 1
    %p200 = por %p198, %p199
    %p201 = scmp.ne.s32.totalorder %s193, %s196
    %p202 = scmp.eq.s32.totalorder %s14, 0
    %p203 = por %p201, %p202
    %p204 = scmp.ne.s32.totalorder %s193, %s196
    %p205 = scmp.eq.s32.totalorder %s19, 1
    %p206 = por %p204, %p205
    %p207 = scmp.ne.s32.totalorder %s196, %s197
    %p208 = scmp.eq.s32.totalorder %s19, 0
    %p209 = por %p207, %p208
    %p210 = scmp.ne.s32.totalorder %s196, %s197
    %p211 = scmp.eq.s32.totalorder %s20, 1
    %p212 = por %p210, %p211
    %p214 = scmp.ne.s32.totalorder %s197, %s213
    %p215 = scmp.eq.s32.totalorder %s20, 0
    %p216 = por %p214, %p215
    %s217 = ssub.s32 %s21, %s33
    %s218 = ssub.s32 %s22, %s29
    %s219 = sor.u32 %s217, %s218
    %p220 = scmp.eq.s32.totalorder %s219, 0
    %s222 = sadd.s32 %s221, 1
    %s223 = scalar_select %p220, %s221, %s222
    %p226 = pneg %p220
    %p227 = scmp.eq.s32.totalorder %s14, 1
    %p228 = por %p226, %p227
    %p229 = scmp.ne.s32.totalorder %s221, %s224
    %p230 = scmp.eq.s32.totalorder %s14, 0
    %p231 = por %p229, %p230
    %p232 = scmp.ne.s32.totalorder %s221, %s224
    %p233 = scmp.eq.s32.totalorder %s19, 1
    %p234 = por %p232, %p233
    %p235 = scmp.ne.s32.totalorder %s224, %s225
    %p236 = scmp.eq.s32.totalorder %s19, 0
    %p237 = por %p235, %p236
    %p238 = scmp.ne.s32.totalorder %s224, %s225
    %p239 = scmp.eq.s32.totalorder %s20, 1
    %p240 = por %p238, %p239
    %p242 = scmp.ne.s32.totalorder %s225, %s241
    %p243 = scmp.eq.s32.totalorder %s20, 0
    %p244 = por %p242, %p243
    %p245 = scmp.le.s32.totalorder 1, %s14
    %p246 = scmp.lt.s32.totalorder %s14, 3
    %p247 = pnand %p245, %p246
    %p248 = pneg %p247
    // Predicated region
    $region9: #{_device_forward.33} parent=5 // pred_check
      _
    $region10: #{_device_forward.33} parent=5 // pred_check_branch
      %250 = sbr.rel (%p247) target = $region12
    $region11: #{_device_forward.33} parent=5 // pred_region
      %s251 = ssub.s32 %s14, 1
      // Predicated region
      $region13: #{_device_forward.33} parent=11 // pred_check
        %p252 = pneg %p129
      $region14: #{_device_forward.33} parent=11 // pred_check_branch
        %254 = sbr.rel (%p252) target = $region16
      $region15: #{_device_forward.33} parent=11 // pred_region
        _
      $region16: #{_device_forward.33} parent=11 // pred_fallthru
        _
    $region12: #{_device_forward.33} parent=5 // pred_fallthru
      _
    %p255 = scmp.lt.s32.totalorder %s14, 2
    // Predicated region
    $region17: #{_device_forward.33} parent=5 // pred_check
      %p256 = pneg %p255
    $region18: #{_device_forward.33} parent=5 // pred_check_branch
      %258 = sbr.rel (%p256) target = $region20
    $region19: #{_device_forward.33} parent=5 // pred_region
      // Predicated region
      $region21: #{_device_forward.33} parent=19 // pred_check
        %p259 = pneg %p48
      $region22: #{_device_forward.33} parent=19 // pred_check_branch
        %261 = sbr.rel (%p259) target = $region24
      $region23: #{_device_forward.33} parent=19 // pred_region
        %s262 = smul.u32 8, %s22
        %p263 = scmp.lt.s32.totalorder %s21, 1
        %s264 = scalar_select %p263, %s21, 1
        %p265 = scmp.lt.s32.totalorder %s262, 7
        %s266 = scalar_select %p265, %s262, 7
        %s267 = smul.addr %s264, 8
        %s268 = sadd.s32 %s266, %s267
        %s269 = smul.addr %s268, 8
        %s270 = scalar_lea.vmem %s0, %s269
        %s271 = smul.u32 8, %s22
      $region24: #{_device_forward.33} parent=19 // pred_fallthru
        _
      // Predicated region
      $region25: #{_device_forward.33} parent=19 // pred_check
        %p272 = pneg %p74
      $region26: #{_device_forward.33} parent=19 // pred_check_branch
        %274 = sbr.rel (%p272) target = $region28
      $region27: #{_device_forward.33} parent=19 // pred_region
        %p275 = scmp.lt.s32.totalorder %s21, 1
        %s276 = scalar_select %p275, %s21, 1
        %s277 = scalar_lea.vmem %s1, %s276
      $region28: #{_device_forward.33} parent=19 // pred_fallthru
        _
      // Predicated region
      $region29: #{_device_forward.33} parent=19 // pred_check
        %p278 = pneg %p102
      $region30: #{_device_forward.33} parent=19 // pred_check_branch
        %280 = sbr.rel (%p278) target = $region32
      $region31: #{_device_forward.33} parent=19 // pred_region
        %s281 = smul.u32 8, %s22
        %p282 = scmp.lt.s32.totalorder %s21, 1
        %s283 = scalar_select %p282, %s21, 1
        %p284 = scmp.lt.s32.totalorder %s281, 7
        %s285 = scalar_select %p284, %s281, 7
        %s286 = smul.addr %s283, 8
        %s287 = sadd.s32 %s285, %s286
        %s288 = smul.addr %s287, 8
        %s289 = scalar_lea.vmem %s2, %s288
        %s290 = smul.u32 8, %s22
      $region32: #{_device_forward.33} parent=19 // pred_fallthru
        _
      // Predicated region
      $region33: #{_device_forward.33} parent=19 // pred_check
        %p291 = pneg %p149
      $region34: #{_device_forward.33} parent=19 // pred_check_branch
        %293 = sbr.rel (%p291) target = $region36
      $region35: #{_device_forward.33} parent=19 // pred_region
        %p294 = scmp.lt.s32.totalorder %s21, 1
        %s295 = scalar_select %p294, %s21, 1
        %s296 = scalar_lea.vmem %s4, %s295
      $region36: #{_device_forward.33} parent=19 // pred_fallthru
        _
      // Predicated region
      $region37: #{_device_forward.33} parent=19 // pred_check
        %p297 = pneg %p175
      $region38: #{_device_forward.33} parent=19 // pred_check_branch
        %299 = sbr.rel (%p297) target = $region40
      $region39: #{_device_forward.33} parent=19 // pred_region
        %p300 = scmp.lt.s32.totalorder %s21, 1
        %s301 = scalar_select %p300, %s21, 1
        %s302 = scalar_lea.vmem %s5, %s301
      $region40: #{_device_forward.33} parent=19 // pred_fallthru
        _
    $region20: #{_device_forward.33} parent=5 // pred_fallthru
      _
    %p303 = scmp.le.s32.totalorder 1, %s14
    %p304 = scmp.lt.s32.totalorder %s14, 3
    %p305 = pnand %p303, %p304
    %p306 = pneg %p305
    // Predicated region
    $region41: #{_device_forward.33} parent=5 // pred_check
      _
    $region42: #{_device_forward.33} parent=5 // pred_check_branch
      %308 = sbr.rel (%p305) target = $region44
    $region43: #{_device_forward.33} parent=5 // pred_region
      %s309 = ssub.s32 %s14, 1
      %s310 = smul.u32 8, %s24
      %p311 = scmp.lt.s32.totalorder %s23, 1
      %s312 = scalar_select %p311, %s23, 1
      %p313 = scmp.lt.s32.totalorder %s310, 7
      %s314 = scalar_select %p313, %s310, 7
      %s315 = smul.addr %s312, 8
      %s316 = sadd.s32 %s314, %s315
      %s317 = smul.addr %s316, 8
      %s318 = scalar_lea.vmem %s0, %s317
      %p319 = pneg %p54
      %p320 = pneg %p51
      %p321 = scmp.lt.s32.totalorder %s23, 1
      %s322 = scalar_select %p321, %s23, 1
      %s323 = scalar_lea.vmem %s1, %s322
      %p324 = pneg %p80
      %p325 = pneg %p77
      %s326 = smul.u32 8, %s24
      %p327 = scmp.lt.s32.totalorder %s23, 1
      %s328 = scalar_select %p327, %s23, 1
      %p329 = scmp.lt.s32.totalorder %s326, 7
      %s330 = scalar_select %p329, %s326, 7
      %s331 = smul.addr %s328, 8
      %s332 = sadd.s32 %s330, %s331
      %s333 = smul.addr %s332, 8
      %s334 = scalar_lea.vmem %s2, %s333
      %p335 = pneg %p108
      %p336 = pneg %p105
      %p337 = pneg %p129
      %p338 = pneg %p126
      %p339 = scmp.lt.s32.totalorder %s23, 1
      %s340 = scalar_select %p339, %s23, 1
      %s341 = scalar_lea.vmem %s4, %s340
      %p342 = pneg %p155
      %p343 = pneg %p152
      %p344 = scmp.lt.s32.totalorder %s23, 1
      %s345 = scalar_select %p344, %s23, 1
      %s346 = scalar_lea.vmem %s5, %s345
      %p347 = pneg %p181
      %p348 = pneg %p178
      %p349 = pneg %p209
      %p350 = pneg %p206
      %s351 = smul.u32 8, %s24
      %p352 = scmp.lt.s32.totalorder %s23, 1
      %s353 = scalar_select %p352, %s23, 1
      %p354 = scmp.lt.s32.totalorder %s351, 7
      %s355 = scalar_select %p354, %s351, 7
      %s356 = smul.addr %s353, 8
      %s357 = sadd.s32 %s355, %s356
      %s358 = smul.addr %s357, 8
      %s359 = scalar_lea.vmem %s6, %s358
      %p360 = pneg %p237
      %p361 = pneg %p234
      %s362 = smul.u32 8, %s24
      %p363 = scmp.lt.s32.totalorder %s23, 1
      %s364 = scalar_select %p363, %s23, 1
      %p365 = scmp.lt.s32.totalorder %s362, 7
      %s366 = scalar_select %p365, %s362, 7
      %s367 = smul.addr %s364, 8
      %s368 = sadd.s32 %s366, %s367
      %s369 = smul.addr %s368, 4
      %s370 = scalar_lea.vmem %s7, %s369
      %s371 = smul.u32 8, %s24
      %p372 = scmp.lt.s32.totalorder %s23, 1
      %s373 = scalar_select %p372, %s23, 1
      %p374 = scmp.lt.s32.totalorder %s371, 7
      %s375 = scalar_select %p374, %s371, 7
      %s376 = smul.addr %s373, 8
      %s377 = sadd.s32 %s375, %s376
      %s378 = smul.addr %s377, 8
      %s379 = scalar_lea.vmem %s0, %s378
      %s380 = smul.u32 8, %s24
      %p381 = scmp.lt.s32.totalorder %s23, 1
      %s382 = scalar_select %p381, %s23, 1
      %s383 = scalar_lea.vmem %s1, %s382
      %s384 = smul.u32 8, %s24
      %p385 = scmp.lt.s32.totalorder %s23, 1
      %s386 = scalar_select %p385, %s23, 1
      %p387 = scmp.lt.s32.totalorder %s384, 7
      %s388 = scalar_select %p387, %s384, 7
      %s389 = smul.addr %s386, 8
      %s390 = sadd.s32 %s388, %s389
      %s391 = smul.addr %s390, 8
      %s392 = scalar_lea.vmem %s2, %s391
      %s393 = smul.u32 8, %s24
      %p394 = scmp.lt.s32.totalorder %s23, 1
      %s395 = scalar_select %p394, %s23, 1
      %s396 = scalar_lea.vmem %s4, %s395
      %p397 = scmp.lt.s32.totalorder %s23, 1
      %s398 = scalar_select %p397, %s23, 1
      %s399 = scalar_lea.vmem %s5, %s398
      %s400 = smul.u32 8, %s24
      %p401 = scmp.lt.s32.totalorder %s23, 1
      %s402 = scalar_select %p401, %s23, 1
      %p403 = scmp.lt.s32.totalorder %s400, 7
      %s404 = scalar_select %p403, %s400, 7
      %s405 = smul.addr %s402, 8
      %s406 = sadd.s32 %s404, %s405
      %s407 = smul.addr %s406, 8
      %s408 = scalar_lea.vmem %s6, %s407
      %s409 = smul.u32 8, %s24
      %s410 = smul.u32 8, %s24
      %p411 = scmp.lt.s32.totalorder %s23, 1
      %s412 = scalar_select %p411, %s23, 1
      %p413 = scmp.lt.s32.totalorder %s410, 7
      %s414 = scalar_select %p413, %s410, 7
      %s415 = smul.addr %s412, 8
      %s416 = sadd.s32 %s414, %s415
      %s417 = smul.addr %s416, 4
      %s418 = scalar_lea.vmem %s7, %s417
      %s419 = smul.u32 8, %s24
      %v420 = vld [vmem:[%s379] sm:$0xff]
      %v421 = vld [vmem:[%s379 + $0x8] sm:$0xff]
      %v422 = vld [vmem:[%s379 + $0x10] sm:$0xff]
      %v423 = vld [vmem:[%s379 + $0x18] sm:$0xff]
      %v424 = vld [vmem:[%s379 + $0x20] sm:$0xff]
      %v425 = vld [vmem:[%s379 + $0x28] sm:$0xff]
      %v426 = vld [vmem:[%s379 + $0x30] sm:$0xff]
      %v427 = vld [vmem:[%s379 + $0x38] sm:$0xff]
      %v428 = vld [vmem:[%s383] sm:$0x1]
      %v429 = vld [vmem:[%s392] sm:$0xff]
      %v430 = vld [vmem:[%s392 + $0x8] sm:$0xff]
      %v431 = vld [vmem:[%s392 + $0x10] sm:$0xff]
      %v432 = vld [vmem:[%s392 + $0x18] sm:$0xff]
      %v433 = vld [vmem:[%s392 + $0x20] sm:$0xff]
      %v434 = vld [vmem:[%s392 + $0x28] sm:$0xff]
      %v435 = vld [vmem:[%s392 + $0x30] sm:$0xff]
      %v436 = vld [vmem:[%s392 + $0x38] sm:$0xff]
      %v438 = vlaneseq
      %v439 = vshrl.u32 %v438, 7
      %v440 = vsub.s32 0, %v439
      %v441 = vrot.slane %v428, %v440
      %v443 = vmul.f32 %v441, %v429
      %v444 = vmul.f32 %v441, %v430
      %v445 = vmul.f32 %v441, %v431
      %v446 = vmul.f32 %v441, %v432
      %v447 = vmul.f32 %v441, %v433
      %v448 = vmul.f32 %v441, %v434
      %v449 = vmul.f32 %v441, %v435
      %v450 = vmul.f32 %v441, %v436
      %v451 = vadd.f32 %v420, %v443
      %v452 = vadd.f32 %v421, %v444
      %v453 = vadd.f32 %v422, %v445
      %v454 = vadd.f32 %v423, %v446
      %v455 = vadd.f32 %v424, %v447
      %v456 = vadd.f32 %v425, %v448
      %v457 = vadd.f32 %v426, %v449
      %v458 = vadd.f32 %v427, %v450
      %vm459 = vcmask 523264
      %460 = vst.msk [vmem:[%s408] sm:$0xff] %vm459, %v451
      %461 = vst.msk [vmem:[%s408 + $0x8] sm:$0xff] %vm459, %v452
      %462 = vst.msk [vmem:[%s408 + $0x10] sm:$0xff] %vm459, %v453
      %463 = vst.msk [vmem:[%s408 + $0x18] sm:$0xff] %vm459, %v454
      %464 = vst.msk [vmem:[%s408 + $0x20] sm:$0xff] %vm459, %v455
      %465 = vst.msk [vmem:[%s408 + $0x28] sm:$0xff] %vm459, %v456
      %466 = vst.msk [vmem:[%s408 + $0x30] sm:$0xff] %vm459, %v457
      %467 = vst.msk [vmem:[%s408 + $0x38] sm:$0xff] %vm459, %v458
      %v468 = vmul.f32 %v451, %v451
      %v469 = vmul.f32 %v452, %v452
      %v470 = vmul.f32 %v453, %v453
      %v471 = vmul.f32 %v454, %v454
      %v472 = vmul.f32 %v455, %v455
      %v473 = vmul.f32 %v456, %v456
      %v474 = vmul.f32 %v457, %v457
      %v475 = vmul.f32 %v458, %v458
      %v476 = vsel %vm459, %v468, 0.0
      %477 = vadd.xlane.f32.xlu0 %v476
      %v478 = vpop.xlane.xlu0 %477
      %v479 = vsel %vm459, %v469, 0.0
      %480 = vadd.xlane.f32.xlu0 %v479
      %v481 = vpop.xlane.xlu0 %480
      %v482 = vsel %vm459, %v470, 0.0
      %483 = vadd.xlane.f32.xlu0 %v482
      %v484 = vpop.xlane.xlu0 %483
      %v485 = vsel %vm459, %v471, 0.0
      %486 = vadd.xlane.f32.xlu0 %v485
      %v487 = vpop.xlane.xlu0 %486
      %v488 = vsel %vm459, %v472, 0.0
      %489 = vadd.xlane.f32.xlu0 %v488
      %v490 = vpop.xlane.xlu0 %489
      %v491 = vsel %vm459, %v473, 0.0
      %492 = vadd.xlane.f32.xlu0 %v491
      %v493 = vpop.xlane.xlu0 %492
      %v494 = vsel %vm459, %v474, 0.0
      %495 = vadd.xlane.f32.xlu0 %v494
      %v496 = vpop.xlane.xlu0 %495
      %v497 = vsel %vm459, %v475, 0.0
      %498 = vadd.xlane.f32.xlu0 %v497
      %v499 = vpop.xlane.xlu0 %498
      %v500 = vrcp.pop 64.0
      %v501 = vmul.f32 %v478, %v500
      %v502 = vmul.f32 %v481, %v500
      %v503 = vmul.f32 %v484, %v500
      %v504 = vmul.f32 %v487, %v500
      %v505 = vmul.f32 %v490, %v500
      %v506 = vmul.f32 %v493, %v500
      %v507 = vmul.f32 %v496, %v500
      %v508 = vmul.f32 %v499, %v500
      %v509 = vadd.f32 %v501, 1e-05
      %v510 = vadd.f32 %v502, 1e-05
      %v511 = vadd.f32 %v503, 1e-05
      %v512 = vadd.f32 %v504, 1e-05
      %v513 = vadd.f32 %v505, 1e-05
      %v514 = vadd.f32 %v506, 1e-05
      %v515 = vadd.f32 %v507, 1e-05
      %v516 = vadd.f32 %v508, 1e-05
      %v517 = vrsqrt.pop %v509
      %v518 = vrsqrt.pop %v510
      %v519 = vrsqrt.pop %v511
      %v520 = vrsqrt.pop %v512
      %v521 = vrsqrt.pop %v513
      %v522 = vrsqrt.pop %v514
      %v523 = vrsqrt.pop %v515
      %v524 = vrsqrt.pop %v516
      %v525 = vmul.f32 %v451, %v517
      %v526 = vmul.f32 %v452, %v518
      %v527 = vmul.f32 %v453, %v519
      %v528 = vmul.f32 %v454, %v520
      %v529 = vmul.f32 %v455, %v521
      %v530 = vmul.f32 %v456, %v522
      %v531 = vmul.f32 %v457, %v523
      %v532 = vmul.f32 %v458, %v524
      %v533 = vld [vmem:[%s3] sm:$0x1]
      %v535 = vlaneseq
      %v536 = vshrl.u32 %v535, 7
      %v537 = vsub.s32 0, %v536
      %v538 = vrot.slane %v533, %v537
      %v540 = vmul.f32 %v525, %v538
      %v541 = vmul.f32 %v526, %v538
      %v542 = vmul.f32 %v527, %v538
      %v543 = vmul.f32 %v528, %v538
      %v544 = vmul.f32 %v529, %v538
      %v545 = vmul.f32 %v530, %v538
      %v546 = vmul.f32 %v531, %v538
      %v547 = vmul.f32 %v532, %v538
      %v548 = vld [vmem:[%s396] sm:$0x1]
      %v549 = vadd.f32 %v548, 1.0
      %v551 = vlaneseq
      %v552 = vshrl.u32 %v551, 7
      %v553 = vsub.s32 0, %v552
      %v554 = vrot.slane %v549, %v553
      %v556 = vmul.f32 %v540, %v554
      %v557 = vmul.f32 %v541, %v554
      %v558 = vmul.f32 %v542, %v554
      %v559 = vmul.f32 %v543, %v554
      %v560 = vmul.f32 %v544, %v554
      %v561 = vmul.f32 %v545, %v554
      %v562 = vmul.f32 %v546, %v554
      %v563 = vmul.f32 %v547, %v554
      %v564 = vld [vmem:[%s399] sm:$0x1]
      %v566 = vlaneseq
      %v567 = vshrl.u32 %v566, 7
      %v568 = vsub.s32 0, %v567
      %v569 = vrot.slane %v564, %v568
      %v571 = vadd.f32 %v556, %v569
      %v572 = vadd.f32 %v557, %v569
      %v573 = vadd.f32 %v558, %v569
      %v574 = vadd.f32 %v559, %v569
      %v575 = vadd.f32 %v560, %v569
      %v576 = vadd.f32 %v561, %v569
      %v577 = vadd.f32 %v562, %v569
      %v578 = vadd.f32 %v563, %v569
      %v579 = vpack.c.bf16 %v572, %v571
      %v580 = vpack.c.bf16 %v574, %v573
      %v581 = vpack.c.bf16 %v576, %v575
      %v582 = vpack.c.bf16 %v578, %v577
      %v587 = vunpack.c.l.b16 %v579
      %v588 = vunpack.c.h.b16 %v579
      %v589 = vunpack.c.l.b16 %v580
      %v590 = vunpack.c.h.b16 %v580
      %v591 = vunpack.c.l.b16 %v581
      %v592 = vunpack.c.h.b16 %v581
      %v593 = vunpack.c.l.b16 %v582
      %v594 = vunpack.c.h.b16 %v582
      %v595 = vpack.c.b16 %v587, %v587
      %v596 = vpack.c.b16 %v588, %v588
      %v597 = vpack.c.b16 %v589, %v589
      %v598 = vpack.c.b16 %v590, %v590
      %v599 = vpack.c.b16 %v591, %v591
      %v600 = vpack.c.b16 %v592, %v592
      %v601 = vpack.c.b16 %v593, %v593
      %v602 = vpack.c.b16 %v594, %v594
      %vm611 = vcmask 519168
      %612 = vst.msk [vmem:[%s418] sm:$0xf] %vm611, %v595
      %613 = vst.msk [vmem:[%s418 + $0x4] sm:$0xf] %vm611, %v596
      %614 = vst.msk [vmem:[%s418 + $0x8] sm:$0xf] %vm611, %v597
      %615 = vst.msk [vmem:[%s418 + $0xc] sm:$0xf] %vm611, %v598
      %616 = vst.msk [vmem:[%s418 + $0x10] sm:$0xf] %vm611, %v599
      %617 = vst.msk [vmem:[%s418 + $0x14] sm:$0xf] %vm611, %v600
      %618 = vst.msk [vmem:[%s418 + $0x18] sm:$0xf] %vm611, %v601
      %619 = vst.msk [vmem:[%s418 + $0x1c] sm:$0xf] %vm611, %v602
      %s620 = smul.u32 8, %s24
      %p621 = scmp.lt.s32.totalorder %s23, 1
      %s622 = scalar_select %p621, %s23, 1
      %p623 = scmp.lt.s32.totalorder %s620, 7
      %s624 = scalar_select %p623, %s620, 7
      %s625 = smul.addr %s622, 8
      %s626 = sadd.s32 %s624, %s625
      %s627 = smul.addr %s626, 8
      %s628 = scalar_lea.vmem %s6, %s627
      %s629 = smul.u32 8, %s24
      %p630 = scmp.lt.s32.totalorder %s23, 1
      %s631 = scalar_select %p630, %s23, 1
      %p632 = scmp.lt.s32.totalorder %s629, 7
      %s633 = scalar_select %p632, %s629, 7
      %s634 = smul.addr %s631, 8
      %s635 = sadd.s32 %s633, %s634
      %s636 = smul.addr %s635, 4
      %s637 = scalar_lea.vmem %s7, %s636
      // Predicated region
      $region45: #{_device_forward.33} parent=43 // pred_check
        %p638 = pneg %p206
      $region46: #{_device_forward.33} parent=43 // pred_check_branch
        %640 = sbr.rel (%p638) target = $region48
      $region47: #{_device_forward.33} parent=43 // pred_region
        %s641 = smul.u32 8, %s24
      $region48: #{_device_forward.33} parent=43 // pred_fallthru
        _
      // Predicated region
      $region49: #{_device_forward.33} parent=43 // pred_check
        %p642 = pneg %p234
      $region50: #{_device_forward.33} parent=43 // pred_check_branch
        %644 = sbr.rel (%p642) target = $region52
      $region51: #{_device_forward.33} parent=43 // pred_region
        %s645 = smul.u32 8, %s24
      $region52: #{_device_forward.33} parent=43 // pred_fallthru
        _
    $region44: #{_device_forward.33} parent=5 // pred_fallthru
      _
    %p646 = scmp.le.s32.totalorder 2, %s14
    // Predicated region
    $region53: #{_device_forward.33} parent=5 // pred_check
      %p647 = pneg %p646
    $region54: #{_device_forward.33} parent=5 // pred_check_branch
      %649 = sbr.rel (%p647) target = $region56
    $region55: #{_device_forward.33} parent=5 // pred_region
      %s650 = ssub.s32 %s14, 2
      // Predicated region
      $region57: #{_device_forward.33} parent=55 // pred_check
        %p651 = pneg %p212
      $region58: #{_device_forward.33} parent=55 // pred_check_branch
        %653 = sbr.rel (%p651) target = $region60
      $region59: #{_device_forward.33} parent=55 // pred_region
        %s654 = smul.u32 8, %s26
        %p655 = scmp.lt.s32.totalorder %s25, 1
        %s656 = scalar_select %p655, %s25, 1
        %p657 = scmp.lt.s32.totalorder %s654, 7
        %s658 = scalar_select %p657, %s654, 7
        %s659 = smul.addr %s656, 8
        %s660 = sadd.s32 %s658, %s659
        %s661 = smul.addr %s660, 8
        %s662 = scalar_lea.vmem %s6, %s661
      $region60: #{_device_forward.33} parent=55 // pred_fallthru
        _
      // Predicated region
      $region61: #{_device_forward.33} parent=55 // pred_check
        %p663 = pneg %p240
      $region62: #{_device_forward.33} parent=55 // pred_check_branch
        %665 = sbr.rel (%p663) target = $region64
      $region63: #{_device_forward.33} parent=55 // pred_region
        %s666 = smul.u32 8, %s26
        %p667 = scmp.lt.s32.totalorder %s25, 1
        %s668 = scalar_select %p667, %s25, 1
        %p669 = scmp.lt.s32.totalorder %s666, 7
        %s670 = scalar_select %p669, %s666, 7
        %s671 = smul.addr %s668, 8
        %s672 = sadd.s32 %s670, %s671
        %s673 = smul.addr %s672, 4
        %s674 = scalar_lea.vmem %s7, %s673
      $region64: #{_device_forward.33} parent=55 // pred_fallthru
        _
    $region56: #{_device_forward.33} parent=5 // pred_fallthru
      _
  $region6: #{_device_forward.33} parent=0 // loop_footer
    %s18 = sadd.s32 1, %s14
  $region7: #{_device_forward.33} parent=0 // loop_footer_branch
    %13 = sbr.rel target = $region3
  $region8: #{_device_forward.33} parent=0 // loop_exit
    _

// kernel: _device_forward.36
$region0: #{_device_forward.36}
  #allocation0 [shape = 'u32[]', space=smem, size = 0x4, offset = 0x4, fixed_abs, tag = 'smem constant byte address 0x4 - core index']
  #allocation1 [shape = 'u32[144,128]{1,0:T(1,128)}', space=vmem, size = 0x12000, scoped, tag = 'internal scratch']
  %s0 = inlined_call_operand.vmem [shape: f32[2,64,64], index: 0, kind: input, shape index: {}]
  %s1 = inlined_call_operand.vmem [shape: f32[2,1,64], index: 1, kind: input, shape index: {}]
  %s2 = inlined_call_operand.vmem [shape: f32[2,64,64], index: 2, kind: input, shape index: {}]
  %s3 = inlined_call_operand.vmem [shape: f32[2,64,64], index: 3, kind: output, shape index: {}]
  %s4 = sld [smem:[#allocation0]]
  $region45: #{_device_forward.36} parent=0
    _
  %s6 = ssub.s32 1, %s4
  %s7 = scalar_select 0, %s6, %s4
  loop: start=0, step=1, limit=4
  $region2: #{_device_forward.36} parent=0 // loop_pre_header
    _
  $region3: #{_device_forward.36} parent=0 // loop_header
    %s9 = sphi 0, %s13
    %p10 = scmp.ge.s32.totalorder %s9, 4
    %s16 = sphi 0, %s28
    %s17 = sphi 0, %s24
    %s18 = sphi 0, %s16
    %s19 = sphi 0, %s17
    %s20 = sphi 0, %s18
    %s21 = sphi 0, %s19
    %s33 = sphi 0, %s35
    %s36 = sphi 0, %s33
    %s37 = sphi 0, %s36
    %s53 = sphi 0, %s37
    %s59 = sphi 0, %s61
    %s62 = sphi 0, %s59
    %s63 = sphi 0, %s62
    %s79 = sphi 0, %s63
    %s87 = sphi 0, %s89
    %s90 = sphi 0, %s87
    %s91 = sphi 0, %s90
    %s107 = sphi 0, %s91
    %s115 = sphi 0, %s117
    %s118 = sphi 0, %s115
    %s119 = sphi 0, %s118
    %s135 = sphi 0, %s119
  $region4: #{_device_forward.36} parent=0 // loop_header_branch
    %12 = sbr.rel (%p10) target = $region8
  $region5: #{_device_forward.36} parent=0 // loop_body
    %s14 = ssub.s32 %s9, 1
    %s15 = ssub.s32 %s9, 2
    %s22 = sadd.s32 1, %s17
    %p23 = scmp.ge.s32.totalorder %s22, 1
    %s24 = scalar_select %p23, 0, %s22
    %s25 = sadd.s32 1, %s16
    %s26 = scalar_select %p23, %s25, %s16
    %p27 = scmp.ge.s32.totalorder %s26, 2
    %s28 = scalar_select %p27, 0, %s26
    %s29 = ssub.s32 %s16, %s28
    %s30 = ssub.s32 %s17, %s24
    %s31 = sor.u32 %s29, %s30
    %p32 = scmp.eq.s32.totalorder %s31, 0
    %s34 = sadd.s32 %s33, 1
    %s35 = scalar_select %p32, %s33, %s34
    %p38 = pneg %p32
    %p39 = scmp.eq.s32.totalorder %s9, 1
    %p40 = por %p38, %p39
    %p41 = scmp.ne.s32.totalorder %s33, %s36
    %p42 = scmp.eq.s32.totalorder %s9, 0
    %p43 = por %p41, %p42
    %p44 = scmp.ne.s32.totalorder %s33, %s36
    %p45 = scmp.eq.s32.totalorder %s14, 1
    %p46 = por %p44, %p45
    %p47 = scmp.ne.s32.totalorder %s36, %s37
    %p48 = scmp.eq.s32.totalorder %s14, 0
    %p49 = por %p47, %p48
    %p50 = scmp.ne.s32.totalorder %s36, %s37
    %p51 = scmp.eq.s32.totalorder %s15, 1
    %p52 = por %p50, %p51
    %p54 = scmp.ne.s32.totalorder %s37, %s53
    %p55 = scmp.eq.s32.totalorder %s15, 0
    %p56 = por %p54, %p55
    %s57 = ssub.s32 %s16, %s28
    %p58 = scmp.eq.s32.totalorder %s57, 0
    %s60 = sadd.s32 %s59, 1
    %s61 = scalar_select %p58, %s59, %s60
    %p64 = pneg %p58
    %p65 = scmp.eq.s32.totalorder %s9, 1
    %p66 = por %p64, %p65
    %p67 = scmp.ne.s32.totalorder %s59, %s62
    %p68 = scmp.eq.s32.totalorder %s9, 0
    %p69 = por %p67, %p68
    %p70 = scmp.ne.s32.totalorder %s59, %s62
    %p71 = scmp.eq.s32.totalorder %s14, 1
    %p72 = por %p70, %p71
    %p73 = scmp.ne.s32.totalorder %s62, %s63
    %p74 = scmp.eq.s32.totalorder %s14, 0
    %p75 = por %p73, %p74
    %p76 = scmp.ne.s32.totalorder %s62, %s63
    %p77 = scmp.eq.s32.totalorder %s15, 1
    %p78 = por %p76, %p77
    %p80 = scmp.ne.s32.totalorder %s63, %s79
    %p81 = scmp.eq.s32.totalorder %s15, 0
    %p82 = por %p80, %p81
    %s83 = ssub.s32 %s16, %s28
    %s84 = ssub.s32 %s17, %s24
    %s85 = sor.u32 %s83, %s84
    %p86 = scmp.eq.s32.totalorder %s85, 0
    %s88 = sadd.s32 %s87, 1
    %s89 = scalar_select %p86, %s87, %s88
    %p92 = pneg %p86
    %p93 = scmp.eq.s32.totalorder %s9, 1
    %p94 = por %p92, %p93
    %p95 = scmp.ne.s32.totalorder %s87, %s90
    %p96 = scmp.eq.s32.totalorder %s9, 0
    %p97 = por %p95, %p96
    %p98 = scmp.ne.s32.totalorder %s87, %s90
    %p99 = scmp.eq.s32.totalorder %s14, 1
    %p100 = por %p98, %p99
    %p101 = scmp.ne.s32.totalorder %s90, %s91
    %p102 = scmp.eq.s32.totalorder %s14, 0
    %p103 = por %p101, %p102
    %p104 = scmp.ne.s32.totalorder %s90, %s91
    %p105 = scmp.eq.s32.totalorder %s15, 1
    %p106 = por %p104, %p105
    %p108 = scmp.ne.s32.totalorder %s91, %s107
    %p109 = scmp.eq.s32.totalorder %s15, 0
    %p110 = por %p108, %p109
    %s111 = ssub.s32 %s16, %s28
    %s112 = ssub.s32 %s17, %s24
    %s113 = sor.u32 %s111, %s112
    %p114 = scmp.eq.s32.totalorder %s113, 0
    %s116 = sadd.s32 %s115, 1
    %s117 = scalar_select %p114, %s115, %s116
    %p120 = pneg %p114
    %p121 = scmp.eq.s32.totalorder %s9, 1
    %p122 = por %p120, %p121
    %p123 = scmp.ne.s32.totalorder %s115, %s118
    %p124 = scmp.eq.s32.totalorder %s9, 0
    %p125 = por %p123, %p124
    %p126 = scmp.ne.s32.totalorder %s115, %s118
    %p127 = scmp.eq.s32.totalorder %s14, 1
    %p128 = por %p126, %p127
    %p129 = scmp.ne.s32.totalorder %s118, %s119
    %p130 = scmp.eq.s32.totalorder %s14, 0
    %p131 = por %p129, %p130
    %p132 = scmp.ne.s32.totalorder %s118, %s119
    %p133 = scmp.eq.s32.totalorder %s15, 1
    %p134 = por %p132, %p133
    %p136 = scmp.ne.s32.totalorder %s119, %s135
    %p137 = scmp.eq.s32.totalorder %s15, 0
    %p138 = por %p136, %p137
    %p139 = scmp.le.s32.totalorder 1, %s9
    %p140 = scmp.lt.s32.totalorder %s9, 3
    %p141 = pnand %p139, %p140
    %p142 = pneg %p141
    // Predicated region
    $region9: #{_device_forward.36} parent=5 // pred_check
      _
    $region10: #{_device_forward.36} parent=5 // pred_check_branch
      %144 = sbr.rel (%p141) target = $region12
    $region11: #{_device_forward.36} parent=5 // pred_region
      %s145 = ssub.s32 %s9, 1
    $region12: #{_device_forward.36} parent=5 // pred_fallthru
      _
    %p146 = scmp.lt.s32.totalorder %s9, 2
    // Predicated region
    $region13: #{_device_forward.36} parent=5 // pred_check
      %p147 = pneg %p146
    $region14: #{_device_forward.36} parent=5 // pred_check_branch
      %149 = sbr.rel (%p147) target = $region16
    $region15: #{_device_forward.36} parent=5 // pred_region
      // Predicated region
      $region17: #{_device_forward.36} parent=15 // pred_check
        %p150 = pneg %p43
      $region18: #{_device_forward.36} parent=15 // pred_check_branch
        %152 = sbr.rel (%p150) target = $region20
      $region19: #{_device_forward.36} parent=15 // pred_region
        %s153 = smul.u32 8, %s17
        %p154 = scmp.lt.s32.totalorder %s16, 1
        %s155 = scalar_select %p154, %s16, 1
        %p156 = scmp.lt.s32.totalorder %s153, 7
        %s157 = scalar_select %p156, %s153, 7
        %s158 = smul.addr %s155, 8
        %s159 = sadd.s32 %s157, %s158
        %s160 = smul.addr %s159, 8
        %s161 = scalar_lea.vmem %s0, %s160
        %s162 = smul.u32 8, %s17
      $region20: #{_device_forward.36} parent=15 // pred_fallthru
        _
      // Predicated region
      $region21: #{_device_forward.36} parent=15 // pred_check
        %p163 = pneg %p69
      $region22: #{_device_forward.36} parent=15 // pred_check_branch
        %165 = sbr.rel (%p163) target = $region24
      $region23: #{_device_forward.36} parent=15 // pred_region
        %p166 = scmp.lt.s32.totalorder %s16, 1
        %s167 = scalar_select %p166, %s16, 1
        %s168 = scalar_lea.vmem %s1, %s167
      $region24: #{_device_forward.36} parent=15 // pred_fallthru
        _
      // Predicated region
      $region25: #{_device_forward.36} parent=15 // pred_check
        %p169 = pneg %p97
      $region26: #{_device_forward.36} parent=15 // pred_check_branch
        %171 = sbr.rel (%p169) target = $region28
      $region27: #{_device_forward.36} parent=15 // pred_region
        %s172 = smul.u32 8, %s17
        %p173 = scmp.lt.s32.totalorder %s16, 1
        %s174 = scalar_select %p173, %s16, 1
        %p175 = scmp.lt.s32.totalorder %s172, 7
        %s176 = scalar_select %p175, %s172, 7
        %s177 = smul.addr %s174, 8
        %s178 = sadd.s32 %s176, %s177
        %s179 = smul.addr %s178, 8
        %s180 = scalar_lea.vmem %s2, %s179
        %s181 = smul.u32 8, %s17
      $region28: #{_device_forward.36} parent=15 // pred_fallthru
        _
    $region16: #{_device_forward.36} parent=5 // pred_fallthru
      _
    %p182 = scmp.le.s32.totalorder 1, %s9
    %p183 = scmp.lt.s32.totalorder %s9, 3
    %p184 = pnand %p182, %p183
    %p185 = pneg %p184
    // Predicated region
    $region29: #{_device_forward.36} parent=5 // pred_check
      _
    $region30: #{_device_forward.36} parent=5 // pred_check_branch
      %187 = sbr.rel (%p184) target = $region32
    $region31: #{_device_forward.36} parent=5 // pred_region
      %s188 = ssub.s32 %s9, 1
      %s189 = smul.u32 8, %s19
      %p190 = scmp.lt.s32.totalorder %s18, 1
      %s191 = scalar_select %p190, %s18, 1
      %p192 = scmp.lt.s32.totalorder %s189, 7
      %s193 = scalar_select %p192, %s189, 7
      %s194 = smul.addr %s191, 8
      %s195 = sadd.s32 %s193, %s194
      %s196 = smul.addr %s195, 8
      %s197 = scalar_lea.vmem %s0, %s196
      %p198 = pneg %p49
      %p199 = pneg %p46
      %p200 = scmp.lt.s32.totalorder %s18, 1
      %s201 = scalar_select %p200, %s18, 1
      %s202 = scalar_lea.vmem %s1, %s201
      %p203 = pneg %p75
      %p204 = pneg %p72
      %s205 = smul.u32 8, %s19
      %p206 = scmp.lt.s32.totalorder %s18, 1
      %s207 = scalar_select %p206, %s18, 1
      %p208 = scmp.lt.s32.totalorder %s205, 7
      %s209 = scalar_select %p208, %s205, 7
      %s210 = smul.addr %s207, 8
      %s211 = sadd.s32 %s209, %s210
      %s212 = smul.addr %s211, 8
      %s213 = scalar_lea.vmem %s2, %s212
      %p214 = pneg %p103
      %p215 = pneg %p100
      %p216 = pneg %p131
      %p217 = pneg %p128
      %s218 = smul.u32 8, %s19
      %p219 = scmp.lt.s32.totalorder %s18, 1
      %s220 = scalar_select %p219, %s18, 1
      %p221 = scmp.lt.s32.totalorder %s218, 7
      %s222 = scalar_select %p221, %s218, 7
      %s223 = smul.addr %s220, 8
      %s224 = sadd.s32 %s222, %s223
      %s225 = smul.addr %s224, 8
      %s226 = scalar_lea.vmem %s3, %s225
      %s227 = smul.u32 8, %s19
      %p228 = scmp.lt.s32.totalorder %s18, 1
      %s229 = scalar_select %p228, %s18, 1
      %p230 = scmp.lt.s32.totalorder %s227, 7
      %s231 = scalar_select %p230, %s227, 7
      %s232 = smul.addr %s229, 8
      %s233 = sadd.s32 %s231, %s232
      %s234 = smul.addr %s233, 8
      %s235 = scalar_lea.vmem %s0, %s234
      %s236 = smul.u32 8, %s19
      %p237 = scmp.lt.s32.totalorder %s18, 1
      %s238 = scalar_select %p237, %s18, 1
      %s239 = scalar_lea.vmem %s1, %s238
      %s240 = smul.u32 8, %s19
      %p241 = scmp.lt.s32.totalorder %s18, 1
      %s242 = scalar_select %p241, %s18, 1
      %p243 = scmp.lt.s32.totalorder %s240, 7
      %s244 = scalar_select %p243, %s240, 7
      %s245 = smul.addr %s242, 8
      %s246 = sadd.s32 %s244, %s245
      %s247 = smul.addr %s246, 8
      %s248 = scalar_lea.vmem %s2, %s247
      %s249 = smul.u32 8, %s19
      %s250 = smul.u32 8, %s19
      %p251 = scmp.lt.s32.totalorder %s18, 1
      %s252 = scalar_select %p251, %s18, 1
      %p253 = scmp.lt.s32.totalorder %s250, 7
      %s254 = scalar_select %p253, %s250, 7
      %s255 = smul.addr %s252, 8
      %s256 = sadd.s32 %s254, %s255
      %s257 = smul.addr %s256, 8
      %s258 = scalar_lea.vmem %s3, %s257
      %s259 = smul.u32 8, %s19
      %v260 = vld [vmem:[%s235] sm:$0xff]
      %v261 = vld [vmem:[%s235 + $0x8] sm:$0xff]
      %v262 = vld [vmem:[%s235 + $0x10] sm:$0xff]
      %v263 = vld [vmem:[%s235 + $0x18] sm:$0xff]
      %v264 = vld [vmem:[%s235 + $0x20] sm:$0xff]
      %v265 = vld [vmem:[%s235 + $0x28] sm:$0xff]
      %v266 = vld [vmem:[%s235 + $0x30] sm:$0xff]
      %v267 = vld [vmem:[%s235 + $0x38] sm:$0xff]
      %v268 = vld [vmem:[%s239] sm:$0x1]
      %v269 = vld [vmem:[%s248] sm:$0xff]
      %v270 = vld [vmem:[%s248 + $0x8] sm:$0xff]
      %v271 = vld [vmem:[%s248 + $0x10] sm:$0xff]
      %v272 = vld [vmem:[%s248 + $0x18] sm:$0xff]
      %v273 = vld [vmem:[%s248 + $0x20] sm:$0xff]
      %v274 = vld [vmem:[%s248 + $0x28] sm:$0xff]
      %v275 = vld [vmem:[%s248 + $0x30] sm:$0xff]
      %v276 = vld [vmem:[%s248 + $0x38] sm:$0xff]
      %v278 = vlaneseq
      %v279 = vshrl.u32 %v278, 7
      %v280 = vsub.s32 0, %v279
      %v281 = vrot.slane %v268, %v280
      %v283 = vmul.f32 %v281, %v269
      %v284 = vmul.f32 %v281, %v270
      %v285 = vmul.f32 %v281, %v271
      %v286 = vmul.f32 %v281, %v272
      %v287 = vmul.f32 %v281, %v273
      %v288 = vmul.f32 %v281, %v274
      %v289 = vmul.f32 %v281, %v275
      %v290 = vmul.f32 %v281, %v276
      %v291 = vadd.f32 %v260, %v283
      %v292 = vadd.f32 %v261, %v284
      %v293 = vadd.f32 %v262, %v285
      %v294 = vadd.f32 %v263, %v286
      %v295 = vadd.f32 %v264, %v287
      %v296 = vadd.f32 %v265, %v288
      %v297 = vadd.f32 %v266, %v289
      %v298 = vadd.f32 %v267, %v290
      %vm299 = vcmask 523264
      %300 = vst.msk [vmem:[%s258] sm:$0xff] %vm299, %v291
      %301 = vst.msk [vmem:[%s258 + $0x8] sm:$0xff] %vm299, %v292
      %302 = vst.msk [vmem:[%s258 + $0x10] sm:$0xff] %vm299, %v293
      %303 = vst.msk [vmem:[%s258 + $0x18] sm:$0xff] %vm299, %v294
      %304 = vst.msk [vmem:[%s258 + $0x20] sm:$0xff] %vm299, %v295
      %305 = vst.msk [vmem:[%s258 + $0x28] sm:$0xff] %vm299, %v296
      %306 = vst.msk [vmem:[%s258 + $0x30] sm:$0xff] %vm299, %v297
      %307 = vst.msk [vmem:[%s258 + $0x38] sm:$0xff] %vm299, %v298
      %s308 = smul.u32 8, %s19
      %p309 = scmp.lt.s32.totalorder %s18, 1
      %s310 = scalar_select %p309, %s18, 1
      %p311 = scmp.lt.s32.totalorder %s308, 7
      %s312 = scalar_select %p311, %s308, 7
      %s313 = smul.addr %s310, 8
      %s314 = sadd.s32 %s312, %s313
      %s315 = smul.addr %s314, 8
      %s316 = scalar_lea.vmem %s3, %s315
      // Predicated region
      $region33: #{_device_forward.36} parent=31 // pred_check
        %p317 = pneg %p128
      $region34: #{_device_forward.36} parent=31 // pred_check_branch
        %319 = sbr.rel (%p317) target = $region36
      $region35: #{_device_forward.36} parent=31 // pred_region
        %s320 = smul.u32 8, %s19
      $region36: #{_device_forward.36} parent=31 // pred_fallthru
        _
    $region32: #{_device_forward.36} parent=5 // pred_fallthru
      _
    %p321 = scmp.le.s32.totalorder 2, %s9
    // Predicated region
    $region37: #{_device_forward.36} parent=5 // pred_check
      %p322 = pneg %p321
    $region38: #{_device_forward.36} parent=5 // pred_check_branch
      %324 = sbr.rel (%p322) target = $region40
    $region39: #{_device_forward.36} parent=5 // pred_region
      %s325 = ssub.s32 %s9, 2
      // Predicated region
      $region41: #{_device_forward.36} parent=39 // pred_check
        %p326 = pneg %p134
      $region42: #{_device_forward.36} parent=39 // pred_check_branch
        %328 = sbr.rel (%p326) target = $region44
      $region43: #{_device_forward.36} parent=39 // pred_region
        %s329 = smul.u32 8, %s21
        %p330 = scmp.lt.s32.totalorder %s20, 1
        %s331 = scalar_select %p330, %s20, 1
        %p332 = scmp.lt.s32.totalorder %s329, 7
        %s333 = scalar_select %p332, %s329, 7
        %s334 = smul.addr %s331, 8
        %s335 = sadd.s32 %s333, %s334
        %s336 = smul.addr %s335, 8
        %s337 = scalar_lea.vmem %s3, %s336
      $region44: #{_device_forward.36} parent=39 // pred_fallthru
        _
    $region40: #{_device_forward.36} parent=5 // pred_fallthru
      _
  $region6: #{_device_forward.36} parent=0 // loop_footer
    %s13 = sadd.s32 1, %s9
  $region7: #{_device_forward.36} parent=0 // loop_footer_branch
    %8 = sbr.rel target = $region3
  $region8: #{_device_forward.36} parent=0 // loop_exit
    _

// kernel: _device_forward.35
$region0: #{_device_forward.35}
  #allocation0 [shape = 'u32[]', space=smem, size = 0x4, offset = 0x4, fixed_abs, tag = 'smem constant byte address 0x4 - core index']
  #allocation1 [shape = 'u32[144,128]{1,0:T(1,128)}', space=vmem, size = 0x12000, scoped, tag = 'internal scratch']
  #allocation2 [shape = 'f32[128,128]{1,0:T(8,128)}', space=vmem, size = 0x10000, scoped, tag = 'scratch operand']
  %s0 = inlined_call_operand.vmem [shape: bf16[128,256], index: 0, kind: input, shape index: {}]
  %s1 = inlined_call_operand.vmem [shape: bf16[256,128], index: 1, kind: input, shape index: {}]
  %s2 = inlined_call_operand.vmem [shape: f32[128,128], index: 2, kind: output, shape index: {}]
  %s3 = sld [smem:[#allocation0]]
  $region26: #{_device_forward.35} parent=0
    _
  %s5 = ssub.s32 1, %s3
  %s6 = scalar_select 0, %s5, %s3
  // Predicated region
  $region2: #{_device_forward.35} parent=0 // pred_check
    _
  $region3: #{_device_forward.35} parent=0 // pred_check_branch
    %8 = sbr.rel (0) target = $region5
  $region4: #{_device_forward.35} parent=0 // pred_region
    _
  $region5: #{_device_forward.35} parent=0 // pred_fallthru
    _
  // Predicated region
  $region6: #{_device_forward.35} parent=0 // pred_check
    _
  $region7: #{_device_forward.35} parent=0 // pred_check_branch
    %10 = sbr.rel (0) target = $region9
  $region8: #{_device_forward.35} parent=0 // pred_region
    _
  $region9: #{_device_forward.35} parent=0 // pred_fallthru
    _
  %p12 = scmp.eq.s32.totalorder 0, 0
  // Predicated region
  $region10: #{_device_forward.35} parent=0 // pred_check
    %p13 = pneg %p12
  $region11: #{_device_forward.35} parent=0 // pred_check_branch
    %15 = sbr.rel (%p13) target = $region13
  $region12: #{_device_forward.35} parent=0 // pred_region
    %16 = vst [vmem:[#allocation2] sm:$0xff] 0.0
    %17 = vst [vmem:[#allocation2 + $0x8] sm:$0xff] 0.0
    %18 = vst [vmem:[#allocation2 + $0x10] sm:$0xff] 0.0
    %19 = vst [vmem:[#allocation2 + $0x18] sm:$0xff] 0.0
    %20 = vst [vmem:[#allocation2 + $0x20] sm:$0xff] 0.0
    %21 = vst [vmem:[#allocation2 + $0x28] sm:$0xff] 0.0
    %22 = vst [vmem:[#allocation2 + $0x30] sm:$0xff] 0.0
    %23 = vst [vmem:[#allocation2 + $0x38] sm:$0xff] 0.0
    %24 = vst [vmem:[#allocation2 + $0x40] sm:$0xff] 0.0
    %25 = vst [vmem:[#allocation2 + $0x48] sm:$0xff] 0.0
    %26 = vst [vmem:[#allocation2 + $0x50] sm:$0xff] 0.0
    %27 = vst [vmem:[#allocation2 + $0x58] sm:$0xff] 0.0
    %28 = vst [vmem:[#allocation2 + $0x60] sm:$0xff] 0.0
    %29 = vst [vmem:[#allocation2 + $0x68] sm:$0xff] 0.0
    %30 = vst [vmem:[#allocation2 + $0x70] sm:$0xff] 0.0
    %31 = vst [vmem:[#allocation2 + $0x78] sm:$0xff] 0.0
  $region13: #{_device_forward.35} parent=0 // pred_fallthru
    _
  %v32 = vld [vmem:[#allocation2] sm:$0xff]
  %v33 = vld [vmem:[#allocation2 + $0x8] sm:$0xff]
  %v34 = vld [vmem:[#allocation2 + $0x10] sm:$0xff]
  %v35 = vld [vmem:[#allocation2 + $0x18] sm:$0xff]
  %v36 = vld [vmem:[#allocation2 + $0x20] sm:$0xff]
  %v37 = vld [vmem:[#allocation2 + $0x28] sm:$0xff]
  %v38 = vld [vmem:[#allocation2 + $0x30] sm:$0xff]
  %v39 = vld [vmem:[#allocation2 + $0x38] sm:$0xff]
  %v40 = vld [vmem:[#allocation2 + $0x40] sm:$0xff]
  %v41 = vld [vmem:[#allocation2 + $0x48] sm:$0xff]
  %v42 = vld [vmem:[#allocation2 + $0x50] sm:$0xff]
  %v43 = vld [vmem:[#allocation2 + $0x58] sm:$0xff]
  %v44 = vld [vmem:[#allocation2 + $0x60] sm:$0xff]
  %v45 = vld [vmem:[#allocation2 + $0x68] sm:$0xff]
  %v46 = vld [vmem:[#allocation2 + $0x70] sm:$0xff]
  %v47 = vld [vmem:[#allocation2 + $0x78] sm:$0xff]
  %v48 = vld [vmem:[%s0] sm:$0xff]
  %v49 = vld [vmem:[%s0 + $0x8] sm:$0xff]
  %v50 = vld [vmem:[%s0 + $0x10] sm:$0xff]
  %v51 = vld [vmem:[%s0 + $0x18] sm:$0xff]
  %v52 = vld [vmem:[%s0 + $0x20] sm:$0xff]
  %v53 = vld [vmem:[%s0 + $0x28] sm:$0xff]
  %v54 = vld [vmem:[%s0 + $0x30] sm:$0xff]
  %v55 = vld [vmem:[%s0 + $0x38] sm:$0xff]
  %v56 = vld [vmem:[%s0 + $0x40] sm:$0xff]
  %v57 = vld [vmem:[%s0 + $0x48] sm:$0xff]
  %v58 = vld [vmem:[%s0 + $0x50] sm:$0xff]
  %v59 = vld [vmem:[%s0 + $0x58] sm:$0xff]
  %v60 = vld [vmem:[%s0 + $0x60] sm:$0xff]
  %v61 = vld [vmem:[%s0 + $0x68] sm:$0xff]
  %v62 = vld [vmem:[%s0 + $0x70] sm:$0xff]
  %v63 = vld [vmem:[%s0 + $0x78] sm:$0xff]
  %v64 = vld [vmem:[%s1] sm:$0xf]
  %v65 = vld [vmem:[%s1 + $0x4] sm:$0xf]
  %v66 = vld [vmem:[%s1 + $0x8] sm:$0xf]
  %v67 = vld [vmem:[%s1 + $0xc] sm:$0xf]
  %v68 = vld [vmem:[%s1 + $0x10] sm:$0xf]
  %v69 = vld [vmem:[%s1 + $0x14] sm:$0xf]
  %v70 = vld [vmem:[%s1 + $0x18] sm:$0xf]
  %v71 = vld [vmem:[%s1 + $0x1c] sm:$0xf]
  %v72 = vld [vmem:[%s1 + $0x20] sm:$0xf]
  %v73 = vld [vmem:[%s1 + $0x24] sm:$0xf]
  %v74 = vld [vmem:[%s1 + $0x28] sm:$0xf]
  %v75 = vld [vmem:[%s1 + $0x2c] sm:$0xf]
  %v76 = vld [vmem:[%s1 + $0x30] sm:$0xf]
  %v77 = vld [vmem:[%s1 + $0x34] sm:$0xf]
  %v78 = vld [vmem:[%s1 + $0x38] sm:$0xf]
  %v79 = vld [vmem:[%s1 + $0x3c] sm:$0xf]
  %v80 = vld [vmem:[%s1 + $0x40] sm:$0xf]
  %v81 = vld [vmem:[%s1 + $0x44] sm:$0xf]
  %v82 = vld [vmem:[%s1 + $0x48] sm:$0xf]
  %v83 = vld [vmem:[%s1 + $0x4c] sm:$0xf]
  %v84 = vld [vmem:[%s1 + $0x50] sm:$0xf]
  %v85 = vld [vmem:[%s1 + $0x54] sm:$0xf]
  %v86 = vld [vmem:[%s1 + $0x58] sm:$0xf]
  %v87 = vld [vmem:[%s1 + $0x5c] sm:$0xf]
  %v88 = vld [vmem:[%s1 + $0x60] sm:$0xf]
  %v89 = vld [vmem:[%s1 + $0x64] sm:$0xf]
  %v90 = vld [vmem:[%s1 + $0x68] sm:$0xf]
  %v91 = vld [vmem:[%s1 + $0x6c] sm:$0xf]
  %v92 = vld [vmem:[%s1 + $0x70] sm:$0xf]
  %v93 = vld [vmem:[%s1 + $0x74] sm:$0xf]
  %v94 = vld [vmem:[%s1 + $0x78] sm:$0xf]
  %v95 = vld [vmem:[%s1 + $0x7c] sm:$0xf]
  %v112 = vunpack.c.l.b16 %v48
  %v113 = vunpack.c.h.b16 %v48
  %v114 = vunpack.c.l.b16 %v49
  %v115 = vunpack.c.h.b16 %v49
  %v116 = vunpack.c.l.b16 %v50
  %v117 = vunpack.c.h.b16 %v50
  %v118 = vunpack.c.l.b16 %v51
  %v119 = vunpack.c.h.b16 %v51
  %v120 = vunpack.c.l.b16 %v52
  %v121 = vunpack.c.h.b16 %v52
  %v122 = vunpack.c.l.b16 %v53
  %v123 = vunpack.c.h.b16 %v53
  %v124 = vunpack.c.l.b16 %v54
  %v125 = vunpack.c.h.b16 %v54
  %v126 = vunpack.c.l.b16 %v55
  %v127 = vunpack.c.h.b16 %v55
  %v128 = vunpack.c.l.b16 %v56
  %v129 = vunpack.c.h.b16 %v56
  %v130 = vunpack.c.l.b16 %v57
  %v131 = vunpack.c.h.b16 %v57
  %v132 = vunpack.c.l.b16 %v58
  %v133 = vunpack.c.h.b16 %v58
  %v134 = vunpack.c.l.b16 %v59
  %v135 = vunpack.c.h.b16 %v59
  %v136 = vunpack.c.l.b16 %v60
  %v137 = vunpack.c.h.b16 %v60
  %v138 = vunpack.c.l.b16 %v61
  %v139 = vunpack.c.h.b16 %v61
  %v140 = vunpack.c.l.b16 %v62
  %v141 = vunpack.c.h.b16 %v62
  %v142 = vunpack.c.l.b16 %v63
  %v143 = vunpack.c.h.b16 %v63
  %v144 = vpack.c.b16 %v114, %v112
  %v145 = vpack.c.b16 %v115, %v113
  %v146 = vpack.c.b16 %v118, %v116
  %v147 = vpack.c.b16 %v119, %v117
  %v148 = vpack.c.b16 %v122, %v120
  %v149 = vpack.c.b16 %v123, %v121
  %v150 = vpack.c.b16 %v126, %v124
  %v151 = vpack.c.b16 %v127, %v125
  %v152 = vpack.c.b16 %v130, %v128
  %v153 = vpack.c.b16 %v131, %v129
  %v154 = vpack.c.b16 %v134, %v132
  %v155 = vpack.c.b16 %v135, %v133
  %v156 = vpack.c.b16 %v138, %v136
  %v157 = vpack.c.b16 %v139, %v137
  %v158 = vpack.c.b16 %v142, %v140
  %v159 = vpack.c.b16 %v143, %v141
  %v208 = vunpack.c.l.b16 %v64
  %v209 = vunpack.c.l.b16 %v65
  %v210 = vunpack.c.l.b16 %v66
  %v211 = vunpack.c.l.b16 %v67
  %v212 = vunpack.c.l.b16 %v68
  %v213 = vunpack.c.l.b16 %v69
  %v214 = vunpack.c.l.b16 %v70
  %v215 = vunpack.c.l.b16 %v71
  %v216 = vunpack.c.l.b16 %v72
  %v217 = vunpack.c.l.b16 %v73
  %v218 = vunpack.c.l.b16 %v74
  %v219 = vunpack.c.l.b16 %v75
  %v220 = vunpack.c.l.b16 %v76
  %v221 = vunpack.c.l.b16 %v77
  %v222 = vunpack.c.l.b16 %v78
  %v223 = vunpack.c.l.b16 %v79
  %v224 = vunpack.c.l.b16 %v80
  %v225 = vunpack.c.l.b16 %v81
  %v226 = vunpack.c.l.b16 %v82
  %v227 = vunpack.c.l.b16 %v83
  %v228 = vunpack.c.l.b16 %v84
  %v229 = vunpack.c.l.b16 %v85
  %v230 = vunpack.c.l.b16 %v86
  %v231 = vunpack.c.l.b16 %v87
  %v232 = vunpack.c.l.b16 %v88
  %v233 = vunpack.c.l.b16 %v89
  %v234 = vunpack.c.l.b16 %v90
  %v235 = vunpack.c.l.b16 %v91
  %v236 = vunpack.c.l.b16 %v92
  %v237 = vunpack.c.l.b16 %v93
  %v238 = vunpack.c.l.b16 %v94
  %v239 = vunpack.c.l.b16 %v95
  %v240 = vpack.c.b16 %v209, %v208
  %v241 = vpack.c.b16 %v211, %v210
  %v242 = vpack.c.b16 %v213, %v212
  %v243 = vpack.c.b16 %v215, %v214
  %v244 = vpack.c.b16 %v217, %v216
  %v245 = vpack.c.b16 %v219, %v218
  %v246 = vpack.c.b16 %v221, %v220
  %v247 = vpack.c.b16 %v223, %v222
  %v248 = vpack.c.b16 %v225, %v224
  %v249 = vpack.c.b16 %v227, %v226
  %v250 = vpack.c.b16 %v229, %v228
  %v251 = vpack.c.b16 %v231, %v230
  %v252 = vpack.c.b16 %v233, %v232
  %v253 = vpack.c.b16 %v235, %v234
  %v254 = vpack.c.b16 %v237, %v236
  %v255 = vpack.c.b16 %v239, %v238
  %272 = vmatprep.subr.bf16.mxu0 0
  %273 = vmatpush1.bf16.msra.mxu0 %v247
  %274 = vmatprep.subr.bf16.mxu0 0
  %275 = vmatpush1.bf16.msra.mxu0 %v246
  %276 = vmatprep.subr.bf16.mxu0 0
  %277 = vmatpush1.bf16.msra.mxu0 %v245
  %278 = vmatprep.subr.bf16.mxu0 0
  %279 = vmatpush1.bf16.msra.mxu0 %v244
  %280 = vmatprep.subr.bf16.mxu0 0
  %281 = vmatpush1.bf16.msra.mxu0 %v243
  %282 = vmatprep.subr.bf16.mxu0 0
  %283 = vmatpush1.bf16.msra.mxu0 %v242
  %284 = vmatprep.subr.bf16.mxu0 0
  %285 = vmatpush1.bf16.msra.mxu0 %v241
  %286 = vmatprep.subr.bf16.mxu0 0
  %287 = vmatpush1.bf16.msra.mxu0 %v240
  %288 = vmatprep.subr.bf16.mxu0 0
  %289 = vmatpush2.bf16.msra.mxu0 %v255
  %290 = vmatprep.subr.bf16.mxu0 0
  %291 = vmatpush2.bf16.msra.mxu0 %v254
  %292 = vmatprep.subr.bf16.mxu0 0
  %293 = vmatpush2.bf16.msra.mxu0 %v253
  %294 = vmatprep.subr.bf16.mxu0 0
  %295 = vmatpush2.bf16.msra.mxu0 %v252
  %296 = vmatprep.subr.bf16.mxu0 0
  %297 = vmatpush2.bf16.msra.mxu0 %v251
  %298 = vmatprep.subr.bf16.mxu0 0
  %299 = vmatpush2.bf16.msra.mxu0 %v250
  %300 = vmatprep.subr.bf16.mxu0 0
  %301 = vmatpush2.bf16.msra.mxu0 %v249
  %302 = vmatprep.subr.bf16.mxu0 0
  %303 = vmatpush2.bf16.msra.mxu0 %v248
  %304 = vmatprep.mubr.bf16.mxu0 %v145
  %305 = vmatmul.mubr.bf16.gmra.mxu0 %v144
  %v306 = vpop.f32.mrf.mxu0
  %v307 = vadd.f32 0.0, %v306
  %v308 = vpop.f32.mrf.mxu0
  %v309 = vpop.f32.mrf.mxu0
  %v310 = vadd.f32 0.0, %v309
  %v311 = vpop.f32.mrf.mxu0
  %312 = vmatprep.mubr.bf16.mxu0 %v147
  %313 = vmatmul.mubr.bf16.gmra.mxu0 %v146
  %v314 = vpop.f32.mrf.mxu0
  %v315 = vadd.f32 0.0, %v314
  %v316 = vpop.f32.mrf.mxu0
  %v317 = vpop.f32.mrf.mxu0
  %v318 = vadd.f32 0.0, %v317
  %v319 = vpop.f32.mrf.mxu0
  %320 = vmatprep.mubr.bf16.mxu0 %v149
  %321 = vmatmul.mubr.bf16.gmra.mxu0 %v148
  %v322 = vpop.f32.mrf.mxu0
  %v323 = vadd.f32 0.0, %v322
  %v324 = vpop.f32.mrf.mxu0
  %v325 = vpop.f32.mrf.mxu0
  %v326 = vadd.f32 0.0, %v325
  %v327 = vpop.f32.mrf.mxu0
  %328 = vmatprep.mubr.bf16.mxu0 %v151
  %329 = vmatmul.mubr.bf16.gmra.mxu0 %v150
  %v330 = vpop.f32.mrf.mxu0
  %v331 = vadd.f32 0.0, %v330
  %v332 = vpop.f32.mrf.mxu0
  %v333 = vpop.f32.mrf.mxu0
  %v334 = vadd.f32 0.0, %v333
  %v335 = vpop.f32.mrf.mxu0
  %336 = vmatprep.mubr.bf16.mxu0 %v153
  %337 = vmatmul.mubr.bf16.gmra.mxu0 %v152
  %v338 = vpop.f32.mrf.mxu0
  %v339 = vadd.f32 0.0, %v338
  %v340 = vpop.f32.mrf.mxu0
  %v341 = vpop.f32.mrf.mxu0
  %v342 = vadd.f32 0.0, %v341
  %v343 = vpop.f32.mrf.mxu0
  %344 = vmatprep.mubr.bf16.mxu0 %v155
  %345 = vmatmul.mubr.bf16.gmra.mxu0 %v154
  %v346 = vpop.f32.mrf.mxu0
  %v347 = vadd.f32 0.0, %v346
  %v348 = vpop.f32.mrf.mxu0
  %v349 = vpop.f32.mrf.mxu0
  %v350 = vadd.f32 0.0, %v349
  %v351 = vpop.f32.mrf.mxu0
  %352 = vmatprep.mubr.bf16.mxu0 %v157
  %353 = vmatmul.mubr.bf16.gmra.mxu0 %v156
  %v354 = vpop.f32.mrf.mxu0
  %v355 = vadd.f32 0.0, %v354
  %v356 = vpop.f32.mrf.mxu0
  %v357 = vpop.f32.mrf.mxu0
  %v358 = vadd.f32 0.0, %v357
  %v359 = vpop.f32.mrf.mxu0
  %360 = vmatprep.mubr.bf16.mxu0 %v159
  %361 = vmatmul.mubr.bf16.gmra.mxu0 %v158
  %v362 = vpop.f32.mrf.mxu0
  %v363 = vadd.f32 0.0, %v362
  %v364 = vpop.f32.mrf.mxu0
  %v365 = vpop.f32.mrf.mxu0
  %v366 = vadd.f32 0.0, %v365
  %v367 = vpop.f32.mrf.mxu0
  %368 = vdwg.mxu0
  %v369 = vadd.f32 %v32, %v307
  %v370 = vadd.f32 %v33, %v310
  %v371 = vadd.f32 %v34, %v315
  %v372 = vadd.f32 %v35, %v318
  %v373 = vadd.f32 %v36, %v323
  %v374 = vadd.f32 %v37, %v326
  %v375 = vadd.f32 %v38, %v331
  %v376 = vadd.f32 %v39, %v334
  %v377 = vadd.f32 %v40, %v339
  %v378 = vadd.f32 %v41, %v342
  %v379 = vadd.f32 %v42, %v347
  %v380 = vadd.f32 %v43, %v350
  %v381 = vadd.f32 %v44, %v355
  %v382 = vadd.f32 %v45, %v358
  %v383 = vadd.f32 %v46, %v363
  %v384 = vadd.f32 %v47, %v366
  %385 = vst [vmem:[#allocation2] sm:$0xff] %v369
  %386 = vst [vmem:[#allocation2 + $0x8] sm:$0xff] %v370
  %387 = vst [vmem:[#allocation2 + $0x10] sm:$0xff] %v371
  %388 = vst [vmem:[#allocation2 + $0x18] sm:$0xff] %v372
  %389 = vst [vmem:[#allocation2 + $0x20] sm:$0xff] %v373
  %390 = vst [vmem:[#allocation2 + $0x28] sm:$0xff] %v374
  %391 = vst [vmem:[#allocation2 + $0x30] sm:$0xff] %v375
  %392 = vst [vmem:[#allocation2 + $0x38] sm:$0xff] %v376
  %393 = vst [vmem:[#allocation2 + $0x40] sm:$0xff] %v377
  %394 = vst [vmem:[#allocation2 + $0x48] sm:$0xff] %v378
  %395 = vst [vmem:[#allocation2 + $0x50] sm:$0xff] %v379
  %396 = vst [vmem:[#allocation2 + $0x58] sm:$0xff] %v380
  %397 = vst [vmem:[#allocation2 + $0x60] sm:$0xff] %v381
  %398 = vst [vmem:[#allocation2 + $0x68] sm:$0xff] %v382
  %399 = vst [vmem:[#allocation2 + $0x70] sm:$0xff] %v383
  %400 = vst [vmem:[#allocation2 + $0x78] sm:$0xff] %v384
  // Predicated region
  $region14: #{_device_forward.35} parent=0 // pred_check
    %p401 = pneg %p12
  $region15: #{_device_forward.35} parent=0 // pred_check_branch
    %403 = sbr.rel (%p401) target = $region17
  $region16: #{_device_forward.35} parent=0 // pred_region
    %v404 = vld [vmem:[#allocation2] sm:$0xff]
    %v405 = vld [vmem:[#allocation2 + $0x8] sm:$0xff]
    %v406 = vld [vmem:[#allocation2 + $0x10] sm:$0xff]
    %v407 = vld [vmem:[#allocation2 + $0x18] sm:$0xff]
    %v408 = vld [vmem:[#allocation2 + $0x20] sm:$0xff]
    %v409 = vld [vmem:[#allocation2 + $0x28] sm:$0xff]
    %v410 = vld [vmem:[#allocation2 + $0x30] sm:$0xff]
    %v411 = vld [vmem:[#allocation2 + $0x38] sm:$0xff]
    %v412 = vld [vmem:[#allocation2 + $0x40] sm:$0xff]
    %v413 = vld [vmem:[#allocation2 + $0x48] sm:$0xff]
    %v414 = vld [vmem:[#allocation2 + $0x50] sm:$0xff]
    %v415 = vld [vmem:[#allocation2 + $0x58] sm:$0xff]
    %v416 = vld [vmem:[#allocation2 + $0x60] sm:$0xff]
    %v417 = vld [vmem:[#allocation2 + $0x68] sm:$0xff]
    %v418 = vld [vmem:[#allocation2 + $0x70] sm:$0xff]
    %v419 = vld [vmem:[#allocation2 + $0x78] sm:$0xff]
    %420 = vst [vmem:[%s2] sm:$0xff] %v404
    %421 = vst [vmem:[%s2 + $0x8] sm:$0xff] %v405
    %422 = vst [vmem:[%s2 + $0x10] sm:$0xff] %v406
    %423 = vst [vmem:[%s2 + $0x18] sm:$0xff] %v407
    %424 = vst [vmem:[%s2 + $0x20] sm:$0xff] %v408
    %425 = vst [vmem:[%s2 + $0x28] sm:$0xff] %v409
    %426 = vst [vmem:[%s2 + $0x30] sm:$0xff] %v410
    %427 = vst [vmem:[%s2 + $0x38] sm:$0xff] %v411
    %428 = vst [vmem:[%s2 + $0x40] sm:$0xff] %v412
    %429 = vst [vmem:[%s2 + $0x48] sm:$0xff] %v413
    %430 = vst [vmem:[%s2 + $0x50] sm:$0xff] %v414
    %431 = vst [vmem:[%s2 + $0x58] sm:$0xff] %v415
    %432 = vst [vmem:[%s2 + $0x60] sm:$0xff] %v416
    %433 = vst [vmem:[%s2 + $0x68] sm:$0xff] %v417
    %434 = vst [vmem:[%s2 + $0x70] sm:$0xff] %v418
    %435 = vst [vmem:[%s2 + $0x78] sm:$0xff] %v419
  $region17: #{_device_forward.35} parent=0 // pred_fallthru
    _
  // Predicated region
  $region18: #{_device_forward.35} parent=0 // pred_check
    _
  $region19: #{_device_forward.35} parent=0 // pred_check_branch
    %437 = sbr.rel (0) target = $region21
  $region20: #{_device_forward.35} parent=0 // pred_region
    _
  $region21: #{_device_forward.35} parent=0 // pred_fallthru
    _
  // Predicated region
  $region22: #{_device_forward.35} parent=0 // pred_check
    _
  $region23: #{_device_forward.35} parent=0 // pred_check_branch
    %439 = sbr.rel (0) target = $region25
  $region24: #{_device_forward.35} parent=0 // pred_region
    _
  $region25: #{_device_forward.35} parent=0 // pred_fallthru
    _

// kernel: _device_forward.34
$region0: #{_device_forward.34}
  #allocation0 [shape = 'u32[]', space=smem, size = 0x4, offset = 0x4, fixed_abs, tag = 'smem constant byte address 0x4 - core index']
  #allocation1 [shape = 'u32[144,128]{1,0:T(1,128)}', space=vmem, size = 0x12000, scoped, tag = 'internal scratch']
  #allocation2 [shape = 'f32[128,256]{1,0:T(8,128)}', space=vmem, size = 0x20000, scoped, tag = 'scratch operand']
  #allocation3 [shape = 'f32[128,256]{1,0:T(8,128)}', space=vmem, size = 0x20000, scoped, tag = 'scratch operand']
  %s0 = inlined_call_operand.vmem [shape: bf16[128,128], index: 0, kind: input, shape index: {}]
  %s1 = inlined_call_operand.vmem [shape: bf16[128,256], index: 1, kind: input, shape index: {}]
  %s2 = inlined_call_operand.vmem [shape: bf16[128,256], index: 2, kind: input, shape index: {}]
  %s3 = inlined_call_operand.vmem [shape: bf16[128,256], index: 3, kind: output, shape index: {}]
  %s4 = sld [smem:[#allocation0]]
  $region30: #{_device_forward.34} parent=0
    _
  %s6 = ssub.s32 1, %s4
  %s7 = scalar_select 0, %s6, %s4
  // Predicated region
  $region2: #{_device_forward.34} parent=0 // pred_check
    _
  $region3: #{_device_forward.34} parent=0 // pred_check_branch
    %9 = sbr.rel (0) target = $region5
  $region4: #{_device_forward.34} parent=0 // pred_region
    _
  $region5: #{_device_forward.34} parent=0 // pred_fallthru
    _
  // Predicated region
  $region6: #{_device_forward.34} parent=0 // pred_check
    _
  $region7: #{_device_forward.34} parent=0 // pred_check_branch
    %11 = sbr.rel (0) target = $region9
  $region8: #{_device_forward.34} parent=0 // pred_region
    _
  $region9: #{_device_forward.34} parent=0 // pred_fallthru
    _
  // Predicated region
  $region10: #{_device_forward.34} parent=0 // pred_check
    _
  $region11: #{_device_forward.34} parent=0 // pred_check_branch
    %13 = sbr.rel (0) target = $region13
  $region12: #{_device_forward.34} parent=0 // pred_region
    _
  $region13: #{_device_forward.34} parent=0 // pred_fallthru
    _
  %p15 = scmp.eq.s32.totalorder 0, 0
  // Predicated region
  $region14: #{_device_forward.34} parent=0 // pred_check
    %p16 = pneg %p15
  $region15: #{_device_forward.34} parent=0 // pred_check_branch
    %18 = sbr.rel (%p16) target = $region17
  $region16: #{_device_forward.34} parent=0 // pred_region
    %19 = vst [vmem:[#allocation2] sm:$0xff] 0.0
    %20 = vst [vmem:[#allocation2 + $0x8] sm:$0xff] 0.0
    %21 = vst [vmem:[#allocation2 + $0x10] sm:$0xff] 0.0
    %22 = vst [vmem:[#allocation2 + $0x18] sm:$0xff] 0.0
    %23 = vst [vmem:[#allocation2 + $0x20] sm:$0xff] 0.0
    %24 = vst [vmem:[#allocation2 + $0x28] sm:$0xff] 0.0
    %25 = vst [vmem:[#allocation2 + $0x30] sm:$0xff] 0.0
    %26 = vst [vmem:[#allocation2 + $0x38] sm:$0xff] 0.0
    %27 = vst [vmem:[#allocation2 + $0x40] sm:$0xff] 0.0
    %28 = vst [vmem:[#allocation2 + $0x48] sm:$0xff] 0.0
    %29 = vst [vmem:[#allocation2 + $0x50] sm:$0xff] 0.0
    %30 = vst [vmem:[#allocation2 + $0x58] sm:$0xff] 0.0
    %31 = vst [vmem:[#allocation2 + $0x60] sm:$0xff] 0.0
    %32 = vst [vmem:[#allocation2 + $0x68] sm:$0xff] 0.0
    %33 = vst [vmem:[#allocation2 + $0x70] sm:$0xff] 0.0
    %34 = vst [vmem:[#allocation2 + $0x78] sm:$0xff] 0.0
    %35 = vst [vmem:[#allocation2 + $0x80] sm:$0xff] 0.0
    %36 = vst [vmem:[#allocation2 + $0x88] sm:$0xff] 0.0
    %37 = vst [vmem:[#allocation2 + $0x90] sm:$0xff] 0.0
    %38 = vst [vmem:[#allocation2 + $0x98] sm:$0xff] 0.0
    %39 = vst [vmem:[#allocation2 + $0xa0] sm:$0xff] 0.0
    %40 = vst [vmem:[#allocation2 + $0xa8] sm:$0xff] 0.0
    %41 = vst [vmem:[#allocation2 + $0xb0] sm:$0xff] 0.0
    %42 = vst [vmem:[#allocation2 + $0xb8] sm:$0xff] 0.0
    %43 = vst [vmem:[#allocation2 + $0xc0] sm:$0xff] 0.0
    %44 = vst [vmem:[#allocation2 + $0xc8] sm:$0xff] 0.0
    %45 = vst [vmem:[#allocation2 + $0xd0] sm:$0xff] 0.0
    %46 = vst [vmem:[#allocation2 + $0xd8] sm:$0xff] 0.0
    %47 = vst [vmem:[#allocation2 + $0xe0] sm:$0xff] 0.0
    %48 = vst [vmem:[#allocation2 + $0xe8] sm:$0xff] 0.0
    %49 = vst [vmem:[#allocation2 + $0xf0] sm:$0xff] 0.0
    %50 = vst [vmem:[#allocation2 + $0xf8] sm:$0xff] 0.0
    %51 = vst [vmem:[#allocation3] sm:$0xff] 0.0
    %52 = vst [vmem:[#allocation3 + $0x8] sm:$0xff] 0.0
    %53 = vst [vmem:[#allocation3 + $0x10] sm:$0xff] 0.0
    %54 = vst [vmem:[#allocation3 + $0x18] sm:$0xff] 0.0
    %55 = vst [vmem:[#allocation3 + $0x20] sm:$0xff] 0.0
    %56 = vst [vmem:[#allocation3 + $0x28] sm:$0xff] 0.0
    %57 = vst [vmem:[#allocation3 + $0x30] sm:$0xff] 0.0
    %58 = vst [vmem:[#allocation3 + $0x38] sm:$0xff] 0.0
    %59 = vst [vmem:[#allocation3 + $0x40] sm:$0xff] 0.0
    %60 = vst [vmem:[#allocation3 + $0x48] sm:$0xff] 0.0
    %61 = vst [vmem:[#allocation3 + $0x50] sm:$0xff] 0.0
    %62 = vst [vmem:[#allocation3 + $0x58] sm:$0xff] 0.0
    %63 = vst [vmem:[#allocation3 + $0x60] sm:$0xff] 0.0
    %64 = vst [vmem:[#allocation3 + $0x68] sm:$0xff] 0.0
    %65 = vst [vmem:[#allocation3 + $0x70] sm:$0xff] 0.0
    %66 = vst [vmem:[#allocation3 + $0x78] sm:$0xff] 0.0
    %67 = vst [vmem:[#allocation3 + $0x80] sm:$0xff] 0.0
    %68 = vst [vmem:[#allocation3 + $0x88] sm:$0xff] 0.0
    %69 = vst [vmem:[#allocation3 + $0x90] sm:$0xff] 0.0
    %70 = vst [vmem:[#allocation3 + $0x98] sm:$0xff] 0.0
    %71 = vst [vmem:[#allocation3 + $0xa0] sm:$0xff] 0.0
    %72 = vst [vmem:[#allocation3 + $0xa8] sm:$0xff] 0.0
    %73 = vst [vmem:[#allocation3 + $0xb0] sm:$0xff] 0.0
    %74 = vst [vmem:[#allocation3 + $0xb8] sm:$0xff] 0.0
    %75 = vst [vmem:[#allocation3 + $0xc0] sm:$0xff] 0.0
    %76 = vst [vmem:[#allocation3 + $0xc8] sm:$0xff] 0.0
    %77 = vst [vmem:[#allocation3 + $0xd0] sm:$0xff] 0.0
    %78 = vst [vmem:[#allocation3 + $0xd8] sm:$0xff] 0.0
    %79 = vst [vmem:[#allocation3 + $0xe0] sm:$0xff] 0.0
    %80 = vst [vmem:[#allocation3 + $0xe8] sm:$0xff] 0.0
    %81 = vst [vmem:[#allocation3 + $0xf0] sm:$0xff] 0.0
    %82 = vst [vmem:[#allocation3 + $0xf8] sm:$0xff] 0.0
  $region17: #{_device_forward.34} parent=0 // pred_fallthru
    _
  %v83 = vld [vmem:[%s0] sm:$0xf]
  %v84 = vld [vmem:[%s0 + $0x4] sm:$0xf]
  %v85 = vld [vmem:[%s0 + $0x8] sm:$0xf]
  %v86 = vld [vmem:[%s0 + $0xc] sm:$0xf]
  %v87 = vld [vmem:[%s0 + $0x10] sm:$0xf]
  %v88 = vld [vmem:[%s0 + $0x14] sm:$0xf]
  %v89 = vld [vmem:[%s0 + $0x18] sm:$0xf]
  %v90 = vld [vmem:[%s0 + $0x1c] sm:$0xf]
  %v91 = vld [vmem:[%s0 + $0x20] sm:$0xf]
  %v92 = vld [vmem:[%s0 + $0x24] sm:$0xf]
  %v93 = vld [vmem:[%s0 + $0x28] sm:$0xf]
  %v94 = vld [vmem:[%s0 + $0x2c] sm:$0xf]
  %v95 = vld [vmem:[%s0 + $0x30] sm:$0xf]
  %v96 = vld [vmem:[%s0 + $0x34] sm:$0xf]
  %v97 = vld [vmem:[%s0 + $0x38] sm:$0xf]
  %v98 = vld [vmem:[%s0 + $0x3c] sm:$0xf]
  %v99 = vld [vmem:[#allocation2] sm:$0xff]
  %v100 = vld [vmem:[#allocation2 + $0x8] sm:$0xff]
  %v101 = vld [vmem:[#allocation2 + $0x10] sm:$0xff]
  %v102 = vld [vmem:[#allocation2 + $0x18] sm:$0xff]
  %v103 = vld [vmem:[#allocation2 + $0x20] sm:$0xff]
  %v104 = vld [vmem:[#allocation2 + $0x28] sm:$0xff]
  %v105 = vld [vmem:[#allocation2 + $0x30] sm:$0xff]
  %v106 = vld [vmem:[#allocation2 + $0x38] sm:$0xff]
  %v107 = vld [vmem:[#allocation2 + $0x40] sm:$0xff]
  %v108 = vld [vmem:[#allocation2 + $0x48] sm:$0xff]
  %v109 = vld [vmem:[#allocation2 + $0x50] sm:$0xff]
  %v110 = vld [vmem:[#allocation2 + $0x58] sm:$0xff]
  %v111 = vld [vmem:[#allocation2 + $0x60] sm:$0xff]
  %v112 = vld [vmem:[#allocation2 + $0x68] sm:$0xff]
  %v113 = vld [vmem:[#allocation2 + $0x70] sm:$0xff]
  %v114 = vld [vmem:[#allocation2 + $0x78] sm:$0xff]
  %v115 = vld [vmem:[#allocation2 + $0x80] sm:$0xff]
  %v116 = vld [vmem:[#allocation2 + $0x88] sm:$0xff]
  %v117 = vld [vmem:[#allocation2 + $0x90] sm:$0xff]
  %v118 = vld [vmem:[#allocation2 + $0x98] sm:$0xff]
  %v119 = vld [vmem:[#allocation2 + $0xa0] sm:$0xff]
  %v120 = vld [vmem:[#allocation2 + $0xa8] sm:$0xff]
  %v121 = vld [vmem:[#allocation2 + $0xb0] sm:$0xff]
  %v122 = vld [vmem:[#allocation2 + $0xb8] sm:$0xff]
  %v123 = vld [vmem:[#allocation2 + $0xc0] sm:$0xff]
  %v124 = vld [vmem:[#allocation2 + $0xc8] sm:$0xff]
  %v125 = vld [vmem:[#allocation2 + $0xd0] sm:$0xff]
  %v126 = vld [vmem:[#allocation2 + $0xd8] sm:$0xff]
  %v127 = vld [vmem:[#allocation2 + $0xe0] sm:$0xff]
  %v128 = vld [vmem:[#allocation2 + $0xe8] sm:$0xff]
  %v129 = vld [vmem:[#allocation2 + $0xf0] sm:$0xff]
  %v130 = vld [vmem:[#allocation2 + $0xf8] sm:$0xff]
  %v131 = vld [vmem:[%s1] sm:$0xff]
  %v132 = vld [vmem:[%s1 + $0x8] sm:$0xff]
  %v133 = vld [vmem:[%s1 + $0x10] sm:$0xff]
  %v134 = vld [vmem:[%s1 + $0x18] sm:$0xff]
  %v135 = vld [vmem:[%s1 + $0x20] sm:$0xff]
  %v136 = vld [vmem:[%s1 + $0x28] sm:$0xff]
  %v137 = vld [vmem:[%s1 + $0x30] sm:$0xff]
  %v138 = vld [vmem:[%s1 + $0x38] sm:$0xff]
  %v139 = vld [vmem:[%s1 + $0x40] sm:$0xff]
  %v140 = vld [vmem:[%s1 + $0x48] sm:$0xff]
  %v141 = vld [vmem:[%s1 + $0x50] sm:$0xff]
  %v142 = vld [vmem:[%s1 + $0x58] sm:$0xff]
  %v143 = vld [vmem:[%s1 + $0x60] sm:$0xff]
  %v144 = vld [vmem:[%s1 + $0x68] sm:$0xff]
  %v145 = vld [vmem:[%s1 + $0x70] sm:$0xff]
  %v146 = vld [vmem:[%s1 + $0x78] sm:$0xff]
  %v163 = vunpack.c.l.b16 %v83
  %v164 = vunpack.c.l.b16 %v84
  %v165 = vunpack.c.l.b16 %v85
  %v166 = vunpack.c.l.b16 %v86
  %v167 = vunpack.c.l.b16 %v87
  %v168 = vunpack.c.l.b16 %v88
  %v169 = vunpack.c.l.b16 %v89
  %v170 = vunpack.c.l.b16 %v90
  %v171 = vunpack.c.l.b16 %v91
  %v172 = vunpack.c.l.b16 %v92
  %v173 = vunpack.c.l.b16 %v93
  %v174 = vunpack.c.l.b16 %v94
  %v175 = vunpack.c.l.b16 %v95
  %v176 = vunpack.c.l.b16 %v96
  %v177 = vunpack.c.l.b16 %v97
  %v178 = vunpack.c.l.b16 %v98
  %v179 = vpack.c.b16 %v164, %v163
  %v180 = vpack.c.b16 %v166, %v165
  %v181 = vpack.c.b16 %v168, %v167
  %v182 = vpack.c.b16 %v170, %v169
  %v183 = vpack.c.b16 %v172, %v171
  %v184 = vpack.c.b16 %v174, %v173
  %v185 = vpack.c.b16 %v176, %v175
  %v186 = vpack.c.b16 %v178, %v177
  %v211 = vunpack.c.l.b16 %v131
  %v212 = vunpack.c.h.b16 %v131
  %v213 = vunpack.c.l.b16 %v132
  %v214 = vunpack.c.h.b16 %v132
  %v215 = vunpack.c.l.b16 %v133
  %v216 = vunpack.c.h.b16 %v133
  %v217 = vunpack.c.l.b16 %v134
  %v218 = vunpack.c.h.b16 %v134
  %v219 = vunpack.c.l.b16 %v135
  %v220 = vunpack.c.h.b16 %v135
  %v221 = vunpack.c.l.b16 %v136
  %v222 = vunpack.c.h.b16 %v136
  %v223 = vunpack.c.l.b16 %v137
  %v224 = vunpack.c.h.b16 %v137
  %v225 = vunpack.c.l.b16 %v138
  %v226 = vunpack.c.h.b16 %v138
  %v227 = vunpack.c.l.b16 %v139
  %v228 = vunpack.c.h.b16 %v139
  %v229 = vunpack.c.l.b16 %v140
  %v230 = vunpack.c.h.b16 %v140
  %v231 = vunpack.c.l.b16 %v141
  %v232 = vunpack.c.h.b16 %v141
  %v233 = vunpack.c.l.b16 %v142
  %v234 = vunpack.c.h.b16 %v142
  %v235 = vunpack.c.l.b16 %v143
  %v236 = vunpack.c.h.b16 %v143
  %v237 = vunpack.c.l.b16 %v144
  %v238 = vunpack.c.h.b16 %v144
  %v239 = vunpack.c.l.b16 %v145
  %v240 = vunpack.c.h.b16 %v145
  %v241 = vunpack.c.l.b16 %v146
  %v242 = vunpack.c.h.b16 %v146
  %v243 = vpack.c.b16 %v213, %v211
  %v244 = vpack.c.b16 %v214, %v212
  %v245 = vpack.c.b16 %v217, %v215
  %v246 = vpack.c.b16 %v218, %v216
  %v247 = vpack.c.b16 %v221, %v219
  %v248 = vpack.c.b16 %v222, %v220
  %v249 = vpack.c.b16 %v225, %v223
  %v250 = vpack.c.b16 %v226, %v224
  %v251 = vpack.c.b16 %v229, %v227
  %v252 = vpack.c.b16 %v230, %v228
  %v253 = vpack.c.b16 %v233, %v231
  %v254 = vpack.c.b16 %v234, %v232
  %v255 = vpack.c.b16 %v237, %v235
  %v256 = vpack.c.b16 %v238, %v236
  %v257 = vpack.c.b16 %v241, %v239
  %v258 = vpack.c.b16 %v242, %v240
  %275 = vmatprep.subr.bf16.mxu0 %v258
  %276 = vmatpush1.bf16.msra.mxu0 %v257
  %277 = vmatprep.subr.bf16.mxu0 %v256
  %278 = vmatpush1.bf16.msra.mxu0 %v255
  %279 = vmatprep.subr.bf16.mxu0 %v254
  %280 = vmatpush1.bf16.msra.mxu0 %v253
  %281 = vmatprep.subr.bf16.mxu0 %v252
  %282 = vmatpush1.bf16.msra.mxu0 %v251
  %283 = vmatprep.subr.bf16.mxu0 %v250
  %284 = vmatpush1.bf16.msra.mxu0 %v249
  %285 = vmatprep.subr.bf16.mxu0 %v248
  %286 = vmatpush1.bf16.msra.mxu0 %v247
  %287 = vmatprep.subr.bf16.mxu0 %v246
  %288 = vmatpush1.bf16.msra.mxu0 %v245
  %289 = vmatprep.subr.bf16.mxu0 %v244
  %290 = vmatpush1.bf16.msra.mxu0 %v243
  %291 = vmatprep.subr.bf16.mxu0 0
  %292 = vmatpush2.bf16.msra.mxu0 0
  %293 = vmatprep.subr.bf16.mxu0 0
  %294 = vmatpush2.bf16.msra.mxu0 0
  %295 = vmatprep.subr.bf16.mxu0 0
  %296 = vmatpush2.bf16.msra.mxu0 0
  %297 = vmatprep.subr.bf16.mxu0 0
  %298 = vmatpush2.bf16.msra.mxu0 0
  %299 = vmatprep.subr.bf16.mxu0 0
  %300 = vmatpush2.bf16.msra.mxu0 0
  %301 = vmatprep.subr.bf16.mxu0 0
  %302 = vmatpush2.bf16.msra.mxu0 0
  %303 = vmatprep.subr.bf16.mxu0 0
  %304 = vmatpush2.bf16.msra.mxu0 0
  %305 = vmatprep.subr.bf16.mxu0 0
  %306 = vmatpush2.bf16.msra.mxu0 0
  %307 = vmatprep.mubr.bf16.mxu0 0
  %308 = vmatmul.mubr.bf16.gmra.mxu0 %v179
  %v309 = vpop.f32.mrf.mxu0
  %v310 = vadd.f32 0.0, %v309
  %v311 = vpop.f32.mrf.mxu0
  %v312 = vadd.f32 0.0, %v311
  %v313 = vpop.f32.mrf.mxu0
  %v314 = vadd.f32 0.0, %v313
  %v315 = vpop.f32.mrf.mxu0
  %v316 = vadd.f32 0.0, %v315
  %317 = vmatprep.mubr.bf16.mxu0 0
  %318 = vmatmul.mubr.bf16.gmra.mxu0 %v180
  %v319 = vpop.f32.mrf.mxu0
  %v320 = vadd.f32 0.0, %v319
  %v321 = vpop.f32.mrf.mxu0
  %v322 = vadd.f32 0.0, %v321
  %v323 = vpop.f32.mrf.mxu0
  %v324 = vadd.f32 0.0, %v323
  %v325 = vpop.f32.mrf.mxu0
  %v326 = vadd.f32 0.0, %v325
  %327 = vmatprep.mubr.bf16.mxu0 0
  %328 = vmatmul.mubr.bf16.gmra.mxu0 %v181
  %v329 = vpop.f32.mrf.mxu0
  %v330 = vadd.f32 0.0, %v329
  %v331 = vpop.f32.mrf.mxu0
  %v332 = vadd.f32 0.0, %v331
  %v333 = vpop.f32.mrf.mxu0
  %v334 = vadd.f32 0.0, %v333
  %v335 = vpop.f32.mrf.mxu0
  %v336 = vadd.f32 0.0, %v335
  %337 = vmatprep.mubr.bf16.mxu0 0
  %338 = vmatmul.mubr.bf16.gmra.mxu0 %v182
  %v339 = vpop.f32.mrf.mxu0
  %v340 = vadd.f32 0.0, %v339
  %v341 = vpop.f32.mrf.mxu0
  %v342 = vadd.f32 0.0, %v341
  %v343 = vpop.f32.mrf.mxu0
  %v344 = vadd.f32 0.0, %v343
  %v345 = vpop.f32.mrf.mxu0
  %v346 = vadd.f32 0.0, %v345
  %347 = vmatprep.mubr.bf16.mxu0 0
  %348 = vmatmul.mubr.bf16.gmra.mxu0 %v183
  %v349 = vpop.f32.mrf.mxu0
  %v350 = vadd.f32 0.0, %v349
  %v351 = vpop.f32.mrf.mxu0
  %v352 = vadd.f32 0.0, %v351
  %v353 = vpop.f32.mrf.mxu0
  %v354 = vadd.f32 0.0, %v353
  %v355 = vpop.f32.mrf.mxu0
  %v356 = vadd.f32 0.0, %v355
  %357 = vmatprep.mubr.bf16.mxu0 0
  %358 = vmatmul.mubr.bf16.gmra.mxu0 %v184
  %v359 = vpop.f32.mrf.mxu0
  %v360 = vadd.f32 0.0, %v359
  %v361 = vpop.f32.mrf.mxu0
  %v362 = vadd.f32 0.0, %v361
  %v363 = vpop.f32.mrf.mxu0
  %v364 = vadd.f32 0.0, %v363
  %v365 = vpop.f32.mrf.mxu0
  %v366 = vadd.f32 0.0, %v365
  %367 = vmatprep.mubr.bf16.mxu0 0
  %368 = vmatmul.mubr.bf16.gmra.mxu0 %v185
  %v369 = vpop.f32.mrf.mxu0
  %v370 = vadd.f32 0.0, %v369
  %v371 = vpop.f32.mrf.mxu0
  %v372 = vadd.f32 0.0, %v371
  %v373 = vpop.f32.mrf.mxu0
  %v374 = vadd.f32 0.0, %v373
  %v375 = vpop.f32.mrf.mxu0
  %v376 = vadd.f32 0.0, %v375
  %377 = vmatprep.mubr.bf16.mxu0 0
  %378 = vmatmul.mubr.bf16.gmra.mxu0 %v186
  %v379 = vpop.f32.mrf.mxu0
  %v380 = vadd.f32 0.0, %v379
  %v381 = vpop.f32.mrf.mxu0
  %v382 = vadd.f32 0.0, %v381
  %v383 = vpop.f32.mrf.mxu0
  %v384 = vadd.f32 0.0, %v383
  %v385 = vpop.f32.mrf.mxu0
  %v386 = vadd.f32 0.0, %v385
  %387 = vdwg.mxu0
  %v388 = vadd.f32 %v99, %v310
  %v389 = vadd.f32 %v100, %v312
  %v390 = vadd.f32 %v101, %v314
  %v391 = vadd.f32 %v102, %v316
  %v392 = vadd.f32 %v103, %v320
  %v393 = vadd.f32 %v104, %v322
  %v394 = vadd.f32 %v105, %v324
  %v395 = vadd.f32 %v106, %v326
  %v396 = vadd.f32 %v107, %v330
  %v397 = vadd.f32 %v108, %v332
  %v398 = vadd.f32 %v109, %v334
  %v399 = vadd.f32 %v110, %v336
  %v400 = vadd.f32 %v111, %v340
  %v401 = vadd.f32 %v112, %v342
  %v402 = vadd.f32 %v113, %v344
  %v403 = vadd.f32 %v114, %v346
  %v404 = vadd.f32 %v115, %v350
  %v405 = vadd.f32 %v116, %v352
  %v406 = vadd.f32 %v117, %v354
  %v407 = vadd.f32 %v118, %v356
  %v408 = vadd.f32 %v119, %v360
  %v409 = vadd.f32 %v120, %v362
  %v410 = vadd.f32 %v121, %v364
  %v411 = vadd.f32 %v122, %v366
  %v412 = vadd.f32 %v123, %v370
  %v413 = vadd.f32 %v124, %v372
  %v414 = vadd.f32 %v125, %v374
  %v415 = vadd.f32 %v126, %v376
  %v416 = vadd.f32 %v127, %v380
  %v417 = vadd.f32 %v128, %v382
  %v418 = vadd.f32 %v129, %v384
  %v419 = vadd.f32 %v130, %v386
  %420 = vst [vmem:[#allocation2] sm:$0xff] %v388
  %421 = vst [vmem:[#allocation2 + $0x8] sm:$0xff] %v389
  %422 = vst [vmem:[#allocation2 + $0x10] sm:$0xff] %v390
  %423 = vst [vmem:[#allocation2 + $0x18] sm:$0xff] %v391
  %424 = vst [vmem:[#allocation2 + $0x20] sm:$0xff] %v392
  %425 = vst [vmem:[#allocation2 + $0x28] sm:$0xff] %v393
  %426 = vst [vmem:[#allocation2 + $0x30] sm:$0xff] %v394
  %427 = vst [vmem:[#allocation2 + $0x38] sm:$0xff] %v395
  %428 = vst [vmem:[#allocation2 + $0x40] sm:$0xff] %v396
  %429 = vst [vmem:[#allocation2 + $0x48] sm:$0xff] %v397
  %430 = vst [vmem:[#allocation2 + $0x50] sm:$0xff] %v398
  %431 = vst [vmem:[#allocation2 + $0x58] sm:$0xff] %v399
  %432 = vst [vmem:[#allocation2 + $0x60] sm:$0xff] %v400
  %433 = vst [vmem:[#allocation2 + $0x68] sm:$0xff] %v401
  %434 = vst [vmem:[#allocation2 + $0x70] sm:$0xff] %v402
  %435 = vst [vmem:[#allocation2 + $0x78] sm:$0xff] %v403
  %436 = vst [vmem:[#allocation2 + $0x80] sm:$0xff] %v404
  %437 = vst [vmem:[#allocation2 + $0x88] sm:$0xff] %v405
  %438 = vst [vmem:[#allocation2 + $0x90] sm:$0xff] %v406
  %439 = vst [vmem:[#allocation2 + $0x98] sm:$0xff] %v407
  %440 = vst [vmem:[#allocation2 + $0xa0] sm:$0xff] %v408
  %441 = vst [vmem:[#allocation2 + $0xa8] sm:$0xff] %v409
  %442 = vst [vmem:[#allocation2 + $0xb0] sm:$0xff] %v410
  %443 = vst [vmem:[#allocation2 + $0xb8] sm:$0xff] %v411
  %444 = vst [vmem:[#allocation2 + $0xc0] sm:$0xff] %v412
  %445 = vst [vmem:[#allocation2 + $0xc8] sm:$0xff] %v413
  %446 = vst [vmem:[#allocation2 + $0xd0] sm:$0xff] %v414
  %447 = vst [vmem:[#allocation2 + $0xd8] sm:$0xff] %v415
  %448 = vst [vmem:[#allocation2 + $0xe0] sm:$0xff] %v416
  %449 = vst [vmem:[#allocation2 + $0xe8] sm:$0xff] %v417
  %450 = vst [vmem:[#allocation2 + $0xf0] sm:$0xff] %v418
  %451 = vst [vmem:[#allocation2 + $0xf8] sm:$0xff] %v419
  %v452 = vld [vmem:[#allocation3] sm:$0xff]
  %v453 = vld [vmem:[#allocation3 + $0x8] sm:$0xff]
  %v454 = vld [vmem:[#allocation3 + $0x10] sm:$0xff]
  %v455 = vld [vmem:[#allocation3 + $0x18] sm:$0xff]
  %v456 = vld [vmem:[#allocation3 + $0x20] sm:$0xff]
  %v457 = vld [vmem:[#allocation3 + $0x28] sm:$0xff]
  %v458 = vld [vmem:[#allocation3 + $0x30] sm:$0xff]
  %v459 = vld [vmem:[#allocation3 + $0x38] sm:$0xff]
  %v460 = vld [vmem:[#allocation3 + $0x40] sm:$0xff]
  %v461 = vld [vmem:[#allocation3 + $0x48] sm:$0xff]
  %v462 = vld [vmem:[#allocation3 + $0x50] sm:$0xff]
  %v463 = vld [vmem:[#allocation3 + $0x58] sm:$0xff]
  %v464 = vld [vmem:[#allocation3 + $0x60] sm:$0xff]
  %v465 = vld [vmem:[#allocation3 + $0x68] sm:$0xff]
  %v466 = vld [vmem:[#allocation3 + $0x70] sm:$0xff]
  %v467 = vld [vmem:[#allocation3 + $0x78] sm:$0xff]
  %v468 = vld [vmem:[#allocation3 + $0x80] sm:$0xff]
  %v469 = vld [vmem:[#allocation3 + $0x88] sm:$0xff]
  %v470 = vld [vmem:[#allocation3 + $0x90] sm:$0xff]
  %v471 = vld [vmem:[#allocation3 + $0x98] sm:$0xff]
  %v472 = vld [vmem:[#allocation3 + $0xa0] sm:$0xff]
  %v473 = vld [vmem:[#allocation3 + $0xa8] sm:$0xff]
  %v474 = vld [vmem:[#allocation3 + $0xb0] sm:$0xff]
  %v475 = vld [vmem:[#allocation3 + $0xb8] sm:$0xff]
  %v476 = vld [vmem:[#allocation3 + $0xc0] sm:$0xff]
  %v477 = vld [vmem:[#allocation3 + $0xc8] sm:$0xff]
  %v478 = vld [vmem:[#allocation3 + $0xd0] sm:$0xff]
  %v479 = vld [vmem:[#allocation3 + $0xd8] sm:$0xff]
  %v480 = vld [vmem:[#allocation3 + $0xe0] sm:$0xff]
  %v481 = vld [vmem:[#allocation3 + $0xe8] sm:$0xff]
  %v482 = vld [vmem:[#allocation3 + $0xf0] sm:$0xff]
  %v483 = vld [vmem:[#allocation3 + $0xf8] sm:$0xff]
  %v484 = vld [vmem:[%s2] sm:$0xff]
  %v485 = vld [vmem:[%s2 + $0x8] sm:$0xff]
  %v486 = vld [vmem:[%s2 + $0x10] sm:$0xff]
  %v487 = vld [vmem:[%s2 + $0x18] sm:$0xff]
  %v488 = vld [vmem:[%s2 + $0x20] sm:$0xff]
  %v489 = vld [vmem:[%s2 + $0x28] sm:$0xff]
  %v490 = vld [vmem:[%s2 + $0x30] sm:$0xff]
  %v491 = vld [vmem:[%s2 + $0x38] sm:$0xff]
  %v492 = vld [vmem:[%s2 + $0x40] sm:$0xff]
  %v493 = vld [vmem:[%s2 + $0x48] sm:$0xff]
  %v494 = vld [vmem:[%s2 + $0x50] sm:$0xff]
  %v495 = vld [vmem:[%s2 + $0x58] sm:$0xff]
  %v496 = vld [vmem:[%s2 + $0x60] sm:$0xff]
  %v497 = vld [vmem:[%s2 + $0x68] sm:$0xff]
  %v498 = vld [vmem:[%s2 + $0x70] sm:$0xff]
  %v499 = vld [vmem:[%s2 + $0x78] sm:$0xff]
  %v516 = vunpack.c.l.b16 %v484
  %v517 = vunpack.c.h.b16 %v484
  %v518 = vunpack.c.l.b16 %v485
  %v519 = vunpack.c.h.b16 %v485
  %v520 = vunpack.c.l.b16 %v486
  %v521 = vunpack.c.h.b16 %v486
  %v522 = vunpack.c.l.b16 %v487
  %v523 = vunpack.c.h.b16 %v487
  %v524 = vunpack.c.l.b16 %v488
  %v525 = vunpack.c.h.b16 %v488
  %v526 = vunpack.c.l.b16 %v489
  %v527 = vunpack.c.h.b16 %v489
  %v528 = vunpack.c.l.b16 %v490
  %v529 = vunpack.c.h.b16 %v490
  %v530 = vunpack.c.l.b16 %v491
  %v531 = vunpack.c.h.b16 %v491
  %v532 = vunpack.c.l.b16 %v492
  %v533 = vunpack.c.h.b16 %v492
  %v534 = vunpack.c.l.b16 %v493
  %v535 = vunpack.c.h.b16 %v493
  %v536 = vunpack.c.l.b16 %v494
  %v537 = vunpack.c.h.b16 %v494
  %v538 = vunpack.c.l.b16 %v495
  %v539 = vunpack.c.h.b16 %v495
  %v540 = vunpack.c.l.b16 %v496
  %v541 = vunpack.c.h.b16 %v496
  %v542 = vunpack.c.l.b16 %v497
  %v543 = vunpack.c.h.b16 %v497
  %v544 = vunpack.c.l.b16 %v498
  %v545 = vunpack.c.h.b16 %v498
  %v546 = vunpack.c.l.b16 %v499
  %v547 = vunpack.c.h.b16 %v499
  %v548 = vpack.c.b16 %v518, %v516
  %v549 = vpack.c.b16 %v519, %v517
  %v550 = vpack.c.b16 %v522, %v520
  %v551 = vpack.c.b16 %v523, %v521
  %v552 = vpack.c.b16 %v526, %v524
  %v553 = vpack.c.b16 %v527, %v525
  %v554 = vpack.c.b16 %v530, %v528
  %v555 = vpack.c.b16 %v531, %v529
  %v556 = vpack.c.b16 %v534, %v532
  %v557 = vpack.c.b16 %v535, %v533
  %v558 = vpack.c.b16 %v538, %v536
  %v559 = vpack.c.b16 %v539, %v537
  %v560 = vpack.c.b16 %v542, %v540
  %v561 = vpack.c.b16 %v543, %v541
  %v562 = vpack.c.b16 %v546, %v544
  %v563 = vpack.c.b16 %v547, %v545
  %580 = vmatprep.subr.bf16.mxu0 %v563
  %581 = vmatpush1.bf16.msra.mxu0 %v562
  %582 = vmatprep.subr.bf16.mxu0 %v561
  %583 = vmatpush1.bf16.msra.mxu0 %v560
  %584 = vmatprep.subr.bf16.mxu0 %v559
  %585 = vmatpush1.bf16.msra.mxu0 %v558
  %586 = vmatprep.subr.bf16.mxu0 %v557
  %587 = vmatpush1.bf16.msra.mxu0 %v556
  %588 = vmatprep.subr.bf16.mxu0 %v555
  %589 = vmatpush1.bf16.msra.mxu0 %v554
  %590 = vmatprep.subr.bf16.mxu0 %v553
  %591 = vmatpush1.bf16.msra.mxu0 %v552
  %592 = vmatprep.subr.bf16.mxu0 %v551
  %593 = vmatpush1.bf16.msra.mxu0 %v550
  %594 = vmatprep.subr.bf16.mxu0 %v549
  %595 = vmatpush1.bf16.msra.mxu0 %v548
  %596 = vmatprep.subr.bf16.mxu0 0
  %597 = vmatpush2.bf16.msra.mxu0 0
  %598 = vmatprep.subr.bf16.mxu0 0
  %599 = vmatpush2.bf16.msra.mxu0 0
  %600 = vmatprep.subr.bf16.mxu0 0
  %601 = vmatpush2.bf16.msra.mxu0 0
  %602 = vmatprep.subr.bf16.mxu0 0
  %603 = vmatpush2.bf16.msra.mxu0 0
  %604 = vmatprep.subr.bf16.mxu0 0
  %605 = vmatpush2.bf16.msra.mxu0 0
  %606 = vmatprep.subr.bf16.mxu0 0
  %607 = vmatpush2.bf16.msra.mxu0 0
  %608 = vmatprep.subr.bf16.mxu0 0
  %609 = vmatpush2.bf16.msra.mxu0 0
  %610 = vmatprep.subr.bf16.mxu0 0
  %611 = vmatpush2.bf16.msra.mxu0 0
  %612 = vmatprep.mubr.bf16.mxu0 0
  %613 = vmatmul.mubr.bf16.gmra.mxu0 %v179
  %v614 = vpop.f32.mrf.mxu0
  %v615 = vadd.f32 0.0, %v614
  %v616 = vpop.f32.mrf.mxu0
  %v617 = vadd.f32 0.0, %v616
  %v618 = vpop.f32.mrf.mxu0
  %v619 = vadd.f32 0.0, %v618
  %v620 = vpop.f32.mrf.mxu0
  %v621 = vadd.f32 0.0, %v620
  %622 = vmatprep.mubr.bf16.mxu0 0
  %623 = vmatmul.mubr.bf16.gmra.mxu0 %v180
  %v624 = vpop.f32.mrf.mxu0
  %v625 = vadd.f32 0.0, %v624
  %v626 = vpop.f32.mrf.mxu0
  %v627 = vadd.f32 0.0, %v626
  %v628 = vpop.f32.mrf.mxu0
  %v629 = vadd.f32 0.0, %v628
  %v630 = vpop.f32.mrf.mxu0
  %v631 = vadd.f32 0.0, %v630
  %632 = vmatprep.mubr.bf16.mxu0 0
  %633 = vmatmul.mubr.bf16.gmra.mxu0 %v181
  %v634 = vpop.f32.mrf.mxu0
  %v635 = vadd.f32 0.0, %v634
  %v636 = vpop.f32.mrf.mxu0
  %v637 = vadd.f32 0.0, %v636
  %v638 = vpop.f32.mrf.mxu0
  %v639 = vadd.f32 0.0, %v638
  %v640 = vpop.f32.mrf.mxu0
  %v641 = vadd.f32 0.0, %v640
  %642 = vmatprep.mubr.bf16.mxu0 0
  %643 = vmatmul.mubr.bf16.gmra.mxu0 %v182
  %v644 = vpop.f32.mrf.mxu0
  %v645 = vadd.f32 0.0, %v644
  %v646 = vpop.f32.mrf.mxu0
  %v647 = vadd.f32 0.0, %v646
  %v648 = vpop.f32.mrf.mxu0
  %v649 = vadd.f32 0.0, %v648
  %v650 = vpop.f32.mrf.mxu0
  %v651 = vadd.f32 0.0, %v650
  %652 = vmatprep.mubr.bf16.mxu0 0
  %653 = vmatmul.mubr.bf16.gmra.mxu0 %v183
  %v654 = vpop.f32.mrf.mxu0
  %v655 = vadd.f32 0.0, %v654
  %v656 = vpop.f32.mrf.mxu0
  %v657 = vadd.f32 0.0, %v656
  %v658 = vpop.f32.mrf.mxu0
  %v659 = vadd.f32 0.0, %v658
  %v660 = vpop.f32.mrf.mxu0
  %v661 = vadd.f32 0.0, %v660
  %662 = vmatprep.mubr.bf16.mxu0 0
  %663 = vmatmul.mubr.bf16.gmra.mxu0 %v184
  %v664 = vpop.f32.mrf.mxu0
  %v665 = vadd.f32 0.0, %v664
  %v666 = vpop.f32.mrf.mxu0
  %v667 = vadd.f32 0.0, %v666
  %v668 = vpop.f32.mrf.mxu0
  %v669 = vadd.f32 0.0, %v668
  %v670 = vpop.f32.mrf.mxu0
  %v671 = vadd.f32 0.0, %v670
  %672 = vmatprep.mubr.bf16.mxu0 0
  %673 = vmatmul.mubr.bf16.gmra.mxu0 %v185
  %v674 = vpop.f32.mrf.mxu0
  %v675 = vadd.f32 0.0, %v674
  %v676 = vpop.f32.mrf.mxu0
  %v677 = vadd.f32 0.0, %v676
  %v678 = vpop.f32.mrf.mxu0
  %v679 = vadd.f32 0.0, %v678
  %v680 = vpop.f32.mrf.mxu0
  %v681 = vadd.f32 0.0, %v680
  %682 = vmatprep.mubr.bf16.mxu0 0
  %683 = vmatmul.mubr.bf16.gmra.mxu0 %v186
  %v684 = vpop.f32.mrf.mxu0
  %v685 = vadd.f32 0.0, %v684
  %v686 = vpop.f32.mrf.mxu0
  %v687 = vadd.f32 0.0, %v686
  %v688 = vpop.f32.mrf.mxu0
  %v689 = vadd.f32 0.0, %v688
  %v690 = vpop.f32.mrf.mxu0
  %v691 = vadd.f32 0.0, %v690
  %692 = vdwg.mxu0
  %v693 = vadd.f32 %v452, %v615
  %v694 = vadd.f32 %v453, %v617
  %v695 = vadd.f32 %v454, %v619
  %v696 = vadd.f32 %v455, %v621
  %v697 = vadd.f32 %v456, %v625
  %v698 = vadd.f32 %v457, %v627
  %v699 = vadd.f32 %v458, %v629
  %v700 = vadd.f32 %v459, %v631
  %v701 = vadd.f32 %v460, %v635
  %v702 = vadd.f32 %v461, %v637
  %v703 = vadd.f32 %v462, %v639
  %v704 = vadd.f32 %v463, %v641
  %v705 = vadd.f32 %v464, %v645
  %v706 = vadd.f32 %v465, %v647
  %v707 = vadd.f32 %v466, %v649
  %v708 = vadd.f32 %v467, %v651
  %v709 = vadd.f32 %v468, %v655
  %v710 = vadd.f32 %v469, %v657
  %v711 = vadd.f32 %v470, %v659
  %v712 = vadd.f32 %v471, %v661
  %v713 = vadd.f32 %v472, %v665
  %v714 = vadd.f32 %v473, %v667
  %v715 = vadd.f32 %v474, %v669
  %v716 = vadd.f32 %v475, %v671
  %v717 = vadd.f32 %v476, %v675
  %v718 = vadd.f32 %v477, %v677
  %v719 = vadd.f32 %v478, %v679
  %v720 = vadd.f32 %v479, %v681
  %v721 = vadd.f32 %v480, %v685
  %v722 = vadd.f32 %v481, %v687
  %v723 = vadd.f32 %v482, %v689
  %v724 = vadd.f32 %v483, %v691
  %725 = vst [vmem:[#allocation3] sm:$0xff] %v693
  %726 = vst [vmem:[#allocation3 + $0x8] sm:$0xff] %v694
  %727 = vst [vmem:[#allocation3 + $0x10] sm:$0xff] %v695
  %728 = vst [vmem:[#allocation3 + $0x18] sm:$0xff] %v696
  %729 = vst [vmem:[#allocation3 + $0x20] sm:$0xff] %v697
  %730 = vst [vmem:[#allocation3 + $0x28] sm:$0xff] %v698
  %731 = vst [vmem:[#allocation3 + $0x30] sm:$0xff] %v699
  %732 = vst [vmem:[#allocation3 + $0x38] sm:$0xff] %v700
  %733 = vst [vmem:[#allocation3 + $0x40] sm:$0xff] %v701
  %734 = vst [vmem:[#allocation3 + $0x48] sm:$0xff] %v702
  %735 = vst [vmem:[#allocation3 + $0x50] sm:$0xff] %v703
  %736 = vst [vmem:[#allocation3 + $0x58] sm:$0xff] %v704
  %737 = vst [vmem:[#allocation3 + $0x60] sm:$0xff] %v705
  %738 = vst [vmem:[#allocation3 + $0x68] sm:$0xff] %v706
  %739 = vst [vmem:[#allocation3 + $0x70] sm:$0xff] %v707
  %740 = vst [vmem:[#allocation3 + $0x78] sm:$0xff] %v708
  %741 = vst [vmem:[#allocation3 + $0x80] sm:$0xff] %v709
  %742 = vst [vmem:[#allocation3 + $0x88] sm:$0xff] %v710
  %743 = vst [vmem:[#allocation3 + $0x90] sm:$0xff] %v711
  %744 = vst [vmem:[#allocation3 + $0x98] sm:$0xff] %v712
  %745 = vst [vmem:[#allocation3 + $0xa0] sm:$0xff] %v713
  %746 = vst [vmem:[#allocation3 + $0xa8] sm:$0xff] %v714
  %747 = vst [vmem:[#allocation3 + $0xb0] sm:$0xff] %v715
  %748 = vst [vmem:[#allocation3 + $0xb8] sm:$0xff] %v716
  %749 = vst [vmem:[#allocation3 + $0xc0] sm:$0xff] %v717
  %750 = vst [vmem:[#allocation3 + $0xc8] sm:$0xff] %v718
  %751 = vst [vmem:[#allocation3 + $0xd0] sm:$0xff] %v719
  %752 = vst [vmem:[#allocation3 + $0xd8] sm:$0xff] %v720
  %753 = vst [vmem:[#allocation3 + $0xe0] sm:$0xff] %v721
  %754 = vst [vmem:[#allocation3 + $0xe8] sm:$0xff] %v722
  %755 = vst [vmem:[#allocation3 + $0xf0] sm:$0xff] %v723
  %756 = vst [vmem:[#allocation3 + $0xf8] sm:$0xff] %v724
  // Predicated region
  $region18: #{_device_forward.34} parent=0 // pred_check
    %p757 = pneg %p15
  $region19: #{_device_forward.34} parent=0 // pred_check_branch
    %759 = sbr.rel (%p757) target = $region21
  $region20: #{_device_forward.34} parent=0 // pred_region
    %v760 = vld [vmem:[#allocation2] sm:$0xff]
    %v761 = vld [vmem:[#allocation2 + $0x8] sm:$0xff]
    %v762 = vld [vmem:[#allocation2 + $0x10] sm:$0xff]
    %v763 = vld [vmem:[#allocation2 + $0x18] sm:$0xff]
    %v764 = vld [vmem:[#allocation2 + $0x20] sm:$0xff]
    %v765 = vld [vmem:[#allocation2 + $0x28] sm:$0xff]
    %v766 = vld [vmem:[#allocation2 + $0x30] sm:$0xff]
    %v767 = vld [vmem:[#allocation2 + $0x38] sm:$0xff]
    %v768 = vld [vmem:[#allocation2 + $0x40] sm:$0xff]
    %v769 = vld [vmem:[#allocation2 + $0x48] sm:$0xff]
    %v770 = vld [vmem:[#allocation2 + $0x50] sm:$0xff]
    %v771 = vld [vmem:[#allocation2 + $0x58] sm:$0xff]
    %v772 = vld [vmem:[#allocation2 + $0x60] sm:$0xff]
    %v773 = vld [vmem:[#allocation2 + $0x68] sm:$0xff]
    %v774 = vld [vmem:[#allocation2 + $0x70] sm:$0xff]
    %v775 = vld [vmem:[#allocation2 + $0x78] sm:$0xff]
    %v776 = vld [vmem:[#allocation2 + $0x80] sm:$0xff]
    %v777 = vld [vmem:[#allocation2 + $0x88] sm:$0xff]
    %v778 = vld [vmem:[#allocation2 + $0x90] sm:$0xff]
    %v779 = vld [vmem:[#allocation2 + $0x98] sm:$0xff]
    %v780 = vld [vmem:[#allocation2 + $0xa0] sm:$0xff]
    %v781 = vld [vmem:[#allocation2 + $0xa8] sm:$0xff]
    %v782 = vld [vmem:[#allocation2 + $0xb0] sm:$0xff]
    %v783 = vld [vmem:[#allocation2 + $0xb8] sm:$0xff]
    %v784 = vld [vmem:[#allocation2 + $0xc0] sm:$0xff]
    %v785 = vld [vmem:[#allocation2 + $0xc8] sm:$0xff]
    %v786 = vld [vmem:[#allocation2 + $0xd0] sm:$0xff]
    %v787 = vld [vmem:[#allocation2 + $0xd8] sm:$0xff]
    %v788 = vld [vmem:[#allocation2 + $0xe0] sm:$0xff]
    %v789 = vld [vmem:[#allocation2 + $0xe8] sm:$0xff]
    %v790 = vld [vmem:[#allocation2 + $0xf0] sm:$0xff]
    %v791 = vld [vmem:[#allocation2 + $0xf8] sm:$0xff]
    %v792 = vxor.u32 %v760, 2147483648
    %v793 = vxor.u32 %v761, 2147483648
    %v794 = vxor.u32 %v762, 2147483648
    %v795 = vxor.u32 %v763, 2147483648
    %v796 = vxor.u32 %v764, 2147483648
    %v797 = vxor.u32 %v765, 2147483648
    %v798 = vxor.u32 %v766, 2147483648
    %v799 = vxor.u32 %v767, 2147483648
    %v800 = vxor.u32 %v768, 2147483648
    %v801 = vxor.u32 %v769, 2147483648
    %v802 = vxor.u32 %v770, 2147483648
    %v803 = vxor.u32 %v771, 2147483648
    %v804 = vxor.u32 %v772, 2147483648
    %v805 = vxor.u32 %v773, 2147483648
    %v806 = vxor.u32 %v774, 2147483648
    %v807 = vxor.u32 %v775, 2147483648
    %v808 = vxor.u32 %v776, 2147483648
    %v809 = vxor.u32 %v777, 2147483648
    %v810 = vxor.u32 %v778, 2147483648
    %v811 = vxor.u32 %v779, 2147483648
    %v812 = vxor.u32 %v780, 2147483648
    %v813 = vxor.u32 %v781, 2147483648
    %v814 = vxor.u32 %v782, 2147483648
    %v815 = vxor.u32 %v783, 2147483648
    %v816 = vxor.u32 %v784, 2147483648
    %v817 = vxor.u32 %v785, 2147483648
    %v818 = vxor.u32 %v786, 2147483648
    %v819 = vxor.u32 %v787, 2147483648
    %v820 = vxor.u32 %v788, 2147483648
    %v821 = vxor.u32 %v789, 2147483648
    %v822 = vxor.u32 %v790, 2147483648
    %v823 = vxor.u32 %v791, 2147483648
    %v824 = vmul.f32 %v792, 1.442695
    %v825 = vpow.pop %v824
    %v826 = vmul.f32 %v793, 1.442695
    %v827 = vpow.pop %v826
    %v828 = vmul.f32 %v794, 1.442695
    %v829 = vpow.pop %v828
    %v830 = vmul.f32 %v795, 1.442695
    %v831 = vpow.pop %v830
    %v832 = vmul.f32 %v796, 1.442695
    %v833 = vpow.pop %v832
    %v834 = vmul.f32 %v797, 1.442695
    %v835 = vpow.pop %v834
    %v836 = vmul.f32 %v798, 1.442695
    %v837 = vpow.pop %v836
    %v838 = vmul.f32 %v799, 1.442695
    %v839 = vpow.pop %v838
    %v840 = vmul.f32 %v800, 1.442695
    %v841 = vpow.pop %v840
    %v842 = vmul.f32 %v801, 1.442695
    %v843 = vpow.pop %v842
    %v844 = vmul.f32 %v802, 1.442695
    %v845 = vpow.pop %v844
    %v846 = vmul.f32 %v803, 1.442695
    %v847 = vpow.pop %v846
    %v848 = vmul.f32 %v804, 1.442695
    %v849 = vpow.pop %v848
    %v850 = vmul.f32 %v805, 1.442695
    %v851 = vpow.pop %v850
    %v852 = vmul.f32 %v806, 1.442695
    %v853 = vpow.pop %v852
    %v854 = vmul.f32 %v807, 1.442695
    %v855 = vpow.pop %v854
    %v856 = vmul.f32 %v808, 1.442695
    %v857 = vpow.pop %v856
    %v858 = vmul.f32 %v809, 1.442695
    %v859 = vpow.pop %v858
    %v860 = vmul.f32 %v810, 1.442695
    %v861 = vpow.pop %v860
    %v862 = vmul.f32 %v811, 1.442695
    %v863 = vpow.pop %v862
    %v864 = vmul.f32 %v812, 1.442695
    %v865 = vpow.pop %v864
    %v866 = vmul.f32 %v813, 1.442695
    %v867 = vpow.pop %v866
    %v868 = vmul.f32 %v814, 1.442695
    %v869 = vpow.pop %v868
    %v870 = vmul.f32 %v815, 1.442695
    %v871 = vpow.pop %v870
    %v872 = vmul.f32 %v816, 1.442695
    %v873 = vpow.pop %v872
    %v874 = vmul.f32 %v817, 1.442695
    %v875 = vpow.pop %v874
    %v876 = vmul.f32 %v818, 1.442695
    %v877 = vpow.pop %v876
    %v878 = vmul.f32 %v819, 1.442695
    %v879 = vpow.pop %v878
    %v880 = vmul.f32 %v820, 1.442695
    %v881 = vpow.pop %v880
    %v882 = vmul.f32 %v821, 1.442695
    %v883 = vpow.pop %v882
    %v884 = vmul.f32 %v822, 1.442695
    %v885 = vpow.pop %v884
    %v886 = vmul.f32 %v823, 1.442695
    %v887 = vpow.pop %v886
    %v888 = vadd.f32 %v825, 1.0
    %v889 = vadd.f32 %v827, 1.0
    %v890 = vadd.f32 %v829, 1.0
    %v891 = vadd.f32 %v831, 1.0
    %v892 = vadd.f32 %v833, 1.0
    %v893 = vadd.f32 %v835, 1.0
    %v894 = vadd.f32 %v837, 1.0
    %v895 = vadd.f32 %v839, 1.0
    %v896 = vadd.f32 %v841, 1.0
    %v897 = vadd.f32 %v843, 1.0
    %v898 = vadd.f32 %v845, 1.0
    %v899 = vadd.f32 %v847, 1.0
    %v900 = vadd.f32 %v849, 1.0
    %v901 = vadd.f32 %v851, 1.0
    %v902 = vadd.f32 %v853, 1.0
    %v903 = vadd.f32 %v855, 1.0
    %v904 = vadd.f32 %v857, 1.0
    %v905 = vadd.f32 %v859, 1.0
    %v906 = vadd.f32 %v861, 1.0
    %v907 = vadd.f32 %v863, 1.0
    %v908 = vadd.f32 %v865, 1.0
    %v909 = vadd.f32 %v867, 1.0
    %v910 = vadd.f32 %v869, 1.0
    %v911 = vadd.f32 %v871, 1.0
    %v912 = vadd.f32 %v873, 1.0
    %v913 = vadd.f32 %v875, 1.0
    %v914 = vadd.f32 %v877, 1.0
    %v915 = vadd.f32 %v879, 1.0
    %v916 = vadd.f32 %v881, 1.0
    %v917 = vadd.f32 %v883, 1.0
    %v918 = vadd.f32 %v885, 1.0
    %v919 = vadd.f32 %v887, 1.0
    %v920 = vrcp.pop %v888
    %v921 = vmul.f32 1.0, %v920
    %v922 = vrcp.pop %v889
    %v923 = vmul.f32 1.0, %v922
    %v924 = vrcp.pop %v890
    %v925 = vmul.f32 1.0, %v924
    %v926 = vrcp.pop %v891
    %v927 = vmul.f32 1.0, %v926
    %v928 = vrcp.pop %v892
    %v929 = vmul.f32 1.0, %v928
    %v930 = vrcp.pop %v893
    %v931 = vmul.f32 1.0, %v930
    %v932 = vrcp.pop %v894
    %v933 = vmul.f32 1.0, %v932
    %v934 = vrcp.pop %v895
    %v935 = vmul.f32 1.0, %v934
    %v936 = vrcp.pop %v896
    %v937 = vmul.f32 1.0, %v936
    %v938 = vrcp.pop %v897
    %v939 = vmul.f32 1.0, %v938
    %v940 = vrcp.pop %v898
    %v941 = vmul.f32 1.0, %v940
    %v942 = vrcp.pop %v899
    %v943 = vmul.f32 1.0, %v942
    %v944 = vrcp.pop %v900
    %v945 = vmul.f32 1.0, %v944
    %v946 = vrcp.pop %v901
    %v947 = vmul.f32 1.0, %v946
    %v948 = vrcp.pop %v902
    %v949 = vmul.f32 1.0, %v948
    %v950 = vrcp.pop %v903
    %v951 = vmul.f32 1.0, %v950
    %v952 = vrcp.pop %v904
    %v953 = vmul.f32 1.0, %v952
    %v954 = vrcp.pop %v905
    %v955 = vmul.f32 1.0, %v954
    %v956 = vrcp.pop %v906
    %v957 = vmul.f32 1.0, %v956
    %v958 = vrcp.pop %v907
    %v959 = vmul.f32 1.0, %v958
    %v960 = vrcp.pop %v908
    %v961 = vmul.f32 1.0, %v960
    %v962 = vrcp.pop %v909
    %v963 = vmul.f32 1.0, %v962
    %v964 = vrcp.pop %v910
    %v965 = vmul.f32 1.0, %v964
    %v966 = vrcp.pop %v911
    %v967 = vmul.f32 1.0, %v966
    %v968 = vrcp.pop %v912
    %v969 = vmul.f32 1.0, %v968
    %v970 = vrcp.pop %v913
    %v971 = vmul.f32 1.0, %v970
    %v972 = vrcp.pop %v914
    %v973 = vmul.f32 1.0, %v972
    %v974 = vrcp.pop %v915
    %v975 = vmul.f32 1.0, %v974
    %v976 = vrcp.pop %v916
    %v977 = vmul.f32 1.0, %v976
    %v978 = vrcp.pop %v917
    %v979 = vmul.f32 1.0, %v978
    %v980 = vrcp.pop %v918
    %v981 = vmul.f32 1.0, %v980
    %v982 = vrcp.pop %v919
    %v983 = vmul.f32 1.0, %v982
    %v984 = vmul.f32 %v760, %v921
    %v985 = vmul.f32 %v761, %v923
    %v986 = vmul.f32 %v762, %v925
    %v987 = vmul.f32 %v763, %v927
    %v988 = vmul.f32 %v764, %v929
    %v989 = vmul.f32 %v765, %v931
    %v990 = vmul.f32 %v766, %v933
    %v991 = vmul.f32 %v767, %v935
    %v992 = vmul.f32 %v768, %v937
    %v993 = vmul.f32 %v769, %v939
    %v994 = vmul.f32 %v770, %v941
    %v995 = vmul.f32 %v771, %v943
    %v996 = vmul.f32 %v772, %v945
    %v997 = vmul.f32 %v773, %v947
    %v998 = vmul.f32 %v774, %v949
    %v999 = vmul.f32 %v775, %v951
    %v1000 = vmul.f32 %v776, %v953
    %v1001 = vmul.f32 %v777, %v955
    %v1002 = vmul.f32 %v778, %v957
    %v1003 = vmul.f32 %v779, %v959
    %v1004 = vmul.f32 %v780, %v961
    %v1005 = vmul.f32 %v781, %v963
    %v1006 = vmul.f32 %v782, %v965
    %v1007 = vmul.f32 %v783, %v967
    %v1008 = vmul.f32 %v784, %v969
    %v1009 = vmul.f32 %v785, %v971
    %v1010 = vmul.f32 %v786, %v973
    %v1011 = vmul.f32 %v787, %v975
    %v1012 = vmul.f32 %v788, %v977
    %v1013 = vmul.f32 %v789, %v979
    %v1014 = vmul.f32 %v790, %v981
    %v1015 = vmul.f32 %v791, %v983
    %v1016 = vld [vmem:[#allocation3] sm:$0xff]
    %v1017 = vld [vmem:[#allocation3 + $0x8] sm:$0xff]
    %v1018 = vld [vmem:[#allocation3 + $0x10] sm:$0xff]
    %v1019 = vld [vmem:[#allocation3 + $0x18] sm:$0xff]
    %v1020 = vld [vmem:[#allocation3 + $0x20] sm:$0xff]
    %v1021 = vld [vmem:[#allocation3 + $0x28] sm:$0xff]
    %v1022 = vld [vmem:[#allocation3 + $0x30] sm:$0xff]
    %v1023 = vld [vmem:[#allocation3 + $0x38] sm:$0xff]
    %v1024 = vld [vmem:[#allocation3 + $0x40] sm:$0xff]
    %v1025 = vld [vmem:[#allocation3 + $0x48] sm:$0xff]
    %v1026 = vld [vmem:[#allocation3 + $0x50] sm:$0xff]
    %v1027 = vld [vmem:[#allocation3 + $0x58] sm:$0xff]
    %v1028 = vld [vmem:[#allocation3 + $0x60] sm:$0xff]
    %v1029 = vld [vmem:[#allocation3 + $0x68] sm:$0xff]
    %v1030 = vld [vmem:[#allocation3 + $0x70] sm:$0xff]
    %v1031 = vld [vmem:[#allocation3 + $0x78] sm:$0xff]
    %v1032 = vld [vmem:[#allocation3 + $0x80] sm:$0xff]
    %v1033 = vld [vmem:[#allocation3 + $0x88] sm:$0xff]
    %v1034 = vld [vmem:[#allocation3 + $0x90] sm:$0xff]
    %v1035 = vld [vmem:[#allocation3 + $0x98] sm:$0xff]
    %v1036 = vld [vmem:[#allocation3 + $0xa0] sm:$0xff]
    %v1037 = vld [vmem:[#allocation3 + $0xa8] sm:$0xff]
    %v1038 = vld [vmem:[#allocation3 + $0xb0] sm:$0xff]
    %v1039 = vld [vmem:[#allocation3 + $0xb8] sm:$0xff]
    %v1040 = vld [vmem:[#allocation3 + $0xc0] sm:$0xff]
    %v1041 = vld [vmem:[#allocation3 + $0xc8] sm:$0xff]
    %v1042 = vld [vmem:[#allocation3 + $0xd0] sm:$0xff]
    %v1043 = vld [vmem:[#allocation3 + $0xd8] sm:$0xff]
    %v1044 = vld [vmem:[#allocation3 + $0xe0] sm:$0xff]
    %v1045 = vld [vmem:[#allocation3 + $0xe8] sm:$0xff]
    %v1046 = vld [vmem:[#allocation3 + $0xf0] sm:$0xff]
    %v1047 = vld [vmem:[#allocation3 + $0xf8] sm:$0xff]
    %v1048 = vmul.f32 %v984, %v1016
    %v1049 = vmul.f32 %v985, %v1017
    %v1050 = vmul.f32 %v986, %v1018
    %v1051 = vmul.f32 %v987, %v1019
    %v1052 = vmul.f32 %v988, %v1020
    %v1053 = vmul.f32 %v989, %v1021
    %v1054 = vmul.f32 %v990, %v1022
    %v1055 = vmul.f32 %v991, %v1023
    %v1056 = vmul.f32 %v992, %v1024
    %v1057 = vmul.f32 %v993, %v1025
    %v1058 = vmul.f32 %v994, %v1026
    %v1059 = vmul.f32 %v995, %v1027
    %v1060 = vmul.f32 %v996, %v1028
    %v1061 = vmul.f32 %v997, %v1029
    %v1062 = vmul.f32 %v998, %v1030
    %v1063 = vmul.f32 %v999, %v1031
    %v1064 = vmul.f32 %v1000, %v1032
    %v1065 = vmul.f32 %v1001, %v1033
    %v1066 = vmul.f32 %v1002, %v1034
    %v1067 = vmul.f32 %v1003, %v1035
    %v1068 = vmul.f32 %v1004, %v1036
    %v1069 = vmul.f32 %v1005, %v1037
    %v1070 = vmul.f32 %v1006, %v1038
    %v1071 = vmul.f32 %v1007, %v1039
    %v1072 = vmul.f32 %v1008, %v1040
    %v1073 = vmul.f32 %v1009, %v1041
    %v1074 = vmul.f32 %v1010, %v1042
    %v1075 = vmul.f32 %v1011, %v1043
    %v1076 = vmul.f32 %v1012, %v1044
    %v1077 = vmul.f32 %v1013, %v1045
    %v1078 = vmul.f32 %v1014, %v1046
    %v1079 = vmul.f32 %v1015, %v1047
    %v1080 = vpack.c.bf16 %v1050, %v1048
    %v1081 = vpack.c.bf16 %v1051, %v1049
    %v1082 = vpack.c.bf16 %v1054, %v1052
    %v1083 = vpack.c.bf16 %v1055, %v1053
    %v1084 = vpack.c.bf16 %v1058, %v1056
    %v1085 = vpack.c.bf16 %v1059, %v1057
    %v1086 = vpack.c.bf16 %v1062, %v1060
    %v1087 = vpack.c.bf16 %v1063, %v1061
    %v1088 = vpack.c.bf16 %v1066, %v1064
    %v1089 = vpack.c.bf16 %v1067, %v1065
    %v1090 = vpack.c.bf16 %v1070, %v1068
    %v1091 = vpack.c.bf16 %v1071, %v1069
    %v1092 = vpack.c.bf16 %v1074, %v1072
    %v1093 = vpack.c.bf16 %v1075, %v1073
    %v1094 = vpack.c.bf16 %v1078, %v1076
    %v1095 = vpack.c.bf16 %v1079, %v1077
    %v1112 = vunpack.c.l.b16 %v1080
    %v1113 = vunpack.c.l.b16 %v1081
    %v1114 = vunpack.c.h.b16 %v1080
    %v1115 = vunpack.c.h.b16 %v1081
    %v1116 = vunpack.c.l.b16 %v1082
    %v1117 = vunpack.c.l.b16 %v1083
    %v1118 = vunpack.c.h.b16 %v1082
    %v1119 = vunpack.c.h.b16 %v1083
    %v1120 = vunpack.c.l.b16 %v1084
    %v1121 = vunpack.c.l.b16 %v1085
    %v1122 = vunpack.c.h.b16 %v1084
    %v1123 = vunpack.c.h.b16 %v1085
    %v1124 = vunpack.c.l.b16 %v1086
    %v1125 = vunpack.c.l.b16 %v1087
    %v1126 = vunpack.c.h.b16 %v1086
    %v1127 = vunpack.c.h.b16 %v1087
    %v1128 = vunpack.c.l.b16 %v1088
    %v1129 = vunpack.c.l.b16 %v1089
    %v1130 = vunpack.c.h.b16 %v1088
    %v1131 = vunpack.c.h.b16 %v1089
    %v1132 = vunpack.c.l.b16 %v1090
    %v1133 = vunpack.c.l.b16 %v1091
    %v1134 = vunpack.c.h.b16 %v1090
    %v1135 = vunpack.c.h.b16 %v1091
    %v1136 = vunpack.c.l.b16 %v1092
    %v1137 = vunpack.c.l.b16 %v1093
    %v1138 = vunpack.c.h.b16 %v1092
    %v1139 = vunpack.c.h.b16 %v1093
    %v1140 = vunpack.c.l.b16 %v1094
    %v1141 = vunpack.c.l.b16 %v1095
    %v1142 = vunpack.c.h.b16 %v1094
    %v1143 = vunpack.c.h.b16 %v1095
    %v1144 = vpack.c.b16 %v1113, %v1112
    %v1145 = vpack.c.b16 %v1115, %v1114
    %v1146 = vpack.c.b16 %v1117, %v1116
    %v1147 = vpack.c.b16 %v1119, %v1118
    %v1148 = vpack.c.b16 %v1121, %v1120
    %v1149 = vpack.c.b16 %v1123, %v1122
    %v1150 = vpack.c.b16 %v1125, %v1124
    %v1151 = vpack.c.b16 %v1127, %v1126
    %v1152 = vpack.c.b16 %v1129, %v1128
    %v1153 = vpack.c.b16 %v1131, %v1130
    %v1154 = vpack.c.b16 %v1133, %v1132
    %v1155 = vpack.c.b16 %v1135, %v1134
    %v1156 = vpack.c.b16 %v1137, %v1136
    %v1157 = vpack.c.b16 %v1139, %v1138
    %v1158 = vpack.c.b16 %v1141, %v1140
    %v1159 = vpack.c.b16 %v1143, %v1142
    %1176 = vst [vmem:[%s3] sm:$0xff] %v1144
    %1177 = vst [vmem:[%s3 + $0x8] sm:$0xff] %v1145
    %1178 = vst [vmem:[%s3 + $0x10] sm:$0xff] %v1146
    %1179 = vst [vmem:[%s3 + $0x18] sm:$0xff] %v1147
    %1180 = vst [vmem:[%s3 + $0x20] sm:$0xff] %v1148
    %1181 = vst [vmem:[%s3 + $0x28] sm:$0xff] %v1149
    %1182 = vst [vmem:[%s3 + $0x30] sm:$0xff] %v1150
    %1183 = vst [vmem:[%s3 + $0x38] sm:$0xff] %v1151
    %1184 = vst [vmem:[%s3 + $0x40] sm:$0xff] %v1152
    %1185 = vst [vmem:[%s3 + $0x48] sm:$0xff] %v1153
    %1186 = vst [vmem:[%s3 + $0x50] sm:$0xff] %v1154
    %1187 = vst [vmem:[%s3 + $0x58] sm:$0xff] %v1155
    %1188 = vst [vmem:[%s3 + $0x60] sm:$0xff] %v1156
    %1189 = vst [vmem:[%s3 + $0x68] sm:$0xff] %v1157
    %1190 = vst [vmem:[%s3 + $0x70] sm:$0xff] %v1158
    %1191 = vst [vmem:[%s3 + $0x78] sm:$0xff] %v1159
  $region21: #{_device_forward.34} parent=0 // pred_fallthru
    _
  // Predicated region
  $region22: #{_device_forward.34} parent=0 // pred_check
    _
  $region23: #{_device_forward.34} parent=0 // pred_check_branch
    %1193 = sbr.rel (0) target = $region25
  $region24: #{_device_forward.34} parent=0 // pred_region
    _
  $region25: #{_device_forward.34} parent=0 // pred_fallthru
    _
  // Predicated region
  $region26: #{_device_forward.34} parent=0 // pred_check
    _
  $region27: #{_device_forward.34} parent=0 // pred_check_branch
    %1195 = sbr.rel (0) target = $region29
  $region28: #{_device_forward.34} parent=0 // pred_region
    _
  $region29: #{_device_forward.34} parent=0 // pred_fallthru
    _

// kernel: _device_forward.45
$region0: #{_device_forward.45}
  #allocation0 [shape = 'u32[]', space=smem, size = 0x4, offset = 0x4, fixed_abs, tag = 'smem constant byte address 0x4 - core index']
  #allocation1 [shape = 'u32[144,128]{1,0:T(1,128)}', space=vmem, size = 0x12000, scoped, tag = 'internal scratch']
  %s0 = inlined_call_operand.vmem [shape: f32[2,64,64], index: 0, kind: input, shape index: {}]
  %s1 = inlined_call_operand.vmem [shape: f32[2,1,64], index: 1, kind: input, shape index: {}]
  %s2 = inlined_call_operand.vmem [shape: f32[2,1,64], index: 2, kind: input, shape index: {}]
  %s3 = inlined_call_operand.vmem [shape: bf16[2,64,64], index: 3, kind: output, shape index: {}]
  %s4 = sld [smem:[#allocation0]]
  $region45: #{_device_forward.45} parent=0
    _
  %s6 = ssub.s32 1, %s4
  %s7 = scalar_select 0, %s6, %s4
  loop: start=0, step=1, limit=4
  $region2: #{_device_forward.45} parent=0 // loop_pre_header
    _
  $region3: #{_device_forward.45} parent=0 // loop_header
    %s9 = sphi 0, %s13
    %p10 = scmp.ge.s32.totalorder %s9, 4
    %s16 = sphi 0, %s28
    %s17 = sphi 0, %s24
    %s18 = sphi 0, %s16
    %s19 = sphi 0, %s17
    %s20 = sphi 0, %s18
    %s21 = sphi 0, %s19
    %s33 = sphi 0, %s35
    %s36 = sphi 0, %s33
    %s37 = sphi 0, %s36
    %s53 = sphi 0, %s37
    %s59 = sphi 0, %s61
    %s62 = sphi 0, %s59
    %s63 = sphi 0, %s62
    %s79 = sphi 0, %s63
    %s85 = sphi 0, %s87
    %s88 = sphi 0, %s85
    %s89 = sphi 0, %s88
    %s105 = sphi 0, %s89
    %s113 = sphi 0, %s115
    %s116 = sphi 0, %s113
    %s117 = sphi 0, %s116
    %s133 = sphi 0, %s117
  $region4: #{_device_forward.45} parent=0 // loop_header_branch
    %12 = sbr.rel (%p10) target = $region8
  $region5: #{_device_forward.45} parent=0 // loop_body
    %s14 = ssub.s32 %s9, 1
    %s15 = ssub.s32 %s9, 2
    %s22 = sadd.s32 1, %s17
    %p23 = scmp.ge.s32.totalorder %s22, 1
    %s24 = scalar_select %p23, 0, %s22
    %s25 = sadd.s32 1, %s16
    %s26 = scalar_select %p23, %s25, %s16
    %p27 = scmp.ge.s32.totalorder %s26, 2
    %s28 = scalar_select %p27, 0, %s26
    %s29 = ssub.s32 %s16, %s28
    %s30 = ssub.s32 %s17, %s24
    %s31 = sor.u32 %s29, %s30
    %p32 = scmp.eq.s32.totalorder %s31, 0
    %s34 = sadd.s32 %s33, 1
    %s35 = scalar_select %p32, %s33, %s34
    %p38 = pneg %p32
    %p39 = scmp.eq.s32.totalorder %s9, 1
    %p40 = por %p38, %p39
    %p41 = scmp.ne.s32.totalorder %s33, %s36
    %p42 = scmp.eq.s32.totalorder %s9, 0
    %p43 = por %p41, %p42
    %p44 = scmp.ne.s32.totalorder %s33, %s36
    %p45 = scmp.eq.s32.totalorder %s14, 1
    %p46 = por %p44, %p45
    %p47 = scmp.ne.s32.totalorder %s36, %s37
    %p48 = scmp.eq.s32.totalorder %s14, 0
    %p49 = por %p47, %p48
    %p50 = scmp.ne.s32.totalorder %s36, %s37
    %p51 = scmp.eq.s32.totalorder %s15, 1
    %p52 = por %p50, %p51
    %p54 = scmp.ne.s32.totalorder %s37, %s53
    %p55 = scmp.eq.s32.totalorder %s15, 0
    %p56 = por %p54, %p55
    %s57 = ssub.s32 %s16, %s28
    %p58 = scmp.eq.s32.totalorder %s57, 0
    %s60 = sadd.s32 %s59, 1
    %s61 = scalar_select %p58, %s59, %s60
    %p64 = pneg %p58
    %p65 = scmp.eq.s32.totalorder %s9, 1
    %p66 = por %p64, %p65
    %p67 = scmp.ne.s32.totalorder %s59, %s62
    %p68 = scmp.eq.s32.totalorder %s9, 0
    %p69 = por %p67, %p68
    %p70 = scmp.ne.s32.totalorder %s59, %s62
    %p71 = scmp.eq.s32.totalorder %s14, 1
    %p72 = por %p70, %p71
    %p73 = scmp.ne.s32.totalorder %s62, %s63
    %p74 = scmp.eq.s32.totalorder %s14, 0
    %p75 = por %p73, %p74
    %p76 = scmp.ne.s32.totalorder %s62, %s63
    %p77 = scmp.eq.s32.totalorder %s15, 1
    %p78 = por %p76, %p77
    %p80 = scmp.ne.s32.totalorder %s63, %s79
    %p81 = scmp.eq.s32.totalorder %s15, 0
    %p82 = por %p80, %p81
    %s83 = ssub.s32 %s16, %s28
    %p84 = scmp.eq.s32.totalorder %s83, 0
    %s86 = sadd.s32 %s85, 1
    %s87 = scalar_select %p84, %s85, %s86
    %p90 = pneg %p84
    %p91 = scmp.eq.s32.totalorder %s9, 1
    %p92 = por %p90, %p91
    %p93 = scmp.ne.s32.totalorder %s85, %s88
    %p94 = scmp.eq.s32.totalorder %s9, 0
    %p95 = por %p93, %p94
    %p96 = scmp.ne.s32.totalorder %s85, %s88
    %p97 = scmp.eq.s32.totalorder %s14, 1
    %p98 = por %p96, %p97
    %p99 = scmp.ne.s32.totalorder %s88, %s89
    %p100 = scmp.eq.s32.totalorder %s14, 0
    %p101 = por %p99, %p100
    %p102 = scmp.ne.s32.totalorder %s88, %s89
    %p103 = scmp.eq.s32.totalorder %s15, 1
    %p104 = por %p102, %p103
    %p106 = scmp.ne.s32.totalorder %s89, %s105
    %p107 = scmp.eq.s32.totalorder %s15, 0
    %p108 = por %p106, %p107
    %s109 = ssub.s32 %s16, %s28
    %s110 = ssub.s32 %s17, %s24
    %s111 = sor.u32 %s109, %s110
    %p112 = scmp.eq.s32.totalorder %s111, 0
    %s114 = sadd.s32 %s113, 1
    %s115 = scalar_select %p112, %s113, %s114
    %p118 = pneg %p112
    %p119 = scmp.eq.s32.totalorder %s9, 1
    %p120 = por %p118, %p119
    %p121 = scmp.ne.s32.totalorder %s113, %s116
    %p122 = scmp.eq.s32.totalorder %s9, 0
    %p123 = por %p121, %p122
    %p124 = scmp.ne.s32.totalorder %s113, %s116
    %p125 = scmp.eq.s32.totalorder %s14, 1
    %p126 = por %p124, %p125
    %p127 = scmp.ne.s32.totalorder %s116, %s117
    %p128 = scmp.eq.s32.totalorder %s14, 0
    %p129 = por %p127, %p128
    %p130 = scmp.ne.s32.totalorder %s116, %s117
    %p131 = scmp.eq.s32.totalorder %s15, 1
    %p132 = por %p130, %p131
    %p134 = scmp.ne.s32.totalorder %s117, %s133
    %p135 = scmp.eq.s32.totalorder %s15, 0
    %p136 = por %p134, %p135
    %p137 = scmp.le.s32.totalorder 1, %s9
    %p138 = scmp.lt.s32.totalorder %s9, 3
    %p139 = pnand %p137, %p138
    %p140 = pneg %p139
    // Predicated region
    $region9: #{_device_forward.45} parent=5 // pred_check
      _
    $region10: #{_device_forward.45} parent=5 // pred_check_branch
      %142 = sbr.rel (%p139) target = $region12
    $region11: #{_device_forward.45} parent=5 // pred_region
      %s143 = ssub.s32 %s9, 1
    $region12: #{_device_forward.45} parent=5 // pred_fallthru
      _
    %p144 = scmp.lt.s32.totalorder %s9, 2
    // Predicated region
    $region13: #{_device_forward.45} parent=5 // pred_check
      %p145 = pneg %p144
    $region14: #{_device_forward.45} parent=5 // pred_check_branch
      %147 = sbr.rel (%p145) target = $region16
    $region15: #{_device_forward.45} parent=5 // pred_region
      // Predicated region
      $region17: #{_device_forward.45} parent=15 // pred_check
        %p148 = pneg %p43
      $region18: #{_device_forward.45} parent=15 // pred_check_branch
        %150 = sbr.rel (%p148) target = $region20
      $region19: #{_device_forward.45} parent=15 // pred_region
        %s151 = smul.u32 8, %s17
        %p152 = scmp.lt.s32.totalorder %s16, 1
        %s153 = scalar_select %p152, %s16, 1
        %p154 = scmp.lt.s32.totalorder %s151, 7
        %s155 = scalar_select %p154, %s151, 7
        %s156 = smul.addr %s153, 8
        %s157 = sadd.s32 %s155, %s156
        %s158 = smul.addr %s157, 8
        %s159 = scalar_lea.vmem %s0, %s158
        %s160 = smul.u32 8, %s17
      $region20: #{_device_forward.45} parent=15 // pred_fallthru
        _
      // Predicated region
      $region21: #{_device_forward.45} parent=15 // pred_check
        %p161 = pneg %p69
      $region22: #{_device_forward.45} parent=15 // pred_check_branch
        %163 = sbr.rel (%p161) target = $region24
      $region23: #{_device_forward.45} parent=15 // pred_region
        %p164 = scmp.lt.s32.totalorder %s16, 1
        %s165 = scalar_select %p164, %s16, 1
        %s166 = scalar_lea.vmem %s1, %s165
      $region24: #{_device_forward.45} parent=15 // pred_fallthru
        _
      // Predicated region
      $region25: #{_device_forward.45} parent=15 // pred_check
        %p167 = pneg %p95
      $region26: #{_device_forward.45} parent=15 // pred_check_branch
        %169 = sbr.rel (%p167) target = $region28
      $region27: #{_device_forward.45} parent=15 // pred_region
        %p170 = scmp.lt.s32.totalorder %s16, 1
        %s171 = scalar_select %p170, %s16, 1
        %s172 = scalar_lea.vmem %s2, %s171
      $region28: #{_device_forward.45} parent=15 // pred_fallthru
        _
    $region16: #{_device_forward.45} parent=5 // pred_fallthru
      _
    %p173 = scmp.le.s32.totalorder 1, %s9
    %p174 = scmp.lt.s32.totalorder %s9, 3
    %p175 = pnand %p173, %p174
    %p176 = pneg %p175
    // Predicated region
    $region29: #{_device_forward.45} parent=5 // pred_check
      _
    $region30: #{_device_forward.45} parent=5 // pred_check_branch
      %178 = sbr.rel (%p175) target = $region32
    $region31: #{_device_forward.45} parent=5 // pred_region
      %s179 = ssub.s32 %s9, 1
      %s180 = smul.u32 8, %s19
      %p181 = scmp.lt.s32.totalorder %s18, 1
      %s182 = scalar_select %p181, %s18, 1
      %p183 = scmp.lt.s32.totalorder %s180, 7
      %s184 = scalar_select %p183, %s180, 7
      %s185 = smul.addr %s182, 8
      %s186 = sadd.s32 %s184, %s185
      %s187 = smul.addr %s186, 8
      %s188 = scalar_lea.vmem %s0, %s187
      %p189 = pneg %p49
      %p190 = pneg %p46
      %p191 = scmp.lt.s32.totalorder %s18, 1
      %s192 = scalar_select %p191, %s18, 1
      %s193 = scalar_lea.vmem %s1, %s192
      %p194 = pneg %p75
      %p195 = pneg %p72
      %p196 = scmp.lt.s32.totalorder %s18, 1
      %s197 = scalar_select %p196, %s18, 1
      %s198 = scalar_lea.vmem %s2, %s197
      %p199 = pneg %p101
      %p200 = pneg %p98
      %p201 = pneg %p129
      %p202 = pneg %p126
      %s203 = smul.u32 8, %s19
      %p204 = scmp.lt.s32.totalorder %s18, 1
      %s205 = scalar_select %p204, %s18, 1
      %p206 = scmp.lt.s32.totalorder %s203, 7
      %s207 = scalar_select %p206, %s203, 7
      %s208 = smul.addr %s205, 8
      %s209 = sadd.s32 %s207, %s208
      %s210 = smul.addr %s209, 4
      %s211 = scalar_lea.vmem %s3, %s210
      %s212 = smul.u32 8, %s19
      %p213 = scmp.lt.s32.totalorder %s18, 1
      %s214 = scalar_select %p213, %s18, 1
      %p215 = scmp.lt.s32.totalorder %s212, 7
      %s216 = scalar_select %p215, %s212, 7
      %s217 = smul.addr %s214, 8
      %s218 = sadd.s32 %s216, %s217
      %s219 = smul.addr %s218, 8
      %s220 = scalar_lea.vmem %s0, %s219
      %s221 = smul.u32 8, %s19
      %p222 = scmp.lt.s32.totalorder %s18, 1
      %s223 = scalar_select %p222, %s18, 1
      %s224 = scalar_lea.vmem %s1, %s223
      %p225 = scmp.lt.s32.totalorder %s18, 1
      %s226 = scalar_select %p225, %s18, 1
      %s227 = scalar_lea.vmem %s2, %s226
      %s228 = smul.u32 8, %s19
      %p229 = scmp.lt.s32.totalorder %s18, 1
      %s230 = scalar_select %p229, %s18, 1
      %p231 = scmp.lt.s32.totalorder %s228, 7
      %s232 = scalar_select %p231, %s228, 7
      %s233 = smul.addr %s230, 8
      %s234 = sadd.s32 %s232, %s233
      %s235 = smul.addr %s234, 4
      %s236 = scalar_lea.vmem %s3, %s235
      %s237 = smul.u32 8, %s19
      %v238 = vld [vmem:[%s220] sm:$0xff]
      %v239 = vld [vmem:[%s220 + $0x8] sm:$0xff]
      %v240 = vld [vmem:[%s220 + $0x10] sm:$0xff]
      %v241 = vld [vmem:[%s220 + $0x18] sm:$0xff]
      %v242 = vld [vmem:[%s220 + $0x20] sm:$0xff]
      %v243 = vld [vmem:[%s220 + $0x28] sm:$0xff]
      %v244 = vld [vmem:[%s220 + $0x30] sm:$0xff]
      %v245 = vld [vmem:[%s220 + $0x38] sm:$0xff]
      %vm246 = vcmask 523264
      %v247 = vsel %vm246, %v238, 0.0
      %248 = vadd.xlane.f32.xlu0 %v247
      %v249 = vpop.xlane.xlu0 %248
      %v250 = vsel %vm246, %v239, 0.0
      %251 = vadd.xlane.f32.xlu0 %v250
      %v252 = vpop.xlane.xlu0 %251
      %v253 = vsel %vm246, %v240, 0.0
      %254 = vadd.xlane.f32.xlu0 %v253
      %v255 = vpop.xlane.xlu0 %254
      %v256 = vsel %vm246, %v241, 0.0
      %257 = vadd.xlane.f32.xlu0 %v256
      %v258 = vpop.xlane.xlu0 %257
      %v259 = vsel %vm246, %v242, 0.0
      %260 = vadd.xlane.f32.xlu0 %v259
      %v261 = vpop.xlane.xlu0 %260
      %v262 = vsel %vm246, %v243, 0.0
      %263 = vadd.xlane.f32.xlu0 %v262
      %v264 = vpop.xlane.xlu0 %263
      %v265 = vsel %vm246, %v244, 0.0
      %266 = vadd.xlane.f32.xlu0 %v265
      %v267 = vpop.xlane.xlu0 %266
      %v268 = vsel %vm246, %v245, 0.0
      %269 = vadd.xlane.f32.xlu0 %v268
      %v270 = vpop.xlane.xlu0 %269
      %v271 = vrcp.pop 64.0
      %v272 = vmul.f32 %v249, %v271
      %v273 = vmul.f32 %v252, %v271
      %v274 = vmul.f32 %v255, %v271
      %v275 = vmul.f32 %v258, %v271
      %v276 = vmul.f32 %v261, %v271
      %v277 = vmul.f32 %v264, %v271
      %v278 = vmul.f32 %v267, %v271
      %v279 = vmul.f32 %v270, %v271
      %v280 = vsub.f32 %v238, %v272
      %v281 = vsub.f32 %v239, %v273
      %v282 = vsub.f32 %v240, %v274
      %v283 = vsub.f32 %v241, %v275
      %v284 = vsub.f32 %v242, %v276
      %v285 = vsub.f32 %v243, %v277
      %v286 = vsub.f32 %v244, %v278
      %v287 = vsub.f32 %v245, %v279
      %v288 = vmul.f32 %v280, %v280
      %v289 = vmul.f32 %v281, %v281
      %v290 = vmul.f32 %v282, %v282
      %v291 = vmul.f32 %v283, %v283
      %v292 = vmul.f32 %v284, %v284
      %v293 = vmul.f32 %v285, %v285
      %v294 = vmul.f32 %v286, %v286
      %v295 = vmul.f32 %v287, %v287
      %v296 = vsel %vm246, %v288, 0.0
      %297 = vadd.xlane.f32.xlu0 %v296
      %v298 = vpop.xlane.xlu0 %297
      %v299 = vsel %vm246, %v289, 0.0
      %300 = vadd.xlane.f32.xlu0 %v299
      %v301 = vpop.xlane.xlu0 %300
      %v302 = vsel %vm246, %v290, 0.0
      %303 = vadd.xlane.f32.xlu0 %v302
      %v304 = vpop.xlane.xlu0 %303
      %v305 = vsel %vm246, %v291, 0.0
      %306 = vadd.xlane.f32.xlu0 %v305
      %v307 = vpop.xlane.xlu0 %306
      %v308 = vsel %vm246, %v292, 0.0
      %309 = vadd.xlane.f32.xlu0 %v308
      %v310 = vpop.xlane.xlu0 %309
      %v311 = vsel %vm246, %v293, 0.0
      %312 = vadd.xlane.f32.xlu0 %v311
      %v313 = vpop.xlane.xlu0 %312
      %v314 = vsel %vm246, %v294, 0.0
      %315 = vadd.xlane.f32.xlu0 %v314
      %v316 = vpop.xlane.xlu0 %315
      %v317 = vsel %vm246, %v295, 0.0
      %318 = vadd.xlane.f32.xlu0 %v317
      %v319 = vpop.xlane.xlu0 %318
      %v320 = vmul.f32 %v298, %v271
      %v321 = vmul.f32 %v301, %v271
      %v322 = vmul.f32 %v304, %v271
      %v323 = vmul.f32 %v307, %v271
      %v324 = vmul.f32 %v310, %v271
      %v325 = vmul.f32 %v313, %v271
      %v326 = vmul.f32 %v316, %v271
      %v327 = vmul.f32 %v319, %v271
      %v328 = vadd.f32 %v320, 1e-06
      %v329 = vadd.f32 %v321, 1e-06
      %v330 = vadd.f32 %v322, 1e-06
      %v331 = vadd.f32 %v323, 1e-06
      %v332 = vadd.f32 %v324, 1e-06
      %v333 = vadd.f32 %v325, 1e-06
      %v334 = vadd.f32 %v326, 1e-06
      %v335 = vadd.f32 %v327, 1e-06
      %v336 = vrsqrt.pop %v328
      %v337 = vrsqrt.pop %v329
      %v338 = vrsqrt.pop %v330
      %v339 = vrsqrt.pop %v331
      %v340 = vrsqrt.pop %v332
      %v341 = vrsqrt.pop %v333
      %v342 = vrsqrt.pop %v334
      %v343 = vrsqrt.pop %v335
      %v344 = vmul.f32 %v280, %v336
      %v345 = vmul.f32 %v281, %v337
      %v346 = vmul.f32 %v282, %v338
      %v347 = vmul.f32 %v283, %v339
      %v348 = vmul.f32 %v284, %v340
      %v349 = vmul.f32 %v285, %v341
      %v350 = vmul.f32 %v286, %v342
      %v351 = vmul.f32 %v287, %v343
      %v352 = vld [vmem:[%s224] sm:$0x1]
      %v353 = vadd.f32 %v352, 1.0
      %v355 = vlaneseq
      %v356 = vshrl.u32 %v355, 7
      %v357 = vsub.s32 0, %v356
      %v358 = vrot.slane %v353, %v357
      %v360 = vmul.f32 %v344, %v358
      %v361 = vmul.f32 %v345, %v358
      %v362 = vmul.f32 %v346, %v358
      %v363 = vmul.f32 %v347, %v358
      %v364 = vmul.f32 %v348, %v358
      %v365 = vmul.f32 %v349, %v358
      %v366 = vmul.f32 %v350, %v358
      %v367 = vmul.f32 %v351, %v358
      %v368 = vld [vmem:[%s227] sm:$0x1]
      %v370 = vlaneseq
      %v371 = vshrl.u32 %v370, 7
      %v372 = vsub.s32 0, %v371
      %v373 = vrot.slane %v368, %v372
      %v375 = vadd.f32 %v360, %v373
      %v376 = vadd.f32 %v361, %v373
      %v377 = vadd.f32 %v362, %v373
      %v378 = vadd.f32 %v363, %v373
      %v379 = vadd.f32 %v364, %v373
      %v380 = vadd.f32 %v365, %v373
      %v381 = vadd.f32 %v366, %v373
      %v382 = vadd.f32 %v367, %v373
      %v383 = vpack.c.bf16 %v376, %v375
      %v384 = vpack.c.bf16 %v378, %v377
      %v385 = vpack.c.bf16 %v380, %v379
      %v386 = vpack.c.bf16 %v382, %v381
      %v391 = vunpack.c.l.b16 %v383
      %v392 = vunpack.c.h.b16 %v383
      %v393 = vunpack.c.l.b16 %v384
      %v394 = vunpack.c.h.b16 %v384
      %v395 = vunpack.c.l.b16 %v385
      %v396 = vunpack.c.h.b16 %v385
      %v397 = vunpack.c.l.b16 %v386
      %v398 = vunpack.c.h.b16 %v386
      %v399 = vpack.c.b16 %v391, %v391
      %v400 = vpack.c.b16 %v392, %v392
      %v401 = vpack.c.b16 %v393, %v393
      %v402 = vpack.c.b16 %v394, %v394
      %v403 = vpack.c.b16 %v395, %v395
      %v404 = vpack.c.b16 %v396, %v396
      %v405 = vpack.c.b16 %v397, %v397
      %v406 = vpack.c.b16 %v398, %v398
      %vm415 = vcmask 519168
      %416 = vst.msk [vmem:[%s236] sm:$0xf] %vm415, %v399
      %417 = vst.msk [vmem:[%s236 + $0x4] sm:$0xf] %vm415, %v400
      %418 = vst.msk [vmem:[%s236 + $0x8] sm:$0xf] %vm415, %v401
      %419 = vst.msk [vmem:[%s236 + $0xc] sm:$0xf] %vm415, %v402
      %420 = vst.msk [vmem:[%s236 + $0x10] sm:$0xf] %vm415, %v403
      %421 = vst.msk [vmem:[%s236 + $0x14] sm:$0xf] %vm415, %v404
      %422 = vst.msk [vmem:[%s236 + $0x18] sm:$0xf] %vm415, %v405
      %423 = vst.msk [vmem:[%s236 + $0x1c] sm:$0xf] %vm415, %v406
      %s424 = smul.u32 8, %s19
      %p425 = scmp.lt.s32.totalorder %s18, 1
      %s426 = scalar_select %p425, %s18, 1
      %p427 = scmp.lt.s32.totalorder %s424, 7
      %s428 = scalar_select %p427, %s424, 7
      %s429 = smul.addr %s426, 8
      %s430 = sadd.s32 %s428, %s429
      %s431 = smul.addr %s430, 4
      %s432 = scalar_lea.vmem %s3, %s431
      // Predicated region
      $region33: #{_device_forward.45} parent=31 // pred_check
        %p433 = pneg %p126
      $region34: #{_device_forward.45} parent=31 // pred_check_branch
        %435 = sbr.rel (%p433) target = $region36
      $region35: #{_device_forward.45} parent=31 // pred_region
        %s436 = smul.u32 8, %s19
      $region36: #{_device_forward.45} parent=31 // pred_fallthru
        _
    $region32: #{_device_forward.45} parent=5 // pred_fallthru
      _
    %p437 = scmp.le.s32.totalorder 2, %s9
    // Predicated region
    $region37: #{_device_forward.45} parent=5 // pred_check
      %p438 = pneg %p437
    $region38: #{_device_forward.45} parent=5 // pred_check_branch
      %440 = sbr.rel (%p438) target = $region40
    $region39: #{_device_forward.45} parent=5 // pred_region
      %s441 = ssub.s32 %s9, 2
      // Predicated region
      $region41: #{_device_forward.45} parent=39 // pred_check
        %p442 = pneg %p132
      $region42: #{_device_forward.45} parent=39 // pred_check_branch
        %444 = sbr.rel (%p442) target = $region44
      $region43: #{_device_forward.45} parent=39 // pred_region
        %s445 = smul.u32 8, %s21
        %p446 = scmp.lt.s32.totalorder %s20, 1
        %s447 = scalar_select %p446, %s20, 1
        %p448 = scmp.lt.s32.totalorder %s445, 7
        %s449 = scalar_select %p448, %s445, 7
        %s450 = smul.addr %s447, 8
        %s451 = sadd.s32 %s449, %s450
        %s452 = smul.addr %s451, 4
        %s453 = scalar_lea.vmem %s3, %s452
      $region44: #{_device_forward.45} parent=39 // pred_fallthru
        _
    $region40: #{_device_forward.45} parent=5 // pred_fallthru
      _
  $region6: #{_device_forward.45} parent=0 // loop_footer
    %s13 = sadd.s32 1, %s9
  $region7: #{_device_forward.45} parent=0 // loop_footer_branch
    %8 = sbr.rel target = $region3
  $region8: #{_device_forward.45} parent=0 // loop_exit
    _

// kernel: _device_forward.47
$region0: #{_device_forward.47}
  #allocation0 [shape = 'u32[]', space=smem, size = 0x4, offset = 0x4, fixed_abs, tag = 'smem constant byte address 0x4 - core index']
  #allocation1 [shape = 'u32[144,128]{1,0:T(1,128)}', space=vmem, size = 0x12000, scoped, tag = 'internal scratch']
  #allocation2 [shape = 'f32[2,768]{1,0:T(2,128)}', space=vmem, size = 0x1800, scoped, tag = 'scratch operand']
  %s0 = inlined_call_operand.vmem [shape: f32[2,768], index: 0, kind: input, shape index: {}]
  %s1 = inlined_call_operand.vmem [shape: f32[2,768], index: 1, kind: input, shape index: {}]
  %s2 = inlined_call_operand.vmem [shape: f32[2,768], index: 2, kind: input, shape index: {}]
  %s3 = inlined_call_operand.vmem [shape: f32[2,1], index: 3, kind: output, shape index: {}]
  %s4 = sld [smem:[#allocation0]]
  $region30: #{_device_forward.47} parent=0
    _
  %s6 = ssub.s32 1, %s4
  %s7 = scalar_select 0, %s6, %s4
  // Predicated region
  $region2: #{_device_forward.47} parent=0 // pred_check
    _
  $region3: #{_device_forward.47} parent=0 // pred_check_branch
    %9 = sbr.rel (0) target = $region5
  $region4: #{_device_forward.47} parent=0 // pred_region
    _
  $region5: #{_device_forward.47} parent=0 // pred_fallthru
    _
  // Predicated region
  $region6: #{_device_forward.47} parent=0 // pred_check
    _
  $region7: #{_device_forward.47} parent=0 // pred_check_branch
    %11 = sbr.rel (0) target = $region9
  $region8: #{_device_forward.47} parent=0 // pred_region
    _
  $region9: #{_device_forward.47} parent=0 // pred_fallthru
    _
  // Predicated region
  $region10: #{_device_forward.47} parent=0 // pred_check
    _
  $region11: #{_device_forward.47} parent=0 // pred_check_branch
    %13 = sbr.rel (0) target = $region13
  $region12: #{_device_forward.47} parent=0 // pred_region
    _
  $region13: #{_device_forward.47} parent=0 // pred_fallthru
    _
  %p14 = scmp.eq.s32.totalorder 0, 0
  // Predicated region
  $region14: #{_device_forward.47} parent=0 // pred_check
    %p15 = pneg %p14
  $region15: #{_device_forward.47} parent=0 // pred_check_branch
    %17 = sbr.rel (%p15) target = $region17
  $region16: #{_device_forward.47} parent=0 // pred_region
    %18 = vst [vmem:[#allocation2] sm:$0xff] 0.0
    %19 = vst [vmem:[#allocation2 + $0x8] sm:$0xf] 0.0
  $region17: #{_device_forward.47} parent=0 // pred_fallthru
    _
  %v20 = vld [vmem:[%s1] sm:$0xff]
  %v21 = vld [vmem:[%s1 + $0x8] sm:$0xf]
  %v22 = vld [vmem:[%s0] sm:$0xff]
  %v23 = vld [vmem:[%s0 + $0x8] sm:$0xf]
  %v24 = vsub.f32 %v20, %v22
  %v25 = vsub.f32 %v21, %v23
  %v26 = vld [vmem:[%s2] sm:$0xff]
  %v27 = vld [vmem:[%s2 + $0x8] sm:$0xf]
  %v28 = vsub.f32 %v24, %v26
  %v29 = vsub.f32 %v25, %v27
  %v30 = vld [vmem:[#allocation2] sm:$0xff]
  %v31 = vld [vmem:[#allocation2 + $0x8] sm:$0xf]
  %v32 = vmul.f32 %v28, %v28
  %v33 = vmul.f32 %v29, %v29
  %v34 = vadd.f32 %v30, %v32
  %v35 = vadd.f32 %v31, %v33
  %36 = vst [vmem:[#allocation2] sm:$0xff] %v34
  %37 = vst [vmem:[#allocation2 + $0x8] sm:$0xf] %v35
  // Predicated region
  $region18: #{_device_forward.47} parent=0 // pred_check
    %p38 = pneg %p14
  $region19: #{_device_forward.47} parent=0 // pred_check_branch
    %40 = sbr.rel (%p38) target = $region21
  $region20: #{_device_forward.47} parent=0 // pred_region
    %v41 = vld [vmem:[#allocation2] sm:$0xff]
    %v42 = vld [vmem:[#allocation2 + $0x8] sm:$0xf]
    %v45 = vcombine.high %v41, %v41
    %v47 = vunpack.c.l.s4 1983009808
    %v48 = vunpack.c.0.s8 %v47
    %v49 = vlaneseq
    %v50 = vshrl.u32 %v49, 7
    %v51 = vsub.s32 %v48, %v50
    %v52 = vrot.slane %v41, %v51
    %v54 = vunpack.c.l.s4 1983009808
    %v55 = vunpack.c.0.s8 %v54
    %v56 = vlaneseq
    %v57 = vshrl.u32 %v56, 7
    %v58 = vsub.s32 %v55, %v57
    %v59 = vrot.slane %v45, %v58
    %v60 = vcombine.high %v52, %v52
    %v61 = vcombine.high %v59, %v59
    %v63 = vunpack.c.l.s4 1983009808
    %v64 = vunpack.c.0.s8 %v63
    %v65 = vlaneseq
    %v66 = vshrl.u32 %v65, 7
    %v67 = vsub.s32 %v64, %v66
    %v68 = vrot.slane %v42, %v67
    %v69 = vcombine.high %v68, %v68
    %vm76 = vcmask 1041408
    %v77 = vsel %vm76, %v52, 0.0
    %v78 = vsel %vm76, %v60, 0.0
    %v79 = vadd.f32 %v77, %v78
    %v80 = vsel %vm76, %v59, 0.0
    %v81 = vadd.f32 %v79, %v80
    %v82 = vsel %vm76, %v61, 0.0
    %v83 = vadd.f32 %v81, %v82
    %v84 = vsel %vm76, %v68, 0.0
    %v85 = vadd.f32 %v83, %v84
    %v86 = vsel %vm76, %v69, 0.0
    %v87 = vadd.f32 %v85, %v86
    %88 = vadd.xlane.f32.xlu0 %v87
    %v89 = vpop.xlane.xlu0 %88
    %v90 = vmul.f32 %v89, 0.0013020834
    %vm91 = vcmask 1024
    %92 = vst.msk [vmem:[%s3] sm:$0x3] %vm91, %v90
  $region21: #{_device_forward.47} parent=0 // pred_fallthru
    _
  // Predicated region
  $region22: #{_device_forward.47} parent=0 // pred_check
    _
  $region23: #{_device_forward.47} parent=0 // pred_check_branch
    %94 = sbr.rel (0) target = $region25
  $region24: #{_device_forward.47} parent=0 // pred_region
    _
  $region25: #{_device_forward.47} parent=0 // pred_fallthru
    _
  // Predicated region
  $region26: #{_device_forward.47} parent=0 // pred_check
    _
  $region27: #{_device_forward.47} parent=0 // pred_check_branch
    %96 = sbr.rel (0) target = $region29
  $region28: #{_device_forward.47} parent=0 // pred_region
    _
  $region29: #{_device_forward.47} parent=0 // pred_fallthru
    _

</llo_original>
